<compile_context>
chip_gen: v6e
topology: v6e:2x2x1
jax: 0.10.0
libtpu: 0.0.40
codegen_flags: <defaults>
</compile_context>

<pallas_src>
import jax
import jax.numpy as jnp
import numpy as np
from jax import lax
from jax.experimental import pallas as pl
from jax.experimental.pallas import tpu as pltpu


# ---------------------------------------------------------------------------
# Fused Pallas kernel: whole FastSCNN forward for one image per grid step.
# Activation layout inside the kernel: (H, W*C) — rows = image rows,
# lanes = width-major / channel-minor.  Everything is plain 2-D MXU matmuls.
# ---------------------------------------------------------------------------
def _fastscnn_kernel(x_ref,
                     sy1_ref, t1_ref, sh1_ref,
                     sy2_ref, t2_ref, sh2_ref,
                     sy3_ref, t3_ref, sh3_ref,
                     sy4_ref, t4_ref, sh4_ref,
                     t5_ref, sh5_ref, t6_ref, sh6_ref,
                     wy_ref, rx_ref,
                     o_ref):
    f32 = jnp.float32

    def conv3x3(act, sy_ref, t_ref, sh_ref):
        """3x3 conv (+folded BN) + ReLU. act: (Hi, Wi*Ci) bf16 value."""
        act32 = act.astype(f32)
        acc = None
        for dy in range(3):
            # Row-tap gather (exact 0/1 selection; handles stride & zero pad).
            rows = jnp.dot(sy_ref[dy], act32, preferred_element_type=f32)
            # Banded matrix folds the three dx taps + BN-scaled conv weights.
            part = jnp.dot(rows.astype(jnp.bfloat16), t_ref[dy],
                           preferred_element_type=f32)
            acc = part if acc is None else acc + part
        acc = jnp.maximum(acc + sh_ref[...], 0.0)
        return acc.astype(jnp.bfloat16)

    act = x_ref[0]                                       # (H, W*3) bf16
    act = conv3x3(act, sy1_ref, t1_ref, sh1_ref)         # ltd conv1, stride 2
    act = conv3x3(act, sy2_ref, t2_ref, sh2_ref)         # ltd conv2, stride 2
    act = conv3x3(act, sy3_ref, t3_ref, sh3_ref)         # gfe conv1, stride 2
    act = conv3x3(act, sy4_ref, t4_ref, sh4_ref)         # gfe conv2, stride 1

    # classifier: 1x1 conv + ReLU, Dropout (identity at inference), 1x1 conv.
    h = jnp.dot(act, t5_ref[...], preferred_element_type=f32) + sh5_ref[...]
    h = jnp.maximum(h, 0.0).astype(jnp.bfloat16)
    logits = jnp.dot(h, t6_ref[...], preferred_element_type=f32) + sh6_ref[...]

    # Separable bilinear upsample (align_corners=True), NCHW planes out.
    t_up = jnp.dot(wy_ref[...], logits.astype(jnp.bfloat16),
                   preferred_element_type=f32).astype(jnp.bfloat16)  # (H, Wc*nc)
    n_cls = o_ref.shape[1]
    for c in range(n_cls):
        plane = jnp.dot(t_up, rx_ref[c], preferred_element_type=f32)  # (H, W)
        o_ref[0, c, :, :] = plane


# ---------------------------------------------------------------------------
# pallas_call wrapper (the only per-call XLA glue is the entry transpose/cast)
# ---------------------------------------------------------------------------
def fast_scnn_forward(consts, x_nchw):
    """consts: tuple from prepare_params(); x_nchw: (N, 3, H, W) float32."""
    N, Cin, H, W = x_nchw.shape
    n_classes = consts[-1].shape[0]          # rx: (n_classes, Wc*n_classes, W)

    # Entry glue: NCHW -> (N, H, W*Cin) bf16.
    x = jnp.transpose(x_nchw, (0, 2, 3, 1)).reshape(N, H, W * Cin)
    x = x.astype(jnp.bfloat16)

    operands = (x,) + tuple(consts)
    in_specs = [pl.BlockSpec((1, H, W * Cin), lambda n: (n, 0, 0))]
    for c in consts:  # weights: full-array blocks, revisited every grid step
        in_specs.append(pl.BlockSpec(c.shape, lambda n, _nd=c.ndim: (0,) * _nd))
    out_spec = pl.BlockSpec((1, n_classes, H, W), lambda n: (n, 0, 0, 0))

    # VMEM accounting: weights (revisited, single-buffered) + per-image x/out
    # blocks (double-buffered) + generous headroom for padding/intermediates.
    block_bytes = sum(int(a.size) * a.dtype.itemsize for a in consts)
    block_bytes += (int(x.size) // N) * x.dtype.itemsize
    block_bytes += n_classes * H * W * 4
    vmem_limit = int(2 * block_bytes) + (8 << 20)
    assert vmem_limit <= 48 * 1024 * 1024, (
        "fused FastSCNN kernel is sized for small/medium inputs; "
        "tile spatially for larger resolutions")

    return pl.pallas_call(
        _fastscnn_kernel,
        out_shape=jax.ShapeDtypeStruct((N, n_classes, H, W), jnp.float32),
        grid_spec=pltpu.PrefetchScalarGridSpec(
            num_scalar_prefetch=0,
            grid=(N,),
            in_specs=in_specs,
            out_specs=out_spec,
        ),
        compiler_params=pltpu.CompilerParams(
            dimension_semantics=("parallel",),  # v7x: one image per TensorCore
            vmem_limit_bytes=vmem_limit,
        ),
    )(*operands)


# ---------------------------------------------------------------------------
# One-time weight folding (outside the jitted hot path)
# ---------------------------------------------------------------------------
def _row_select(Ho, Hi, stride, dy):
    """Sy[ho, h] = 1 iff h == stride*ho + dy - 1 (pad=1) and 0 <= h < Hi."""
    S = np.zeros((Ho, Hi), np.float32)
    for ho in range(Ho):
        h = stride * ho + dy - 1
        if 0 <= h < Hi:
            S[ho, h] = 1.0
    return S


def _col_select(Wo, Wi, stride, dx):
    """Sel[w, wo] = 1 iff w == stride*wo + dx - 1 (pad=1) and 0 <= w < Wi."""
    S = np.zeros((Wi, Wo), np.float32)
    for wo in range(Wo):
        w = stride * wo + dx - 1
        if 0 <= w < Wi:
            S[w, wo] = 1.0
    return S


def _fold_bn(w, bias, bn):
    """Fold BN scale into a conv weight: returns (w' (Co,Ci,KH,KW) f32, shift (Co,) f32)."""
    Co = w.shape[0]
    wf = w.astype(jnp.float32)
    b = bias.astype(jnp.float32) if bias is not None else jnp.zeros((Co,), jnp.float32)
    if bn is None:
        return wf, b
    gamma, beta, mean, var, eps = bn
    scale = gamma / jnp.sqrt(var + eps)
    return wf * scale[:, None, None, None], beta + scale * (b - mean)


def _conv3x3_mats(w, bias, bn, stride, Hi, Wi):
    """Per-dy row-select + banded weight matrices for a 3x3, pad=1 conv."""
    Co, Ci, KH, KW = w.shape
    assert (KH, KW) == (3, 3)
    Ho = (Hi - 1) // stride + 1
    Wo = (Wi - 1) // stride + 1
    wf, shift = _fold_bn(w, bias, bn)
    sy = np.stack([_row_select(Ho, Hi, stride, dy) for dy in range(3)])   # (3,Ho,Hi)
    ts = []
    for dy in range(3):
        T = jnp.zeros((Wi * Ci, Wo * Co), jnp.float32)
        for dx in range(3):
            sel = jnp.asarray(_col_select(Wo, Wi, stride, dx))            # (Wi,Wo)
            T = T + jnp.kron(sel, jnp.transpose(wf[:, :, dy, dx]))        # ⊗ (Ci,Co)
        ts.append(T)
    t = jnp.stack(ts).astype(jnp.bfloat16)                                # (3,Wi*Ci,Wo*Co)
    sh = jnp.tile(shift, (Wo,)).reshape(1, Wo * Co).astype(jnp.float32)
    return jnp.asarray(sy, jnp.float32), t, sh, Ho, Wo


def _conv1x1_mats(w, bias, Wo):
    """Block-diagonal (I_Wo ⊗ W^T) matrix for a 1x1 conv in (H, W*C) layout."""
    Co = w.shape[0]
    wmat = jnp.transpose(w.astype(jnp.float32)[:, :, 0, 0])               # (Ci,Co)
    T = jnp.kron(jnp.eye(Wo, dtype=jnp.float32), wmat).astype(jnp.bfloat16)
    b = bias.astype(jnp.float32) if bias is not None else jnp.zeros((Co,), jnp.float32)
    sh = jnp.tile(b, (Wo,)).reshape(1, Wo * Co).astype(jnp.float32)
    return T, sh


def _bilinear_weights(out_size, in_size):
    """(out_size, in_size) bilinear weights, align_corners=True (PyTorch)."""
    if out_size == 1:
        src = np.zeros((1,), np.float64)
    else:
        src = np.arange(out_size, dtype=np.float64) * (in_size - 1) / (out_size - 1)
    i0 = np.clip(np.floor(src).astype(np.int64), 0, in_size - 1)
    i1 = np.clip(i0 + 1, 0, in_size - 1)
    frac = src - i0
    M = np.zeros((out_size, in_size), np.float64)
    M[np.arange(out_size), i0] += 1.0 - frac
    M[np.arange(out_size), i1] += frac
    return M.astype(np.float32)


def _upsample_mats(H, W, Hc, Wc, n_classes):
    wy = _bilinear_weights(H, Hc)                                         # (H, Hc)
    wx = _bilinear_weights(W, Wc)                                         # (W, Wc)
    rx = np.zeros((n_classes, Wc * n_classes, W), np.float32)
    for c in range(n_classes):
        onehot = np.zeros((n_classes, 1), np.float32)
        onehot[c, 0] = 1.0
        rx[c] = np.kron(wx.T, onehot)                                     # (Wc*nc, W)
    return jnp.asarray(wy, jnp.bfloat16), jnp.asarray(rx, jnp.bfloat16)


def prepare_params(params, n_classes, H, W):
    """Fold all weights / BN / interp matrices once; returns a flat tuple."""
    p = params
    layers = [
        (p['ltd1_w'], None, p['ltd1_bn'], 2),
        (p['ltd2_w'], None, p['ltd2_bn'], 2),
        (p['gfe1_w'], p['gfe1_b'], p['gfe1_bn'], 2),
        (p['gfe2_w'], p['gfe2_b'], p['gfe2_bn'], 1),
    ]
    consts = []
    Hi, Wi = H, W
    for (w, b, bn, s) in layers:
        sy, t, sh, Hi, Wi = _conv3x3_mats(w, b, bn, s, Hi, Wi)
        consts += [sy, t, sh]
    Hc, Wc = Hi, Wi
    t5, sh5 = _conv1x1_mats(p['clf1_w'], p['clf1_b'], Wc)
    t6, sh6 = _conv1x1_mats(p['clf2_w'], p['clf2_b'], Wc)
    wy, rx = _upsample_mats(H, W, Hc, Wc, n_classes)
    consts += [t5, sh5, t6, sh6, wy, rx]
    return tuple(consts)


# ---------------------------------------------------------------------------
# Parameter init (matches the PyTorch module shapes / eval-mode defaults)
# ---------------------------------------------------------------------------
def init_params(key, n_classes):
    def conv_w(k, cout, cin, ksz):
        bound = 1.0 / np.sqrt(float(cin * ksz * ksz))
        return jax.random.uniform(k, (cout, cin, ksz, ksz), jnp.float32, -bound, bound)

    def conv_b(k, cout, cin, ksz):
        bound = 1.0 / np.sqrt(float(cin * ksz * ksz))
        return jax.random.uniform(k, (cout,), jnp.float32, -bound, bound)

    def bn(c):
        # fresh BatchNorm2d in eval mode: gamma=1, beta=0, mean=0, var=1, eps=1e-5
        return (jnp.ones((c,), jnp.float32), jnp.zeros((c,), jnp.float32),
                jnp.zeros((c,), jnp.float32), jnp.ones((c,), jnp.float32), 1e-5)

    ks = jax.random.split(key, 10)
    p = {}
    p['ltd1_w'] = conv_w(ks[0], 32, 3, 3);  p['ltd1_bn'] = bn(32)
    p['ltd2_w'] = conv_w(ks[1], 48, 32, 3); p['ltd2_bn'] = bn(48)
    p['gfe1_w'] = conv_w(ks[2], 128, 48, 3);  p['gfe1_b'] = conv_b(ks[3], 128, 48, 3)
    p['gfe1_bn'] = bn(128)
    p['gfe2_w'] = conv_w(ks[4], 128, 128, 3); p['gfe2_b'] = conv_b(ks[5], 128, 128, 3)
    p['gfe2_bn'] = bn(128)
    p['clf1_w'] = conv_w(ks[6], 128, 128, 1); p['clf1_b'] = conv_b(ks[7], 128, 128, 1)
    p['clf2_w'] = conv_w(ks[8], n_classes, 128, 1)
    p['clf2_b'] = conv_b(ks[9], n_classes, 128, 1)
    return p


# ---------------------------------------------------------------------------
# Pure-XLA f32 reference (PyTorch-module semantics in eval mode) for checking
# ---------------------------------------------------------------------------
def reference_forward(params, x_nchw):
    p = params
    N, _, H, W = x_nchw.shape
    x = jnp.transpose(x_nchw, (0, 2, 3, 1)).astype(jnp.float32)

    def conv(x, w, b, bn, stride, relu=True):
        wf, shift = _fold_bn(w, b, bn)
        y = lax.conv_general_dilated(
            x, jnp.transpose(wf, (2, 3, 1, 0)), (stride, stride),
            ((1, 1), (1, 1)), dimension_numbers=('NHWC', 'HWIO', 'NHWC'))
        y = y + shift
        return jnp.maximum(y, 0.0) if relu else y

    x = conv(x, p['ltd1_w'], None, p['ltd1_bn'], 2)
    x = conv(x, p['ltd2_w'], None, p['ltd2_bn'], 2)
    x = conv(x, p['gfe1_w'], p['gfe1_b'], p['gfe1_bn'], 2)
    x = conv(x, p['gfe2_w'], p['gfe2_b'], p['gfe2_bn'], 1)
    x = jnp.maximum(
        jnp.einsum('nhwc,oc->nhwo', x, p['clf1_w'][:, :, 0, 0]) + p['clf1_b'], 0.0)
    x = jnp.einsum('nhwc,oc->nhwo', x, p['clf2_w'][:, :, 0, 0]) + p['clf2_b']
    Hc, Wc = x.shape[1], x.shape[2]
    wy = jnp.asarray(_bilinear_weights(H, Hc))
    wx = jnp.asarray(_bilinear_weights(W, Wc))
    return jnp.einsum('yi,xj,nijc->ncyx', wy, wx, x)


if __name__ == "__main__":
    n_classes = 2
    N, Cin, H, W = 2, 3, 32, 32

    key = jax.random.PRNGKey(0)
    k_param, k_in = jax.random.split(key)
    params = init_params(k_param, n_classes)
    x = jax.random.normal(k_in, (N, Cin, H, W), jnp.float32)   # NCHW, like PyTorch

    consts = prepare_params(params, n_classes, H, W)           # one-time folding
    fwd = jax.jit(fast_scnn_forward)
    out = jax.block_until_ready(fwd(consts, x))

    assert out.shape == (N, n_classes, H, W), out.shape
    assert bool(jnp.all(jnp.isfinite(out)))

    # Loose check against the pure-XLA f32 reference (kernel uses bf16 MXU ops).
    ref = jax.block_until_ready(jax.jit(reference_forward)(params, x))
    err = float(jnp.max(jnp.abs(out - ref)) / (jnp.max(jnp.abs(ref)) + 1e-6))
    assert err < 5e-2, f"normalized max error too large: {err}"
    print("KERNEL_OK")
</pallas_src>

<mosaic_0001>
module attributes {stable_mosaic.version = 11 : i64} {
  func.func @_fastscnn_kernel(%arg0: i32, %arg1: memref<1x32x96xbf16, #tpu.memory_space<vmem>>, %arg2: memref<3x16x32xf32, #tpu.memory_space<vmem>>, %arg3: memref<3x96x512xbf16, #tpu.memory_space<vmem>>, %arg4: memref<1x512xf32, #tpu.memory_space<vmem>>, %arg5: memref<3x8x16xf32, #tpu.memory_space<vmem>>, %arg6: memref<3x512x384xbf16, #tpu.memory_space<vmem>>, %arg7: memref<1x384xf32, #tpu.memory_space<vmem>>, %arg8: memref<3x4x8xf32, #tpu.memory_space<vmem>>, %arg9: memref<3x384x512xbf16, #tpu.memory_space<vmem>>, %arg10: memref<1x512xf32, #tpu.memory_space<vmem>>, %arg11: memref<3x4x4xf32, #tpu.memory_space<vmem>>, %arg12: memref<3x512x512xbf16, #tpu.memory_space<vmem>>, %arg13: memref<1x512xf32, #tpu.memory_space<vmem>>, %arg14: memref<512x512xbf16, #tpu.memory_space<vmem>>, %arg15: memref<1x512xf32, #tpu.memory_space<vmem>>, %arg16: memref<512x8xbf16, #tpu.memory_space<vmem>>, %arg17: memref<1x8xf32, #tpu.memory_space<vmem>>, %arg18: memref<32x4xbf16, #tpu.memory_space<vmem>>, %arg19: memref<2x8x32xbf16, #tpu.memory_space<vmem>>, %arg20: memref<1x2x32x32xf32, #tpu.memory_space<vmem>>) attributes {dimension_semantics = [#tpu.dimension_semantics<parallel>], iteration_bounds = array<i64: 2>, scalar_prefetch = 0 : i64, scratch_operands = 0 : i64, tpu.core_type = #tpu.core_type<tc>, window_params = [{transform_indices = @transform_0, window_bounds = array<i64: 1, 32, 96>}, {pipeline_mode = #tpu.pipeline_mode<synchronous>, transform_indices = @transform_1, window_bounds = array<i64: 3, 16, 32>}, {pipeline_mode = #tpu.pipeline_mode<synchronous>, transform_indices = @transform_2, window_bounds = array<i64: 3, 96, 512>}, {pipeline_mode = #tpu.pipeline_mode<synchronous>, transform_indices = @transform_3, window_bounds = array<i64: 1, 512>}, {pipeline_mode = #tpu.pipeline_mode<synchronous>, transform_indices = @transform_4, window_bounds = array<i64: 3, 8, 16>}, {pipeline_mode = #tpu.pipeline_mode<synchronous>, transform_indices = @transform_5, window_bounds = array<i64: 3, 512, 384>}, {pipeline_mode = #tpu.pipeline_mode<synchronous>, transform_indices = @transform_6, window_bounds = array<i64: 1, 384>}, {pipeline_mode = #tpu.pipeline_mode<synchronous>, transform_indices = @transform_7, window_bounds = array<i64: 3, 4, 8>}, {pipeline_mode = #tpu.pipeline_mode<synchronous>, transform_indices = @transform_8, window_bounds = array<i64: 3, 384, 512>}, {pipeline_mode = #tpu.pipeline_mode<synchronous>, transform_indices = @transform_9, window_bounds = array<i64: 1, 512>}, {pipeline_mode = #tpu.pipeline_mode<synchronous>, transform_indices = @transform_10, window_bounds = array<i64: 3, 4, 4>}, {pipeline_mode = #tpu.pipeline_mode<synchronous>, transform_indices = @transform_11, window_bounds = array<i64: 3, 512, 512>}, {pipeline_mode = #tpu.pipeline_mode<synchronous>, transform_indices = @transform_12, window_bounds = array<i64: 1, 512>}, {pipeline_mode = #tpu.pipeline_mode<synchronous>, transform_indices = @transform_13, window_bounds = array<i64: 512, 512>}, {pipeline_mode = #tpu.pipeline_mode<synchronous>, transform_indices = @transform_14, window_bounds = array<i64: 1, 512>}, {pipeline_mode = #tpu.pipeline_mode<synchronous>, transform_indices = @transform_15, window_bounds = array<i64: 512, 8>}, {pipeline_mode = #tpu.pipeline_mode<synchronous>, transform_indices = @transform_16, window_bounds = array<i64: 1, 8>}, {pipeline_mode = #tpu.pipeline_mode<synchronous>, transform_indices = @transform_17, window_bounds = array<i64: 32, 4>}, {pipeline_mode = #tpu.pipeline_mode<synchronous>, transform_indices = @transform_18, window_bounds = array<i64: 2, 8, 32>}, {transform_indices = @transform_19, window_bounds = array<i64: 1, 2, 32, 32>}]} {
    %c0 = arith.constant 0 : index
    %c0_0 = arith.constant 0 : index
    %c0_1 = arith.constant 0 : index
    %0 = vector.load %arg1[%c0, %c0_0, %c0_1] : memref<1x32x96xbf16, #tpu.memory_space<vmem>>, vector<1x32x96xbf16>
    %1 = vector.shape_cast %0 : vector<1x32x96xbf16> to vector<32x96xbf16>
    %2 = arith.extf %1 : vector<32x96xbf16> to vector<32x96xf32>
    %c0_2 = arith.constant 0 : index
    %c0_3 = arith.constant 0 : index
    %c0_4 = arith.constant 0 : index
    %3 = vector.load %arg2[%c0_2, %c0_3, %c0_4] : memref<3x16x32xf32, #tpu.memory_space<vmem>>, vector<1x16x32xf32>
    %4 = vector.shape_cast %3 : vector<1x16x32xf32> to vector<16x32xf32>
    %cst = arith.constant dense<0.000000e+00> : vector<16x96xf32>
    %5 = tpu.matmul %4, %2, %cst {dimension_numbers = #tpu.dot_dimension_numbers<[1], [0], [0], [1], [0, 0, 1, 1], [], []>} : vector<16x32xf32>, vector<32x96xf32>, vector<16x96xf32> -> vector<16x96xf32>
    %6 = arith.truncf %5 : vector<16x96xf32> to vector<16x96xbf16>
    %c0_5 = arith.constant 0 : index
    %c0_6 = arith.constant 0 : index
    %c0_7 = arith.constant 0 : index
    %7 = vector.load %arg3[%c0_5, %c0_6, %c0_7] : memref<3x96x512xbf16, #tpu.memory_space<vmem>>, vector<1x96x512xbf16>
    %8 = vector.shape_cast %7 : vector<1x96x512xbf16> to vector<96x512xbf16>
    %cst_8 = arith.constant dense<0.000000e+00> : vector<16x512xf32>
    %9 = tpu.matmul %6, %8, %cst_8 {dimension_numbers = #tpu.dot_dimension_numbers<[1], [0], [0], [1], [0, 0, 1, 1], [], []>} : vector<16x96xbf16>, vector<96x512xbf16>, vector<16x512xf32> -> vector<16x512xf32>
    %c1 = arith.constant 1 : index
    %c0_9 = arith.constant 0 : index
    %c0_10 = arith.constant 0 : index
    %10 = vector.load %arg2[%c1, %c0_9, %c0_10] : memref<3x16x32xf32, #tpu.memory_space<vmem>>, vector<1x16x32xf32>
    %11 = vector.shape_cast %10 : vector<1x16x32xf32> to vector<16x32xf32>
    %cst_11 = arith.constant dense<0.000000e+00> : vector<16x96xf32>
    %12 = tpu.matmul %11, %2, %cst_11 {dimension_numbers = #tpu.dot_dimension_numbers<[1], [0], [0], [1], [0, 0, 1, 1], [], []>} : vector<16x32xf32>, vector<32x96xf32>, vector<16x96xf32> -> vector<16x96xf32>
    %13 = arith.truncf %12 : vector<16x96xf32> to vector<16x96xbf16>
    %c1_12 = arith.constant 1 : index
    %c0_13 = arith.constant 0 : index
    %c0_14 = arith.constant 0 : index
    %14 = vector.load %arg3[%c1_12, %c0_13, %c0_14] : memref<3x96x512xbf16, #tpu.memory_space<vmem>>, vector<1x96x512xbf16>
    %15 = vector.shape_cast %14 : vector<1x96x512xbf16> to vector<96x512xbf16>
    %cst_15 = arith.constant dense<0.000000e+00> : vector<16x512xf32>
    %16 = tpu.matmul %13, %15, %cst_15 {dimension_numbers = #tpu.dot_dimension_numbers<[1], [0], [0], [1], [0, 0, 1, 1], [], []>} : vector<16x96xbf16>, vector<96x512xbf16>, vector<16x512xf32> -> vector<16x512xf32>
    %17 = arith.addf %9, %16 : vector<16x512xf32>
    %c2 = arith.constant 2 : index
    %c0_16 = arith.constant 0 : index
    %c0_17 = arith.constant 0 : index
    %18 = vector.load %arg2[%c2, %c0_16, %c0_17] : memref<3x16x32xf32, #tpu.memory_space<vmem>>, vector<1x16x32xf32>
    %19 = vector.shape_cast %18 : vector<1x16x32xf32> to vector<16x32xf32>
    %cst_18 = arith.constant dense<0.000000e+00> : vector<16x96xf32>
    %20 = tpu.matmul %19, %2, %cst_18 {dimension_numbers = #tpu.dot_dimension_numbers<[1], [0], [0], [1], [0, 0, 1, 1], [], []>} : vector<16x32xf32>, vector<32x96xf32>, vector<16x96xf32> -> vector<16x96xf32>
    %21 = arith.truncf %20 : vector<16x96xf32> to vector<16x96xbf16>
    %c2_19 = arith.constant 2 : index
    %c0_20 = arith.constant 0 : index
    %c0_21 = arith.constant 0 : index
    %22 = vector.load %arg3[%c2_19, %c0_20, %c0_21] : memref<3x96x512xbf16, #tpu.memory_space<vmem>>, vector<1x96x512xbf16>
    %23 = vector.shape_cast %22 : vector<1x96x512xbf16> to vector<96x512xbf16>
    %cst_22 = arith.constant dense<0.000000e+00> : vector<16x512xf32>
    %24 = tpu.matmul %21, %23, %cst_22 {dimension_numbers = #tpu.dot_dimension_numbers<[1], [0], [0], [1], [0, 0, 1, 1], [], []>} : vector<16x96xbf16>, vector<96x512xbf16>, vector<16x512xf32> -> vector<16x512xf32>
    %25 = arith.addf %17, %24 : vector<16x512xf32>
    %c0_23 = arith.constant 0 : index
    %c0_24 = arith.constant 0 : index
    %26 = vector.load %arg4[%c0_23, %c0_24] : memref<1x512xf32, #tpu.memory_space<vmem>>, vector<1x512xf32>
    %27 = vector.broadcast %26 : vector<1x512xf32> to vector<16x512xf32>
    %28 = arith.addf %25, %27 : vector<16x512xf32>
    %cst_25 = arith.constant 0.000000e+00 : f32
    %29 = vector.broadcast %cst_25 : f32 to vector<16x512xf32>
    %30 = arith.maximumf %28, %29 : vector<16x512xf32>
    %31 = arith.truncf %30 : vector<16x512xf32> to vector<16x512xbf16>
    %32 = arith.extf %31 : vector<16x512xbf16> to vector<16x512xf32>
    %c0_26 = arith.constant 0 : index
    %c0_27 = arith.constant 0 : index
    %c0_28 = arith.constant 0 : index
    %33 = vector.load %arg5[%c0_26, %c0_27, %c0_28] : memref<3x8x16xf32, #tpu.memory_space<vmem>>, vector<1x8x16xf32>
    %34 = vector.shape_cast %33 : vector<1x8x16xf32> to vector<8x16xf32>
    %cst_29 = arith.constant dense<0.000000e+00> : vector<8x512xf32>
    %35 = tpu.matmul %34, %32, %cst_29 {dimension_numbers = #tpu.dot_dimension_numbers<[1], [0], [0], [1], [0, 0, 1, 1], [], []>} : vector<8x16xf32>, vector<16x512xf32>, vector<8x512xf32> -> vector<8x512xf32>
    %36 = arith.truncf %35 : vector<8x512xf32> to vector<8x512xbf16>
    %c0_30 = arith.constant 0 : index
    %c0_31 = arith.constant 0 : index
    %c0_32 = arith.constant 0 : index
    %37 = vector.load %arg6[%c0_30, %c0_31, %c0_32] : memref<3x512x384xbf16, #tpu.memory_space<vmem>>, vector<1x512x384xbf16>
    %38 = vector.shape_cast %37 : vector<1x512x384xbf16> to vector<512x384xbf16>
    %cst_33 = arith.constant dense<0.000000e+00> : vector<8x384xf32>
    %39 = tpu.matmul %36, %38, %cst_33 {dimension_numbers = #tpu.dot_dimension_numbers<[1], [0], [0], [1], [0, 0, 1, 1], [], []>} : vector<8x512xbf16>, vector<512x384xbf16>, vector<8x384xf32> -> vector<8x384xf32>
    %c1_34 = arith.constant 1 : index
    %c0_35 = arith.constant 0 : index
    %c0_36 = arith.constant 0 : index
    %40 = vector.load %arg5[%c1_34, %c0_35, %c0_36] : memref<3x8x16xf32, #tpu.memory_space<vmem>>, vector<1x8x16xf32>
    %41 = vector.shape_cast %40 : vector<1x8x16xf32> to vector<8x16xf32>
    %cst_37 = arith.constant dense<0.000000e+00> : vector<8x512xf32>
    %42 = tpu.matmul %41, %32, %cst_37 {dimension_numbers = #tpu.dot_dimension_numbers<[1], [0], [0], [1], [0, 0, 1, 1], [], []>} : vector<8x16xf32>, vector<16x512xf32>, vector<8x512xf32> -> vector<8x512xf32>
    %43 = arith.truncf %42 : vector<8x512xf32> to vector<8x512xbf16>
    %c1_38 = arith.constant 1 : index
    %c0_39 = arith.constant 0 : index
    %c0_40 = arith.constant 0 : index
    %44 = vector.load %arg6[%c1_38, %c0_39, %c0_40] : memref<3x512x384xbf16, #tpu.memory_space<vmem>>, vector<1x512x384xbf16>
    %45 = vector.shape_cast %44 : vector<1x512x384xbf16> to vector<512x384xbf16>
    %cst_41 = arith.constant dense<0.000000e+00> : vector<8x384xf32>
    %46 = tpu.matmul %43, %45, %cst_41 {dimension_numbers = #tpu.dot_dimension_numbers<[1], [0], [0], [1], [0, 0, 1, 1], [], []>} : vector<8x512xbf16>, vector<512x384xbf16>, vector<8x384xf32> -> vector<8x384xf32>
    %47 = arith.addf %39, %46 : vector<8x384xf32>
    %c2_42 = arith.constant 2 : index
    %c0_43 = arith.constant 0 : index
    %c0_44 = arith.constant 0 : index
    %48 = vector.load %arg5[%c2_42, %c0_43, %c0_44] : memref<3x8x16xf32, #tpu.memory_space<vmem>>, vector<1x8x16xf32>
    %49 = vector.shape_cast %48 : vector<1x8x16xf32> to vector<8x16xf32>
    %cst_45 = arith.constant dense<0.000000e+00> : vector<8x512xf32>
    %50 = tpu.matmul %49, %32, %cst_45 {dimension_numbers = #tpu.dot_dimension_numbers<[1], [0], [0], [1], [0, 0, 1, 1], [], []>} : vector<8x16xf32>, vector<16x512xf32>, vector<8x512xf32> -> vector<8x512xf32>
    %51 = arith.truncf %50 : vector<8x512xf32> to vector<8x512xbf16>
    %c2_46 = arith.constant 2 : index
    %c0_47 = arith.constant 0 : index
    %c0_48 = arith.constant 0 : index
    %52 = vector.load %arg6[%c2_46, %c0_47, %c0_48] : memref<3x512x384xbf16, #tpu.memory_space<vmem>>, vector<1x512x384xbf16>
    %53 = vector.shape_cast %52 : vector<1x512x384xbf16> to vector<512x384xbf16>
    %cst_49 = arith.constant dense<0.000000e+00> : vector<8x384xf32>
    %54 = tpu.matmul %51, %53, %cst_49 {dimension_numbers = #tpu.dot_dimension_numbers<[1], [0], [0], [1], [0, 0, 1, 1], [], []>} : vector<8x512xbf16>, vector<512x384xbf16>, vector<8x384xf32> -> vector<8x384xf32>
    %55 = arith.addf %47, %54 : vector<8x384xf32>
    %c0_50 = arith.constant 0 : index
    %c0_51 = arith.constant 0 : index
    %56 = vector.load %arg7[%c0_50, %c0_51] : memref<1x384xf32, #tpu.memory_space<vmem>>, vector<1x384xf32>
    %57 = vector.broadcast %56 : vector<1x384xf32> to vector<8x384xf32>
    %58 = arith.addf %55, %57 : vector<8x384xf32>
    %cst_52 = arith.constant 0.000000e+00 : f32
    %59 = vector.broadcast %cst_52 : f32 to vector<8x384xf32>
    %60 = arith.maximumf %58, %59 : vector<8x384xf32>
    %61 = arith.truncf %60 : vector<8x384xf32> to vector<8x384xbf16>
    %62 = arith.extf %61 : vector<8x384xbf16> to vector<8x384xf32>
    %c0_53 = arith.constant 0 : index
    %c0_54 = arith.constant 0 : index
    %c0_55 = arith.constant 0 : index
    %63 = vector.load %arg8[%c0_53, %c0_54, %c0_55] : memref<3x4x8xf32, #tpu.memory_space<vmem>>, vector<1x4x8xf32>
    %64 = vector.shape_cast %63 : vector<1x4x8xf32> to vector<4x8xf32>
    %cst_56 = arith.constant dense<0.000000e+00> : vector<4x384xf32>
    %65 = tpu.matmul %64, %62, %cst_56 {dimension_numbers = #tpu.dot_dimension_numbers<[1], [0], [0], [1], [0, 0, 1, 1], [], []>} : vector<4x8xf32>, vector<8x384xf32>, vector<4x384xf32> -> vector<4x384xf32>
    %66 = arith.truncf %65 : vector<4x384xf32> to vector<4x384xbf16>
    %c0_57 = arith.constant 0 : index
    %c0_58 = arith.constant 0 : index
    %c0_59 = arith.constant 0 : index
    %67 = vector.load %arg9[%c0_57, %c0_58, %c0_59] : memref<3x384x512xbf16, #tpu.memory_space<vmem>>, vector<1x384x512xbf16>
    %68 = vector.shape_cast %67 : vector<1x384x512xbf16> to vector<384x512xbf16>
    %cst_60 = arith.constant dense<0.000000e+00> : vector<4x512xf32>
    %69 = tpu.matmul %66, %68, %cst_60 {dimension_numbers = #tpu.dot_dimension_numbers<[1], [0], [0], [1], [0, 0, 1, 1], [], []>} : vector<4x384xbf16>, vector<384x512xbf16>, vector<4x512xf32> -> vector<4x512xf32>
    %c1_61 = arith.constant 1 : index
    %c0_62 = arith.constant 0 : index
    %c0_63 = arith.constant 0 : index
    %70 = vector.load %arg8[%c1_61, %c0_62, %c0_63] : memref<3x4x8xf32, #tpu.memory_space<vmem>>, vector<1x4x8xf32>
    %71 = vector.shape_cast %70 : vector<1x4x8xf32> to vector<4x8xf32>
    %cst_64 = arith.constant dense<0.000000e+00> : vector<4x384xf32>
    %72 = tpu.matmul %71, %62, %cst_64 {dimension_numbers = #tpu.dot_dimension_numbers<[1], [0], [0], [1], [0, 0, 1, 1], [], []>} : vector<4x8xf32>, vector<8x384xf32>, vector<4x384xf32> -> vector<4x384xf32>
    %73 = arith.truncf %72 : vector<4x384xf32> to vector<4x384xbf16>
    %c1_65 = arith.constant 1 : index
    %c0_66 = arith.constant 0 : index
    %c0_67 = arith.constant 0 : index
    %74 = vector.load %arg9[%c1_65, %c0_66, %c0_67] : memref<3x384x512xbf16, #tpu.memory_space<vmem>>, vector<1x384x512xbf16>
    %75 = vector.shape_cast %74 : vector<1x384x512xbf16> to vector<384x512xbf16>
    %cst_68 = arith.constant dense<0.000000e+00> : vector<4x512xf32>
    %76 = tpu.matmul %73, %75, %cst_68 {dimension_numbers = #tpu.dot_dimension_numbers<[1], [0], [0], [1], [0, 0, 1, 1], [], []>} : vector<4x384xbf16>, vector<384x512xbf16>, vector<4x512xf32> -> vector<4x512xf32>
    %77 = arith.addf %69, %76 : vector<4x512xf32>
    %c2_69 = arith.constant 2 : index
    %c0_70 = arith.constant 0 : index
    %c0_71 = arith.constant 0 : index
    %78 = vector.load %arg8[%c2_69, %c0_70, %c0_71] : memref<3x4x8xf32, #tpu.memory_space<vmem>>, vector<1x4x8xf32>
    %79 = vector.shape_cast %78 : vector<1x4x8xf32> to vector<4x8xf32>
    %cst_72 = arith.constant dense<0.000000e+00> : vector<4x384xf32>
    %80 = tpu.matmul %79, %62, %cst_72 {dimension_numbers = #tpu.dot_dimension_numbers<[1], [0], [0], [1], [0, 0, 1, 1], [], []>} : vector<4x8xf32>, vector<8x384xf32>, vector<4x384xf32> -> vector<4x384xf32>
    %81 = arith.truncf %80 : vector<4x384xf32> to vector<4x384xbf16>
    %c2_73 = arith.constant 2 : index
    %c0_74 = arith.constant 0 : index
    %c0_75 = arith.constant 0 : index
    %82 = vector.load %arg9[%c2_73, %c0_74, %c0_75] : memref<3x384x512xbf16, #tpu.memory_space<vmem>>, vector<1x384x512xbf16>
    %83 = vector.shape_cast %82 : vector<1x384x512xbf16> to vector<384x512xbf16>
    %cst_76 = arith.constant dense<0.000000e+00> : vector<4x512xf32>
    %84 = tpu.matmul %81, %83, %cst_76 {dimension_numbers = #tpu.dot_dimension_numbers<[1], [0], [0], [1], [0, 0, 1, 1], [], []>} : vector<4x384xbf16>, vector<384x512xbf16>, vector<4x512xf32> -> vector<4x512xf32>
    %85 = arith.addf %77, %84 : vector<4x512xf32>
    %c0_77 = arith.constant 0 : index
    %c0_78 = arith.constant 0 : index
    %86 = vector.load %arg10[%c0_77, %c0_78] : memref<1x512xf32, #tpu.memory_space<vmem>>, vector<1x512xf32>
    %87 = vector.broadcast %86 : vector<1x512xf32> to vector<4x512xf32>
    %88 = arith.addf %85, %87 : vector<4x512xf32>
    %cst_79 = arith.constant 0.000000e+00 : f32
    %89 = vector.broadcast %cst_79 : f32 to vector<4x512xf32>
    %90 = arith.maximumf %88, %89 : vector<4x512xf32>
    %91 = arith.truncf %90 : vector<4x512xf32> to vector<4x512xbf16>
    %92 = arith.extf %91 : vector<4x512xbf16> to vector<4x512xf32>
    %c0_80 = arith.constant 0 : index
    %c0_81 = arith.constant 0 : index
    %c0_82 = arith.constant 0 : index
    %93 = vector.load %arg11[%c0_80, %c0_81, %c0_82] : memref<3x4x4xf32, #tpu.memory_space<vmem>>, vector<1x4x4xf32>
    %94 = vector.shape_cast %93 : vector<1x4x4xf32> to vector<4x4xf32>
    %cst_83 = arith.constant dense<0.000000e+00> : vector<4x512xf32>
    %95 = tpu.matmul %94, %92, %cst_83 {dimension_numbers = #tpu.dot_dimension_numbers<[1], [0], [0], [1], [0, 0, 1, 1], [], []>} : vector<4x4xf32>, vector<4x512xf32>, vector<4x512xf32> -> vector<4x512xf32>
    %96 = arith.truncf %95 : vector<4x512xf32> to vector<4x512xbf16>
    %c0_84 = arith.constant 0 : index
    %c0_85 = arith.constant 0 : index
    %c0_86 = arith.constant 0 : index
    %97 = vector.load %arg12[%c0_84, %c0_85, %c0_86] : memref<3x512x512xbf16, #tpu.memory_space<vmem>>, vector<1x512x512xbf16>
    %98 = vector.shape_cast %97 : vector<1x512x512xbf16> to vector<512x512xbf16>
    %cst_87 = arith.constant dense<0.000000e+00> : vector<4x512xf32>
    %99 = tpu.matmul %96, %98, %cst_87 {dimension_numbers = #tpu.dot_dimension_numbers<[1], [0], [0], [1], [0, 0, 1, 1], [], []>} : vector<4x512xbf16>, vector<512x512xbf16>, vector<4x512xf32> -> vector<4x512xf32>
    %c1_88 = arith.constant 1 : index
    %c0_89 = arith.constant 0 : index
    %c0_90 = arith.constant 0 : index
    %100 = vector.load %arg11[%c1_88, %c0_89, %c0_90] : memref<3x4x4xf32, #tpu.memory_space<vmem>>, vector<1x4x4xf32>
    %101 = vector.shape_cast %100 : vector<1x4x4xf32> to vector<4x4xf32>
    %cst_91 = arith.constant dense<0.000000e+00> : vector<4x512xf32>
    %102 = tpu.matmul %101, %92, %cst_91 {dimension_numbers = #tpu.dot_dimension_numbers<[1], [0], [0], [1], [0, 0, 1, 1], [], []>} : vector<4x4xf32>, vector<4x512xf32>, vector<4x512xf32> -> vector<4x512xf32>
    %103 = arith.truncf %102 : vector<4x512xf32> to vector<4x512xbf16>
    %c1_92 = arith.constant 1 : index
    %c0_93 = arith.constant 0 : index
    %c0_94 = arith.constant 0 : index
    %104 = vector.load %arg12[%c1_92, %c0_93, %c0_94] : memref<3x512x512xbf16, #tpu.memory_space<vmem>>, vector<1x512x512xbf16>
    %105 = vector.shape_cast %104 : vector<1x512x512xbf16> to vector<512x512xbf16>
    %cst_95 = arith.constant dense<0.000000e+00> : vector<4x512xf32>
    %106 = tpu.matmul %103, %105, %cst_95 {dimension_numbers = #tpu.dot_dimension_numbers<[1], [0], [0], [1], [0, 0, 1, 1], [], []>} : vector<4x512xbf16>, vector<512x512xbf16>, vector<4x512xf32> -> vector<4x512xf32>
    %107 = arith.addf %99, %106 : vector<4x512xf32>
    %c2_96 = arith.constant 2 : index
    %c0_97 = arith.constant 0 : index
    %c0_98 = arith.constant 0 : index
    %108 = vector.load %arg11[%c2_96, %c0_97, %c0_98] : memref<3x4x4xf32, #tpu.memory_space<vmem>>, vector<1x4x4xf32>
    %109 = vector.shape_cast %108 : vector<1x4x4xf32> to vector<4x4xf32>
    %cst_99 = arith.constant dense<0.000000e+00> : vector<4x512xf32>
    %110 = tpu.matmul %109, %92, %cst_99 {dimension_numbers = #tpu.dot_dimension_numbers<[1], [0], [0], [1], [0, 0, 1, 1], [], []>} : vector<4x4xf32>, vector<4x512xf32>, vector<4x512xf32> -> vector<4x512xf32>
    %111 = arith.truncf %110 : vector<4x512xf32> to vector<4x512xbf16>
    %c2_100 = arith.constant 2 : index
    %c0_101 = arith.constant 0 : index
    %c0_102 = arith.constant 0 : index
    %112 = vector.load %arg12[%c2_100, %c0_101, %c0_102] : memref<3x512x512xbf16, #tpu.memory_space<vmem>>, vector<1x512x512xbf16>
    %113 = vector.shape_cast %112 : vector<1x512x512xbf16> to vector<512x512xbf16>
    %cst_103 = arith.constant dense<0.000000e+00> : vector<4x512xf32>
    %114 = tpu.matmul %111, %113, %cst_103 {dimension_numbers = #tpu.dot_dimension_numbers<[1], [0], [0], [1], [0, 0, 1, 1], [], []>} : vector<4x512xbf16>, vector<512x512xbf16>, vector<4x512xf32> -> vector<4x512xf32>
    %115 = arith.addf %107, %114 : vector<4x512xf32>
    %c0_104 = arith.constant 0 : index
    %c0_105 = arith.constant 0 : index
    %116 = vector.load %arg13[%c0_104, %c0_105] : memref<1x512xf32, #tpu.memory_space<vmem>>, vector<1x512xf32>
    %117 = vector.broadcast %116 : vector<1x512xf32> to vector<4x512xf32>
    %118 = arith.addf %115, %117 : vector<4x512xf32>
    %cst_106 = arith.constant 0.000000e+00 : f32
    %119 = vector.broadcast %cst_106 : f32 to vector<4x512xf32>
    %120 = arith.maximumf %118, %119 : vector<4x512xf32>
    %121 = arith.truncf %120 : vector<4x512xf32> to vector<4x512xbf16>
    %c0_107 = arith.constant 0 : index
    %c0_108 = arith.constant 0 : index
    %122 = vector.load %arg14[%c0_107, %c0_108] : memref<512x512xbf16, #tpu.memory_space<vmem>>, vector<512x512xbf16>
    %cst_109 = arith.constant dense<0.000000e+00> : vector<4x512xf32>
    %123 = tpu.matmul %121, %122, %cst_109 {dimension_numbers = #tpu.dot_dimension_numbers<[1], [0], [0], [1], [0, 0, 1, 1], [], []>} : vector<4x512xbf16>, vector<512x512xbf16>, vector<4x512xf32> -> vector<4x512xf32>
    %c0_110 = arith.constant 0 : index
    %c0_111 = arith.constant 0 : index
    %124 = vector.load %arg15[%c0_110, %c0_111] : memref<1x512xf32, #tpu.memory_space<vmem>>, vector<1x512xf32>
    %125 = vector.broadcast %124 : vector<1x512xf32> to vector<4x512xf32>
    %126 = arith.addf %123, %125 : vector<4x512xf32>
    %cst_112 = arith.constant 0.000000e+00 : f32
    %127 = vector.broadcast %cst_112 : f32 to vector<4x512xf32>
    %128 = arith.maximumf %126, %127 : vector<4x512xf32>
    %129 = arith.truncf %128 : vector<4x512xf32> to vector<4x512xbf16>
    %c0_113 = arith.constant 0 : index
    %c0_114 = arith.constant 0 : index
    %130 = vector.load %arg16[%c0_113, %c0_114] : memref<512x8xbf16, #tpu.memory_space<vmem>>, vector<512x8xbf16>
    %cst_115 = arith.constant dense<0.000000e+00> : vector<4x8xf32>
    %131 = tpu.matmul %129, %130, %cst_115 {dimension_numbers = #tpu.dot_dimension_numbers<[1], [0], [0], [1], [0, 0, 1, 1], [], []>} : vector<4x512xbf16>, vector<512x8xbf16>, vector<4x8xf32> -> vector<4x8xf32>
    %c0_116 = arith.constant 0 : index
    %c0_117 = arith.constant 0 : index
    %132 = vector.load %arg17[%c0_116, %c0_117] : memref<1x8xf32, #tpu.memory_space<vmem>>, vector<1x8xf32>
    %133 = vector.broadcast %132 : vector<1x8xf32> to vector<4x8xf32>
    %134 = arith.addf %131, %133 : vector<4x8xf32>
    %c0_118 = arith.constant 0 : index
    %c0_119 = arith.constant 0 : index
    %135 = vector.load %arg18[%c0_118, %c0_119] : memref<32x4xbf16, #tpu.memory_space<vmem>>, vector<32x4xbf16>
    %136 = arith.truncf %134 : vector<4x8xf32> to vector<4x8xbf16>
    %cst_120 = arith.constant dense<0.000000e+00> : vector<32x8xf32>
    %137 = tpu.matmul %135, %136, %cst_120 {dimension_numbers = #tpu.dot_dimension_numbers<[1], [0], [0], [1], [0, 0, 1, 1], [], []>} : vector<32x4xbf16>, vector<4x8xbf16>, vector<32x8xf32> -> vector<32x8xf32>
    %138 = arith.truncf %137 : vector<32x8xf32> to vector<32x8xbf16>
    %c0_121 = arith.constant 0 : index
    %c0_122 = arith.constant 0 : index
    %c0_123 = arith.constant 0 : index
    %139 = vector.load %arg19[%c0_121, %c0_122, %c0_123] : memref<2x8x32xbf16, #tpu.memory_space<vmem>>, vector<1x8x32xbf16>
    %140 = vector.shape_cast %139 : vector<1x8x32xbf16> to vector<8x32xbf16>
    %cst_124 = arith.constant dense<0.000000e+00> : vector<32x32xf32>
    %141 = tpu.matmul %138, %140, %cst_124 {dimension_numbers = #tpu.dot_dimension_numbers<[1], [0], [0], [1], [0, 0, 1, 1], [], []>} : vector<32x8xbf16>, vector<8x32xbf16>, vector<32x32xf32> -> vector<32x32xf32>
    %c0_125 = arith.constant 0 : index
    %c0_126 = arith.constant 0 : index
    %c0_127 = arith.constant 0 : index
    %c0_128 = arith.constant 0 : index
    %142 = vector.load %arg20[%c0_125, %c0_126, %c0_127, %c0_128] : memref<1x2x32x32xf32, #tpu.memory_space<vmem>>, vector<1x1x32x32xf32>
    %143 = vector.shape_cast %142 : vector<1x1x32x32xf32> to vector<32x32xf32>
    %144 = vector.shape_cast %141 : vector<32x32xf32> to vector<1x1x32x32xf32>
    tpu.vector_store %arg20[%c0_125, %c0_126, %c0_127, %c0_128], %144 {strides = array<i32>} : memref<1x2x32x32xf32, #tpu.memory_space<vmem>>, vector<1x1x32x32xf32>,
    %c1_129 = arith.constant 1 : index
    %c0_130 = arith.constant 0 : index
    %c0_131 = arith.constant 0 : index
    %145 = vector.load %arg19[%c1_129, %c0_130, %c0_131] : memref<2x8x32xbf16, #tpu.memory_space<vmem>>, vector<1x8x32xbf16>
    %146 = vector.shape_cast %145 : vector<1x8x32xbf16> to vector<8x32xbf16>
    %cst_132 = arith.constant dense<0.000000e+00> : vector<32x32xf32>
    %147 = tpu.matmul %138, %146, %cst_132 {dimension_numbers = #tpu.dot_dimension_numbers<[1], [0], [0], [1], [0, 0, 1, 1], [], []>} : vector<32x8xbf16>, vector<8x32xbf16>, vector<32x32xf32> -> vector<32x32xf32>
    %c0_133 = arith.constant 0 : index
    %c1_134 = arith.constant 1 : index
    %c0_135 = arith.constant 0 : index
    %c0_136 = arith.constant 0 : index
    %148 = vector.load %arg20[%c0_133, %c1_134, %c0_135, %c0_136] : memref<1x2x32x32xf32, #tpu.memory_space<vmem>>, vector<1x1x32x32xf32>
    %149 = vector.shape_cast %148 : vector<1x1x32x32xf32> to vector<32x32xf32>
    %150 = vector.shape_cast %147 : vector<32x32xf32> to vector<1x1x32x32xf32>
    tpu.vector_store %arg20[%c0_133, %c1_134, %c0_135, %c0_136], %150 {strides = array<i32>} : memref<1x2x32x32xf32, #tpu.memory_space<vmem>>, vector<1x1x32x32xf32>,
    return
  }
  func.func @transform_0(%arg0: i32) -> (i32, i32, i32) {
    %c0_i32 = arith.constant 0 : i32
    %c0_i32_0 = arith.constant 0 : i32
    %c0_i32_1 = arith.constant 0 : i32
    return %arg0, %c0_i32, %c0_i32_0 : i32, i32, i32
  }
  func.func @transform_1(%arg0: i32) -> (i32, i32, i32) {
    %c0_i32 = arith.constant 0 : i32
    %c0_i32_0 = arith.constant 0 : i32
    %c0_i32_1 = arith.constant 0 : i32
    %c0_i32_2 = arith.constant 0 : i32
    return %c0_i32, %c0_i32_0, %c0_i32_1 : i32, i32, i32
  }
  func.func @transform_2(%arg0: i32) -> (i32, i32, i32) {
    %c0_i32 = arith.constant 0 : i32
    %c0_i32_0 = arith.constant 0 : i32
    %c0_i32_1 = arith.constant 0 : i32
    %c0_i32_2 = arith.constant 0 : i32
    return %c0_i32, %c0_i32_0, %c0_i32_1 : i32, i32, i32
  }
  func.func @transform_3(%arg0: i32) -> (i32, i32) {
    %c0_i32 = arith.constant 0 : i32
    %c0_i32_0 = arith.constant 0 : i32
    %c0_i32_1 = arith.constant 0 : i32
    return %c0_i32, %c0_i32_0 : i32, i32
  }
  func.func @transform_4(%arg0: i32) -> (i32, i32, i32) {
    %c0_i32 = arith.constant 0 : i32
    %c0_i32_0 = arith.constant 0 : i32
    %c0_i32_1 = arith.constant 0 : i32
    %c0_i32_2 = arith.constant 0 : i32
    return %c0_i32, %c0_i32_0, %c0_i32_1 : i32, i32, i32
  }
  func.func @transform_5(%arg0: i32) -> (i32, i32, i32) {
    %c0_i32 = arith.constant 0 : i32
    %c0_i32_0 = arith.constant 0 : i32
    %c0_i32_1 = arith.constant 0 : i32
    %c0_i32_2 = arith.constant 0 : i32
    return %c0_i32, %c0_i32_0, %c0_i32_1 : i32, i32, i32
  }
  func.func @transform_6(%arg0: i32) -> (i32, i32) {
    %c0_i32 = arith.constant 0 : i32
    %c0_i32_0 = arith.constant 0 : i32
    %c0_i32_1 = arith.constant 0 : i32
    return %c0_i32, %c0_i32_0 : i32, i32
  }
  func.func @transform_7(%arg0: i32) -> (i32, i32, i32) {
    %c0_i32 = arith.constant 0 : i32
    %c0_i32_0 = arith.constant 0 : i32
    %c0_i32_1 = arith.constant 0 : i32
    %c0_i32_2 = arith.constant 0 : i32
    return %c0_i32, %c0_i32_0, %c0_i32_1 : i32, i32, i32
  }
  func.func @transform_8(%arg0: i32) -> (i32, i32, i32) {
    %c0_i32 = arith.constant 0 : i32
    %c0_i32_0 = arith.constant 0 : i32
    %c0_i32_1 = arith.constant 0 : i32
    %c0_i32_2 = arith.constant 0 : i32
    return %c0_i32, %c0_i32_0, %c0_i32_1 : i32, i32, i32
  }
  func.func @transform_9(%arg0: i32) -> (i32, i32) {
    %c0_i32 = arith.constant 0 : i32
    %c0_i32_0 = arith.constant 0 : i32
    %c0_i32_1 = arith.constant 0 : i32
    return %c0_i32, %c0_i32_0 : i32, i32
  }
  func.func @transform_10(%arg0: i32) -> (i32, i32, i32) {
    %c0_i32 = arith.constant 0 : i32
    %c0_i32_0 = arith.constant 0 : i32
    %c0_i32_1 = arith.constant 0 : i32
    %c0_i32_2 = arith.constant 0 : i32
    return %c0_i32, %c0_i32_0, %c0_i32_1 : i32, i32, i32
  }
  func.func @transform_11(%arg0: i32) -> (i32, i32, i32) {
    %c0_i32 = arith.constant 0 : i32
    %c0_i32_0 = arith.constant 0 : i32
    %c0_i32_1 = arith.constant 0 : i32
    %c0_i32_2 = arith.constant 0 : i32
    return %c0_i32, %c0_i32_0, %c0_i32_1 : i32, i32, i32
  }
  func.func @transform_12(%arg0: i32) -> (i32, i32) {
    %c0_i32 = arith.constant 0 : i32
    %c0_i32_0 = arith.constant 0 : i32
    %c0_i32_1 = arith.constant 0 : i32
    return %c0_i32, %c0_i32_0 : i32, i32
  }
  func.func @transform_13(%arg0: i32) -> (i32, i32) {
    %c0_i32 = arith.constant 0 : i32
    %c0_i32_0 = arith.constant 0 : i32
    %c0_i32_1 = arith.constant 0 : i32
    return %c0_i32, %c0_i32_0 : i32, i32
  }
  func.func @transform_14(%arg0: i32) -> (i32, i32) {
    %c0_i32 = arith.constant 0 : i32
    %c0_i32_0 = arith.constant 0 : i32
    %c0_i32_1 = arith.constant 0 : i32
    return %c0_i32, %c0_i32_0 : i32, i32
  }
  func.func @transform_15(%arg0: i32) -> (i32, i32) {
    %c0_i32 = arith.constant 0 : i32
    %c0_i32_0 = arith.constant 0 : i32
    %c0_i32_1 = arith.constant 0 : i32
    return %c0_i32, %c0_i32_0 : i32, i32
  }
  func.func @transform_16(%arg0: i32) -> (i32, i32) {
    %c0_i32 = arith.constant 0 : i32
    %c0_i32_0 = arith.constant 0 : i32
    %c0_i32_1 = arith.constant 0 : i32
    return %c0_i32, %c0_i32_0 : i32, i32
  }
  func.func @transform_17(%arg0: i32) -> (i32, i32) {
    %c0_i32 = arith.constant 0 : i32
    %c0_i32_0 = arith.constant 0 : i32
    %c0_i32_1 = arith.constant 0 : i32
    return %c0_i32, %c0_i32_0 : i32, i32
  }
  func.func @transform_18(%arg0: i32) -> (i32, i32, i32) {
    %c0_i32 = arith.constant 0 : i32
    %c0_i32_0 = arith.constant 0 : i32
    %c0_i32_1 = arith.constant 0 : i32
    %c0_i32_2 = arith.constant 0 : i32
    return %c0_i32, %c0_i32_0, %c0_i32_1 : i32, i32, i32
  }
  func.func @transform_19(%arg0: i32) -> (i32, i32, i32, i32) {
    %c0_i32 = arith.constant 0 : i32
    %c0_i32_0 = arith.constant 0 : i32
    %c0_i32_1 = arith.constant 0 : i32
    %c0_i32_2 = arith.constant 0 : i32
    return %arg0, %c0_i32, %c0_i32_0, %c0_i32_1 : i32, i32, i32, i32
  }
}

</mosaic_0001>

<llo_original>
// kernel: fast_scnn_forward.1
$region0: #{fast_scnn_forward.1}
  #allocation0 [shape = 'u32[]', space=smem, size = 0x4, offset = 0x4, fixed_abs, tag = 'smem constant byte address 0x4 - core index']
  #allocation1 [shape = 'u32[144,128]{1,0:T(1,128)}', space=vmem, size = 0x12000, scoped, tag = 'internal scratch']
  %s0 = inlined_call_operand.vmem [shape: bf16[2,32,96], index: 0, kind: input, shape index: {}]
  %s1 = inlined_call_operand.hbm [shape: f32[3,16,32], index: 1, kind: input, shape index: {}]
  %s2 = inlined_call_operand.hbm [shape: bf16[3,96,512], index: 2, kind: input, shape index: {}]
  %s3 = inlined_call_operand.hbm [shape: f32[1,512], index: 3, kind: input, shape index: {}]
  %s4 = inlined_call_operand.hbm [shape: f32[3,8,16], index: 4, kind: input, shape index: {}]
  %s5 = inlined_call_operand.hbm [shape: bf16[3,512,384], index: 5, kind: input, shape index: {}]
  %s6 = inlined_call_operand.hbm [shape: f32[1,384], index: 6, kind: input, shape index: {}]
  %s7 = inlined_call_operand.hbm [shape: f32[3,4,8], index: 7, kind: input, shape index: {}]
  %s8 = inlined_call_operand.hbm [shape: bf16[3,384,512], index: 8, kind: input, shape index: {}]
  %s9 = inlined_call_operand.hbm [shape: f32[1,512], index: 9, kind: input, shape index: {}]
  %s10 = inlined_call_operand.hbm [shape: f32[3,4,4], index: 10, kind: input, shape index: {}]
  %s11 = inlined_call_operand.hbm [shape: bf16[3,512,512], index: 11, kind: input, shape index: {}]
  %s12 = inlined_call_operand.hbm [shape: f32[1,512], index: 12, kind: input, shape index: {}]
  %s13 = inlined_call_operand.hbm [shape: bf16[512,512], index: 13, kind: input, shape index: {}]
  %s14 = inlined_call_operand.hbm [shape: f32[1,512], index: 14, kind: input, shape index: {}]
  %s15 = inlined_call_operand.vmem [shape: bf16[512,8], index: 15, kind: input, shape index: {}]
  %s16 = inlined_call_operand.hbm [shape: f32[1,8], index: 16, kind: input, shape index: {}]
  %s17 = inlined_call_operand.vmem [shape: bf16[32,4], index: 17, kind: input, shape index: {}]
  %s18 = inlined_call_operand.hbm [shape: bf16[2,8,32], index: 18, kind: input, shape index: {}]
  %s19 = inlined_call_operand.hbm [shape: f32[2,2,32,32], index: 19, kind: output, shape index: {}]
  %s20 = sld [smem:[#allocation0]]
  $region173: #{fast_scnn_forward.1} parent=0
    _
  %s22 = ssub.s32 1, %s20
  %s23 = scalar_select 0, %s22, %s20
  $region1: #{fast_scnn_forward.1} parent=0
    #allocation2 [shape = 'u8[24576]{0}', space=vmem, size = 0x6000, scoped, tag = 'input window, operand 1, single buffered']
    #allocation3 [shape = 's32[2]{0}', space=sflag, size = 0x8, scoped, tag = 'scoped memory for fast_scnn_forward.1']
    #allocation4 [shape = 's32[2]{0}', space=sflag, size = 0x8, scoped, tag = 'scoped memory for fast_scnn_forward.1']
    #allocation5 [shape = 'u8[294912]{0}', space=vmem, size = 0x48000, scoped, tag = 'input window, operand 2, single buffered']
    #allocation6 [shape = 's32[1]{0}', space=sflag, size = 0x4, scoped, tag = 'scoped memory for fast_scnn_forward.1']
    #allocation7 [shape = 'u8[2048]{0}', space=vmem, size = 0x800, scoped, tag = 'input window, operand 3, single buffered']
    #allocation8 [shape = 'u8[12288]{0}', space=vmem, size = 0x3000, scoped, tag = 'input window, operand 4, single buffered']
    #allocation9 [shape = 's32[1]{0}', space=sflag, size = 0x4, scoped, tag = 'scoped memory for fast_scnn_forward.1']
    #allocation10 [shape = 'u8[1179648]{0}', space=vmem, size = 0x120000, scoped, tag = 'input window, operand 5, single buffered']
    #allocation11 [shape = 'u8[1536]{0}', space=vmem, size = 0x800, scoped, tag = 'input window, operand 6, single buffered']
    #allocation12 [shape = 's32[1]{0}', space=sflag, size = 0x4, scoped, tag = 'scoped memory for fast_scnn_forward.1']
    #allocation13 [shape = 'u8[6144]{0}', space=vmem, size = 0x1800, scoped, tag = 'input window, operand 7, single buffered']
    #allocation14 [shape = 'u8[1179648]{0}', space=vmem, size = 0x120000, scoped, tag = 'input window, operand 8, single buffered']
    #allocation15 [shape = 's32[1]{0}', space=sflag, size = 0x4, scoped, tag = 'scoped memory for fast_scnn_forward.1']
    #allocation16 [shape = 'u8[2048]{0}', space=vmem, size = 0x800, scoped, tag = 'input window, operand 9, single buffered']
    #allocation17 [shape = 'u8[6144]{0}', space=vmem, size = 0x1800, scoped, tag = 'input window, operand 10, single buffered']
    #allocation18 [shape = 's32[1]{0}', space=sflag, size = 0x4, scoped, tag = 'scoped memory for fast_scnn_forward.1']
    #allocation19 [shape = 'u8[1572864]{0}', space=vmem, size = 0x180000, scoped, tag = 'input window, operand 11, single buffered']
    #allocation20 [shape = 'u8[2048]{0}', space=vmem, size = 0x800, scoped, tag = 'input window, operand 12, single buffered']
    #allocation21 [shape = 's32[1]{0}', space=sflag, size = 0x4, scoped, tag = 'scoped memory for fast_scnn_forward.1']
    #allocation22 [shape = 'u8[524288]{0}', space=vmem, size = 0x80000, scoped, tag = 'input window, operand 13, single buffered']
    #allocation23 [shape = 'u8[2048]{0}', space=vmem, size = 0x800, scoped, tag = 'input window, operand 14, single buffered']
    #allocation24 [shape = 's32[1]{0}', space=sflag, size = 0x4, scoped, tag = 'scoped memory for fast_scnn_forward.1']
    #allocation25 [shape = 'u8[512]{0}', space=vmem, size = 0x400, scoped, tag = 'input window, operand 16, single buffered']
    #allocation26 [shape = 'u8[4096]{0}', space=vmem, size = 0x1000, scoped, tag = 'input window, operand 18, single buffered']
    #allocation27 [shape = 's32[1]{0}', space=sflag, size = 0x4, scoped, tag = 'scoped memory for fast_scnn_forward.1']
    #allocation28 [shape = 'u8[65536]{0}', space=vmem, size = 0x10000, scoped, tag = 'output window, operand 0']
    %24 = vsyncpa [#allocation3], 0
    %25 = vsyncpa [#allocation6], 0
    %26 = vsyncpa [#allocation9], 0
    %27 = vsyncpa [#allocation12], 0
    %28 = vsyncpa [#allocation15], 0
    %29 = vsyncpa [#allocation18], 0
    %30 = vsyncpa [#allocation21], 0
    %31 = vsyncpa [#allocation24], 0
    %32 = vsyncpa [#allocation27], 0
    %33 = vsyncpa [#allocation4], 0
    %s34 = scalar_lea.sflag [#allocation4], 1
    %35 = vsyncpa %s34, 0
    loop: start=0, step=1, limit=4
    $region2: #{fast_scnn_forward.1} parent=1 // loop_pre_header
      _
    $region3: #{fast_scnn_forward.1} parent=1 // loop_header
      %s37 = sphi 0, %s41
      %p38 = scmp.ge.s32.totalorder %s37, 4
      %s47 = sphi 0, %s49
      %s50 = sphi 0, %s47
      %s51 = sphi 0, %s50
      %s67 = sphi 0, %s51
      %s71 = sphi 0, %s71
      %s73 = sphi 0, %s71
      %s74 = sphi 0, %s73
      %s88 = sphi 0, %s74
      %s92 = sphi 0, %s92
      %s94 = sphi 0, %s92
      %s95 = sphi 0, %s94
      %s109 = sphi 0, %s95
      %s113 = sphi 0, %s113
      %s115 = sphi 0, %s113
      %s116 = sphi 0, %s115
      %s130 = sphi 0, %s116
      %s134 = sphi 0, %s134
      %s136 = sphi 0, %s134
      %s137 = sphi 0, %s136
      %s151 = sphi 0, %s137
      %s155 = sphi 0, %s155
      %s157 = sphi 0, %s155
      %s158 = sphi 0, %s157
      %s172 = sphi 0, %s158
      %s176 = sphi 0, %s176
      %s178 = sphi 0, %s176
      %s179 = sphi 0, %s178
      %s193 = sphi 0, %s179
      %s197 = sphi 0, %s197
      %s199 = sphi 0, %s197
      %s200 = sphi 0, %s199
      %s214 = sphi 0, %s200
      %s218 = sphi 0, %s218
      %s220 = sphi 0, %s218
      %s221 = sphi 0, %s220
      %s235 = sphi 0, %s221
      %s239 = sphi 0, %s239
      %s241 = sphi 0, %s239
      %s242 = sphi 0, %s241
      %s256 = sphi 0, %s242
      %s260 = sphi 0, %s260
      %s262 = sphi 0, %s260
      %s263 = sphi 0, %s262
      %s277 = sphi 0, %s263
      %s281 = sphi 0, %s281
      %s283 = sphi 0, %s281
      %s284 = sphi 0, %s283
      %s298 = sphi 0, %s284
      %s302 = sphi 0, %s302
      %s304 = sphi 0, %s302
      %s305 = sphi 0, %s304
      %s319 = sphi 0, %s305
      %s323 = sphi 0, %s323
      %s325 = sphi 0, %s323
      %s326 = sphi 0, %s325
      %s340 = sphi 0, %s326
      %s344 = sphi 0, %s344
      %s346 = sphi 0, %s344
      %s347 = sphi 0, %s346
      %s361 = sphi 0, %s347
      %s365 = sphi 0, %s365
      %s367 = sphi 0, %s365
      %s368 = sphi 0, %s367
      %s382 = sphi 0, %s368
      %s386 = sphi 0, %s386
      %s388 = sphi 0, %s386
      %s389 = sphi 0, %s388
      %s403 = sphi 0, %s389
      %s407 = sphi 0, %s407
      %s409 = sphi 0, %s407
      %s410 = sphi 0, %s409
      %s424 = sphi 0, %s410
      %s428 = sphi 0, %s428
      %s430 = sphi 0, %s428
      %s431 = sphi 0, %s430
      %s445 = sphi 0, %s431
      %s451 = sphi 0, %s453
      %s454 = sphi 0, %s451
      %s455 = sphi 0, %s454
      %s471 = sphi 0, %s455
    $region4: #{fast_scnn_forward.1} parent=1 // loop_header_branch
      %40 = sbr.rel (%p38) target = $region8
    $region5: #{fast_scnn_forward.1} parent=1 // loop_body
      %s42 = ssub.s32 %s37, 1
      %s43 = ssub.s32 %s37, 2
      %s44 = sadd.s32 %s37, 1
      %s45 = ssub.s32 %s37, %s44
      %p46 = scmp.eq.s32.totalorder %s45, 0
      %s48 = sadd.s32 %s47, 1
      %s49 = scalar_select %p46, %s47, %s48
      %p52 = pneg %p46
      %p53 = scmp.eq.s32.totalorder %s37, 1
      %p54 = por %p52, %p53
      %p55 = scmp.ne.s32.totalorder %s47, %s50
      %p56 = scmp.eq.s32.totalorder %s37, 0
      %p57 = por %p55, %p56
      %p58 = scmp.ne.s32.totalorder %s47, %s50
      %p59 = scmp.eq.s32.totalorder %s42, 1
      %p60 = por %p58, %p59
      %p61 = scmp.ne.s32.totalorder %s50, %s51
      %p62 = scmp.eq.s32.totalorder %s42, 0
      %p63 = por %p61, %p62
      %p64 = scmp.ne.s32.totalorder %s50, %s51
      %p65 = scmp.eq.s32.totalorder %s43, 1
      %p66 = por %p64, %p65
      %p68 = scmp.ne.s32.totalorder %s51, %s67
      %p69 = scmp.eq.s32.totalorder %s43, 0
      %p70 = por %p68, %p69
      %s72 = sadd.s32 %s71, 1
      %p75 = scmp.eq.s32.totalorder %s37, 1
      %p76 = scmp.ne.s32.totalorder %s71, %s73
      %p77 = scmp.eq.s32.totalorder %s37, 0
      %p78 = por %p76, %p77
      %p79 = scmp.ne.s32.totalorder %s71, %s73
      %p80 = scmp.eq.s32.totalorder %s42, 1
      %p81 = por %p79, %p80
      %p82 = scmp.ne.s32.totalorder %s73, %s74
      %p83 = scmp.eq.s32.totalorder %s42, 0
      %p84 = por %p82, %p83
      %p85 = scmp.ne.s32.totalorder %s73, %s74
      %p86 = scmp.eq.s32.totalorder %s43, 1
      %p87 = por %p85, %p86
      %p89 = scmp.ne.s32.totalorder %s74, %s88
      %p90 = scmp.eq.s32.totalorder %s43, 0
      %p91 = por %p89, %p90
      %s93 = sadd.s32 %s92, 1
      %p96 = scmp.eq.s32.totalorder %s37, 1
      %p97 = scmp.ne.s32.totalorder %s92, %s94
      %p98 = scmp.eq.s32.totalorder %s37, 0
      %p99 = por %p97, %p98
      %p100 = scmp.ne.s32.totalorder %s92, %s94
      %p101 = scmp.eq.s32.totalorder %s42, 1
      %p102 = por %p100, %p101
      %p103 = scmp.ne.s32.totalorder %s94, %s95
      %p104 = scmp.eq.s32.totalorder %s42, 0
      %p105 = por %p103, %p104
      %p106 = scmp.ne.s32.totalorder %s94, %s95
      %p107 = scmp.eq.s32.totalorder %s43, 1
      %p108 = por %p106, %p107
      %p110 = scmp.ne.s32.totalorder %s95, %s109
      %p111 = scmp.eq.s32.totalorder %s43, 0
      %p112 = por %p110, %p111
      %s114 = sadd.s32 %s113, 1
      %p117 = scmp.eq.s32.totalorder %s37, 1
      %p118 = scmp.ne.s32.totalorder %s113, %s115
      %p119 = scmp.eq.s32.totalorder %s37, 0
      %p120 = por %p118, %p119
      %p121 = scmp.ne.s32.totalorder %s113, %s115
      %p122 = scmp.eq.s32.totalorder %s42, 1
      %p123 = por %p121, %p122
      %p124 = scmp.ne.s32.totalorder %s115, %s116
      %p125 = scmp.eq.s32.totalorder %s42, 0
      %p126 = por %p124, %p125
      %p127 = scmp.ne.s32.totalorder %s115, %s116
      %p128 = scmp.eq.s32.totalorder %s43, 1
      %p129 = por %p127, %p128
      %p131 = scmp.ne.s32.totalorder %s116, %s130
      %p132 = scmp.eq.s32.totalorder %s43, 0
      %p133 = por %p131, %p132
      %s135 = sadd.s32 %s134, 1
      %p138 = scmp.eq.s32.totalorder %s37, 1
      %p139 = scmp.ne.s32.totalorder %s134, %s136
      %p140 = scmp.eq.s32.totalorder %s37, 0
      %p141 = por %p139, %p140
      %p142 = scmp.ne.s32.totalorder %s134, %s136
      %p143 = scmp.eq.s32.totalorder %s42, 1
      %p144 = por %p142, %p143
      %p145 = scmp.ne.s32.totalorder %s136, %s137
      %p146 = scmp.eq.s32.totalorder %s42, 0
      %p147 = por %p145, %p146
      %p148 = scmp.ne.s32.totalorder %s136, %s137
      %p149 = scmp.eq.s32.totalorder %s43, 1
      %p150 = por %p148, %p149
      %p152 = scmp.ne.s32.totalorder %s137, %s151
      %p153 = scmp.eq.s32.totalorder %s43, 0
      %p154 = por %p152, %p153
      %s156 = sadd.s32 %s155, 1
      %p159 = scmp.eq.s32.totalorder %s37, 1
      %p160 = scmp.ne.s32.totalorder %s155, %s157
      %p161 = scmp.eq.s32.totalorder %s37, 0
      %p162 = por %p160, %p161
      %p163 = scmp.ne.s32.totalorder %s155, %s157
      %p164 = scmp.eq.s32.totalorder %s42, 1
      %p165 = por %p163, %p164
      %p166 = scmp.ne.s32.totalorder %s157, %s158
      %p167 = scmp.eq.s32.totalorder %s42, 0
      %p168 = por %p166, %p167
      %p169 = scmp.ne.s32.totalorder %s157, %s158
      %p170 = scmp.eq.s32.totalorder %s43, 1
      %p171 = por %p169, %p170
      %p173 = scmp.ne.s32.totalorder %s158, %s172
      %p174 = scmp.eq.s32.totalorder %s43, 0
      %p175 = por %p173, %p174
      %s177 = sadd.s32 %s176, 1
      %p180 = scmp.eq.s32.totalorder %s37, 1
      %p181 = scmp.ne.s32.totalorder %s176, %s178
      %p182 = scmp.eq.s32.totalorder %s37, 0
      %p183 = por %p181, %p182
      %p184 = scmp.ne.s32.totalorder %s176, %s178
      %p185 = scmp.eq.s32.totalorder %s42, 1
      %p186 = por %p184, %p185
      %p187 = scmp.ne.s32.totalorder %s178, %s179
      %p188 = scmp.eq.s32.totalorder %s42, 0
      %p189 = por %p187, %p188
      %p190 = scmp.ne.s32.totalorder %s178, %s179
      %p191 = scmp.eq.s32.totalorder %s43, 1
      %p192 = por %p190, %p191
      %p194 = scmp.ne.s32.totalorder %s179, %s193
      %p195 = scmp.eq.s32.totalorder %s43, 0
      %p196 = por %p194, %p195
      %s198 = sadd.s32 %s197, 1
      %p201 = scmp.eq.s32.totalorder %s37, 1
      %p202 = scmp.ne.s32.totalorder %s197, %s199
      %p203 = scmp.eq.s32.totalorder %s37, 0
      %p204 = por %p202, %p203
      %p205 = scmp.ne.s32.totalorder %s197, %s199
      %p206 = scmp.eq.s32.totalorder %s42, 1
      %p207 = por %p205, %p206
      %p208 = scmp.ne.s32.totalorder %s199, %s200
      %p209 = scmp.eq.s32.totalorder %s42, 0
      %p210 = por %p208, %p209
      %p211 = scmp.ne.s32.totalorder %s199, %s200
      %p212 = scmp.eq.s32.totalorder %s43, 1
      %p213 = por %p211, %p212
      %p215 = scmp.ne.s32.totalorder %s200, %s214
      %p216 = scmp.eq.s32.totalorder %s43, 0
      %p217 = por %p215, %p216
      %s219 = sadd.s32 %s218, 1
      %p222 = scmp.eq.s32.totalorder %s37, 1
      %p223 = scmp.ne.s32.totalorder %s218, %s220
      %p224 = scmp.eq.s32.totalorder %s37, 0
      %p225 = por %p223, %p224
      %p226 = scmp.ne.s32.totalorder %s218, %s220
      %p227 = scmp.eq.s32.totalorder %s42, 1
      %p228 = por %p226, %p227
      %p229 = scmp.ne.s32.totalorder %s220, %s221
      %p230 = scmp.eq.s32.totalorder %s42, 0
      %p231 = por %p229, %p230
      %p232 = scmp.ne.s32.totalorder %s220, %s221
      %p233 = scmp.eq.s32.totalorder %s43, 1
      %p234 = por %p232, %p233
      %p236 = scmp.ne.s32.totalorder %s221, %s235
      %p237 = scmp.eq.s32.totalorder %s43, 0
      %p238 = por %p236, %p237
      %s240 = sadd.s32 %s239, 1
      %p243 = scmp.eq.s32.totalorder %s37, 1
      %p244 = scmp.ne.s32.totalorder %s239, %s241
      %p245 = scmp.eq.s32.totalorder %s37, 0
      %p246 = por %p244, %p245
      %p247 = scmp.ne.s32.totalorder %s239, %s241
      %p248 = scmp.eq.s32.totalorder %s42, 1
      %p249 = por %p247, %p248
      %p250 = scmp.ne.s32.totalorder %s241, %s242
      %p251 = scmp.eq.s32.totalorder %s42, 0
      %p252 = por %p250, %p251
      %p253 = scmp.ne.s32.totalorder %s241, %s242
      %p254 = scmp.eq.s32.totalorder %s43, 1
      %p255 = por %p253, %p254
      %p257 = scmp.ne.s32.totalorder %s242, %s256
      %p258 = scmp.eq.s32.totalorder %s43, 0
      %p259 = por %p257, %p258
      %s261 = sadd.s32 %s260, 1
      %p264 = scmp.eq.s32.totalorder %s37, 1
      %p265 = scmp.ne.s32.totalorder %s260, %s262
      %p266 = scmp.eq.s32.totalorder %s37, 0
      %p267 = por %p265, %p266
      %p268 = scmp.ne.s32.totalorder %s260, %s262
      %p269 = scmp.eq.s32.totalorder %s42, 1
      %p270 = por %p268, %p269
      %p271 = scmp.ne.s32.totalorder %s262, %s263
      %p272 = scmp.eq.s32.totalorder %s42, 0
      %p273 = por %p271, %p272
      %p274 = scmp.ne.s32.totalorder %s262, %s263
      %p275 = scmp.eq.s32.totalorder %s43, 1
      %p276 = por %p274, %p275
      %p278 = scmp.ne.s32.totalorder %s263, %s277
      %p279 = scmp.eq.s32.totalorder %s43, 0
      %p280 = por %p278, %p279
      %s282 = sadd.s32 %s281, 1
      %p285 = scmp.eq.s32.totalorder %s37, 1
      %p286 = scmp.ne.s32.totalorder %s281, %s283
      %p287 = scmp.eq.s32.totalorder %s37, 0
      %p288 = por %p286, %p287
      %p289 = scmp.ne.s32.totalorder %s281, %s283
      %p290 = scmp.eq.s32.totalorder %s42, 1
      %p291 = por %p289, %p290
      %p292 = scmp.ne.s32.totalorder %s283, %s284
      %p293 = scmp.eq.s32.totalorder %s42, 0
      %p294 = por %p292, %p293
      %p295 = scmp.ne.s32.totalorder %s283, %s284
      %p296 = scmp.eq.s32.totalorder %s43, 1
      %p297 = por %p295, %p296
      %p299 = scmp.ne.s32.totalorder %s284, %s298
      %p300 = scmp.eq.s32.totalorder %s43, 0
      %p301 = por %p299, %p300
      %s303 = sadd.s32 %s302, 1
      %p306 = scmp.eq.s32.totalorder %s37, 1
      %p307 = scmp.ne.s32.totalorder %s302, %s304
      %p308 = scmp.eq.s32.totalorder %s37, 0
      %p309 = por %p307, %p308
      %p310 = scmp.ne.s32.totalorder %s302, %s304
      %p311 = scmp.eq.s32.totalorder %s42, 1
      %p312 = por %p310, %p311
      %p313 = scmp.ne.s32.totalorder %s304, %s305
      %p314 = scmp.eq.s32.totalorder %s42, 0
      %p315 = por %p313, %p314
      %p316 = scmp.ne.s32.totalorder %s304, %s305
      %p317 = scmp.eq.s32.totalorder %s43, 1
      %p318 = por %p316, %p317
      %p320 = scmp.ne.s32.totalorder %s305, %s319
      %p321 = scmp.eq.s32.totalorder %s43, 0
      %p322 = por %p320, %p321
      %s324 = sadd.s32 %s323, 1
      %p327 = scmp.eq.s32.totalorder %s37, 1
      %p328 = scmp.ne.s32.totalorder %s323, %s325
      %p329 = scmp.eq.s32.totalorder %s37, 0
      %p330 = por %p328, %p329
      %p331 = scmp.ne.s32.totalorder %s323, %s325
      %p332 = scmp.eq.s32.totalorder %s42, 1
      %p333 = por %p331, %p332
      %p334 = scmp.ne.s32.totalorder %s325, %s326
      %p335 = scmp.eq.s32.totalorder %s42, 0
      %p336 = por %p334, %p335
      %p337 = scmp.ne.s32.totalorder %s325, %s326
      %p338 = scmp.eq.s32.totalorder %s43, 1
      %p339 = por %p337, %p338
      %p341 = scmp.ne.s32.totalorder %s326, %s340
      %p342 = scmp.eq.s32.totalorder %s43, 0
      %p343 = por %p341, %p342
      %s345 = sadd.s32 %s344, 1
      %p348 = scmp.eq.s32.totalorder %s37, 1
      %p349 = scmp.ne.s32.totalorder %s344, %s346
      %p350 = scmp.eq.s32.totalorder %s37, 0
      %p351 = por %p349, %p350
      %p352 = scmp.ne.s32.totalorder %s344, %s346
      %p353 = scmp.eq.s32.totalorder %s42, 1
      %p354 = por %p352, %p353
      %p355 = scmp.ne.s32.totalorder %s346, %s347
      %p356 = scmp.eq.s32.totalorder %s42, 0
      %p357 = por %p355, %p356
      %p358 = scmp.ne.s32.totalorder %s346, %s347
      %p359 = scmp.eq.s32.totalorder %s43, 1
      %p360 = por %p358, %p359
      %p362 = scmp.ne.s32.totalorder %s347, %s361
      %p363 = scmp.eq.s32.totalorder %s43, 0
      %p364 = por %p362, %p363
      %s366 = sadd.s32 %s365, 1
      %p369 = scmp.eq.s32.totalorder %s37, 1
      %p370 = scmp.ne.s32.totalorder %s365, %s367
      %p371 = scmp.eq.s32.totalorder %s37, 0
      %p372 = por %p370, %p371
      %p373 = scmp.ne.s32.totalorder %s365, %s367
      %p374 = scmp.eq.s32.totalorder %s42, 1
      %p375 = por %p373, %p374
      %p376 = scmp.ne.s32.totalorder %s367, %s368
      %p377 = scmp.eq.s32.totalorder %s42, 0
      %p378 = por %p376, %p377
      %p379 = scmp.ne.s32.totalorder %s367, %s368
      %p380 = scmp.eq.s32.totalorder %s43, 1
      %p381 = por %p379, %p380
      %p383 = scmp.ne.s32.totalorder %s368, %s382
      %p384 = scmp.eq.s32.totalorder %s43, 0
      %p385 = por %p383, %p384
      %s387 = sadd.s32 %s386, 1
      %p390 = scmp.eq.s32.totalorder %s37, 1
      %p391 = scmp.ne.s32.totalorder %s386, %s388
      %p392 = scmp.eq.s32.totalorder %s37, 0
      %p393 = por %p391, %p392
      %p394 = scmp.ne.s32.totalorder %s386, %s388
      %p395 = scmp.eq.s32.totalorder %s42, 1
      %p396 = por %p394, %p395
      %p397 = scmp.ne.s32.totalorder %s388, %s389
      %p398 = scmp.eq.s32.totalorder %s42, 0
      %p399 = por %p397, %p398
      %p400 = scmp.ne.s32.totalorder %s388, %s389
      %p401 = scmp.eq.s32.totalorder %s43, 1
      %p402 = por %p400, %p401
      %p404 = scmp.ne.s32.totalorder %s389, %s403
      %p405 = scmp.eq.s32.totalorder %s43, 0
      %p406 = por %p404, %p405
      %s408 = sadd.s32 %s407, 1
      %p411 = scmp.eq.s32.totalorder %s37, 1
      %p412 = scmp.ne.s32.totalorder %s407, %s409
      %p413 = scmp.eq.s32.totalorder %s37, 0
      %p414 = por %p412, %p413
      %p415 = scmp.ne.s32.totalorder %s407, %s409
      %p416 = scmp.eq.s32.totalorder %s42, 1
      %p417 = por %p415, %p416
      %p418 = scmp.ne.s32.totalorder %s409, %s410
      %p419 = scmp.eq.s32.totalorder %s42, 0
      %p420 = por %p418, %p419
      %p421 = scmp.ne.s32.totalorder %s409, %s410
      %p422 = scmp.eq.s32.totalorder %s43, 1
      %p423 = por %p421, %p422
      %p425 = scmp.ne.s32.totalorder %s410, %s424
      %p426 = scmp.eq.s32.totalorder %s43, 0
      %p427 = por %p425, %p426
      %s429 = sadd.s32 %s428, 1
      %p432 = scmp.eq.s32.totalorder %s37, 1
      %p433 = scmp.ne.s32.totalorder %s428, %s430
      %p434 = scmp.eq.s32.totalorder %s37, 0
      %p435 = por %p433, %p434
      %p436 = scmp.ne.s32.totalorder %s428, %s430
      %p437 = scmp.eq.s32.totalorder %s42, 1
      %p438 = por %p436, %p437
      %p439 = scmp.ne.s32.totalorder %s430, %s431
      %p440 = scmp.eq.s32.totalorder %s42, 0
      %p441 = por %p439, %p440
      %p442 = scmp.ne.s32.totalorder %s430, %s431
      %p443 = scmp.eq.s32.totalorder %s43, 1
      %p444 = por %p442, %p443
      %p446 = scmp.ne.s32.totalorder %s431, %s445
      %p447 = scmp.eq.s32.totalorder %s43, 0
      %p448 = por %p446, %p447
      %s449 = ssub.s32 %s37, %s44
      %p450 = scmp.eq.s32.totalorder %s449, 0
      %s452 = sadd.s32 %s451, 1
      %s453 = scalar_select %p450, %s451, %s452
      %p456 = pneg %p450
      %p457 = scmp.eq.s32.totalorder %s37, 1
      %p458 = por %p456, %p457
      %p459 = scmp.ne.s32.totalorder %s451, %s454
      %p460 = scmp.eq.s32.totalorder %s37, 0
      %p461 = por %p459, %p460
      %p462 = scmp.ne.s32.totalorder %s451, %s454
      %p463 = scmp.eq.s32.totalorder %s42, 1
      %p464 = por %p462, %p463
      %p465 = scmp.ne.s32.totalorder %s454, %s455
      %p466 = scmp.eq.s32.totalorder %s42, 0
      %p467 = por %p465, %p466
      %p468 = scmp.ne.s32.totalorder %s454, %s455
      %p469 = scmp.eq.s32.totalorder %s43, 1
      %p470 = por %p468, %p469
      %p472 = scmp.ne.s32.totalorder %s455, %s471
      %p473 = scmp.eq.s32.totalorder %s43, 0
      %p474 = por %p472, %p473
      %p475 = scmp.le.s32.totalorder 1, %s37
      %p476 = scmp.lt.s32.totalorder %s37, 3
      %p477 = pnand %p475, %p476
      %p478 = pneg %p477
      // Predicated region
      $region9: #{fast_scnn_forward.1} parent=5 // pred_check
        _
      $region10: #{fast_scnn_forward.1} parent=5 // pred_check_branch
        %480 = sbr.rel (%p477) target = $region12
      $region11: #{fast_scnn_forward.1} parent=5 // pred_region
        %s481 = ssub.s32 %s37, 1
        // Predicated region
        $region13: #{fast_scnn_forward.1} parent=11 // pred_check
          %p482 = pneg %p84
        $region14: #{fast_scnn_forward.1} parent=11 // pred_check_branch
          %484 = sbr.rel (%p482) target = $region16
        $region15: #{fast_scnn_forward.1} parent=11 // pred_region
          %s486 = ssub.s32 768, 768
          %487 = vsyncadd [#allocation3], %s486
          %s488 = sshll.u32 [#allocation2], 4
          %s489 = int_to_ptr.vmem [resolvable:$true] %s488
          %494 = dma.hbm_to_vmem [thread:$0]  %s1, 768, %s489, [#allocation3], 128, 128, 8
        $region16: #{fast_scnn_forward.1} parent=11 // pred_fallthru
          _
        // Predicated region
        $region17: #{fast_scnn_forward.1} parent=11 // pred_check
          %p495 = pneg %p105
        $region18: #{fast_scnn_forward.1} parent=11 // pred_check_branch
          %497 = sbr.rel (%p495) target = $region20
        $region19: #{fast_scnn_forward.1} parent=11 // pred_region
          %s499 = ssub.s32 9216, 9216
          %500 = vsyncadd [#allocation6], %s499
          %s501 = sshll.u32 [#allocation5], 4
          %s502 = int_to_ptr.vmem [resolvable:$true] %s501
          %507 = dma.hbm_to_vmem [thread:$0]  %s2, 9216, %s502, [#allocation6], 256, 256, 16
        $region20: #{fast_scnn_forward.1} parent=11 // pred_fallthru
          _
        // Predicated region
        $region21: #{fast_scnn_forward.1} parent=11 // pred_check
          %p508 = pneg %p126
        $region22: #{fast_scnn_forward.1} parent=11 // pred_check_branch
          %510 = sbr.rel (%p508) target = $region24
        $region23: #{fast_scnn_forward.1} parent=11 // pred_region
          %s512 = ssub.s32 64, 64
          %513 = vsyncadd [#allocation6], %s512
          %s515 = sshll.u32 [#allocation7], 4
          %s516 = int_to_ptr.vmem [resolvable:$true] %s515
          %518 = dma.hbm_to_vmem [thread:$0]  %s3, 64, %s516, [#allocation6]
        $region24: #{fast_scnn_forward.1} parent=11 // pred_fallthru
          _
        // Predicated region
        $region25: #{fast_scnn_forward.1} parent=11 // pred_check
          %p519 = pneg %p147
        $region26: #{fast_scnn_forward.1} parent=11 // pred_check_branch
          %521 = sbr.rel (%p519) target = $region28
        $region27: #{fast_scnn_forward.1} parent=11 // pred_region
          %s523 = ssub.s32 384, 384
          %524 = vsyncadd [#allocation9], %s523
          %s525 = sshll.u32 [#allocation8], 4
          %s526 = int_to_ptr.vmem [resolvable:$true] %s525
          %531 = dma.hbm_to_vmem [thread:$0]  %s4, 384, %s526, [#allocation9], 128, 128, 8
        $region28: #{fast_scnn_forward.1} parent=11 // pred_fallthru
          _
        // Predicated region
        $region29: #{fast_scnn_forward.1} parent=11 // pred_check
          %p532 = pneg %p168
        $region30: #{fast_scnn_forward.1} parent=11 // pred_check_branch
          %534 = sbr.rel (%p532) target = $region32
        $region31: #{fast_scnn_forward.1} parent=11 // pred_region
          %s536 = ssub.s32 36864, 36864
          %537 = vsyncadd [#allocation9], %s536
          %s538 = sshll.u32 [#allocation10], 4
          %s539 = int_to_ptr.vmem [resolvable:$true] %s538
          %544 = dma.hbm_to_vmem [thread:$0]  %s5, 36864, %s539, [#allocation9], 192, 192, 12
        $region32: #{fast_scnn_forward.1} parent=11 // pred_fallthru
          _
        // Predicated region
        $region33: #{fast_scnn_forward.1} parent=11 // pred_check
          %p545 = pneg %p189
        $region34: #{fast_scnn_forward.1} parent=11 // pred_check_branch
          %547 = sbr.rel (%p545) target = $region36
        $region35: #{fast_scnn_forward.1} parent=11 // pred_region
          %s549 = ssub.s32 48, 48
          %550 = vsyncadd [#allocation12], %s549
          %s552 = sshll.u32 [#allocation11], 4
          %s553 = int_to_ptr.vmem [resolvable:$true] %s552
          %555 = dma.hbm_to_vmem [thread:$0]  %s6, 48, %s553, [#allocation12]
        $region36: #{fast_scnn_forward.1} parent=11 // pred_fallthru
          _
        // Predicated region
        $region37: #{fast_scnn_forward.1} parent=11 // pred_check
          %p556 = pneg %p210
        $region38: #{fast_scnn_forward.1} parent=11 // pred_check_branch
          %558 = sbr.rel (%p556) target = $region40
        $region39: #{fast_scnn_forward.1} parent=11 // pred_region
          %s560 = ssub.s32 192, 192
          %561 = vsyncadd [#allocation12], %s560
          %s562 = sshll.u32 [#allocation13], 4
          %s563 = int_to_ptr.vmem [resolvable:$true] %s562
          %568 = dma.hbm_to_vmem [thread:$0]  %s7, 192, %s563, [#allocation12], 64, 64, 4
        $region40: #{fast_scnn_forward.1} parent=11 // pred_fallthru
          _
        // Predicated region
        $region41: #{fast_scnn_forward.1} parent=11 // pred_check
          %p569 = pneg %p231
        $region42: #{fast_scnn_forward.1} parent=11 // pred_check_branch
          %571 = sbr.rel (%p569) target = $region44
        $region43: #{fast_scnn_forward.1} parent=11 // pred_region
          %s573 = ssub.s32 36864, 36864
          %574 = vsyncadd [#allocation15], %s573
          %s575 = sshll.u32 [#allocation14], 4
          %s576 = int_to_ptr.vmem [resolvable:$true] %s575
          %581 = dma.hbm_to_vmem [thread:$0]  %s8, 36864, %s576, [#allocation15], 256, 256, 16
        $region44: #{fast_scnn_forward.1} parent=11 // pred_fallthru
          _
        // Predicated region
        $region45: #{fast_scnn_forward.1} parent=11 // pred_check
          %p582 = pneg %p252
        $region46: #{fast_scnn_forward.1} parent=11 // pred_check_branch
          %584 = sbr.rel (%p582) target = $region48
        $region47: #{fast_scnn_forward.1} parent=11 // pred_region
          %s586 = ssub.s32 64, 64
          %587 = vsyncadd [#allocation15], %s586
          %s589 = sshll.u32 [#allocation16], 4
          %s590 = int_to_ptr.vmem [resolvable:$true] %s589
          %592 = dma.hbm_to_vmem [thread:$0]  %s9, 64, %s590, [#allocation15]
        $region48: #{fast_scnn_forward.1} parent=11 // pred_fallthru
          _
        // Predicated region
        $region49: #{fast_scnn_forward.1} parent=11 // pred_check
          %p593 = pneg %p273
        $region50: #{fast_scnn_forward.1} parent=11 // pred_check_branch
          %595 = sbr.rel (%p593) target = $region52
        $region51: #{fast_scnn_forward.1} parent=11 // pred_region
          %s597 = ssub.s32 192, 192
          %598 = vsyncadd [#allocation18], %s597
          %s599 = sshll.u32 [#allocation17], 4
          %s600 = int_to_ptr.vmem [resolvable:$true] %s599
          %605 = dma.hbm_to_vmem [thread:$0]  %s10, 192, %s600, [#allocation18], 64, 64, 4
        $region52: #{fast_scnn_forward.1} parent=11 // pred_fallthru
          _
        // Predicated region
        $region53: #{fast_scnn_forward.1} parent=11 // pred_check
          %p606 = pneg %p294
        $region54: #{fast_scnn_forward.1} parent=11 // pred_check_branch
          %608 = sbr.rel (%p606) target = $region56
        $region55: #{fast_scnn_forward.1} parent=11 // pred_region
          %s610 = ssub.s32 49152, 49152
          %611 = vsyncadd [#allocation18], %s610
          %s612 = sshll.u32 [#allocation19], 4
          %s613 = int_to_ptr.vmem [resolvable:$true] %s612
          %618 = dma.hbm_to_vmem [thread:$0]  %s11, 49152, %s613, [#allocation18], 256, 256, 16
        $region56: #{fast_scnn_forward.1} parent=11 // pred_fallthru
          _
        // Predicated region
        $region57: #{fast_scnn_forward.1} parent=11 // pred_check
          %p619 = pneg %p315
        $region58: #{fast_scnn_forward.1} parent=11 // pred_check_branch
          %621 = sbr.rel (%p619) target = $region60
        $region59: #{fast_scnn_forward.1} parent=11 // pred_region
          %s623 = ssub.s32 64, 64
          %624 = vsyncadd [#allocation21], %s623
          %s626 = sshll.u32 [#allocation20], 4
          %s627 = int_to_ptr.vmem [resolvable:$true] %s626
          %629 = dma.hbm_to_vmem [thread:$0]  %s12, 64, %s627, [#allocation21]
        $region60: #{fast_scnn_forward.1} parent=11 // pred_fallthru
          _
        // Predicated region
        $region61: #{fast_scnn_forward.1} parent=11 // pred_check
          %p630 = pneg %p336
        $region62: #{fast_scnn_forward.1} parent=11 // pred_check_branch
          %632 = sbr.rel (%p630) target = $region64
        $region63: #{fast_scnn_forward.1} parent=11 // pred_region
          %s634 = ssub.s32 16384, 16384
          %635 = vsyncadd [#allocation21], %s634
          %s636 = sshll.u32 [#allocation22], 4
          %s637 = int_to_ptr.vmem [resolvable:$true] %s636
          %642 = dma.hbm_to_vmem [thread:$0]  %s13, 16384, %s637, [#allocation21], 256, 256, 16
        $region64: #{fast_scnn_forward.1} parent=11 // pred_fallthru
          _
        // Predicated region
        $region65: #{fast_scnn_forward.1} parent=11 // pred_check
          %p643 = pneg %p357
        $region66: #{fast_scnn_forward.1} parent=11 // pred_check_branch
          %645 = sbr.rel (%p643) target = $region68
        $region67: #{fast_scnn_forward.1} parent=11 // pred_region
          %s647 = ssub.s32 64, 64
          %648 = vsyncadd [#allocation24], %s647
          %s650 = sshll.u32 [#allocation23], 4
          %s651 = int_to_ptr.vmem [resolvable:$true] %s650
          %653 = dma.hbm_to_vmem [thread:$0]  %s14, 64, %s651, [#allocation24]
        $region68: #{fast_scnn_forward.1} parent=11 // pred_fallthru
          _
        // Predicated region
        $region69: #{fast_scnn_forward.1} parent=11 // pred_check
          %p654 = pneg %p378
        $region70: #{fast_scnn_forward.1} parent=11 // pred_check_branch
          %656 = sbr.rel (%p654) target = $region72
        $region71: #{fast_scnn_forward.1} parent=11 // pred_region
          _
        $region72: #{fast_scnn_forward.1} parent=11 // pred_fallthru
          _
        // Predicated region
        $region73: #{fast_scnn_forward.1} parent=11 // pred_check
          %p657 = pneg %p399
        $region74: #{fast_scnn_forward.1} parent=11 // pred_check_branch
          %659 = sbr.rel (%p657) target = $region76
        $region75: #{fast_scnn_forward.1} parent=11 // pred_region
          %s661 = ssub.s32 16, 16
          %662 = vsyncadd [#allocation24], %s661
          %s664 = sshll.u32 [#allocation25], 4
          %s665 = int_to_ptr.vmem [resolvable:$true] %s664
          %667 = dma.hbm_to_vmem [thread:$0]  %s16, 16, %s665, [#allocation24]
        $region76: #{fast_scnn_forward.1} parent=11 // pred_fallthru
          _
        // Predicated region
        $region77: #{fast_scnn_forward.1} parent=11 // pred_check
          %p668 = pneg %p420
        $region78: #{fast_scnn_forward.1} parent=11 // pred_check_branch
          %670 = sbr.rel (%p668) target = $region80
        $region79: #{fast_scnn_forward.1} parent=11 // pred_region
          _
        $region80: #{fast_scnn_forward.1} parent=11 // pred_fallthru
          _
        // Predicated region
        $region81: #{fast_scnn_forward.1} parent=11 // pred_check
          %p671 = pneg %p441
        $region82: #{fast_scnn_forward.1} parent=11 // pred_check_branch
          %673 = sbr.rel (%p671) target = $region84
        $region83: #{fast_scnn_forward.1} parent=11 // pred_region
          %s675 = ssub.s32 128, 128
          %676 = vsyncadd [#allocation27], %s675
          %s677 = sshll.u32 [#allocation26], 4
          %s678 = int_to_ptr.vmem [resolvable:$true] %s677
          %683 = dma.hbm_to_vmem [thread:$0]  %s18, 128, %s678, [#allocation27], 64, 64, 4
        $region84: #{fast_scnn_forward.1} parent=11 // pred_fallthru
          _
      $region12: #{fast_scnn_forward.1} parent=5 // pred_fallthru
        _
      %p684 = scmp.lt.s32.totalorder %s37, 2
      // Predicated region
      $region85: #{fast_scnn_forward.1} parent=5 // pred_check
        %p685 = pneg %p684
      $region86: #{fast_scnn_forward.1} parent=5 // pred_check_branch
        %687 = sbr.rel (%p685) target = $region88
      $region87: #{fast_scnn_forward.1} parent=5 // pred_region
        // Predicated region
        $region89: #{fast_scnn_forward.1} parent=87 // pred_check
          %p688 = pneg %p57
        $region90: #{fast_scnn_forward.1} parent=87 // pred_check_branch
          %690 = sbr.rel (%p688) target = $region92
        $region91: #{fast_scnn_forward.1} parent=87 // pred_region
          %p691 = scmp.lt.s32.totalorder %s37, 1
          %s692 = scalar_select %p691, %s37, 1
          %s693 = smul.addr %s692, 4
          %s694 = smul.addr %s693, 4
          %s695 = scalar_lea.vmem %s0, %s694
        $region92: #{fast_scnn_forward.1} parent=87 // pred_fallthru
          _
      $region88: #{fast_scnn_forward.1} parent=5 // pred_fallthru
        _
      %p696 = scmp.le.s32.totalorder 1, %s37
      %p697 = scmp.lt.s32.totalorder %s37, 3
      %p698 = pnand %p696, %p697
      %p699 = pneg %p698
      // Predicated region
      $region93: #{fast_scnn_forward.1} parent=5 // pred_check
        _
      $region94: #{fast_scnn_forward.1} parent=5 // pred_check_branch
        %701 = sbr.rel (%p698) target = $region96
      $region95: #{fast_scnn_forward.1} parent=5 // pred_region
        %s702 = ssub.s32 %s37, 1
        // Predicated region
        $region97: #{fast_scnn_forward.1} parent=95 // pred_check
          %p703 = pneg %p84
        $region98: #{fast_scnn_forward.1} parent=95 // pred_check_branch
          %705 = sbr.rel (%p703) target = $region100
        $region99: #{fast_scnn_forward.1} parent=95 // pred_region
          %706 = dma.done [#allocation3], 768
        $region100: #{fast_scnn_forward.1} parent=95 // pred_fallthru
          _
        // Predicated region
        $region101: #{fast_scnn_forward.1} parent=95 // pred_check
          %p707 = pneg %p105
        $region102: #{fast_scnn_forward.1} parent=95 // pred_check_branch
          %709 = sbr.rel (%p707) target = $region104
        $region103: #{fast_scnn_forward.1} parent=95 // pred_region
          %710 = dma.done [#allocation6], 9216
        $region104: #{fast_scnn_forward.1} parent=95 // pred_fallthru
          _
        // Predicated region
        $region105: #{fast_scnn_forward.1} parent=95 // pred_check
          %p711 = pneg %p126
        $region106: #{fast_scnn_forward.1} parent=95 // pred_check_branch
          %713 = sbr.rel (%p711) target = $region108
        $region107: #{fast_scnn_forward.1} parent=95 // pred_region
          %714 = dma.done [#allocation6], 64
        $region108: #{fast_scnn_forward.1} parent=95 // pred_fallthru
          _
        // Predicated region
        $region109: #{fast_scnn_forward.1} parent=95 // pred_check
          %p715 = pneg %p147
        $region110: #{fast_scnn_forward.1} parent=95 // pred_check_branch
          %717 = sbr.rel (%p715) target = $region112
        $region111: #{fast_scnn_forward.1} parent=95 // pred_region
          %718 = dma.done [#allocation9], 384
        $region112: #{fast_scnn_forward.1} parent=95 // pred_fallthru
          _
        // Predicated region
        $region113: #{fast_scnn_forward.1} parent=95 // pred_check
          %p719 = pneg %p168
        $region114: #{fast_scnn_forward.1} parent=95 // pred_check_branch
          %721 = sbr.rel (%p719) target = $region116
        $region115: #{fast_scnn_forward.1} parent=95 // pred_region
          %722 = dma.done [#allocation9], 36864
        $region116: #{fast_scnn_forward.1} parent=95 // pred_fallthru
          _
        // Predicated region
        $region117: #{fast_scnn_forward.1} parent=95 // pred_check
          %p723 = pneg %p189
        $region118: #{fast_scnn_forward.1} parent=95 // pred_check_branch
          %725 = sbr.rel (%p723) target = $region120
        $region119: #{fast_scnn_forward.1} parent=95 // pred_region
          %726 = dma.done [#allocation12], 48
        $region120: #{fast_scnn_forward.1} parent=95 // pred_fallthru
          _
        // Predicated region
        $region121: #{fast_scnn_forward.1} parent=95 // pred_check
          %p727 = pneg %p210
        $region122: #{fast_scnn_forward.1} parent=95 // pred_check_branch
          %729 = sbr.rel (%p727) target = $region124
        $region123: #{fast_scnn_forward.1} parent=95 // pred_region
          %730 = dma.done [#allocation12], 192
        $region124: #{fast_scnn_forward.1} parent=95 // pred_fallthru
          _
        // Predicated region
        $region125: #{fast_scnn_forward.1} parent=95 // pred_check
          %p731 = pneg %p231
        $region126: #{fast_scnn_forward.1} parent=95 // pred_check_branch
          %733 = sbr.rel (%p731) target = $region128
        $region127: #{fast_scnn_forward.1} parent=95 // pred_region
          %734 = dma.done [#allocation15], 36864
        $region128: #{fast_scnn_forward.1} parent=95 // pred_fallthru
          _
        // Predicated region
        $region129: #{fast_scnn_forward.1} parent=95 // pred_check
          %p735 = pneg %p252
        $region130: #{fast_scnn_forward.1} parent=95 // pred_check_branch
          %737 = sbr.rel (%p735) target = $region132
        $region131: #{fast_scnn_forward.1} parent=95 // pred_region
          %738 = dma.done [#allocation15], 64
        $region132: #{fast_scnn_forward.1} parent=95 // pred_fallthru
          _
        // Predicated region
        $region133: #{fast_scnn_forward.1} parent=95 // pred_check
          %p739 = pneg %p273
        $region134: #{fast_scnn_forward.1} parent=95 // pred_check_branch
          %741 = sbr.rel (%p739) target = $region136
        $region135: #{fast_scnn_forward.1} parent=95 // pred_region
          %742 = dma.done [#allocation18], 192
        $region136: #{fast_scnn_forward.1} parent=95 // pred_fallthru
          _
        // Predicated region
        $region137: #{fast_scnn_forward.1} parent=95 // pred_check
          %p743 = pneg %p294
        $region138: #{fast_scnn_forward.1} parent=95 // pred_check_branch
          %745 = sbr.rel (%p743) target = $region140
        $region139: #{fast_scnn_forward.1} parent=95 // pred_region
          %746 = dma.done [#allocation18], 49152
        $region140: #{fast_scnn_forward.1} parent=95 // pred_fallthru
          _
        // Predicated region
        $region141: #{fast_scnn_forward.1} parent=95 // pred_check
          %p747 = pneg %p315
        $region142: #{fast_scnn_forward.1} parent=95 // pred_check_branch
          %749 = sbr.rel (%p747) target = $region144
        $region143: #{fast_scnn_forward.1} parent=95 // pred_region
          %750 = dma.done [#allocation21], 64
        $region144: #{fast_scnn_forward.1} parent=95 // pred_fallthru
          _
        // Predicated region
        $region145: #{fast_scnn_forward.1} parent=95 // pred_check
          %p751 = pneg %p336
        $region146: #{fast_scnn_forward.1} parent=95 // pred_check_branch
          %753 = sbr.rel (%p751) target = $region148
        $region147: #{fast_scnn_forward.1} parent=95 // pred_region
          %754 = dma.done [#allocation21], 16384
        $region148: #{fast_scnn_forward.1} parent=95 // pred_fallthru
          _
        // Predicated region
        $region149: #{fast_scnn_forward.1} parent=95 // pred_check
          %p755 = pneg %p357
        $region150: #{fast_scnn_forward.1} parent=95 // pred_check_branch
          %757 = sbr.rel (%p755) target = $region152
        $region151: #{fast_scnn_forward.1} parent=95 // pred_region
          %758 = dma.done [#allocation24], 64
        $region152: #{fast_scnn_forward.1} parent=95 // pred_fallthru
          _
        // Predicated region
        $region153: #{fast_scnn_forward.1} parent=95 // pred_check
          %p759 = pneg %p399
        $region154: #{fast_scnn_forward.1} parent=95 // pred_check_branch
          %761 = sbr.rel (%p759) target = $region156
        $region155: #{fast_scnn_forward.1} parent=95 // pred_region
          %762 = dma.done [#allocation24], 16
        $region156: #{fast_scnn_forward.1} parent=95 // pred_fallthru
          _
        // Predicated region
        $region157: #{fast_scnn_forward.1} parent=95 // pred_check
          %p763 = pneg %p441
        $region158: #{fast_scnn_forward.1} parent=95 // pred_check_branch
          %765 = sbr.rel (%p763) target = $region160
        $region159: #{fast_scnn_forward.1} parent=95 // pred_region
          %766 = dma.done [#allocation27], 128
        $region160: #{fast_scnn_forward.1} parent=95 // pred_fallthru
          _
        %p767 = scmp.lt.s32.totalorder %s42, 1
        %s768 = scalar_select %p767, %s42, 1
        %s769 = smul.addr %s768, 4
        %s770 = smul.addr %s769, 4
        %s771 = scalar_lea.vmem %s0, %s770
        %p772 = pneg %p63
        %p773 = pneg %p60
        %p774 = pneg %p84
        %p775 = pneg %p81
        %p776 = pneg %p105
        %p777 = pneg %p102
        %p778 = pneg %p126
        %p779 = pneg %p123
        %p780 = pneg %p147
        %p781 = pneg %p144
        %p782 = pneg %p168
        %p783 = pneg %p165
        %p784 = pneg %p189
        %p785 = pneg %p186
        %p786 = pneg %p210
        %p787 = pneg %p207
        %p788 = pneg %p231
        %p789 = pneg %p228
        %p790 = pneg %p252
        %p791 = pneg %p249
        %p792 = pneg %p273
        %p793 = pneg %p270
        %p794 = pneg %p294
        %p795 = pneg %p291
        %p796 = pneg %p315
        %p797 = pneg %p312
        %p798 = pneg %p336
        %p799 = pneg %p333
        %p800 = pneg %p357
        %p801 = pneg %p354
        %p802 = pneg %p378
        %p803 = pneg %p375
        %p804 = pneg %p399
        %p805 = pneg %p396
        %p806 = pneg %p420
        %p807 = pneg %p417
        %p808 = pneg %p441
        %p809 = pneg %p438
        %p810 = pneg %p467
        %p811 = pneg %p464
        %s812 = sand.u32 %s454, 1
        %s813 = scalar_lea.sflag [#allocation4], %s812
        %s814 = sand.u32 %s454, 1
        %s815 = smul.addr %s814, 64
        %s816 = scalar_lea.vmem [#allocation28], %s815
        %p817 = scmp.lt.s32.totalorder %s42, 1
        %s818 = scalar_select %p817, %s42, 1
        %s819 = smul.addr %s818, 4
        %s820 = smul.addr %s819, 4
        %s821 = scalar_lea.vmem %s0, %s820
        %v823 = vld [vmem:[%s821] sm:$0xf]
        %v824 = vld [vmem:[%s821 + $0x4] sm:$0xf]
        %v825 = vld [vmem:[%s821 + $0x8] sm:$0xf]
        %v826 = vld [vmem:[%s821 + $0xc] sm:$0xf]
        %v827 = vunpack.c.l.bf16 %v823
        %v828 = vunpack.c.l.bf16 %v824
        %v829 = vunpack.c.l.bf16 %v825
        %v830 = vunpack.c.l.bf16 %v826
        %v831 = vld [vmem:[#allocation2] sm:$0xff]
        %v832 = vld [vmem:[#allocation2 + $0x8] sm:$0xff]
        %vm833 = vcmask 261120
        %v835 = vsel %vm833, %v831, 0
        %v838 = vsel %vm833, %v832, 0
        %840 = vmatprep.subr.mxu0 0.0
        %841 = vmatpush1.msra.mxu0 0.0
        %842 = vmatprep.subr.mxu0 0.0
        %843 = vmatpush1.msra.mxu0 0.0
        %844 = vmatprep.subr.mxu0 0.0
        %845 = vmatpush1.msra.mxu0 0.0
        %846 = vmatprep.subr.mxu0 0.0
        %847 = vmatpush1.msra.mxu0 0.0
        %848 = vmatprep.subr.mxu0 0.0
        %849 = vmatpush1.msra.mxu0 0.0
        %850 = vmatprep.subr.mxu0 0.0
        %851 = vmatpush1.msra.mxu0 0.0
        %852 = vmatprep.subr.mxu0 0.0
        %853 = vmatpush1.msra.mxu0 0.0
        %854 = vmatprep.subr.mxu0 0.0
        %855 = vmatpush1.msra.mxu0 0.0
        %856 = vmatprep.subr.mxu0 0.0
        %857 = vmatpush1.msra.mxu0 0.0
        %858 = vmatprep.subr.mxu0 0.0
        %859 = vmatpush1.msra.mxu0 0.0
        %860 = vmatprep.subr.mxu0 0.0
        %861 = vmatpush1.msra.mxu0 0.0
        %862 = vmatprep.subr.mxu0 0.0
        %863 = vmatpush1.msra.mxu0 0.0
        %864 = vmatprep.subr.mxu0 0.0
        %865 = vmatpush1.msra.mxu0 %v830
        %866 = vmatprep.subr.mxu0 0.0
        %867 = vmatpush1.msra.mxu0 %v829
        %868 = vmatprep.subr.mxu0 0.0
        %869 = vmatpush1.msra.mxu0 %v828
        %870 = vmatprep.subr.mxu0 0.0
        %871 = vmatpush1.msra.mxu0 %v827
        %872 = vmatprep.subr.mxu0 0.0
        %873 = vmatpush2.msra.mxu0 0.0
        %874 = vmatprep.subr.mxu0 0.0
        %875 = vmatpush2.msra.mxu0 0.0
        %876 = vmatprep.subr.mxu0 0.0
        %877 = vmatpush2.msra.mxu0 0.0
        %878 = vmatprep.subr.mxu0 0.0
        %879 = vmatpush2.msra.mxu0 0.0
        %880 = vmatprep.subr.mxu0 0.0
        %881 = vmatpush2.msra.mxu0 0.0
        %882 = vmatprep.subr.mxu0 0.0
        %883 = vmatpush2.msra.mxu0 0.0
        %884 = vmatprep.subr.mxu0 0.0
        %885 = vmatpush2.msra.mxu0 0.0
        %886 = vmatprep.subr.mxu0 0.0
        %887 = vmatpush2.msra.mxu0 0.0
        %888 = vmatprep.subr.mxu0 0.0
        %889 = vmatpush2.msra.mxu0 0.0
        %890 = vmatprep.subr.mxu0 0.0
        %891 = vmatpush2.msra.mxu0 0.0
        %892 = vmatprep.subr.mxu0 0.0
        %893 = vmatpush2.msra.mxu0 0.0
        %894 = vmatprep.subr.mxu0 0.0
        %895 = vmatpush2.msra.mxu0 0.0
        %896 = vmatprep.subr.mxu0 0.0
        %897 = vmatpush2.msra.mxu0 0.0
        %898 = vmatprep.subr.mxu0 0.0
        %899 = vmatpush2.msra.mxu0 0.0
        %900 = vmatprep.subr.mxu0 0.0
        %901 = vmatpush2.msra.mxu0 0.0
        %902 = vmatprep.subr.mxu0 0.0
        %903 = vmatpush2.msra.mxu0 0.0
        %904 = vmatprep.mubr.f32.mxu0 0.0
        %905 = vmatmul.mubr.f32.gmra.mxu0 %v835
        %v906 = vpop.f32.mrf.mxu0
        %v907 = vadd.f32 0.0, %v906
        %v908 = vpop.f32.mrf.mxu0
        %909 = vmatprep.mubr.f32.mxu0 0.0
        %910 = vmatmul.mubr.f32.gmra.mxu0 %v838
        %v911 = vpop.f32.mrf.mxu0
        %v912 = vadd.f32 0.0, %v911
        %v913 = vpop.f32.mrf.mxu0
        %914 = vdwg.mxu0
        %v915 = vpack.c.bf16 %v912, %v907
        %v916 = vld [vmem:[#allocation5] sm:$0xff]
        %v917 = vld [vmem:[#allocation5 + $0x8] sm:$0xff]
        %v918 = vld [vmem:[#allocation5 + $0x10] sm:$0xff]
        %v919 = vld [vmem:[#allocation5 + $0x18] sm:$0xff]
        %v920 = vld [vmem:[#allocation5 + $0x20] sm:$0xff]
        %v921 = vld [vmem:[#allocation5 + $0x28] sm:$0xff]
        %v922 = vld [vmem:[#allocation5 + $0x30] sm:$0xff]
        %v923 = vld [vmem:[#allocation5 + $0x38] sm:$0xff]
        %v924 = vld [vmem:[#allocation5 + $0x40] sm:$0xff]
        %v925 = vld [vmem:[#allocation5 + $0x48] sm:$0xff]
        %v926 = vld [vmem:[#allocation5 + $0x50] sm:$0xff]
        %v927 = vld [vmem:[#allocation5 + $0x58] sm:$0xff]
        %v928 = vld [vmem:[#allocation5 + $0x60] sm:$0xff]
        %v929 = vld [vmem:[#allocation5 + $0x68] sm:$0xff]
        %v930 = vld [vmem:[#allocation5 + $0x70] sm:$0xff]
        %v931 = vld [vmem:[#allocation5 + $0x78] sm:$0xff]
        %v932 = vld [vmem:[#allocation5 + $0x80] sm:$0xff]
        %v933 = vld [vmem:[#allocation5 + $0x88] sm:$0xff]
        %v934 = vld [vmem:[#allocation5 + $0x90] sm:$0xff]
        %v935 = vld [vmem:[#allocation5 + $0x98] sm:$0xff]
        %v936 = vld [vmem:[#allocation5 + $0xa0] sm:$0xff]
        %v937 = vld [vmem:[#allocation5 + $0xa8] sm:$0xff]
        %v938 = vld [vmem:[#allocation5 + $0xb0] sm:$0xff]
        %v939 = vld [vmem:[#allocation5 + $0xb8] sm:$0xff]
        %s940 = scalar_lea.vmem [#allocation2], 16
        %v941 = vld [vmem:[%s940] sm:$0xff]
        %v942 = vld [vmem:[%s940 + $0x8] sm:$0xff]
        %v944 = vsel %vm833, %v941, 0
        %v947 = vsel %vm833, %v942, 0
        %949 = vmatprep.subr.mxu0 0.0
        %950 = vmatpush1.msra.mxu0 0.0
        %951 = vmatprep.subr.mxu0 0.0
        %952 = vmatpush1.msra.mxu0 0.0
        %953 = vmatprep.subr.mxu0 0.0
        %954 = vmatpush1.msra.mxu0 0.0
        %955 = vmatprep.subr.mxu0 0.0
        %956 = vmatpush1.msra.mxu0 0.0
        %957 = vmatprep.subr.mxu0 0.0
        %958 = vmatpush1.msra.mxu0 0.0
        %959 = vmatprep.subr.mxu0 0.0
        %960 = vmatpush1.msra.mxu0 0.0
        %961 = vmatprep.subr.mxu0 0.0
        %962 = vmatpush1.msra.mxu0 0.0
        %963 = vmatprep.subr.mxu0 0.0
        %964 = vmatpush1.msra.mxu0 0.0
        %965 = vmatprep.subr.mxu0 0.0
        %966 = vmatpush1.msra.mxu0 0.0
        %967 = vmatprep.subr.mxu0 0.0
        %968 = vmatpush1.msra.mxu0 0.0
        %969 = vmatprep.subr.mxu0 0.0
        %970 = vmatpush1.msra.mxu0 0.0
        %971 = vmatprep.subr.mxu0 0.0
        %972 = vmatpush1.msra.mxu0 0.0
        %973 = vmatprep.subr.mxu0 0.0
        %974 = vmatpush1.msra.mxu0 %v830
        %975 = vmatprep.subr.mxu0 0.0
        %976 = vmatpush1.msra.mxu0 %v829
        %977 = vmatprep.subr.mxu0 0.0
        %978 = vmatpush1.msra.mxu0 %v828
        %979 = vmatprep.subr.mxu0 0.0
        %980 = vmatpush1.msra.mxu0 %v827
        %981 = vmatprep.subr.mxu0 0.0
        %982 = vmatpush2.msra.mxu0 0.0
        %983 = vmatprep.subr.mxu0 0.0
        %984 = vmatpush2.msra.mxu0 0.0
        %985 = vmatprep.subr.mxu0 0.0
        %986 = vmatpush2.msra.mxu0 0.0
        %987 = vmatprep.subr.mxu0 0.0
        %988 = vmatpush2.msra.mxu0 0.0
        %989 = vmatprep.subr.mxu0 0.0
        %990 = vmatpush2.msra.mxu0 0.0
        %991 = vmatprep.subr.mxu0 0.0
        %992 = vmatpush2.msra.mxu0 0.0
        %993 = vmatprep.subr.mxu0 0.0
        %994 = vmatpush2.msra.mxu0 0.0
        %995 = vmatprep.subr.mxu0 0.0
        %996 = vmatpush2.msra.mxu0 0.0
        %997 = vmatprep.subr.mxu0 0.0
        %998 = vmatpush2.msra.mxu0 0.0
        %999 = vmatprep.subr.mxu0 0.0
        %1000 = vmatpush2.msra.mxu0 0.0
        %1001 = vmatprep.subr.mxu0 0.0
        %1002 = vmatpush2.msra.mxu0 0.0
        %1003 = vmatprep.subr.mxu0 0.0
        %1004 = vmatpush2.msra.mxu0 0.0
        %1005 = vmatprep.subr.mxu0 0.0
        %1006 = vmatpush2.msra.mxu0 0.0
        %1007 = vmatprep.subr.mxu0 0.0
        %1008 = vmatpush2.msra.mxu0 0.0
        %1009 = vmatprep.subr.mxu0 0.0
        %1010 = vmatpush2.msra.mxu0 0.0
        %1011 = vmatprep.subr.mxu0 0.0
        %1012 = vmatpush2.msra.mxu0 0.0
        %1013 = vmatprep.mubr.f32.mxu0 0.0
        %1014 = vmatmul.mubr.f32.gmra.mxu0 %v944
        %v1015 = vpop.f32.mrf.mxu0
        %v1016 = vadd.f32 0.0, %v1015
        %v1017 = vpop.f32.mrf.mxu0
        %1018 = vmatprep.mubr.f32.mxu0 0.0
        %1019 = vmatmul.mubr.f32.gmra.mxu0 %v947
        %v1020 = vpop.f32.mrf.mxu0
        %v1021 = vadd.f32 0.0, %v1020
        %v1022 = vpop.f32.mrf.mxu0
        %1023 = vdwg.mxu0
        %v1024 = vpack.c.bf16 %v1021, %v1016
        %s1025 = scalar_lea.vmem [#allocation5], 192
        %v1026 = vld [vmem:[%s1025] sm:$0xff]
        %v1027 = vld [vmem:[%s1025 + $0x8] sm:$0xff]
        %v1028 = vld [vmem:[%s1025 + $0x10] sm:$0xff]
        %v1029 = vld [vmem:[%s1025 + $0x18] sm:$0xff]
        %v1030 = vld [vmem:[%s1025 + $0x20] sm:$0xff]
        %v1031 = vld [vmem:[%s1025 + $0x28] sm:$0xff]
        %v1032 = vld [vmem:[%s1025 + $0x30] sm:$0xff]
        %v1033 = vld [vmem:[%s1025 + $0x38] sm:$0xff]
        %v1034 = vld [vmem:[%s1025 + $0x40] sm:$0xff]
        %v1035 = vld [vmem:[%s1025 + $0x48] sm:$0xff]
        %v1036 = vld [vmem:[%s1025 + $0x50] sm:$0xff]
        %v1037 = vld [vmem:[%s1025 + $0x58] sm:$0xff]
        %v1038 = vld [vmem:[%s1025 + $0x60] sm:$0xff]
        %v1039 = vld [vmem:[%s1025 + $0x68] sm:$0xff]
        %v1040 = vld [vmem:[%s1025 + $0x70] sm:$0xff]
        %v1041 = vld [vmem:[%s1025 + $0x78] sm:$0xff]
        %v1042 = vld [vmem:[%s1025 + $0x80] sm:$0xff]
        %v1043 = vld [vmem:[%s1025 + $0x88] sm:$0xff]
        %v1044 = vld [vmem:[%s1025 + $0x90] sm:$0xff]
        %v1045 = vld [vmem:[%s1025 + $0x98] sm:$0xff]
        %v1046 = vld [vmem:[%s1025 + $0xa0] sm:$0xff]
        %v1047 = vld [vmem:[%s1025 + $0xa8] sm:$0xff]
        %v1048 = vld [vmem:[%s1025 + $0xb0] sm:$0xff]
        %v1049 = vld [vmem:[%s1025 + $0xb8] sm:$0xff]
        %v1074 = vunpack.c.l.b16 %v1026
        %v1075 = vunpack.c.h.b16 %v1026
        %v1076 = vunpack.c.l.b16 %v1027
        %v1077 = vunpack.c.h.b16 %v1027
        %v1078 = vunpack.c.l.b16 %v1028
        %v1079 = vunpack.c.h.b16 %v1028
        %v1080 = vunpack.c.l.b16 %v1029
        %v1081 = vunpack.c.h.b16 %v1029
        %v1082 = vunpack.c.l.b16 %v1030
        %v1083 = vunpack.c.h.b16 %v1030
        %v1084 = vunpack.c.l.b16 %v1031
        %v1085 = vunpack.c.h.b16 %v1031
        %v1086 = vunpack.c.l.b16 %v1032
        %v1087 = vunpack.c.h.b16 %v1032
        %v1088 = vunpack.c.l.b16 %v1033
        %v1089 = vunpack.c.h.b16 %v1033
        %v1090 = vunpack.c.l.b16 %v1034
        %v1091 = vunpack.c.h.b16 %v1034
        %v1092 = vunpack.c.l.b16 %v1035
        %v1093 = vunpack.c.h.b16 %v1035
        %v1094 = vunpack.c.l.b16 %v1036
        %v1095 = vunpack.c.h.b16 %v1036
        %v1096 = vunpack.c.l.b16 %v1037
        %v1097 = vunpack.c.h.b16 %v1037
        %v1098 = vunpack.c.l.b16 %v1038
        %v1099 = vunpack.c.h.b16 %v1038
        %v1100 = vunpack.c.l.b16 %v1039
        %v1101 = vunpack.c.h.b16 %v1039
        %v1102 = vunpack.c.l.b16 %v1040
        %v1103 = vunpack.c.h.b16 %v1040
        %v1104 = vunpack.c.l.b16 %v1041
        %v1105 = vunpack.c.h.b16 %v1041
        %v1106 = vunpack.c.l.b16 %v1042
        %v1107 = vunpack.c.h.b16 %v1042
        %v1108 = vunpack.c.l.b16 %v1043
        %v1109 = vunpack.c.h.b16 %v1043
        %v1110 = vunpack.c.l.b16 %v1044
        %v1111 = vunpack.c.h.b16 %v1044
        %v1112 = vunpack.c.l.b16 %v1045
        %v1113 = vunpack.c.h.b16 %v1045
        %v1114 = vunpack.c.l.b16 %v1046
        %v1115 = vunpack.c.h.b16 %v1046
        %v1116 = vunpack.c.l.b16 %v1047
        %v1117 = vunpack.c.h.b16 %v1047
        %v1118 = vunpack.c.l.b16 %v1048
        %v1119 = vunpack.c.h.b16 %v1048
        %v1120 = vunpack.c.l.b16 %v1049
        %v1121 = vunpack.c.h.b16 %v1049
        %v1122 = vpack.c.b16 %v1078, %v1074
        %v1123 = vpack.c.b16 %v1079, %v1075
        %v1124 = vpack.c.b16 %v1080, %v1076
        %v1125 = vpack.c.b16 %v1081, %v1077
        %v1126 = vpack.c.b16 %v1086, %v1082
        %v1127 = vpack.c.b16 %v1087, %v1083
        %v1128 = vpack.c.b16 %v1088, %v1084
        %v1129 = vpack.c.b16 %v1089, %v1085
        %v1130 = vpack.c.b16 %v1094, %v1090
        %v1131 = vpack.c.b16 %v1095, %v1091
        %v1132 = vpack.c.b16 %v1096, %v1092
        %v1133 = vpack.c.b16 %v1097, %v1093
        %v1134 = vpack.c.b16 %v1102, %v1098
        %v1135 = vpack.c.b16 %v1103, %v1099
        %v1136 = vpack.c.b16 %v1104, %v1100
        %v1137 = vpack.c.b16 %v1105, %v1101
        %v1138 = vpack.c.b16 %v1110, %v1106
        %v1139 = vpack.c.b16 %v1111, %v1107
        %v1140 = vpack.c.b16 %v1112, %v1108
        %v1141 = vpack.c.b16 %v1113, %v1109
        %v1142 = vpack.c.b16 %v1118, %v1114
        %v1143 = vpack.c.b16 %v1119, %v1115
        %v1144 = vpack.c.b16 %v1120, %v1116
        %v1145 = vpack.c.b16 %v1121, %v1117
        %vm1170 = vcmask 785408
        %v1172 = vsel %vm1170, %v1024, 0
        %1174 = vmatprep.subr.bf16.mxu0 0
        %1175 = vmatpush1.bf16.msra.mxu0 0
        %1176 = vmatprep.subr.bf16.mxu0 0
        %1177 = vmatpush1.bf16.msra.mxu0 0
        %1178 = vmatprep.subr.bf16.mxu0 %v1143
        %1179 = vmatpush1.bf16.msra.mxu0 %v1142
        %1180 = vmatprep.subr.bf16.mxu0 %v1139
        %1181 = vmatpush1.bf16.msra.mxu0 %v1138
        %1182 = vmatprep.subr.bf16.mxu0 %v1135
        %1183 = vmatpush1.bf16.msra.mxu0 %v1134
        %1184 = vmatprep.subr.bf16.mxu0 %v1131
        %1185 = vmatpush1.bf16.msra.mxu0 %v1130
        %1186 = vmatprep.subr.bf16.mxu0 %v1127
        %1187 = vmatpush1.bf16.msra.mxu0 %v1126
        %1188 = vmatprep.subr.bf16.mxu0 %v1123
        %1189 = vmatpush1.bf16.msra.mxu0 %v1122
        %1190 = vmatprep.subr.bf16.mxu0 0
        %1191 = vmatpush2.bf16.msra.mxu0 0
        %1192 = vmatprep.subr.bf16.mxu0 0
        %1193 = vmatpush2.bf16.msra.mxu0 0
        %1194 = vmatprep.subr.bf16.mxu0 0
        %1195 = vmatpush2.bf16.msra.mxu0 0
        %1196 = vmatprep.subr.bf16.mxu0 0
        %1197 = vmatpush2.bf16.msra.mxu0 0
        %1198 = vmatprep.subr.bf16.mxu0 0
        %1199 = vmatpush2.bf16.msra.mxu0 0
        %1200 = vmatprep.subr.bf16.mxu0 0
        %1201 = vmatpush2.bf16.msra.mxu0 0
        %1202 = vmatprep.subr.bf16.mxu0 0
        %1203 = vmatpush2.bf16.msra.mxu0 0
        %1204 = vmatprep.subr.bf16.mxu0 0
        %1205 = vmatpush2.bf16.msra.mxu0 0
        %1206 = vmatprep.mubr.bf16.mxu0 0
        %1207 = vmatmul.mubr.bf16.gmra.mxu0 %v1172
        %v1208 = vpop.f32.mrf.mxu0
        %v1209 = vadd.f32 0.0, %v1208
        %v1210 = vpop.f32.mrf.mxu0
        %v1211 = vadd.f32 0.0, %v1210
        %v1212 = vpop.f32.mrf.mxu0
        %v1213 = vadd.f32 0.0, %v1212
        %v1214 = vpop.f32.mrf.mxu0
        %v1215 = vadd.f32 0.0, %v1214
        %1216 = vdwg.mxu0
        %1217 = vmatprep.subr.bf16.mxu0 0
        %1218 = vmatpush1.bf16.msra.mxu0 0
        %1219 = vmatprep.subr.bf16.mxu0 0
        %1220 = vmatpush1.bf16.msra.mxu0 0
        %1221 = vmatprep.subr.bf16.mxu0 %v1145
        %1222 = vmatpush1.bf16.msra.mxu0 %v1144
        %1223 = vmatprep.subr.bf16.mxu0 %v1141
        %1224 = vmatpush1.bf16.msra.mxu0 %v1140
        %1225 = vmatprep.subr.bf16.mxu0 %v1137
        %1226 = vmatpush1.bf16.msra.mxu0 %v1136
        %1227 = vmatprep.subr.bf16.mxu0 %v1133
        %1228 = vmatpush1.bf16.msra.mxu0 %v1132
        %1229 = vmatprep.subr.bf16.mxu0 %v1129
        %1230 = vmatpush1.bf16.msra.mxu0 %v1128
        %1231 = vmatprep.subr.bf16.mxu0 %v1125
        %1232 = vmatpush1.bf16.msra.mxu0 %v1124
        %1233 = vmatprep.subr.bf16.mxu0 0
        %1234 = vmatpush2.bf16.msra.mxu0 0
        %1235 = vmatprep.subr.bf16.mxu0 0
        %1236 = vmatpush2.bf16.msra.mxu0 0
        %1237 = vmatprep.subr.bf16.mxu0 0
        %1238 = vmatpush2.bf16.msra.mxu0 0
        %1239 = vmatprep.subr.bf16.mxu0 0
        %1240 = vmatpush2.bf16.msra.mxu0 0
        %1241 = vmatprep.subr.bf16.mxu0 0
        %1242 = vmatpush2.bf16.msra.mxu0 0
        %1243 = vmatprep.subr.bf16.mxu0 0
        %1244 = vmatpush2.bf16.msra.mxu0 0
        %1245 = vmatprep.subr.bf16.mxu0 0
        %1246 = vmatpush2.bf16.msra.mxu0 0
        %1247 = vmatprep.subr.bf16.mxu0 0
        %1248 = vmatpush2.bf16.msra.mxu0 0
        %1249 = vmatprep.mubr.bf16.mxu0 0
        %1250 = vmatmul.mubr.bf16.gmra.mxu0 %v1172
        %v1251 = vpop.f32.mrf.mxu0
        %v1252 = vadd.f32 0.0, %v1251
        %v1253 = vpop.f32.mrf.mxu0
        %v1254 = vadd.f32 0.0, %v1253
        %v1255 = vpop.f32.mrf.mxu0
        %v1256 = vadd.f32 0.0, %v1255
        %v1257 = vpop.f32.mrf.mxu0
        %v1258 = vadd.f32 0.0, %v1257
        %1259 = vdwg.mxu0
        %v1284 = vunpack.c.l.b16 %v916
        %v1285 = vunpack.c.h.b16 %v916
        %v1286 = vunpack.c.l.b16 %v917
        %v1287 = vunpack.c.h.b16 %v917
        %v1288 = vunpack.c.l.b16 %v918
        %v1289 = vunpack.c.h.b16 %v918
        %v1290 = vunpack.c.l.b16 %v919
        %v1291 = vunpack.c.h.b16 %v919
        %v1292 = vunpack.c.l.b16 %v920
        %v1293 = vunpack.c.h.b16 %v920
        %v1294 = vunpack.c.l.b16 %v921
        %v1295 = vunpack.c.h.b16 %v921
        %v1296 = vunpack.c.l.b16 %v922
        %v1297 = vunpack.c.h.b16 %v922
        %v1298 = vunpack.c.l.b16 %v923
        %v1299 = vunpack.c.h.b16 %v923
        %v1300 = vunpack.c.l.b16 %v924
        %v1301 = vunpack.c.h.b16 %v924
        %v1302 = vunpack.c.l.b16 %v925
        %v1303 = vunpack.c.h.b16 %v925
        %v1304 = vunpack.c.l.b16 %v926
        %v1305 = vunpack.c.h.b16 %v926
        %v1306 = vunpack.c.l.b16 %v927
        %v1307 = vunpack.c.h.b16 %v927
        %v1308 = vunpack.c.l.b16 %v928
        %v1309 = vunpack.c.h.b16 %v928
        %v1310 = vunpack.c.l.b16 %v929
        %v1311 = vunpack.c.h.b16 %v929
        %v1312 = vunpack.c.l.b16 %v930
        %v1313 = vunpack.c.h.b16 %v930
        %v1314 = vunpack.c.l.b16 %v931
        %v1315 = vunpack.c.h.b16 %v931
        %v1316 = vunpack.c.l.b16 %v932
        %v1317 = vunpack.c.h.b16 %v932
        %v1318 = vunpack.c.l.b16 %v933
        %v1319 = vunpack.c.h.b16 %v933
        %v1320 = vunpack.c.l.b16 %v934
        %v1321 = vunpack.c.h.b16 %v934
        %v1322 = vunpack.c.l.b16 %v935
        %v1323 = vunpack.c.h.b16 %v935
        %v1324 = vunpack.c.l.b16 %v936
        %v1325 = vunpack.c.h.b16 %v936
        %v1326 = vunpack.c.l.b16 %v937
        %v1327 = vunpack.c.h.b16 %v937
        %v1328 = vunpack.c.l.b16 %v938
        %v1329 = vunpack.c.h.b16 %v938
        %v1330 = vunpack.c.l.b16 %v939
        %v1331 = vunpack.c.h.b16 %v939
        %v1332 = vpack.c.b16 %v1288, %v1284
        %v1333 = vpack.c.b16 %v1289, %v1285
        %v1334 = vpack.c.b16 %v1290, %v1286
        %v1335 = vpack.c.b16 %v1291, %v1287
        %v1336 = vpack.c.b16 %v1296, %v1292
        %v1337 = vpack.c.b16 %v1297, %v1293
        %v1338 = vpack.c.b16 %v1298, %v1294
        %v1339 = vpack.c.b16 %v1299, %v1295
        %v1340 = vpack.c.b16 %v1304, %v1300
        %v1341 = vpack.c.b16 %v1305, %v1301
        %v1342 = vpack.c.b16 %v1306, %v1302
        %v1343 = vpack.c.b16 %v1307, %v1303
        %v1344 = vpack.c.b16 %v1312, %v1308
        %v1345 = vpack.c.b16 %v1313, %v1309
        %v1346 = vpack.c.b16 %v1314, %v1310
        %v1347 = vpack.c.b16 %v1315, %v1311
        %v1348 = vpack.c.b16 %v1320, %v1316
        %v1349 = vpack.c.b16 %v1321, %v1317
        %v1350 = vpack.c.b16 %v1322, %v1318
        %v1351 = vpack.c.b16 %v1323, %v1319
        %v1352 = vpack.c.b16 %v1328, %v1324
        %v1353 = vpack.c.b16 %v1329, %v1325
        %v1354 = vpack.c.b16 %v1330, %v1326
        %v1355 = vpack.c.b16 %v1331, %v1327
        %v1381 = vsel %vm1170, %v915, 0
        %1383 = vmatprep.subr.bf16.mxu0 0
        %1384 = vmatpush1.bf16.msra.mxu0 0
        %1385 = vmatprep.subr.bf16.mxu0 0
        %1386 = vmatpush1.bf16.msra.mxu0 0
        %1387 = vmatprep.subr.bf16.mxu0 %v1353
        %1388 = vmatpush1.bf16.msra.mxu0 %v1352
        %1389 = vmatprep.subr.bf16.mxu0 %v1349
        %1390 = vmatpush1.bf16.msra.mxu0 %v1348
        %1391 = vmatprep.subr.bf16.mxu0 %v1345
        %1392 = vmatpush1.bf16.msra.mxu0 %v1344
        %1393 = vmatprep.subr.bf16.mxu0 %v1341
        %1394 = vmatpush1.bf16.msra.mxu0 %v1340
        %1395 = vmatprep.subr.bf16.mxu0 %v1337
        %1396 = vmatpush1.bf16.msra.mxu0 %v1336
        %1397 = vmatprep.subr.bf16.mxu0 %v1333
        %1398 = vmatpush1.bf16.msra.mxu0 %v1332
        %1399 = vmatprep.subr.bf16.mxu0 0
        %1400 = vmatpush2.bf16.msra.mxu0 0
        %1401 = vmatprep.subr.bf16.mxu0 0
        %1402 = vmatpush2.bf16.msra.mxu0 0
        %1403 = vmatprep.subr.bf16.mxu0 0
        %1404 = vmatpush2.bf16.msra.mxu0 0
        %1405 = vmatprep.subr.bf16.mxu0 0
        %1406 = vmatpush2.bf16.msra.mxu0 0
        %1407 = vmatprep.subr.bf16.mxu0 0
        %1408 = vmatpush2.bf16.msra.mxu0 0
        %1409 = vmatprep.subr.bf16.mxu0 0
        %1410 = vmatpush2.bf16.msra.mxu0 0
        %1411 = vmatprep.subr.bf16.mxu0 0
        %1412 = vmatpush2.bf16.msra.mxu0 0
        %1413 = vmatprep.subr.bf16.mxu0 0
        %1414 = vmatpush2.bf16.msra.mxu0 0
        %1415 = vmatprep.mubr.bf16.mxu0 0
        %1416 = vmatmul.mubr.bf16.gmra.mxu0 %v1381
        %v1417 = vpop.f32.mrf.mxu0
        %v1418 = vadd.f32 %v1209, %v1417
        %v1419 = vpop.f32.mrf.mxu0
        %v1420 = vadd.f32 %v1211, %v1419
        %v1421 = vpop.f32.mrf.mxu0
        %v1422 = vadd.f32 %v1213, %v1421
        %v1423 = vpop.f32.mrf.mxu0
        %v1424 = vadd.f32 %v1215, %v1423
        %1425 = vdwg.mxu0
        %1426 = vmatprep.subr.bf16.mxu0 0
        %1427 = vmatpush1.bf16.msra.mxu0 0
        %1428 = vmatprep.subr.bf16.mxu0 0
        %1429 = vmatpush1.bf16.msra.mxu0 0
        %1430 = vmatprep.subr.bf16.mxu0 %v1355
        %1431 = vmatpush1.bf16.msra.mxu0 %v1354
        %1432 = vmatprep.subr.bf16.mxu0 %v1351
        %1433 = vmatpush1.bf16.msra.mxu0 %v1350
        %1434 = vmatprep.subr.bf16.mxu0 %v1347
        %1435 = vmatpush1.bf16.msra.mxu0 %v1346
        %1436 = vmatprep.subr.bf16.mxu0 %v1343
        %1437 = vmatpush1.bf16.msra.mxu0 %v1342
        %1438 = vmatprep.subr.bf16.mxu0 %v1339
        %1439 = vmatpush1.bf16.msra.mxu0 %v1338
        %1440 = vmatprep.subr.bf16.mxu0 %v1335
        %1441 = vmatpush1.bf16.msra.mxu0 %v1334
        %1442 = vmatprep.subr.bf16.mxu0 0
        %1443 = vmatpush2.bf16.msra.mxu0 0
        %1444 = vmatprep.subr.bf16.mxu0 0
        %1445 = vmatpush2.bf16.msra.mxu0 0
        %1446 = vmatprep.subr.bf16.mxu0 0
        %1447 = vmatpush2.bf16.msra.mxu0 0
        %1448 = vmatprep.subr.bf16.mxu0 0
        %1449 = vmatpush2.bf16.msra.mxu0 0
        %1450 = vmatprep.subr.bf16.mxu0 0
        %1451 = vmatpush2.bf16.msra.mxu0 0
        %1452 = vmatprep.subr.bf16.mxu0 0
        %1453 = vmatpush2.bf16.msra.mxu0 0
        %1454 = vmatprep.subr.bf16.mxu0 0
        %1455 = vmatpush2.bf16.msra.mxu0 0
        %1456 = vmatprep.subr.bf16.mxu0 0
        %1457 = vmatpush2.bf16.msra.mxu0 0
        %1458 = vmatprep.mubr.bf16.mxu0 0
        %1459 = vmatmul.mubr.bf16.gmra.mxu0 %v1381
        %v1460 = vpop.f32.mrf.mxu0
        %v1461 = vadd.f32 %v1252, %v1460
        %v1462 = vpop.f32.mrf.mxu0
        %v1463 = vadd.f32 %v1254, %v1462
        %v1464 = vpop.f32.mrf.mxu0
        %v1465 = vadd.f32 %v1256, %v1464
        %v1466 = vpop.f32.mrf.mxu0
        %v1467 = vadd.f32 %v1258, %v1466
        %1468 = vdwg.mxu0
        %s1469 = scalar_lea.vmem [#allocation2], 32
        %v1470 = vld [vmem:[%s1469] sm:$0xff]
        %v1471 = vld [vmem:[%s1469 + $0x8] sm:$0xff]
        %v1473 = vsel %vm833, %v1470, 0
        %v1476 = vsel %vm833, %v1471, 0
        %1478 = vmatprep.subr.mxu0 0.0
        %1479 = vmatpush1.msra.mxu0 0.0
        %1480 = vmatprep.subr.mxu0 0.0
        %1481 = vmatpush1.msra.mxu0 0.0
        %1482 = vmatprep.subr.mxu0 0.0
        %1483 = vmatpush1.msra.mxu0 0.0
        %1484 = vmatprep.subr.mxu0 0.0
        %1485 = vmatpush1.msra.mxu0 0.0
        %1486 = vmatprep.subr.mxu0 0.0
        %1487 = vmatpush1.msra.mxu0 0.0
        %1488 = vmatprep.subr.mxu0 0.0
        %1489 = vmatpush1.msra.mxu0 0.0
        %1490 = vmatprep.subr.mxu0 0.0
        %1491 = vmatpush1.msra.mxu0 0.0
        %1492 = vmatprep.subr.mxu0 0.0
        %1493 = vmatpush1.msra.mxu0 0.0
        %1494 = vmatprep.subr.mxu0 0.0
        %1495 = vmatpush1.msra.mxu0 0.0
        %1496 = vmatprep.subr.mxu0 0.0
        %1497 = vmatpush1.msra.mxu0 0.0
        %1498 = vmatprep.subr.mxu0 0.0
        %1499 = vmatpush1.msra.mxu0 0.0
        %1500 = vmatprep.subr.mxu0 0.0
        %1501 = vmatpush1.msra.mxu0 0.0
        %1502 = vmatprep.subr.mxu0 0.0
        %1503 = vmatpush1.msra.mxu0 %v830
        %1504 = vmatprep.subr.mxu0 0.0
        %1505 = vmatpush1.msra.mxu0 %v829
        %1506 = vmatprep.subr.mxu0 0.0
        %1507 = vmatpush1.msra.mxu0 %v828
        %1508 = vmatprep.subr.mxu0 0.0
        %1509 = vmatpush1.msra.mxu0 %v827
        %1510 = vmatprep.subr.mxu0 0.0
        %1511 = vmatpush2.msra.mxu0 0.0
        %1512 = vmatprep.subr.mxu0 0.0
        %1513 = vmatpush2.msra.mxu0 0.0
        %1514 = vmatprep.subr.mxu0 0.0
        %1515 = vmatpush2.msra.mxu0 0.0
        %1516 = vmatprep.subr.mxu0 0.0
        %1517 = vmatpush2.msra.mxu0 0.0
        %1518 = vmatprep.subr.mxu0 0.0
        %1519 = vmatpush2.msra.mxu0 0.0
        %1520 = vmatprep.subr.mxu0 0.0
        %1521 = vmatpush2.msra.mxu0 0.0
        %1522 = vmatprep.subr.mxu0 0.0
        %1523 = vmatpush2.msra.mxu0 0.0
        %1524 = vmatprep.subr.mxu0 0.0
        %1525 = vmatpush2.msra.mxu0 0.0
        %1526 = vmatprep.subr.mxu0 0.0
        %1527 = vmatpush2.msra.mxu0 0.0
        %1528 = vmatprep.subr.mxu0 0.0
        %1529 = vmatpush2.msra.mxu0 0.0
        %1530 = vmatprep.subr.mxu0 0.0
        %1531 = vmatpush2.msra.mxu0 0.0
        %1532 = vmatprep.subr.mxu0 0.0
        %1533 = vmatpush2.msra.mxu0 0.0
        %1534 = vmatprep.subr.mxu0 0.0
        %1535 = vmatpush2.msra.mxu0 0.0
        %1536 = vmatprep.subr.mxu0 0.0
        %1537 = vmatpush2.msra.mxu0 0.0
        %1538 = vmatprep.subr.mxu0 0.0
        %1539 = vmatpush2.msra.mxu0 0.0
        %1540 = vmatprep.subr.mxu0 0.0
        %1541 = vmatpush2.msra.mxu0 0.0
        %1542 = vmatprep.mubr.f32.mxu0 0.0
        %1543 = vmatmul.mubr.f32.gmra.mxu0 %v1473
        %v1544 = vpop.f32.mrf.mxu0
        %v1545 = vadd.f32 0.0, %v1544
        %v1546 = vpop.f32.mrf.mxu0
        %1547 = vmatprep.mubr.f32.mxu0 0.0
        %1548 = vmatmul.mubr.f32.gmra.mxu0 %v1476
        %v1549 = vpop.f32.mrf.mxu0
        %v1550 = vadd.f32 0.0, %v1549
        %v1551 = vpop.f32.mrf.mxu0
        %1552 = vdwg.mxu0
        %v1553 = vpack.c.bf16 %v1550, %v1545
        %s1554 = scalar_lea.vmem [#allocation5], 384
        %v1555 = vld [vmem:[%s1554] sm:$0xff]
        %v1556 = vld [vmem:[%s1554 + $0x8] sm:$0xff]
        %v1557 = vld [vmem:[%s1554 + $0x10] sm:$0xff]
        %v1558 = vld [vmem:[%s1554 + $0x18] sm:$0xff]
        %v1559 = vld [vmem:[%s1554 + $0x20] sm:$0xff]
        %v1560 = vld [vmem:[%s1554 + $0x28] sm:$0xff]
        %v1561 = vld [vmem:[%s1554 + $0x30] sm:$0xff]
        %v1562 = vld [vmem:[%s1554 + $0x38] sm:$0xff]
        %v1563 = vld [vmem:[%s1554 + $0x40] sm:$0xff]
        %v1564 = vld [vmem:[%s1554 + $0x48] sm:$0xff]
        %v1565 = vld [vmem:[%s1554 + $0x50] sm:$0xff]
        %v1566 = vld [vmem:[%s1554 + $0x58] sm:$0xff]
        %v1567 = vld [vmem:[%s1554 + $0x60] sm:$0xff]
        %v1568 = vld [vmem:[%s1554 + $0x68] sm:$0xff]
        %v1569 = vld [vmem:[%s1554 + $0x70] sm:$0xff]
        %v1570 = vld [vmem:[%s1554 + $0x78] sm:$0xff]
        %v1571 = vld [vmem:[%s1554 + $0x80] sm:$0xff]
        %v1572 = vld [vmem:[%s1554 + $0x88] sm:$0xff]
        %v1573 = vld [vmem:[%s1554 + $0x90] sm:$0xff]
        %v1574 = vld [vmem:[%s1554 + $0x98] sm:$0xff]
        %v1575 = vld [vmem:[%s1554 + $0xa0] sm:$0xff]
        %v1576 = vld [vmem:[%s1554 + $0xa8] sm:$0xff]
        %v1577 = vld [vmem:[%s1554 + $0xb0] sm:$0xff]
        %v1578 = vld [vmem:[%s1554 + $0xb8] sm:$0xff]
        %v1603 = vunpack.c.l.b16 %v1555
        %v1604 = vunpack.c.h.b16 %v1555
        %v1605 = vunpack.c.l.b16 %v1556
        %v1606 = vunpack.c.h.b16 %v1556
        %v1607 = vunpack.c.l.b16 %v1557
        %v1608 = vunpack.c.h.b16 %v1557
        %v1609 = vunpack.c.l.b16 %v1558
        %v1610 = vunpack.c.h.b16 %v1558
        %v1611 = vunpack.c.l.b16 %v1559
        %v1612 = vunpack.c.h.b16 %v1559
        %v1613 = vunpack.c.l.b16 %v1560
        %v1614 = vunpack.c.h.b16 %v1560
        %v1615 = vunpack.c.l.b16 %v1561
        %v1616 = vunpack.c.h.b16 %v1561
        %v1617 = vunpack.c.l.b16 %v1562
        %v1618 = vunpack.c.h.b16 %v1562
        %v1619 = vunpack.c.l.b16 %v1563
        %v1620 = vunpack.c.h.b16 %v1563
        %v1621 = vunpack.c.l.b16 %v1564
        %v1622 = vunpack.c.h.b16 %v1564
        %v1623 = vunpack.c.l.b16 %v1565
        %v1624 = vunpack.c.h.b16 %v1565
        %v1625 = vunpack.c.l.b16 %v1566
        %v1626 = vunpack.c.h.b16 %v1566
        %v1627 = vunpack.c.l.b16 %v1567
        %v1628 = vunpack.c.h.b16 %v1567
        %v1629 = vunpack.c.l.b16 %v1568
        %v1630 = vunpack.c.h.b16 %v1568
        %v1631 = vunpack.c.l.b16 %v1569
        %v1632 = vunpack.c.h.b16 %v1569
        %v1633 = vunpack.c.l.b16 %v1570
        %v1634 = vunpack.c.h.b16 %v1570
        %v1635 = vunpack.c.l.b16 %v1571
        %v1636 = vunpack.c.h.b16 %v1571
        %v1637 = vunpack.c.l.b16 %v1572
        %v1638 = vunpack.c.h.b16 %v1572
        %v1639 = vunpack.c.l.b16 %v1573
        %v1640 = vunpack.c.h.b16 %v1573
        %v1641 = vunpack.c.l.b16 %v1574
        %v1642 = vunpack.c.h.b16 %v1574
        %v1643 = vunpack.c.l.b16 %v1575
        %v1644 = vunpack.c.h.b16 %v1575
        %v1645 = vunpack.c.l.b16 %v1576
        %v1646 = vunpack.c.h.b16 %v1576
        %v1647 = vunpack.c.l.b16 %v1577
        %v1648 = vunpack.c.h.b16 %v1577
        %v1649 = vunpack.c.l.b16 %v1578
        %v1650 = vunpack.c.h.b16 %v1578
        %v1651 = vpack.c.b16 %v1607, %v1603
        %v1652 = vpack.c.b16 %v1608, %v1604
        %v1653 = vpack.c.b16 %v1609, %v1605
        %v1654 = vpack.c.b16 %v1610, %v1606
        %v1655 = vpack.c.b16 %v1615, %v1611
        %v1656 = vpack.c.b16 %v1616, %v1612
        %v1657 = vpack.c.b16 %v1617, %v1613
        %v1658 = vpack.c.b16 %v1618, %v1614
        %v1659 = vpack.c.b16 %v1623, %v1619
        %v1660 = vpack.c.b16 %v1624, %v1620
        %v1661 = vpack.c.b16 %v1625, %v1621
        %v1662 = vpack.c.b16 %v1626, %v1622
        %v1663 = vpack.c.b16 %v1631, %v1627
        %v1664 = vpack.c.b16 %v1632, %v1628
        %v1665 = vpack.c.b16 %v1633, %v1629
        %v1666 = vpack.c.b16 %v1634, %v1630
        %v1667 = vpack.c.b16 %v1639, %v1635
        %v1668 = vpack.c.b16 %v1640, %v1636
        %v1669 = vpack.c.b16 %v1641, %v1637
        %v1670 = vpack.c.b16 %v1642, %v1638
        %v1671 = vpack.c.b16 %v1647, %v1643
        %v1672 = vpack.c.b16 %v1648, %v1644
        %v1673 = vpack.c.b16 %v1649, %v1645
        %v1674 = vpack.c.b16 %v1650, %v1646
        %v1700 = vsel %vm1170, %v1553, 0
        %1702 = vmatprep.subr.bf16.mxu0 0
        %1703 = vmatpush1.bf16.msra.mxu0 0
        %1704 = vmatprep.subr.bf16.mxu0 0
        %1705 = vmatpush1.bf16.msra.mxu0 0
        %1706 = vmatprep.subr.bf16.mxu0 %v1672
        %1707 = vmatpush1.bf16.msra.mxu0 %v1671
        %1708 = vmatprep.subr.bf16.mxu0 %v1668
        %1709 = vmatpush1.bf16.msra.mxu0 %v1667
        %1710 = vmatprep.subr.bf16.mxu0 %v1664
        %1711 = vmatpush1.bf16.msra.mxu0 %v1663
        %1712 = vmatprep.subr.bf16.mxu0 %v1660
        %1713 = vmatpush1.bf16.msra.mxu0 %v1659
        %1714 = vmatprep.subr.bf16.mxu0 %v1656
        %1715 = vmatpush1.bf16.msra.mxu0 %v1655
        %1716 = vmatprep.subr.bf16.mxu0 %v1652
        %1717 = vmatpush1.bf16.msra.mxu0 %v1651
        %1718 = vmatprep.subr.bf16.mxu0 0
        %1719 = vmatpush2.bf16.msra.mxu0 0
        %1720 = vmatprep.subr.bf16.mxu0 0
        %1721 = vmatpush2.bf16.msra.mxu0 0
        %1722 = vmatprep.subr.bf16.mxu0 0
        %1723 = vmatpush2.bf16.msra.mxu0 0
        %1724 = vmatprep.subr.bf16.mxu0 0
        %1725 = vmatpush2.bf16.msra.mxu0 0
        %1726 = vmatprep.subr.bf16.mxu0 0
        %1727 = vmatpush2.bf16.msra.mxu0 0
        %1728 = vmatprep.subr.bf16.mxu0 0
        %1729 = vmatpush2.bf16.msra.mxu0 0
        %1730 = vmatprep.subr.bf16.mxu0 0
        %1731 = vmatpush2.bf16.msra.mxu0 0
        %1732 = vmatprep.subr.bf16.mxu0 0
        %1733 = vmatpush2.bf16.msra.mxu0 0
        %1734 = vmatprep.mubr.bf16.mxu0 0
        %1735 = vmatmul.mubr.bf16.gmra.mxu0 %v1700
        %v1736 = vpop.f32.mrf.mxu0
        %v1737 = vadd.f32 0.0, %v1736
        %v1738 = vpop.f32.mrf.mxu0
        %v1739 = vadd.f32 0.0, %v1738
        %v1740 = vpop.f32.mrf.mxu0
        %v1741 = vadd.f32 0.0, %v1740
        %v1742 = vpop.f32.mrf.mxu0
        %v1743 = vadd.f32 0.0, %v1742
        %1744 = vdwg.mxu0
        %1745 = vmatprep.subr.bf16.mxu0 0
        %1746 = vmatpush1.bf16.msra.mxu0 0
        %1747 = vmatprep.subr.bf16.mxu0 0
        %1748 = vmatpush1.bf16.msra.mxu0 0
        %1749 = vmatprep.subr.bf16.mxu0 %v1674
        %1750 = vmatpush1.bf16.msra.mxu0 %v1673
        %1751 = vmatprep.subr.bf16.mxu0 %v1670
        %1752 = vmatpush1.bf16.msra.mxu0 %v1669
        %1753 = vmatprep.subr.bf16.mxu0 %v1666
        %1754 = vmatpush1.bf16.msra.mxu0 %v1665
        %1755 = vmatprep.subr.bf16.mxu0 %v1662
        %1756 = vmatpush1.bf16.msra.mxu0 %v1661
        %1757 = vmatprep.subr.bf16.mxu0 %v1658
        %1758 = vmatpush1.bf16.msra.mxu0 %v1657
        %1759 = vmatprep.subr.bf16.mxu0 %v1654
        %1760 = vmatpush1.bf16.msra.mxu0 %v1653
        %1761 = vmatprep.subr.bf16.mxu0 0
        %1762 = vmatpush2.bf16.msra.mxu0 0
        %1763 = vmatprep.subr.bf16.mxu0 0
        %1764 = vmatpush2.bf16.msra.mxu0 0
        %1765 = vmatprep.subr.bf16.mxu0 0
        %1766 = vmatpush2.bf16.msra.mxu0 0
        %1767 = vmatprep.subr.bf16.mxu0 0
        %1768 = vmatpush2.bf16.msra.mxu0 0
        %1769 = vmatprep.subr.bf16.mxu0 0
        %1770 = vmatpush2.bf16.msra.mxu0 0
        %1771 = vmatprep.subr.bf16.mxu0 0
        %1772 = vmatpush2.bf16.msra.mxu0 0
        %1773 = vmatprep.subr.bf16.mxu0 0
        %1774 = vmatpush2.bf16.msra.mxu0 0
        %1775 = vmatprep.subr.bf16.mxu0 0
        %1776 = vmatpush2.bf16.msra.mxu0 0
        %1777 = vmatprep.mubr.bf16.mxu0 0
        %1778 = vmatmul.mubr.bf16.gmra.mxu0 %v1700
        %v1779 = vpop.f32.mrf.mxu0
        %v1780 = vadd.f32 0.0, %v1779
        %v1781 = vpop.f32.mrf.mxu0
        %v1782 = vadd.f32 0.0, %v1781
        %v1783 = vpop.f32.mrf.mxu0
        %v1784 = vadd.f32 0.0, %v1783
        %v1785 = vpop.f32.mrf.mxu0
        %v1786 = vadd.f32 0.0, %v1785
        %1787 = vdwg.mxu0
        %v1788 = vadd.f32 %v1418, %v1737
        %v1789 = vadd.f32 %v1420, %v1739
        %v1790 = vadd.f32 %v1461, %v1780
        %v1791 = vadd.f32 %v1463, %v1782
        %v1792 = vadd.f32 %v1422, %v1741
        %v1793 = vadd.f32 %v1424, %v1743
        %v1794 = vadd.f32 %v1465, %v1784
        %v1795 = vadd.f32 %v1467, %v1786
        %v1796 = vld [vmem:[#allocation7] sm:$0xf]
        %v1798 = vlaneseq
        %v1799 = vshrl.u32 %v1798, 7
        %v1800 = vsub.s32 0, %v1799
        %v1801 = vrot.slane %v1796, %v1800
        %v1802 = vlaneseq
        %v1803 = vshrl.u32 %v1802, 7
        %v1804 = vsub.s32 1, %v1803
        %v1805 = vrot.slane %v1796, %v1804
        %v1806 = vlaneseq
        %v1807 = vshrl.u32 %v1806, 7
        %v1808 = vsub.s32 2, %v1807
        %v1809 = vrot.slane %v1796, %v1808
        %v1810 = vlaneseq
        %v1811 = vshrl.u32 %v1810, 7
        %v1812 = vsub.s32 3, %v1811
        %v1813 = vrot.slane %v1796, %v1812
        %v1818 = vadd.f32 %v1788, %v1801
        %v1819 = vadd.f32 %v1789, %v1805
        %v1820 = vadd.f32 %v1790, %v1809
        %v1821 = vadd.f32 %v1791, %v1813
        %v1822 = vadd.f32 %v1792, %v1801
        %v1823 = vadd.f32 %v1793, %v1805
        %v1824 = vadd.f32 %v1794, %v1809
        %v1825 = vadd.f32 %v1795, %v1813
        %v1826 = vmax.f32 %v1818, 0.0
        %v1827 = vmax.f32 %v1819, 0.0
        %v1828 = vmax.f32 %v1820, 0.0
        %v1829 = vmax.f32 %v1821, 0.0
        %v1830 = vmax.f32 %v1822, 0.0
        %v1831 = vmax.f32 %v1823, 0.0
        %v1832 = vmax.f32 %v1824, 0.0
        %v1833 = vmax.f32 %v1825, 0.0
        %v1834 = vpack.c.bf16 %v1830, %v1826
        %v1835 = vpack.c.bf16 %v1831, %v1827
        %v1836 = vpack.c.bf16 %v1832, %v1828
        %v1837 = vpack.c.bf16 %v1833, %v1829
        %v1838 = vunpack.c.l.bf16 %v1834
        %v1839 = vunpack.c.l.bf16 %v1835
        %v1840 = vunpack.c.l.bf16 %v1836
        %v1841 = vunpack.c.l.bf16 %v1837
        %v1842 = vunpack.c.h.bf16 %v1834
        %v1843 = vunpack.c.h.bf16 %v1835
        %v1844 = vunpack.c.h.bf16 %v1836
        %v1845 = vunpack.c.h.bf16 %v1837
        %v1846 = vld [vmem:[#allocation8] sm:$0xff]
        %vm1847 = vcmask 130048
        %v1849 = vsel %vm1847, %v1846, 0
        %1851 = vmatprep.subr.mxu0 0.0
        %1852 = vmatpush1.msra.mxu0 0.0
        %1853 = vmatprep.subr.mxu0 0.0
        %1854 = vmatpush1.msra.mxu0 0.0
        %1855 = vmatprep.subr.mxu0 0.0
        %1856 = vmatpush1.msra.mxu0 0.0
        %1857 = vmatprep.subr.mxu0 0.0
        %1858 = vmatpush1.msra.mxu0 0.0
        %1859 = vmatprep.subr.mxu0 0.0
        %1860 = vmatpush1.msra.mxu0 0.0
        %1861 = vmatprep.subr.mxu0 0.0
        %1862 = vmatpush1.msra.mxu0 0.0
        %1863 = vmatprep.subr.mxu0 0.0
        %1864 = vmatpush1.msra.mxu0 0.0
        %1865 = vmatprep.subr.mxu0 0.0
        %1866 = vmatpush1.msra.mxu0 0.0
        %1867 = vmatprep.subr.mxu0 0.0
        %1868 = vmatpush1.msra.mxu0 0.0
        %1869 = vmatprep.subr.mxu0 0.0
        %1870 = vmatpush1.msra.mxu0 0.0
        %1871 = vmatprep.subr.mxu0 0.0
        %1872 = vmatpush1.msra.mxu0 0.0
        %1873 = vmatprep.subr.mxu0 0.0
        %1874 = vmatpush1.msra.mxu0 0.0
        %1875 = vmatprep.subr.mxu0 0.0
        %1876 = vmatpush1.msra.mxu0 0.0
        %1877 = vmatprep.subr.mxu0 0.0
        %1878 = vmatpush1.msra.mxu0 0.0
        %1879 = vmatprep.subr.mxu0 %v1843
        %1880 = vmatpush1.msra.mxu0 %v1842
        %1881 = vmatprep.subr.mxu0 %v1839
        %1882 = vmatpush1.msra.mxu0 %v1838
        %1883 = vmatprep.subr.mxu0 0.0
        %1884 = vmatpush2.msra.mxu0 0.0
        %1885 = vmatprep.subr.mxu0 0.0
        %1886 = vmatpush2.msra.mxu0 0.0
        %1887 = vmatprep.subr.mxu0 0.0
        %1888 = vmatpush2.msra.mxu0 0.0
        %1889 = vmatprep.subr.mxu0 0.0
        %1890 = vmatpush2.msra.mxu0 0.0
        %1891 = vmatprep.subr.mxu0 0.0
        %1892 = vmatpush2.msra.mxu0 0.0
        %1893 = vmatprep.subr.mxu0 0.0
        %1894 = vmatpush2.msra.mxu0 0.0
        %1895 = vmatprep.subr.mxu0 0.0
        %1896 = vmatpush2.msra.mxu0 0.0
        %1897 = vmatprep.subr.mxu0 0.0
        %1898 = vmatpush2.msra.mxu0 0.0
        %1899 = vmatprep.subr.mxu0 0.0
        %1900 = vmatpush2.msra.mxu0 0.0
        %1901 = vmatprep.subr.mxu0 0.0
        %1902 = vmatpush2.msra.mxu0 0.0
        %1903 = vmatprep.subr.mxu0 0.0
        %1904 = vmatpush2.msra.mxu0 0.0
        %1905 = vmatprep.subr.mxu0 0.0
        %1906 = vmatpush2.msra.mxu0 0.0
        %1907 = vmatprep.subr.mxu0 0.0
        %1908 = vmatpush2.msra.mxu0 0.0
        %1909 = vmatprep.subr.mxu0 0.0
        %1910 = vmatpush2.msra.mxu0 0.0
        %1911 = vmatprep.subr.mxu0 0.0
        %1912 = vmatpush2.msra.mxu0 0.0
        %1913 = vmatprep.subr.mxu0 0.0
        %1914 = vmatpush2.msra.mxu0 0.0
        %1915 = vmatprep.mubr.f32.mxu0 0.0
        %1916 = vmatmul.mubr.f32.gmra.mxu0 %v1849
        %v1917 = vpop.f32.mrf.mxu0
        %v1918 = vadd.f32 0.0, %v1917
        %v1919 = vpop.f32.mrf.mxu0
        %v1920 = vadd.f32 0.0, %v1919
        %1921 = vdwg.mxu0
        %1922 = vmatprep.subr.mxu0 0.0
        %1923 = vmatpush1.msra.mxu0 0.0
        %1924 = vmatprep.subr.mxu0 0.0
        %1925 = vmatpush1.msra.mxu0 0.0
        %1926 = vmatprep.subr.mxu0 0.0
        %1927 = vmatpush1.msra.mxu0 0.0
        %1928 = vmatprep.subr.mxu0 0.0
        %1929 = vmatpush1.msra.mxu0 0.0
        %1930 = vmatprep.subr.mxu0 0.0
        %1931 = vmatpush1.msra.mxu0 0.0
        %1932 = vmatprep.subr.mxu0 0.0
        %1933 = vmatpush1.msra.mxu0 0.0
        %1934 = vmatprep.subr.mxu0 0.0
        %1935 = vmatpush1.msra.mxu0 0.0
        %1936 = vmatprep.subr.mxu0 0.0
        %1937 = vmatpush1.msra.mxu0 0.0
        %1938 = vmatprep.subr.mxu0 0.0
        %1939 = vmatpush1.msra.mxu0 0.0
        %1940 = vmatprep.subr.mxu0 0.0
        %1941 = vmatpush1.msra.mxu0 0.0
        %1942 = vmatprep.subr.mxu0 0.0
        %1943 = vmatpush1.msra.mxu0 0.0
        %1944 = vmatprep.subr.mxu0 0.0
        %1945 = vmatpush1.msra.mxu0 0.0
        %1946 = vmatprep.subr.mxu0 0.0
        %1947 = vmatpush1.msra.mxu0 0.0
        %1948 = vmatprep.subr.mxu0 0.0
        %1949 = vmatpush1.msra.mxu0 0.0
        %1950 = vmatprep.subr.mxu0 %v1845
        %1951 = vmatpush1.msra.mxu0 %v1844
        %1952 = vmatprep.subr.mxu0 %v1841
        %1953 = vmatpush1.msra.mxu0 %v1840
        %1954 = vmatprep.subr.mxu0 0.0
        %1955 = vmatpush2.msra.mxu0 0.0
        %1956 = vmatprep.subr.mxu0 0.0
        %1957 = vmatpush2.msra.mxu0 0.0
        %1958 = vmatprep.subr.mxu0 0.0
        %1959 = vmatpush2.msra.mxu0 0.0
        %1960 = vmatprep.subr.mxu0 0.0
        %1961 = vmatpush2.msra.mxu0 0.0
        %1962 = vmatprep.subr.mxu0 0.0
        %1963 = vmatpush2.msra.mxu0 0.0
        %1964 = vmatprep.subr.mxu0 0.0
        %1965 = vmatpush2.msra.mxu0 0.0
        %1966 = vmatprep.subr.mxu0 0.0
        %1967 = vmatpush2.msra.mxu0 0.0
        %1968 = vmatprep.subr.mxu0 0.0
        %1969 = vmatpush2.msra.mxu0 0.0
        %1970 = vmatprep.subr.mxu0 0.0
        %1971 = vmatpush2.msra.mxu0 0.0
        %1972 = vmatprep.subr.mxu0 0.0
        %1973 = vmatpush2.msra.mxu0 0.0
        %1974 = vmatprep.subr.mxu0 0.0
        %1975 = vmatpush2.msra.mxu0 0.0
        %1976 = vmatprep.subr.mxu0 0.0
        %1977 = vmatpush2.msra.mxu0 0.0
        %1978 = vmatprep.subr.mxu0 0.0
        %1979 = vmatpush2.msra.mxu0 0.0
        %1980 = vmatprep.subr.mxu0 0.0
        %1981 = vmatpush2.msra.mxu0 0.0
        %1982 = vmatprep.subr.mxu0 0.0
        %1983 = vmatpush2.msra.mxu0 0.0
        %1984 = vmatprep.subr.mxu0 0.0
        %1985 = vmatpush2.msra.mxu0 0.0
        %1986 = vmatprep.mubr.f32.mxu0 0.0
        %1987 = vmatmul.mubr.f32.gmra.mxu0 %v1849
        %v1988 = vpop.f32.mrf.mxu0
        %v1989 = vadd.f32 0.0, %v1988
        %v1990 = vpop.f32.mrf.mxu0
        %v1991 = vadd.f32 0.0, %v1990
        %1992 = vdwg.mxu0
        %v1993 = vpack.c.bf16 %v1918, %v1918
        %v1994 = vpack.c.bf16 %v1920, %v1920
        %v1995 = vpack.c.bf16 %v1989, %v1989
        %v1996 = vpack.c.bf16 %v1991, %v1991
        %v1997 = vld [vmem:[#allocation10] sm:$0xff]
        %v1998 = vld [vmem:[#allocation10 + $0x8] sm:$0xf]
        %v1999 = vld [vmem:[#allocation10 + $0xc] sm:$0xff]
        %v2000 = vld [vmem:[#allocation10 + $0x14] sm:$0xf]
        %v2001 = vld [vmem:[#allocation10 + $0x18] sm:$0xff]
        %v2002 = vld [vmem:[#allocation10 + $0x20] sm:$0xf]
        %v2003 = vld [vmem:[#allocation10 + $0x24] sm:$0xff]
        %v2004 = vld [vmem:[#allocation10 + $0x2c] sm:$0xf]
        %v2005 = vld [vmem:[#allocation10 + $0x30] sm:$0xff]
        %v2006 = vld [vmem:[#allocation10 + $0x38] sm:$0xf]
        %v2007 = vld [vmem:[#allocation10 + $0x3c] sm:$0xff]
        %v2008 = vld [vmem:[#allocation10 + $0x44] sm:$0xf]
        %v2009 = vld [vmem:[#allocation10 + $0x48] sm:$0xff]
        %v2010 = vld [vmem:[#allocation10 + $0x50] sm:$0xf]
        %v2011 = vld [vmem:[#allocation10 + $0x54] sm:$0xff]
        %v2012 = vld [vmem:[#allocation10 + $0x5c] sm:$0xf]
        %v2013 = vld [vmem:[#allocation10 + $0x60] sm:$0xff]
        %v2014 = vld [vmem:[#allocation10 + $0x68] sm:$0xf]
        %v2015 = vld [vmem:[#allocation10 + $0x6c] sm:$0xff]
        %v2016 = vld [vmem:[#allocation10 + $0x74] sm:$0xf]
        %v2017 = vld [vmem:[#allocation10 + $0x78] sm:$0xff]
        %v2018 = vld [vmem:[#allocation10 + $0x80] sm:$0xf]
        %v2019 = vld [vmem:[#allocation10 + $0x84] sm:$0xff]
        %v2020 = vld [vmem:[#allocation10 + $0x8c] sm:$0xf]
        %v2021 = vld [vmem:[#allocation10 + $0x90] sm:$0xff]
        %v2022 = vld [vmem:[#allocation10 + $0x98] sm:$0xf]
        %v2023 = vld [vmem:[#allocation10 + $0x9c] sm:$0xff]
        %v2024 = vld [vmem:[#allocation10 + $0xa4] sm:$0xf]
        %v2025 = vld [vmem:[#allocation10 + $0xa8] sm:$0xff]
        %v2026 = vld [vmem:[#allocation10 + $0xb0] sm:$0xf]
        %v2027 = vld [vmem:[#allocation10 + $0xb4] sm:$0xff]
        %v2028 = vld [vmem:[#allocation10 + $0xbc] sm:$0xf]
        %v2029 = vld [vmem:[#allocation10 + $0xc0] sm:$0xff]
        %v2030 = vld [vmem:[#allocation10 + $0xc8] sm:$0xf]
        %v2031 = vld [vmem:[#allocation10 + $0xcc] sm:$0xff]
        %v2032 = vld [vmem:[#allocation10 + $0xd4] sm:$0xf]
        %v2033 = vld [vmem:[#allocation10 + $0xd8] sm:$0xff]
        %v2034 = vld [vmem:[#allocation10 + $0xe0] sm:$0xf]
        %v2035 = vld [vmem:[#allocation10 + $0xe4] sm:$0xff]
        %v2036 = vld [vmem:[#allocation10 + $0xec] sm:$0xf]
        %v2037 = vld [vmem:[#allocation10 + $0xf0] sm:$0xff]
        %v2038 = vld [vmem:[#allocation10 + $0xf8] sm:$0xf]
        %v2039 = vld [vmem:[#allocation10 + $0xfc] sm:$0xff]
        %v2040 = vld [vmem:[#allocation10 + $0x104] sm:$0xf]
        %v2041 = vld [vmem:[#allocation10 + $0x108] sm:$0xff]
        %v2042 = vld [vmem:[#allocation10 + $0x110] sm:$0xf]
        %v2043 = vld [vmem:[#allocation10 + $0x114] sm:$0xff]
        %v2044 = vld [vmem:[#allocation10 + $0x11c] sm:$0xf]
        %v2045 = vld [vmem:[#allocation10 + $0x120] sm:$0xff]
        %v2046 = vld [vmem:[#allocation10 + $0x128] sm:$0xf]
        %v2047 = vld [vmem:[#allocation10 + $0x12c] sm:$0xff]
        %v2048 = vld [vmem:[#allocation10 + $0x134] sm:$0xf]
        %v2049 = vld [vmem:[#allocation10 + $0x138] sm:$0xff]
        %v2050 = vld [vmem:[#allocation10 + $0x140] sm:$0xf]
        %v2051 = vld [vmem:[#allocation10 + $0x144] sm:$0xff]
        %v2052 = vld [vmem:[#allocation10 + $0x14c] sm:$0xf]
        %v2053 = vld [vmem:[#allocation10 + $0x150] sm:$0xff]
        %v2054 = vld [vmem:[#allocation10 + $0x158] sm:$0xf]
        %v2055 = vld [vmem:[#allocation10 + $0x15c] sm:$0xff]
        %v2056 = vld [vmem:[#allocation10 + $0x164] sm:$0xf]
        %v2057 = vld [vmem:[#allocation10 + $0x168] sm:$0xff]
        %v2058 = vld [vmem:[#allocation10 + $0x170] sm:$0xf]
        %v2059 = vld [vmem:[#allocation10 + $0x174] sm:$0xff]
        %v2060 = vld [vmem:[#allocation10 + $0x17c] sm:$0xf]
        %v2061 = vld [vmem:[#allocation10 + $0x180] sm:$0xff]
        %v2062 = vld [vmem:[#allocation10 + $0x188] sm:$0xf]
        %v2063 = vld [vmem:[#allocation10 + $0x18c] sm:$0xff]
        %v2064 = vld [vmem:[#allocation10 + $0x194] sm:$0xf]
        %v2065 = vld [vmem:[#allocation10 + $0x198] sm:$0xff]
        %v2066 = vld [vmem:[#allocation10 + $0x1a0] sm:$0xf]
        %v2067 = vld [vmem:[#allocation10 + $0x1a4] sm:$0xff]
        %v2068 = vld [vmem:[#allocation10 + $0x1ac] sm:$0xf]
        %v2069 = vld [vmem:[#allocation10 + $0x1b0] sm:$0xff]
        %v2070 = vld [vmem:[#allocation10 + $0x1b8] sm:$0xf]
        %v2071 = vld [vmem:[#allocation10 + $0x1bc] sm:$0xff]
        %v2072 = vld [vmem:[#allocation10 + $0x1c4] sm:$0xf]
        %v2073 = vld [vmem:[#allocation10 + $0x1c8] sm:$0xff]
        %v2074 = vld [vmem:[#allocation10 + $0x1d0] sm:$0xf]
        %v2075 = vld [vmem:[#allocation10 + $0x1d4] sm:$0xff]
        %v2076 = vld [vmem:[#allocation10 + $0x1dc] sm:$0xf]
        %v2077 = vld [vmem:[#allocation10 + $0x1e0] sm:$0xff]
        %v2078 = vld [vmem:[#allocation10 + $0x1e8] sm:$0xf]
        %v2079 = vld [vmem:[#allocation10 + $0x1ec] sm:$0xff]
        %v2080 = vld [vmem:[#allocation10 + $0x1f4] sm:$0xf]
        %v2081 = vld [vmem:[#allocation10 + $0x1f8] sm:$0xff]
        %v2082 = vld [vmem:[#allocation10 + $0x200] sm:$0xf]
        %v2083 = vld [vmem:[#allocation10 + $0x204] sm:$0xff]
        %v2084 = vld [vmem:[#allocation10 + $0x20c] sm:$0xf]
        %v2085 = vld [vmem:[#allocation10 + $0x210] sm:$0xff]
        %v2086 = vld [vmem:[#allocation10 + $0x218] sm:$0xf]
        %v2087 = vld [vmem:[#allocation10 + $0x21c] sm:$0xff]
        %v2088 = vld [vmem:[#allocation10 + $0x224] sm:$0xf]
        %v2089 = vld [vmem:[#allocation10 + $0x228] sm:$0xff]
        %v2090 = vld [vmem:[#allocation10 + $0x230] sm:$0xf]
        %v2091 = vld [vmem:[#allocation10 + $0x234] sm:$0xff]
        %v2092 = vld [vmem:[#allocation10 + $0x23c] sm:$0xf]
        %v2093 = vld [vmem:[#allocation10 + $0x240] sm:$0xff]
        %v2094 = vld [vmem:[#allocation10 + $0x248] sm:$0xf]
        %v2095 = vld [vmem:[#allocation10 + $0x24c] sm:$0xff]
        %v2096 = vld [vmem:[#allocation10 + $0x254] sm:$0xf]
        %v2097 = vld [vmem:[#allocation10 + $0x258] sm:$0xff]
        %v2098 = vld [vmem:[#allocation10 + $0x260] sm:$0xf]
        %v2099 = vld [vmem:[#allocation10 + $0x264] sm:$0xff]
        %v2100 = vld [vmem:[#allocation10 + $0x26c] sm:$0xf]
        %v2101 = vld [vmem:[#allocation10 + $0x270] sm:$0xff]
        %v2102 = vld [vmem:[#allocation10 + $0x278] sm:$0xf]
        %v2103 = vld [vmem:[#allocation10 + $0x27c] sm:$0xff]
        %v2104 = vld [vmem:[#allocation10 + $0x284] sm:$0xf]
        %v2105 = vld [vmem:[#allocation10 + $0x288] sm:$0xff]
        %v2106 = vld [vmem:[#allocation10 + $0x290] sm:$0xf]
        %v2107 = vld [vmem:[#allocation10 + $0x294] sm:$0xff]
        %v2108 = vld [vmem:[#allocation10 + $0x29c] sm:$0xf]
        %v2109 = vld [vmem:[#allocation10 + $0x2a0] sm:$0xff]
        %v2110 = vld [vmem:[#allocation10 + $0x2a8] sm:$0xf]
        %v2111 = vld [vmem:[#allocation10 + $0x2ac] sm:$0xff]
        %v2112 = vld [vmem:[#allocation10 + $0x2b4] sm:$0xf]
        %v2113 = vld [vmem:[#allocation10 + $0x2b8] sm:$0xff]
        %v2114 = vld [vmem:[#allocation10 + $0x2c0] sm:$0xf]
        %v2115 = vld [vmem:[#allocation10 + $0x2c4] sm:$0xff]
        %v2116 = vld [vmem:[#allocation10 + $0x2cc] sm:$0xf]
        %v2117 = vld [vmem:[#allocation10 + $0x2d0] sm:$0xff]
        %v2118 = vld [vmem:[#allocation10 + $0x2d8] sm:$0xf]
        %v2119 = vld [vmem:[#allocation10 + $0x2dc] sm:$0xff]
        %v2120 = vld [vmem:[#allocation10 + $0x2e4] sm:$0xf]
        %v2121 = vld [vmem:[#allocation10 + $0x2e8] sm:$0xff]
        %v2122 = vld [vmem:[#allocation10 + $0x2f0] sm:$0xf]
        %v2123 = vld [vmem:[#allocation10 + $0x2f4] sm:$0xff]
        %v2124 = vld [vmem:[#allocation10 + $0x2fc] sm:$0xf]
        %s2125 = scalar_lea.vmem [#allocation8], 8
        %v2126 = vld [vmem:[%s2125] sm:$0xff]
        %v2128 = vsel %vm1847, %v2126, 0
        %2130 = vmatprep.subr.mxu0 0.0
        %2131 = vmatpush1.msra.mxu0 0.0
        %2132 = vmatprep.subr.mxu0 0.0
        %2133 = vmatpush1.msra.mxu0 0.0
        %2134 = vmatprep.subr.mxu0 0.0
        %2135 = vmatpush1.msra.mxu0 0.0
        %2136 = vmatprep.subr.mxu0 0.0
        %2137 = vmatpush1.msra.mxu0 0.0
        %2138 = vmatprep.subr.mxu0 0.0
        %2139 = vmatpush1.msra.mxu0 0.0
        %2140 = vmatprep.subr.mxu0 0.0
        %2141 = vmatpush1.msra.mxu0 0.0
        %2142 = vmatprep.subr.mxu0 0.0
        %2143 = vmatpush1.msra.mxu0 0.0
        %2144 = vmatprep.subr.mxu0 0.0
        %2145 = vmatpush1.msra.mxu0 0.0
        %2146 = vmatprep.subr.mxu0 0.0
        %2147 = vmatpush1.msra.mxu0 0.0
        %2148 = vmatprep.subr.mxu0 0.0
        %2149 = vmatpush1.msra.mxu0 0.0
        %2150 = vmatprep.subr.mxu0 0.0
        %2151 = vmatpush1.msra.mxu0 0.0
        %2152 = vmatprep.subr.mxu0 0.0
        %2153 = vmatpush1.msra.mxu0 0.0
        %2154 = vmatprep.subr.mxu0 0.0
        %2155 = vmatpush1.msra.mxu0 0.0
        %2156 = vmatprep.subr.mxu0 0.0
        %2157 = vmatpush1.msra.mxu0 0.0
        %2158 = vmatprep.subr.mxu0 %v1843
        %2159 = vmatpush1.msra.mxu0 %v1842
        %2160 = vmatprep.subr.mxu0 %v1839
        %2161 = vmatpush1.msra.mxu0 %v1838
        %2162 = vmatprep.subr.mxu0 0.0
        %2163 = vmatpush2.msra.mxu0 0.0
        %2164 = vmatprep.subr.mxu0 0.0
        %2165 = vmatpush2.msra.mxu0 0.0
        %2166 = vmatprep.subr.mxu0 0.0
        %2167 = vmatpush2.msra.mxu0 0.0
        %2168 = vmatprep.subr.mxu0 0.0
        %2169 = vmatpush2.msra.mxu0 0.0
        %2170 = vmatprep.subr.mxu0 0.0
        %2171 = vmatpush2.msra.mxu0 0.0
        %2172 = vmatprep.subr.mxu0 0.0
        %2173 = vmatpush2.msra.mxu0 0.0
        %2174 = vmatprep.subr.mxu0 0.0
        %2175 = vmatpush2.msra.mxu0 0.0
        %2176 = vmatprep.subr.mxu0 0.0
        %2177 = vmatpush2.msra.mxu0 0.0
        %2178 = vmatprep.subr.mxu0 0.0
        %2179 = vmatpush2.msra.mxu0 0.0
        %2180 = vmatprep.subr.mxu0 0.0
        %2181 = vmatpush2.msra.mxu0 0.0
        %2182 = vmatprep.subr.mxu0 0.0
        %2183 = vmatpush2.msra.mxu0 0.0
        %2184 = vmatprep.subr.mxu0 0.0
        %2185 = vmatpush2.msra.mxu0 0.0
        %2186 = vmatprep.subr.mxu0 0.0
        %2187 = vmatpush2.msra.mxu0 0.0
        %2188 = vmatprep.subr.mxu0 0.0
        %2189 = vmatpush2.msra.mxu0 0.0
        %2190 = vmatprep.subr.mxu0 0.0
        %2191 = vmatpush2.msra.mxu0 0.0
        %2192 = vmatprep.subr.mxu0 0.0
        %2193 = vmatpush2.msra.mxu0 0.0
        %2194 = vmatprep.mubr.f32.mxu0 0.0
        %2195 = vmatmul.mubr.f32.gmra.mxu0 %v2128
        %v2196 = vpop.f32.mrf.mxu0
        %v2197 = vadd.f32 0.0, %v2196
        %v2198 = vpop.f32.mrf.mxu0
        %v2199 = vadd.f32 0.0, %v2198
        %2200 = vdwg.mxu0
        %2201 = vmatprep.subr.mxu0 0.0
        %2202 = vmatpush1.msra.mxu0 0.0
        %2203 = vmatprep.subr.mxu0 0.0
        %2204 = vmatpush1.msra.mxu0 0.0
        %2205 = vmatprep.subr.mxu0 0.0
        %2206 = vmatpush1.msra.mxu0 0.0
        %2207 = vmatprep.subr.mxu0 0.0
        %2208 = vmatpush1.msra.mxu0 0.0
        %2209 = vmatprep.subr.mxu0 0.0
        %2210 = vmatpush1.msra.mxu0 0.0
        %2211 = vmatprep.subr.mxu0 0.0
        %2212 = vmatpush1.msra.mxu0 0.0
        %2213 = vmatprep.subr.mxu0 0.0
        %2214 = vmatpush1.msra.mxu0 0.0
        %2215 = vmatprep.subr.mxu0 0.0
        %2216 = vmatpush1.msra.mxu0 0.0
        %2217 = vmatprep.subr.mxu0 0.0
        %2218 = vmatpush1.msra.mxu0 0.0
        %2219 = vmatprep.subr.mxu0 0.0
        %2220 = vmatpush1.msra.mxu0 0.0
        %2221 = vmatprep.subr.mxu0 0.0
        %2222 = vmatpush1.msra.mxu0 0.0
        %2223 = vmatprep.subr.mxu0 0.0
        %2224 = vmatpush1.msra.mxu0 0.0
        %2225 = vmatprep.subr.mxu0 0.0
        %2226 = vmatpush1.msra.mxu0 0.0
        %2227 = vmatprep.subr.mxu0 0.0
        %2228 = vmatpush1.msra.mxu0 0.0
        %2229 = vmatprep.subr.mxu0 %v1845
        %2230 = vmatpush1.msra.mxu0 %v1844
        %2231 = vmatprep.subr.mxu0 %v1841
        %2232 = vmatpush1.msra.mxu0 %v1840
        %2233 = vmatprep.subr.mxu0 0.0
        %2234 = vmatpush2.msra.mxu0 0.0
        %2235 = vmatprep.subr.mxu0 0.0
        %2236 = vmatpush2.msra.mxu0 0.0
        %2237 = vmatprep.subr.mxu0 0.0
        %2238 = vmatpush2.msra.mxu0 0.0
        %2239 = vmatprep.subr.mxu0 0.0
        %2240 = vmatpush2.msra.mxu0 0.0
        %2241 = vmatprep.subr.mxu0 0.0
        %2242 = vmatpush2.msra.mxu0 0.0
        %2243 = vmatprep.subr.mxu0 0.0
        %2244 = vmatpush2.msra.mxu0 0.0
        %2245 = vmatprep.subr.mxu0 0.0
        %2246 = vmatpush2.msra.mxu0 0.0
        %2247 = vmatprep.subr.mxu0 0.0
        %2248 = vmatpush2.msra.mxu0 0.0
        %2249 = vmatprep.subr.mxu0 0.0
        %2250 = vmatpush2.msra.mxu0 0.0
        %2251 = vmatprep.subr.mxu0 0.0
        %2252 = vmatpush2.msra.mxu0 0.0
        %2253 = vmatprep.subr.mxu0 0.0
        %2254 = vmatpush2.msra.mxu0 0.0
        %2255 = vmatprep.subr.mxu0 0.0
        %2256 = vmatpush2.msra.mxu0 0.0
        %2257 = vmatprep.subr.mxu0 0.0
        %2258 = vmatpush2.msra.mxu0 0.0
        %2259 = vmatprep.subr.mxu0 0.0
        %2260 = vmatpush2.msra.mxu0 0.0
        %2261 = vmatprep.subr.mxu0 0.0
        %2262 = vmatpush2.msra.mxu0 0.0
        %2263 = vmatprep.subr.mxu0 0.0
        %2264 = vmatpush2.msra.mxu0 0.0
        %2265 = vmatprep.mubr.f32.mxu0 0.0
        %2266 = vmatmul.mubr.f32.gmra.mxu0 %v2128
        %v2267 = vpop.f32.mrf.mxu0
        %v2268 = vadd.f32 0.0, %v2267
        %v2269 = vpop.f32.mrf.mxu0
        %v2270 = vadd.f32 0.0, %v2269
        %2271 = vdwg.mxu0
        %v2272 = vpack.c.bf16 %v2197, %v2197
        %v2273 = vpack.c.bf16 %v2199, %v2199
        %v2274 = vpack.c.bf16 %v2268, %v2268
        %v2275 = vpack.c.bf16 %v2270, %v2270
        %s2276 = scalar_lea.vmem [#allocation10], 768
        %v2277 = vld [vmem:[%s2276] sm:$0xff]
        %v2278 = vld [vmem:[%s2276 + $0x8] sm:$0xf]
        %v2279 = vld [vmem:[%s2276 + $0xc] sm:$0xff]
        %v2280 = vld [vmem:[%s2276 + $0x14] sm:$0xf]
        %v2281 = vld [vmem:[%s2276 + $0x18] sm:$0xff]
        %v2282 = vld [vmem:[%s2276 + $0x20] sm:$0xf]
        %v2283 = vld [vmem:[%s2276 + $0x24] sm:$0xff]
        %v2284 = vld [vmem:[%s2276 + $0x2c] sm:$0xf]
        %v2285 = vld [vmem:[%s2276 + $0x30] sm:$0xff]
        %v2286 = vld [vmem:[%s2276 + $0x38] sm:$0xf]
        %v2287 = vld [vmem:[%s2276 + $0x3c] sm:$0xff]
        %v2288 = vld [vmem:[%s2276 + $0x44] sm:$0xf]
        %v2289 = vld [vmem:[%s2276 + $0x48] sm:$0xff]
        %v2290 = vld [vmem:[%s2276 + $0x50] sm:$0xf]
        %v2291 = vld [vmem:[%s2276 + $0x54] sm:$0xff]
        %v2292 = vld [vmem:[%s2276 + $0x5c] sm:$0xf]
        %v2293 = vld [vmem:[%s2276 + $0x60] sm:$0xff]
        %v2294 = vld [vmem:[%s2276 + $0x68] sm:$0xf]
        %v2295 = vld [vmem:[%s2276 + $0x6c] sm:$0xff]
        %v2296 = vld [vmem:[%s2276 + $0x74] sm:$0xf]
        %v2297 = vld [vmem:[%s2276 + $0x78] sm:$0xff]
        %v2298 = vld [vmem:[%s2276 + $0x80] sm:$0xf]
        %v2299 = vld [vmem:[%s2276 + $0x84] sm:$0xff]
        %v2300 = vld [vmem:[%s2276 + $0x8c] sm:$0xf]
        %v2301 = vld [vmem:[%s2276 + $0x90] sm:$0xff]
        %v2302 = vld [vmem:[%s2276 + $0x98] sm:$0xf]
        %v2303 = vld [vmem:[%s2276 + $0x9c] sm:$0xff]
        %v2304 = vld [vmem:[%s2276 + $0xa4] sm:$0xf]
        %v2305 = vld [vmem:[%s2276 + $0xa8] sm:$0xff]
        %v2306 = vld [vmem:[%s2276 + $0xb0] sm:$0xf]
        %v2307 = vld [vmem:[%s2276 + $0xb4] sm:$0xff]
        %v2308 = vld [vmem:[%s2276 + $0xbc] sm:$0xf]
        %v2309 = vld [vmem:[%s2276 + $0xc0] sm:$0xff]
        %v2310 = vld [vmem:[%s2276 + $0xc8] sm:$0xf]
        %v2311 = vld [vmem:[%s2276 + $0xcc] sm:$0xff]
        %v2312 = vld [vmem:[%s2276 + $0xd4] sm:$0xf]
        %v2313 = vld [vmem:[%s2276 + $0xd8] sm:$0xff]
        %v2314 = vld [vmem:[%s2276 + $0xe0] sm:$0xf]
        %v2315 = vld [vmem:[%s2276 + $0xe4] sm:$0xff]
        %v2316 = vld [vmem:[%s2276 + $0xec] sm:$0xf]
        %v2317 = vld [vmem:[%s2276 + $0xf0] sm:$0xff]
        %v2318 = vld [vmem:[%s2276 + $0xf8] sm:$0xf]
        %v2319 = vld [vmem:[%s2276 + $0xfc] sm:$0xff]
        %v2320 = vld [vmem:[%s2276 + $0x104] sm:$0xf]
        %v2321 = vld [vmem:[%s2276 + $0x108] sm:$0xff]
        %v2322 = vld [vmem:[%s2276 + $0x110] sm:$0xf]
        %v2323 = vld [vmem:[%s2276 + $0x114] sm:$0xff]
        %v2324 = vld [vmem:[%s2276 + $0x11c] sm:$0xf]
        %v2325 = vld [vmem:[%s2276 + $0x120] sm:$0xff]
        %v2326 = vld [vmem:[%s2276 + $0x128] sm:$0xf]
        %v2327 = vld [vmem:[%s2276 + $0x12c] sm:$0xff]
        %v2328 = vld [vmem:[%s2276 + $0x134] sm:$0xf]
        %v2329 = vld [vmem:[%s2276 + $0x138] sm:$0xff]
        %v2330 = vld [vmem:[%s2276 + $0x140] sm:$0xf]
        %v2331 = vld [vmem:[%s2276 + $0x144] sm:$0xff]
        %v2332 = vld [vmem:[%s2276 + $0x14c] sm:$0xf]
        %v2333 = vld [vmem:[%s2276 + $0x150] sm:$0xff]
        %v2334 = vld [vmem:[%s2276 + $0x158] sm:$0xf]
        %v2335 = vld [vmem:[%s2276 + $0x15c] sm:$0xff]
        %v2336 = vld [vmem:[%s2276 + $0x164] sm:$0xf]
        %v2337 = vld [vmem:[%s2276 + $0x168] sm:$0xff]
        %v2338 = vld [vmem:[%s2276 + $0x170] sm:$0xf]
        %v2339 = vld [vmem:[%s2276 + $0x174] sm:$0xff]
        %v2340 = vld [vmem:[%s2276 + $0x17c] sm:$0xf]
        %v2341 = vld [vmem:[%s2276 + $0x180] sm:$0xff]
        %v2342 = vld [vmem:[%s2276 + $0x188] sm:$0xf]
        %v2343 = vld [vmem:[%s2276 + $0x18c] sm:$0xff]
        %v2344 = vld [vmem:[%s2276 + $0x194] sm:$0xf]
        %v2345 = vld [vmem:[%s2276 + $0x198] sm:$0xff]
        %v2346 = vld [vmem:[%s2276 + $0x1a0] sm:$0xf]
        %v2347 = vld [vmem:[%s2276 + $0x1a4] sm:$0xff]
        %v2348 = vld [vmem:[%s2276 + $0x1ac] sm:$0xf]
        %v2349 = vld [vmem:[%s2276 + $0x1b0] sm:$0xff]
        %v2350 = vld [vmem:[%s2276 + $0x1b8] sm:$0xf]
        %v2351 = vld [vmem:[%s2276 + $0x1bc] sm:$0xff]
        %v2352 = vld [vmem:[%s2276 + $0x1c4] sm:$0xf]
        %v2353 = vld [vmem:[%s2276 + $0x1c8] sm:$0xff]
        %v2354 = vld [vmem:[%s2276 + $0x1d0] sm:$0xf]
        %v2355 = vld [vmem:[%s2276 + $0x1d4] sm:$0xff]
        %v2356 = vld [vmem:[%s2276 + $0x1dc] sm:$0xf]
        %v2357 = vld [vmem:[%s2276 + $0x1e0] sm:$0xff]
        %v2358 = vld [vmem:[%s2276 + $0x1e8] sm:$0xf]
        %v2359 = vld [vmem:[%s2276 + $0x1ec] sm:$0xff]
        %v2360 = vld [vmem:[%s2276 + $0x1f4] sm:$0xf]
        %v2361 = vld [vmem:[%s2276 + $0x1f8] sm:$0xff]
        %v2362 = vld [vmem:[%s2276 + $0x200] sm:$0xf]
        %v2363 = vld [vmem:[%s2276 + $0x204] sm:$0xff]
        %v2364 = vld [vmem:[%s2276 + $0x20c] sm:$0xf]
        %v2365 = vld [vmem:[%s2276 + $0x210] sm:$0xff]
        %v2366 = vld [vmem:[%s2276 + $0x218] sm:$0xf]
        %v2367 = vld [vmem:[%s2276 + $0x21c] sm:$0xff]
        %v2368 = vld [vmem:[%s2276 + $0x224] sm:$0xf]
        %v2369 = vld [vmem:[%s2276 + $0x228] sm:$0xff]
        %v2370 = vld [vmem:[%s2276 + $0x230] sm:$0xf]
        %v2371 = vld [vmem:[%s2276 + $0x234] sm:$0xff]
        %v2372 = vld [vmem:[%s2276 + $0x23c] sm:$0xf]
        %v2373 = vld [vmem:[%s2276 + $0x240] sm:$0xff]
        %v2374 = vld [vmem:[%s2276 + $0x248] sm:$0xf]
        %v2375 = vld [vmem:[%s2276 + $0x24c] sm:$0xff]
        %v2376 = vld [vmem:[%s2276 + $0x254] sm:$0xf]
        %v2377 = vld [vmem:[%s2276 + $0x258] sm:$0xff]
        %v2378 = vld [vmem:[%s2276 + $0x260] sm:$0xf]
        %v2379 = vld [vmem:[%s2276 + $0x264] sm:$0xff]
        %v2380 = vld [vmem:[%s2276 + $0x26c] sm:$0xf]
        %v2381 = vld [vmem:[%s2276 + $0x270] sm:$0xff]
        %v2382 = vld [vmem:[%s2276 + $0x278] sm:$0xf]
        %v2383 = vld [vmem:[%s2276 + $0x27c] sm:$0xff]
        %v2384 = vld [vmem:[%s2276 + $0x284] sm:$0xf]
        %v2385 = vld [vmem:[%s2276 + $0x288] sm:$0xff]
        %v2386 = vld [vmem:[%s2276 + $0x290] sm:$0xf]
        %v2387 = vld [vmem:[%s2276 + $0x294] sm:$0xff]
        %v2388 = vld [vmem:[%s2276 + $0x29c] sm:$0xf]
        %v2389 = vld [vmem:[%s2276 + $0x2a0] sm:$0xff]
        %v2390 = vld [vmem:[%s2276 + $0x2a8] sm:$0xf]
        %v2391 = vld [vmem:[%s2276 + $0x2ac] sm:$0xff]
        %v2392 = vld [vmem:[%s2276 + $0x2b4] sm:$0xf]
        %v2393 = vld [vmem:[%s2276 + $0x2b8] sm:$0xff]
        %v2394 = vld [vmem:[%s2276 + $0x2c0] sm:$0xf]
        %v2395 = vld [vmem:[%s2276 + $0x2c4] sm:$0xff]
        %v2396 = vld [vmem:[%s2276 + $0x2cc] sm:$0xf]
        %v2397 = vld [vmem:[%s2276 + $0x2d0] sm:$0xff]
        %v2398 = vld [vmem:[%s2276 + $0x2d8] sm:$0xf]
        %v2399 = vld [vmem:[%s2276 + $0x2dc] sm:$0xff]
        %v2400 = vld [vmem:[%s2276 + $0x2e4] sm:$0xf]
        %v2401 = vld [vmem:[%s2276 + $0x2e8] sm:$0xff]
        %v2402 = vld [vmem:[%s2276 + $0x2f0] sm:$0xf]
        %v2403 = vld [vmem:[%s2276 + $0x2f4] sm:$0xff]
        %v2404 = vld [vmem:[%s2276 + $0x2fc] sm:$0xf]
        %v2533 = vunpack.c.l.b16 %v2277
        %v2534 = vunpack.c.h.b16 %v2277
        %v2535 = vunpack.c.l.b16 %v2278
        %v2536 = vunpack.c.l.b16 %v2279
        %v2537 = vunpack.c.h.b16 %v2279
        %v2538 = vunpack.c.l.b16 %v2280
        %v2539 = vunpack.c.l.b16 %v2281
        %v2540 = vunpack.c.h.b16 %v2281
        %v2541 = vunpack.c.l.b16 %v2282
        %v2542 = vunpack.c.l.b16 %v2283
        %v2543 = vunpack.c.h.b16 %v2283
        %v2544 = vunpack.c.l.b16 %v2284
        %v2545 = vunpack.c.l.b16 %v2285
        %v2546 = vunpack.c.h.b16 %v2285
        %v2547 = vunpack.c.l.b16 %v2286
        %v2548 = vunpack.c.l.b16 %v2287
        %v2549 = vunpack.c.h.b16 %v2287
        %v2550 = vunpack.c.l.b16 %v2288
        %v2551 = vunpack.c.l.b16 %v2289
        %v2552 = vunpack.c.h.b16 %v2289
        %v2553 = vunpack.c.l.b16 %v2290
        %v2554 = vunpack.c.l.b16 %v2291
        %v2555 = vunpack.c.h.b16 %v2291
        %v2556 = vunpack.c.l.b16 %v2292
        %v2557 = vunpack.c.l.b16 %v2293
        %v2558 = vunpack.c.h.b16 %v2293
        %v2559 = vunpack.c.l.b16 %v2294
        %v2560 = vunpack.c.l.b16 %v2295
        %v2561 = vunpack.c.h.b16 %v2295
        %v2562 = vunpack.c.l.b16 %v2296
        %v2563 = vunpack.c.l.b16 %v2297
        %v2564 = vunpack.c.h.b16 %v2297
        %v2565 = vunpack.c.l.b16 %v2298
        %v2566 = vunpack.c.l.b16 %v2299
        %v2567 = vunpack.c.h.b16 %v2299
        %v2568 = vunpack.c.l.b16 %v2300
        %v2569 = vunpack.c.l.b16 %v2301
        %v2570 = vunpack.c.h.b16 %v2301
        %v2571 = vunpack.c.l.b16 %v2302
        %v2572 = vunpack.c.l.b16 %v2303
        %v2573 = vunpack.c.h.b16 %v2303
        %v2574 = vunpack.c.l.b16 %v2304
        %v2575 = vunpack.c.l.b16 %v2305
        %v2576 = vunpack.c.h.b16 %v2305
        %v2577 = vunpack.c.l.b16 %v2306
        %v2578 = vunpack.c.l.b16 %v2307
        %v2579 = vunpack.c.h.b16 %v2307
        %v2580 = vunpack.c.l.b16 %v2308
        %v2581 = vunpack.c.l.b16 %v2309
        %v2582 = vunpack.c.h.b16 %v2309
        %v2583 = vunpack.c.l.b16 %v2310
        %v2584 = vunpack.c.l.b16 %v2311
        %v2585 = vunpack.c.h.b16 %v2311
        %v2586 = vunpack.c.l.b16 %v2312
        %v2587 = vunpack.c.l.b16 %v2313
        %v2588 = vunpack.c.h.b16 %v2313
        %v2589 = vunpack.c.l.b16 %v2314
        %v2590 = vunpack.c.l.b16 %v2315
        %v2591 = vunpack.c.h.b16 %v2315
        %v2592 = vunpack.c.l.b16 %v2316
        %v2593 = vunpack.c.l.b16 %v2317
        %v2594 = vunpack.c.h.b16 %v2317
        %v2595 = vunpack.c.l.b16 %v2318
        %v2596 = vunpack.c.l.b16 %v2319
        %v2597 = vunpack.c.h.b16 %v2319
        %v2598 = vunpack.c.l.b16 %v2320
        %v2599 = vunpack.c.l.b16 %v2321
        %v2600 = vunpack.c.h.b16 %v2321
        %v2601 = vunpack.c.l.b16 %v2322
        %v2602 = vunpack.c.l.b16 %v2323
        %v2603 = vunpack.c.h.b16 %v2323
        %v2604 = vunpack.c.l.b16 %v2324
        %v2605 = vunpack.c.l.b16 %v2325
        %v2606 = vunpack.c.h.b16 %v2325
        %v2607 = vunpack.c.l.b16 %v2326
        %v2608 = vunpack.c.l.b16 %v2327
        %v2609 = vunpack.c.h.b16 %v2327
        %v2610 = vunpack.c.l.b16 %v2328
        %v2611 = vunpack.c.l.b16 %v2329
        %v2612 = vunpack.c.h.b16 %v2329
        %v2613 = vunpack.c.l.b16 %v2330
        %v2614 = vunpack.c.l.b16 %v2331
        %v2615 = vunpack.c.h.b16 %v2331
        %v2616 = vunpack.c.l.b16 %v2332
        %v2617 = vunpack.c.l.b16 %v2333
        %v2618 = vunpack.c.h.b16 %v2333
        %v2619 = vunpack.c.l.b16 %v2334
        %v2620 = vunpack.c.l.b16 %v2335
        %v2621 = vunpack.c.h.b16 %v2335
        %v2622 = vunpack.c.l.b16 %v2336
        %v2623 = vunpack.c.l.b16 %v2337
        %v2624 = vunpack.c.h.b16 %v2337
        %v2625 = vunpack.c.l.b16 %v2338
        %v2626 = vunpack.c.l.b16 %v2339
        %v2627 = vunpack.c.h.b16 %v2339
        %v2628 = vunpack.c.l.b16 %v2340
        %v2629 = vunpack.c.l.b16 %v2341
        %v2630 = vunpack.c.h.b16 %v2341
        %v2631 = vunpack.c.l.b16 %v2342
        %v2632 = vunpack.c.l.b16 %v2343
        %v2633 = vunpack.c.h.b16 %v2343
        %v2634 = vunpack.c.l.b16 %v2344
        %v2635 = vunpack.c.l.b16 %v2345
        %v2636 = vunpack.c.h.b16 %v2345
        %v2637 = vunpack.c.l.b16 %v2346
        %v2638 = vunpack.c.l.b16 %v2347
        %v2639 = vunpack.c.h.b16 %v2347
        %v2640 = vunpack.c.l.b16 %v2348
        %v2641 = vunpack.c.l.b16 %v2349
        %v2642 = vunpack.c.h.b16 %v2349
        %v2643 = vunpack.c.l.b16 %v2350
        %v2644 = vunpack.c.l.b16 %v2351
        %v2645 = vunpack.c.h.b16 %v2351
        %v2646 = vunpack.c.l.b16 %v2352
        %v2647 = vunpack.c.l.b16 %v2353
        %v2648 = vunpack.c.h.b16 %v2353
        %v2649 = vunpack.c.l.b16 %v2354
        %v2650 = vunpack.c.l.b16 %v2355
        %v2651 = vunpack.c.h.b16 %v2355
        %v2652 = vunpack.c.l.b16 %v2356
        %v2653 = vunpack.c.l.b16 %v2357
        %v2654 = vunpack.c.h.b16 %v2357
        %v2655 = vunpack.c.l.b16 %v2358
        %v2656 = vunpack.c.l.b16 %v2359
        %v2657 = vunpack.c.h.b16 %v2359
        %v2658 = vunpack.c.l.b16 %v2360
        %v2659 = vunpack.c.l.b16 %v2361
        %v2660 = vunpack.c.h.b16 %v2361
        %v2661 = vunpack.c.l.b16 %v2362
        %v2662 = vunpack.c.l.b16 %v2363
        %v2663 = vunpack.c.h.b16 %v2363
        %v2664 = vunpack.c.l.b16 %v2364
        %v2665 = vunpack.c.l.b16 %v2365
        %v2666 = vunpack.c.h.b16 %v2365
        %v2667 = vunpack.c.l.b16 %v2366
        %v2668 = vunpack.c.l.b16 %v2367
        %v2669 = vunpack.c.h.b16 %v2367
        %v2670 = vunpack.c.l.b16 %v2368
        %v2671 = vunpack.c.l.b16 %v2369
        %v2672 = vunpack.c.h.b16 %v2369
        %v2673 = vunpack.c.l.b16 %v2370
        %v2674 = vunpack.c.l.b16 %v2371
        %v2675 = vunpack.c.h.b16 %v2371
        %v2676 = vunpack.c.l.b16 %v2372
        %v2677 = vunpack.c.l.b16 %v2373
        %v2678 = vunpack.c.h.b16 %v2373
        %v2679 = vunpack.c.l.b16 %v2374
        %v2680 = vunpack.c.l.b16 %v2375
        %v2681 = vunpack.c.h.b16 %v2375
        %v2682 = vunpack.c.l.b16 %v2376
        %v2683 = vunpack.c.l.b16 %v2377
        %v2684 = vunpack.c.h.b16 %v2377
        %v2685 = vunpack.c.l.b16 %v2378
        %v2686 = vunpack.c.l.b16 %v2379
        %v2687 = vunpack.c.h.b16 %v2379
        %v2688 = vunpack.c.l.b16 %v2380
        %v2689 = vunpack.c.l.b16 %v2381
        %v2690 = vunpack.c.h.b16 %v2381
        %v2691 = vunpack.c.l.b16 %v2382
        %v2692 = vunpack.c.l.b16 %v2383
        %v2693 = vunpack.c.h.b16 %v2383
        %v2694 = vunpack.c.l.b16 %v2384
        %v2695 = vunpack.c.l.b16 %v2385
        %v2696 = vunpack.c.h.b16 %v2385
        %v2697 = vunpack.c.l.b16 %v2386
        %v2698 = vunpack.c.l.b16 %v2387
        %v2699 = vunpack.c.h.b16 %v2387
        %v2700 = vunpack.c.l.b16 %v2388
        %v2701 = vunpack.c.l.b16 %v2389
        %v2702 = vunpack.c.h.b16 %v2389
        %v2703 = vunpack.c.l.b16 %v2390
        %v2704 = vunpack.c.l.b16 %v2391
        %v2705 = vunpack.c.h.b16 %v2391
        %v2706 = vunpack.c.l.b16 %v2392
        %v2707 = vunpack.c.l.b16 %v2393
        %v2708 = vunpack.c.h.b16 %v2393
        %v2709 = vunpack.c.l.b16 %v2394
        %v2710 = vunpack.c.l.b16 %v2395
        %v2711 = vunpack.c.h.b16 %v2395
        %v2712 = vunpack.c.l.b16 %v2396
        %v2713 = vunpack.c.l.b16 %v2397
        %v2714 = vunpack.c.h.b16 %v2397
        %v2715 = vunpack.c.l.b16 %v2398
        %v2716 = vunpack.c.l.b16 %v2399
        %v2717 = vunpack.c.h.b16 %v2399
        %v2718 = vunpack.c.l.b16 %v2400
        %v2719 = vunpack.c.l.b16 %v2401
        %v2720 = vunpack.c.h.b16 %v2401
        %v2721 = vunpack.c.l.b16 %v2402
        %v2722 = vunpack.c.l.b16 %v2403
        %v2723 = vunpack.c.h.b16 %v2403
        %v2724 = vunpack.c.l.b16 %v2404
        %v2725 = vpack.c.b16 %v2536, %v2533
        %v2726 = vpack.c.b16 %v2537, %v2534
        %v2727 = vpack.c.b16 %v2538, %v2535
        %v2728 = vpack.c.b16 %v2542, %v2539
        %v2729 = vpack.c.b16 %v2543, %v2540
        %v2730 = vpack.c.b16 %v2544, %v2541
        %v2731 = vpack.c.b16 %v2548, %v2545
        %v2732 = vpack.c.b16 %v2549, %v2546
        %v2733 = vpack.c.b16 %v2550, %v2547
        %v2734 = vpack.c.b16 %v2554, %v2551
        %v2735 = vpack.c.b16 %v2555, %v2552
        %v2736 = vpack.c.b16 %v2556, %v2553
        %v2737 = vpack.c.b16 %v2560, %v2557
        %v2738 = vpack.c.b16 %v2561, %v2558
        %v2739 = vpack.c.b16 %v2562, %v2559
        %v2740 = vpack.c.b16 %v2566, %v2563
        %v2741 = vpack.c.b16 %v2567, %v2564
        %v2742 = vpack.c.b16 %v2568, %v2565
        %v2743 = vpack.c.b16 %v2572, %v2569
        %v2744 = vpack.c.b16 %v2573, %v2570
        %v2745 = vpack.c.b16 %v2574, %v2571
        %v2746 = vpack.c.b16 %v2578, %v2575
        %v2747 = vpack.c.b16 %v2579, %v2576
        %v2748 = vpack.c.b16 %v2580, %v2577
        %v2749 = vpack.c.b16 %v2584, %v2581
        %v2750 = vpack.c.b16 %v2585, %v2582
        %v2751 = vpack.c.b16 %v2586, %v2583
        %v2752 = vpack.c.b16 %v2590, %v2587
        %v2753 = vpack.c.b16 %v2591, %v2588
        %v2754 = vpack.c.b16 %v2592, %v2589
        %v2755 = vpack.c.b16 %v2596, %v2593
        %v2756 = vpack.c.b16 %v2597, %v2594
        %v2757 = vpack.c.b16 %v2598, %v2595
        %v2758 = vpack.c.b16 %v2602, %v2599
        %v2759 = vpack.c.b16 %v2603, %v2600
        %v2760 = vpack.c.b16 %v2604, %v2601
        %v2761 = vpack.c.b16 %v2608, %v2605
        %v2762 = vpack.c.b16 %v2609, %v2606
        %v2763 = vpack.c.b16 %v2610, %v2607
        %v2764 = vpack.c.b16 %v2614, %v2611
        %v2765 = vpack.c.b16 %v2615, %v2612
        %v2766 = vpack.c.b16 %v2616, %v2613
        %v2767 = vpack.c.b16 %v2620, %v2617
        %v2768 = vpack.c.b16 %v2621, %v2618
        %v2769 = vpack.c.b16 %v2622, %v2619
        %v2770 = vpack.c.b16 %v2626, %v2623
        %v2771 = vpack.c.b16 %v2627, %v2624
        %v2772 = vpack.c.b16 %v2628, %v2625
        %v2773 = vpack.c.b16 %v2632, %v2629
        %v2774 = vpack.c.b16 %v2633, %v2630
        %v2775 = vpack.c.b16 %v2634, %v2631
        %v2776 = vpack.c.b16 %v2638, %v2635
        %v2777 = vpack.c.b16 %v2639, %v2636
        %v2778 = vpack.c.b16 %v2640, %v2637
        %v2779 = vpack.c.b16 %v2644, %v2641
        %v2780 = vpack.c.b16 %v2645, %v2642
        %v2781 = vpack.c.b16 %v2646, %v2643
        %v2782 = vpack.c.b16 %v2650, %v2647
        %v2783 = vpack.c.b16 %v2651, %v2648
        %v2784 = vpack.c.b16 %v2652, %v2649
        %v2785 = vpack.c.b16 %v2656, %v2653
        %v2786 = vpack.c.b16 %v2657, %v2654
        %v2787 = vpack.c.b16 %v2658, %v2655
        %v2788 = vpack.c.b16 %v2662, %v2659
        %v2789 = vpack.c.b16 %v2663, %v2660
        %v2790 = vpack.c.b16 %v2664, %v2661
        %v2791 = vpack.c.b16 %v2668, %v2665
        %v2792 = vpack.c.b16 %v2669, %v2666
        %v2793 = vpack.c.b16 %v2670, %v2667
        %v2794 = vpack.c.b16 %v2674, %v2671
        %v2795 = vpack.c.b16 %v2675, %v2672
        %v2796 = vpack.c.b16 %v2676, %v2673
        %v2797 = vpack.c.b16 %v2680, %v2677
        %v2798 = vpack.c.b16 %v2681, %v2678
        %v2799 = vpack.c.b16 %v2682, %v2679
        %v2800 = vpack.c.b16 %v2686, %v2683
        %v2801 = vpack.c.b16 %v2687, %v2684
        %v2802 = vpack.c.b16 %v2688, %v2685
        %v2803 = vpack.c.b16 %v2692, %v2689
        %v2804 = vpack.c.b16 %v2693, %v2690
        %v2805 = vpack.c.b16 %v2694, %v2691
        %v2806 = vpack.c.b16 %v2698, %v2695
        %v2807 = vpack.c.b16 %v2699, %v2696
        %v2808 = vpack.c.b16 %v2700, %v2697
        %v2809 = vpack.c.b16 %v2704, %v2701
        %v2810 = vpack.c.b16 %v2705, %v2702
        %v2811 = vpack.c.b16 %v2706, %v2703
        %v2812 = vpack.c.b16 %v2710, %v2707
        %v2813 = vpack.c.b16 %v2711, %v2708
        %v2814 = vpack.c.b16 %v2712, %v2709
        %v2815 = vpack.c.b16 %v2716, %v2713
        %v2816 = vpack.c.b16 %v2717, %v2714
        %v2817 = vpack.c.b16 %v2718, %v2715
        %v2818 = vpack.c.b16 %v2722, %v2719
        %v2819 = vpack.c.b16 %v2723, %v2720
        %v2820 = vpack.c.b16 %v2724, %v2721
        %2917 = vmatprep.subr.bf16.mxu0 %v2747
        %2918 = vmatpush1.bf16.msra.mxu0 %v2746
        %2919 = vmatprep.subr.bf16.mxu0 %v2744
        %2920 = vmatpush1.bf16.msra.mxu0 %v2743
        %2921 = vmatprep.subr.bf16.mxu0 %v2741
        %2922 = vmatpush1.bf16.msra.mxu0 %v2740
        %2923 = vmatprep.subr.bf16.mxu0 %v2738
        %2924 = vmatpush1.bf16.msra.mxu0 %v2737
        %2925 = vmatprep.subr.bf16.mxu0 %v2735
        %2926 = vmatpush1.bf16.msra.mxu0 %v2734
        %2927 = vmatprep.subr.bf16.mxu0 %v2732
        %2928 = vmatpush1.bf16.msra.mxu0 %v2731
        %2929 = vmatprep.subr.bf16.mxu0 %v2729
        %2930 = vmatpush1.bf16.msra.mxu0 %v2728
        %2931 = vmatprep.subr.bf16.mxu0 %v2726
        %2932 = vmatpush1.bf16.msra.mxu0 %v2725
        %2933 = vmatprep.subr.bf16.mxu0 %v2771
        %2934 = vmatpush2.bf16.msra.mxu0 %v2770
        %2935 = vmatprep.subr.bf16.mxu0 %v2768
        %2936 = vmatpush2.bf16.msra.mxu0 %v2767
        %2937 = vmatprep.subr.bf16.mxu0 %v2765
        %2938 = vmatpush2.bf16.msra.mxu0 %v2764
        %2939 = vmatprep.subr.bf16.mxu0 %v2762
        %2940 = vmatpush2.bf16.msra.mxu0 %v2761
        %2941 = vmatprep.subr.bf16.mxu0 %v2759
        %2942 = vmatpush2.bf16.msra.mxu0 %v2758
        %2943 = vmatprep.subr.bf16.mxu0 %v2756
        %2944 = vmatpush2.bf16.msra.mxu0 %v2755
        %2945 = vmatprep.subr.bf16.mxu0 %v2753
        %2946 = vmatpush2.bf16.msra.mxu0 %v2752
        %2947 = vmatprep.subr.bf16.mxu0 %v2750
        %2948 = vmatpush2.bf16.msra.mxu0 %v2749
        %2949 = vmatprep.mubr.bf16.mxu0 %v2273
        %2950 = vmatmul.mubr.bf16.gmra.mxu0 %v2272
        %v2951 = vpop.f32.mrf.mxu0
        %v2952 = vadd.f32 0.0, %v2951
        %v2953 = vpop.f32.mrf.mxu0
        %v2954 = vadd.f32 0.0, %v2953
        %v2955 = vpop.f32.mrf.mxu0
        %v2956 = vpop.f32.mrf.mxu0
        %2957 = vdwg.mxu0
        %2958 = vmatprep.subr.bf16.mxu0 %v2795
        %2959 = vmatpush1.bf16.msra.mxu0 %v2794
        %2960 = vmatprep.subr.bf16.mxu0 %v2792
        %2961 = vmatpush1.bf16.msra.mxu0 %v2791
        %2962 = vmatprep.subr.bf16.mxu0 %v2789
        %2963 = vmatpush1.bf16.msra.mxu0 %v2788
        %2964 = vmatprep.subr.bf16.mxu0 %v2786
        %2965 = vmatpush1.bf16.msra.mxu0 %v2785
        %2966 = vmatprep.subr.bf16.mxu0 %v2783
        %2967 = vmatpush1.bf16.msra.mxu0 %v2782
        %2968 = vmatprep.subr.bf16.mxu0 %v2780
        %2969 = vmatpush1.bf16.msra.mxu0 %v2779
        %2970 = vmatprep.subr.bf16.mxu0 %v2777
        %2971 = vmatpush1.bf16.msra.mxu0 %v2776
        %2972 = vmatprep.subr.bf16.mxu0 %v2774
        %2973 = vmatpush1.bf16.msra.mxu0 %v2773
        %2974 = vmatprep.subr.bf16.mxu0 %v2819
        %2975 = vmatpush2.bf16.msra.mxu0 %v2818
        %2976 = vmatprep.subr.bf16.mxu0 %v2816
        %2977 = vmatpush2.bf16.msra.mxu0 %v2815
        %2978 = vmatprep.subr.bf16.mxu0 %v2813
        %2979 = vmatpush2.bf16.msra.mxu0 %v2812
        %2980 = vmatprep.subr.bf16.mxu0 %v2810
        %2981 = vmatpush2.bf16.msra.mxu0 %v2809
        %2982 = vmatprep.subr.bf16.mxu0 %v2807
        %2983 = vmatpush2.bf16.msra.mxu0 %v2806
        %2984 = vmatprep.subr.bf16.mxu0 %v2804
        %2985 = vmatpush2.bf16.msra.mxu0 %v2803
        %2986 = vmatprep.subr.bf16.mxu0 %v2801
        %2987 = vmatpush2.bf16.msra.mxu0 %v2800
        %2988 = vmatprep.subr.bf16.mxu0 %v2798
        %2989 = vmatpush2.bf16.msra.mxu0 %v2797
        %2990 = vmatprep.mubr.bf16.mxu0 %v2275
        %2991 = vmatmul.mubr.bf16.gmra.mxu0 %v2274
        %v2992 = vpop.f32.mrf.mxu0
        %v2993 = vadd.f32 %v2952, %v2992
        %v2994 = vpop.f32.mrf.mxu0
        %v2995 = vadd.f32 %v2954, %v2994
        %v2996 = vpop.f32.mrf.mxu0
        %v2997 = vpop.f32.mrf.mxu0
        %2998 = vdwg.mxu0
        %2999 = vmatprep.subr.bf16.mxu0 0
        %3000 = vmatpush1.bf16.msra.mxu0 %v2748
        %3001 = vmatprep.subr.bf16.mxu0 0
        %3002 = vmatpush1.bf16.msra.mxu0 %v2745
        %3003 = vmatprep.subr.bf16.mxu0 0
        %3004 = vmatpush1.bf16.msra.mxu0 %v2742
        %3005 = vmatprep.subr.bf16.mxu0 0
        %3006 = vmatpush1.bf16.msra.mxu0 %v2739
        %3007 = vmatprep.subr.bf16.mxu0 0
        %3008 = vmatpush1.bf16.msra.mxu0 %v2736
        %3009 = vmatprep.subr.bf16.mxu0 0
        %3010 = vmatpush1.bf16.msra.mxu0 %v2733
        %3011 = vmatprep.subr.bf16.mxu0 0
        %3012 = vmatpush1.bf16.msra.mxu0 %v2730
        %3013 = vmatprep.subr.bf16.mxu0 0
        %3014 = vmatpush1.bf16.msra.mxu0 %v2727
        %3015 = vmatprep.subr.bf16.mxu0 0
        %3016 = vmatpush2.bf16.msra.mxu0 %v2772
        %3017 = vmatprep.subr.bf16.mxu0 0
        %3018 = vmatpush2.bf16.msra.mxu0 %v2769
        %3019 = vmatprep.subr.bf16.mxu0 0
        %3020 = vmatpush2.bf16.msra.mxu0 %v2766
        %3021 = vmatprep.subr.bf16.mxu0 0
        %3022 = vmatpush2.bf16.msra.mxu0 %v2763
        %3023 = vmatprep.subr.bf16.mxu0 0
        %3024 = vmatpush2.bf16.msra.mxu0 %v2760
        %3025 = vmatprep.subr.bf16.mxu0 0
        %3026 = vmatpush2.bf16.msra.mxu0 %v2757
        %3027 = vmatprep.subr.bf16.mxu0 0
        %3028 = vmatpush2.bf16.msra.mxu0 %v2754
        %3029 = vmatprep.subr.bf16.mxu0 0
        %3030 = vmatpush2.bf16.msra.mxu0 %v2751
        %3031 = vmatprep.mubr.bf16.mxu0 %v2273
        %3032 = vmatmul.mubr.bf16.gmra.mxu0 %v2272
        %v3033 = vpop.f32.mrf.mxu0
        %v3034 = vadd.f32 0.0, %v3033
        %v3035 = vpop.f32.mrf.mxu0
        %v3036 = vpop.f32.mrf.mxu0
        %v3037 = vpop.f32.mrf.mxu0
        %3038 = vdwg.mxu0
        %3039 = vmatprep.subr.bf16.mxu0 0
        %3040 = vmatpush1.bf16.msra.mxu0 %v2796
        %3041 = vmatprep.subr.bf16.mxu0 0
        %3042 = vmatpush1.bf16.msra.mxu0 %v2793
        %3043 = vmatprep.subr.bf16.mxu0 0
        %3044 = vmatpush1.bf16.msra.mxu0 %v2790
        %3045 = vmatprep.subr.bf16.mxu0 0
        %3046 = vmatpush1.bf16.msra.mxu0 %v2787
        %3047 = vmatprep.subr.bf16.mxu0 0
        %3048 = vmatpush1.bf16.msra.mxu0 %v2784
        %3049 = vmatprep.subr.bf16.mxu0 0
        %3050 = vmatpush1.bf16.msra.mxu0 %v2781
        %3051 = vmatprep.subr.bf16.mxu0 0
        %3052 = vmatpush1.bf16.msra.mxu0 %v2778
        %3053 = vmatprep.subr.bf16.mxu0 0
        %3054 = vmatpush1.bf16.msra.mxu0 %v2775
        %3055 = vmatprep.subr.bf16.mxu0 0
        %3056 = vmatpush2.bf16.msra.mxu0 %v2820
        %3057 = vmatprep.subr.bf16.mxu0 0
        %3058 = vmatpush2.bf16.msra.mxu0 %v2817
        %3059 = vmatprep.subr.bf16.mxu0 0
        %3060 = vmatpush2.bf16.msra.mxu0 %v2814
        %3061 = vmatprep.subr.bf16.mxu0 0
        %3062 = vmatpush2.bf16.msra.mxu0 %v2811
        %3063 = vmatprep.subr.bf16.mxu0 0
        %3064 = vmatpush2.bf16.msra.mxu0 %v2808
        %3065 = vmatprep.subr.bf16.mxu0 0
        %3066 = vmatpush2.bf16.msra.mxu0 %v2805
        %3067 = vmatprep.subr.bf16.mxu0 0
        %3068 = vmatpush2.bf16.msra.mxu0 %v2802
        %3069 = vmatprep.subr.bf16.mxu0 0
        %3070 = vmatpush2.bf16.msra.mxu0 %v2799
        %3071 = vmatprep.mubr.bf16.mxu0 %v2275
        %3072 = vmatmul.mubr.bf16.gmra.mxu0 %v2274
        %v3073 = vpop.f32.mrf.mxu0
        %v3074 = vadd.f32 %v3034, %v3073
        %v3075 = vpop.f32.mrf.mxu0
        %v3076 = vpop.f32.mrf.mxu0
        %v3077 = vpop.f32.mrf.mxu0
        %3078 = vdwg.mxu0
        %v3207 = vunpack.c.l.b16 %v1997
        %v3208 = vunpack.c.h.b16 %v1997
        %v3209 = vunpack.c.l.b16 %v1998
        %v3210 = vunpack.c.l.b16 %v1999
        %v3211 = vunpack.c.h.b16 %v1999
        %v3212 = vunpack.c.l.b16 %v2000
        %v3213 = vunpack.c.l.b16 %v2001
        %v3214 = vunpack.c.h.b16 %v2001
        %v3215 = vunpack.c.l.b16 %v2002
        %v3216 = vunpack.c.l.b16 %v2003
        %v3217 = vunpack.c.h.b16 %v2003
        %v3218 = vunpack.c.l.b16 %v2004
        %v3219 = vunpack.c.l.b16 %v2005
        %v3220 = vunpack.c.h.b16 %v2005
        %v3221 = vunpack.c.l.b16 %v2006
        %v3222 = vunpack.c.l.b16 %v2007
        %v3223 = vunpack.c.h.b16 %v2007
        %v3224 = vunpack.c.l.b16 %v2008
        %v3225 = vunpack.c.l.b16 %v2009
        %v3226 = vunpack.c.h.b16 %v2009
        %v3227 = vunpack.c.l.b16 %v2010
        %v3228 = vunpack.c.l.b16 %v2011
        %v3229 = vunpack.c.h.b16 %v2011
        %v3230 = vunpack.c.l.b16 %v2012
        %v3231 = vunpack.c.l.b16 %v2013
        %v3232 = vunpack.c.h.b16 %v2013
        %v3233 = vunpack.c.l.b16 %v2014
        %v3234 = vunpack.c.l.b16 %v2015
        %v3235 = vunpack.c.h.b16 %v2015
        %v3236 = vunpack.c.l.b16 %v2016
        %v3237 = vunpack.c.l.b16 %v2017
        %v3238 = vunpack.c.h.b16 %v2017
        %v3239 = vunpack.c.l.b16 %v2018
        %v3240 = vunpack.c.l.b16 %v2019
        %v3241 = vunpack.c.h.b16 %v2019
        %v3242 = vunpack.c.l.b16 %v2020
        %v3243 = vunpack.c.l.b16 %v2021
        %v3244 = vunpack.c.h.b16 %v2021
        %v3245 = vunpack.c.l.b16 %v2022
        %v3246 = vunpack.c.l.b16 %v2023
        %v3247 = vunpack.c.h.b16 %v2023
        %v3248 = vunpack.c.l.b16 %v2024
        %v3249 = vunpack.c.l.b16 %v2025
        %v3250 = vunpack.c.h.b16 %v2025
        %v3251 = vunpack.c.l.b16 %v2026
        %v3252 = vunpack.c.l.b16 %v2027
        %v3253 = vunpack.c.h.b16 %v2027
        %v3254 = vunpack.c.l.b16 %v2028
        %v3255 = vunpack.c.l.b16 %v2029
        %v3256 = vunpack.c.h.b16 %v2029
        %v3257 = vunpack.c.l.b16 %v2030
        %v3258 = vunpack.c.l.b16 %v2031
        %v3259 = vunpack.c.h.b16 %v2031
        %v3260 = vunpack.c.l.b16 %v2032
        %v3261 = vunpack.c.l.b16 %v2033
        %v3262 = vunpack.c.h.b16 %v2033
        %v3263 = vunpack.c.l.b16 %v2034
        %v3264 = vunpack.c.l.b16 %v2035
        %v3265 = vunpack.c.h.b16 %v2035
        %v3266 = vunpack.c.l.b16 %v2036
        %v3267 = vunpack.c.l.b16 %v2037
        %v3268 = vunpack.c.h.b16 %v2037
        %v3269 = vunpack.c.l.b16 %v2038
        %v3270 = vunpack.c.l.b16 %v2039
        %v3271 = vunpack.c.h.b16 %v2039
        %v3272 = vunpack.c.l.b16 %v2040
        %v3273 = vunpack.c.l.b16 %v2041
        %v3274 = vunpack.c.h.b16 %v2041
        %v3275 = vunpack.c.l.b16 %v2042
        %v3276 = vunpack.c.l.b16 %v2043
        %v3277 = vunpack.c.h.b16 %v2043
        %v3278 = vunpack.c.l.b16 %v2044
        %v3279 = vunpack.c.l.b16 %v2045
        %v3280 = vunpack.c.h.b16 %v2045
        %v3281 = vunpack.c.l.b16 %v2046
        %v3282 = vunpack.c.l.b16 %v2047
        %v3283 = vunpack.c.h.b16 %v2047
        %v3284 = vunpack.c.l.b16 %v2048
        %v3285 = vunpack.c.l.b16 %v2049
        %v3286 = vunpack.c.h.b16 %v2049
        %v3287 = vunpack.c.l.b16 %v2050
        %v3288 = vunpack.c.l.b16 %v2051
        %v3289 = vunpack.c.h.b16 %v2051
        %v3290 = vunpack.c.l.b16 %v2052
        %v3291 = vunpack.c.l.b16 %v2053
        %v3292 = vunpack.c.h.b16 %v2053
        %v3293 = vunpack.c.l.b16 %v2054
        %v3294 = vunpack.c.l.b16 %v2055
        %v3295 = vunpack.c.h.b16 %v2055
        %v3296 = vunpack.c.l.b16 %v2056
        %v3297 = vunpack.c.l.b16 %v2057
        %v3298 = vunpack.c.h.b16 %v2057
        %v3299 = vunpack.c.l.b16 %v2058
        %v3300 = vunpack.c.l.b16 %v2059
        %v3301 = vunpack.c.h.b16 %v2059
        %v3302 = vunpack.c.l.b16 %v2060
        %v3303 = vunpack.c.l.b16 %v2061
        %v3304 = vunpack.c.h.b16 %v2061
        %v3305 = vunpack.c.l.b16 %v2062
        %v3306 = vunpack.c.l.b16 %v2063
        %v3307 = vunpack.c.h.b16 %v2063
        %v3308 = vunpack.c.l.b16 %v2064
        %v3309 = vunpack.c.l.b16 %v2065
        %v3310 = vunpack.c.h.b16 %v2065
        %v3311 = vunpack.c.l.b16 %v2066
        %v3312 = vunpack.c.l.b16 %v2067
        %v3313 = vunpack.c.h.b16 %v2067
        %v3314 = vunpack.c.l.b16 %v2068
        %v3315 = vunpack.c.l.b16 %v2069
        %v3316 = vunpack.c.h.b16 %v2069
        %v3317 = vunpack.c.l.b16 %v2070
        %v3318 = vunpack.c.l.b16 %v2071
        %v3319 = vunpack.c.h.b16 %v2071
        %v3320 = vunpack.c.l.b16 %v2072
        %v3321 = vunpack.c.l.b16 %v2073
        %v3322 = vunpack.c.h.b16 %v2073
        %v3323 = vunpack.c.l.b16 %v2074
        %v3324 = vunpack.c.l.b16 %v2075
        %v3325 = vunpack.c.h.b16 %v2075
        %v3326 = vunpack.c.l.b16 %v2076
        %v3327 = vunpack.c.l.b16 %v2077
        %v3328 = vunpack.c.h.b16 %v2077
        %v3329 = vunpack.c.l.b16 %v2078
        %v3330 = vunpack.c.l.b16 %v2079
        %v3331 = vunpack.c.h.b16 %v2079
        %v3332 = vunpack.c.l.b16 %v2080
        %v3333 = vunpack.c.l.b16 %v2081
        %v3334 = vunpack.c.h.b16 %v2081
        %v3335 = vunpack.c.l.b16 %v2082
        %v3336 = vunpack.c.l.b16 %v2083
        %v3337 = vunpack.c.h.b16 %v2083
        %v3338 = vunpack.c.l.b16 %v2084
        %v3339 = vunpack.c.l.b16 %v2085
        %v3340 = vunpack.c.h.b16 %v2085
        %v3341 = vunpack.c.l.b16 %v2086
        %v3342 = vunpack.c.l.b16 %v2087
        %v3343 = vunpack.c.h.b16 %v2087
        %v3344 = vunpack.c.l.b16 %v2088
        %v3345 = vunpack.c.l.b16 %v2089
        %v3346 = vunpack.c.h.b16 %v2089
        %v3347 = vunpack.c.l.b16 %v2090
        %v3348 = vunpack.c.l.b16 %v2091
        %v3349 = vunpack.c.h.b16 %v2091
        %v3350 = vunpack.c.l.b16 %v2092
        %v3351 = vunpack.c.l.b16 %v2093
        %v3352 = vunpack.c.h.b16 %v2093
        %v3353 = vunpack.c.l.b16 %v2094
        %v3354 = vunpack.c.l.b16 %v2095
        %v3355 = vunpack.c.h.b16 %v2095
        %v3356 = vunpack.c.l.b16 %v2096
        %v3357 = vunpack.c.l.b16 %v2097
        %v3358 = vunpack.c.h.b16 %v2097
        %v3359 = vunpack.c.l.b16 %v2098
        %v3360 = vunpack.c.l.b16 %v2099
        %v3361 = vunpack.c.h.b16 %v2099
        %v3362 = vunpack.c.l.b16 %v2100
        %v3363 = vunpack.c.l.b16 %v2101
        %v3364 = vunpack.c.h.b16 %v2101
        %v3365 = vunpack.c.l.b16 %v2102
        %v3366 = vunpack.c.l.b16 %v2103
        %v3367 = vunpack.c.h.b16 %v2103
        %v3368 = vunpack.c.l.b16 %v2104
        %v3369 = vunpack.c.l.b16 %v2105
        %v3370 = vunpack.c.h.b16 %v2105
        %v3371 = vunpack.c.l.b16 %v2106
        %v3372 = vunpack.c.l.b16 %v2107
        %v3373 = vunpack.c.h.b16 %v2107
        %v3374 = vunpack.c.l.b16 %v2108
        %v3375 = vunpack.c.l.b16 %v2109
        %v3376 = vunpack.c.h.b16 %v2109
        %v3377 = vunpack.c.l.b16 %v2110
        %v3378 = vunpack.c.l.b16 %v2111
        %v3379 = vunpack.c.h.b16 %v2111
        %v3380 = vunpack.c.l.b16 %v2112
        %v3381 = vunpack.c.l.b16 %v2113
        %v3382 = vunpack.c.h.b16 %v2113
        %v3383 = vunpack.c.l.b16 %v2114
        %v3384 = vunpack.c.l.b16 %v2115
        %v3385 = vunpack.c.h.b16 %v2115
        %v3386 = vunpack.c.l.b16 %v2116
        %v3387 = vunpack.c.l.b16 %v2117
        %v3388 = vunpack.c.h.b16 %v2117
        %v3389 = vunpack.c.l.b16 %v2118
        %v3390 = vunpack.c.l.b16 %v2119
        %v3391 = vunpack.c.h.b16 %v2119
        %v3392 = vunpack.c.l.b16 %v2120
        %v3393 = vunpack.c.l.b16 %v2121
        %v3394 = vunpack.c.h.b16 %v2121
        %v3395 = vunpack.c.l.b16 %v2122
        %v3396 = vunpack.c.l.b16 %v2123
        %v3397 = vunpack.c.h.b16 %v2123
        %v3398 = vunpack.c.l.b16 %v2124
        %v3399 = vpack.c.b16 %v3210, %v3207
        %v3400 = vpack.c.b16 %v3211, %v3208
        %v3401 = vpack.c.b16 %v3212, %v3209
        %v3402 = vpack.c.b16 %v3216, %v3213
        %v3403 = vpack.c.b16 %v3217, %v3214
        %v3404 = vpack.c.b16 %v3218, %v3215
        %v3405 = vpack.c.b16 %v3222, %v3219
        %v3406 = vpack.c.b16 %v3223, %v3220
        %v3407 = vpack.c.b16 %v3224, %v3221
        %v3408 = vpack.c.b16 %v3228, %v3225
        %v3409 = vpack.c.b16 %v3229, %v3226
        %v3410 = vpack.c.b16 %v3230, %v3227
        %v3411 = vpack.c.b16 %v3234, %v3231
        %v3412 = vpack.c.b16 %v3235, %v3232
        %v3413 = vpack.c.b16 %v3236, %v3233
        %v3414 = vpack.c.b16 %v3240, %v3237
        %v3415 = vpack.c.b16 %v3241, %v3238
        %v3416 = vpack.c.b16 %v3242, %v3239
        %v3417 = vpack.c.b16 %v3246, %v3243
        %v3418 = vpack.c.b16 %v3247, %v3244
        %v3419 = vpack.c.b16 %v3248, %v3245
        %v3420 = vpack.c.b16 %v3252, %v3249
        %v3421 = vpack.c.b16 %v3253, %v3250
        %v3422 = vpack.c.b16 %v3254, %v3251
        %v3423 = vpack.c.b16 %v3258, %v3255
        %v3424 = vpack.c.b16 %v3259, %v3256
        %v3425 = vpack.c.b16 %v3260, %v3257
        %v3426 = vpack.c.b16 %v3264, %v3261
        %v3427 = vpack.c.b16 %v3265, %v3262
        %v3428 = vpack.c.b16 %v3266, %v3263
        %v3429 = vpack.c.b16 %v3270, %v3267
        %v3430 = vpack.c.b16 %v3271, %v3268
        %v3431 = vpack.c.b16 %v3272, %v3269
        %v3432 = vpack.c.b16 %v3276, %v3273
        %v3433 = vpack.c.b16 %v3277, %v3274
        %v3434 = vpack.c.b16 %v3278, %v3275
        %v3435 = vpack.c.b16 %v3282, %v3279
        %v3436 = vpack.c.b16 %v3283, %v3280
        %v3437 = vpack.c.b16 %v3284, %v3281
        %v3438 = vpack.c.b16 %v3288, %v3285
        %v3439 = vpack.c.b16 %v3289, %v3286
        %v3440 = vpack.c.b16 %v3290, %v3287
        %v3441 = vpack.c.b16 %v3294, %v3291
        %v3442 = vpack.c.b16 %v3295, %v3292
        %v3443 = vpack.c.b16 %v3296, %v3293
        %v3444 = vpack.c.b16 %v3300, %v3297
        %v3445 = vpack.c.b16 %v3301, %v3298
        %v3446 = vpack.c.b16 %v3302, %v3299
        %v3447 = vpack.c.b16 %v3306, %v3303
        %v3448 = vpack.c.b16 %v3307, %v3304
        %v3449 = vpack.c.b16 %v3308, %v3305
        %v3450 = vpack.c.b16 %v3312, %v3309
        %v3451 = vpack.c.b16 %v3313, %v3310
        %v3452 = vpack.c.b16 %v3314, %v3311
        %v3453 = vpack.c.b16 %v3318, %v3315
        %v3454 = vpack.c.b16 %v3319, %v3316
        %v3455 = vpack.c.b16 %v3320, %v3317
        %v3456 = vpack.c.b16 %v3324, %v3321
        %v3457 = vpack.c.b16 %v3325, %v3322
        %v3458 = vpack.c.b16 %v3326, %v3323
        %v3459 = vpack.c.b16 %v3330, %v3327
        %v3460 = vpack.c.b16 %v3331, %v3328
        %v3461 = vpack.c.b16 %v3332, %v3329
        %v3462 = vpack.c.b16 %v3336, %v3333
        %v3463 = vpack.c.b16 %v3337, %v3334
        %v3464 = vpack.c.b16 %v3338, %v3335
        %v3465 = vpack.c.b16 %v3342, %v3339
        %v3466 = vpack.c.b16 %v3343, %v3340
        %v3467 = vpack.c.b16 %v3344, %v3341
        %v3468 = vpack.c.b16 %v3348, %v3345
        %v3469 = vpack.c.b16 %v3349, %v3346
        %v3470 = vpack.c.b16 %v3350, %v3347
        %v3471 = vpack.c.b16 %v3354, %v3351
        %v3472 = vpack.c.b16 %v3355, %v3352
        %v3473 = vpack.c.b16 %v3356, %v3353
        %v3474 = vpack.c.b16 %v3360, %v3357
        %v3475 = vpack.c.b16 %v3361, %v3358
        %v3476 = vpack.c.b16 %v3362, %v3359
        %v3477 = vpack.c.b16 %v3366, %v3363
        %v3478 = vpack.c.b16 %v3367, %v3364
        %v3479 = vpack.c.b16 %v3368, %v3365
        %v3480 = vpack.c.b16 %v3372, %v3369
        %v3481 = vpack.c.b16 %v3373, %v3370
        %v3482 = vpack.c.b16 %v3374, %v3371
        %v3483 = vpack.c.b16 %v3378, %v3375
        %v3484 = vpack.c.b16 %v3379, %v3376
        %v3485 = vpack.c.b16 %v3380, %v3377
        %v3486 = vpack.c.b16 %v3384, %v3381
        %v3487 = vpack.c.b16 %v3385, %v3382
        %v3488 = vpack.c.b16 %v3386, %v3383
        %v3489 = vpack.c.b16 %v3390, %v3387
        %v3490 = vpack.c.b16 %v3391, %v3388
        %v3491 = vpack.c.b16 %v3392, %v3389
        %v3492 = vpack.c.b16 %v3396, %v3393
        %v3493 = vpack.c.b16 %v3397, %v3394
        %v3494 = vpack.c.b16 %v3398, %v3395
        %3591 = vmatprep.subr.bf16.mxu0 %v3421
        %3592 = vmatpush1.bf16.msra.mxu0 %v3420
        %3593 = vmatprep.subr.bf16.mxu0 %v3418
        %3594 = vmatpush1.bf16.msra.mxu0 %v3417
        %3595 = vmatprep.subr.bf16.mxu0 %v3415
        %3596 = vmatpush1.bf16.msra.mxu0 %v3414
        %3597 = vmatprep.subr.bf16.mxu0 %v3412
        %3598 = vmatpush1.bf16.msra.mxu0 %v3411
        %3599 = vmatprep.subr.bf16.mxu0 %v3409
        %3600 = vmatpush1.bf16.msra.mxu0 %v3408
        %3601 = vmatprep.subr.bf16.mxu0 %v3406
        %3602 = vmatpush1.bf16.msra.mxu0 %v3405
        %3603 = vmatprep.subr.bf16.mxu0 %v3403
        %3604 = vmatpush1.bf16.msra.mxu0 %v3402
        %3605 = vmatprep.subr.bf16.mxu0 %v3400
        %3606 = vmatpush1.bf16.msra.mxu0 %v3399
        %3607 = vmatprep.subr.bf16.mxu0 %v3445
        %3608 = vmatpush2.bf16.msra.mxu0 %v3444
        %3609 = vmatprep.subr.bf16.mxu0 %v3442
        %3610 = vmatpush2.bf16.msra.mxu0 %v3441
        %3611 = vmatprep.subr.bf16.mxu0 %v3439
        %3612 = vmatpush2.bf16.msra.mxu0 %v3438
        %3613 = vmatprep.subr.bf16.mxu0 %v3436
        %3614 = vmatpush2.bf16.msra.mxu0 %v3435
        %3615 = vmatprep.subr.bf16.mxu0 %v3433
        %3616 = vmatpush2.bf16.msra.mxu0 %v3432
        %3617 = vmatprep.subr.bf16.mxu0 %v3430
        %3618 = vmatpush2.bf16.msra.mxu0 %v3429
        %3619 = vmatprep.subr.bf16.mxu0 %v3427
        %3620 = vmatpush2.bf16.msra.mxu0 %v3426
        %3621 = vmatprep.subr.bf16.mxu0 %v3424
        %3622 = vmatpush2.bf16.msra.mxu0 %v3423
        %3623 = vmatprep.mubr.bf16.mxu0 %v1994
        %3624 = vmatmul.mubr.bf16.gmra.mxu0 %v1993
        %v3625 = vpop.f32.mrf.mxu0
        %v3626 = vadd.f32 %v2993, %v3625
        %v3627 = vpop.f32.mrf.mxu0
        %v3628 = vadd.f32 %v2995, %v3627
        %v3629 = vpop.f32.mrf.mxu0
        %v3630 = vpop.f32.mrf.mxu0
        %3631 = vdwg.mxu0
        %3632 = vmatprep.subr.bf16.mxu0 %v3469
        %3633 = vmatpush1.bf16.msra.mxu0 %v3468
        %3634 = vmatprep.subr.bf16.mxu0 %v3466
        %3635 = vmatpush1.bf16.msra.mxu0 %v3465
        %3636 = vmatprep.subr.bf16.mxu0 %v3463
        %3637 = vmatpush1.bf16.msra.mxu0 %v3462
        %3638 = vmatprep.subr.bf16.mxu0 %v3460
        %3639 = vmatpush1.bf16.msra.mxu0 %v3459
        %3640 = vmatprep.subr.bf16.mxu0 %v3457
        %3641 = vmatpush1.bf16.msra.mxu0 %v3456
        %3642 = vmatprep.subr.bf16.mxu0 %v3454
        %3643 = vmatpush1.bf16.msra.mxu0 %v3453
        %3644 = vmatprep.subr.bf16.mxu0 %v3451
        %3645 = vmatpush1.bf16.msra.mxu0 %v3450
        %3646 = vmatprep.subr.bf16.mxu0 %v3448
        %3647 = vmatpush1.bf16.msra.mxu0 %v3447
        %3648 = vmatprep.subr.bf16.mxu0 %v3493
        %3649 = vmatpush2.bf16.msra.mxu0 %v3492
        %3650 = vmatprep.subr.bf16.mxu0 %v3490
        %3651 = vmatpush2.bf16.msra.mxu0 %v3489
        %3652 = vmatprep.subr.bf16.mxu0 %v3487
        %3653 = vmatpush2.bf16.msra.mxu0 %v3486
        %3654 = vmatprep.subr.bf16.mxu0 %v3484
        %3655 = vmatpush2.bf16.msra.mxu0 %v3483
        %3656 = vmatprep.subr.bf16.mxu0 %v3481
        %3657 = vmatpush2.bf16.msra.mxu0 %v3480
        %3658 = vmatprep.subr.bf16.mxu0 %v3478
        %3659 = vmatpush2.bf16.msra.mxu0 %v3477
        %3660 = vmatprep.subr.bf16.mxu0 %v3475
        %3661 = vmatpush2.bf16.msra.mxu0 %v3474
        %3662 = vmatprep.subr.bf16.mxu0 %v3472
        %3663 = vmatpush2.bf16.msra.mxu0 %v3471
        %3664 = vmatprep.mubr.bf16.mxu0 %v1996
        %3665 = vmatmul.mubr.bf16.gmra.mxu0 %v1995
        %v3666 = vpop.f32.mrf.mxu0
        %v3667 = vadd.f32 %v3626, %v3666
        %v3668 = vpop.f32.mrf.mxu0
        %v3669 = vadd.f32 %v3628, %v3668
        %v3670 = vpop.f32.mrf.mxu0
        %v3671 = vpop.f32.mrf.mxu0
        %3672 = vdwg.mxu0
        %3673 = vmatprep.subr.bf16.mxu0 0
        %3674 = vmatpush1.bf16.msra.mxu0 %v3422
        %3675 = vmatprep.subr.bf16.mxu0 0
        %3676 = vmatpush1.bf16.msra.mxu0 %v3419
        %3677 = vmatprep.subr.bf16.mxu0 0
        %3678 = vmatpush1.bf16.msra.mxu0 %v3416
        %3679 = vmatprep.subr.bf16.mxu0 0
        %3680 = vmatpush1.bf16.msra.mxu0 %v3413
        %3681 = vmatprep.subr.bf16.mxu0 0
        %3682 = vmatpush1.bf16.msra.mxu0 %v3410
        %3683 = vmatprep.subr.bf16.mxu0 0
        %3684 = vmatpush1.bf16.msra.mxu0 %v3407
        %3685 = vmatprep.subr.bf16.mxu0 0
        %3686 = vmatpush1.bf16.msra.mxu0 %v3404
        %3687 = vmatprep.subr.bf16.mxu0 0
        %3688 = vmatpush1.bf16.msra.mxu0 %v3401
        %3689 = vmatprep.subr.bf16.mxu0 0
        %3690 = vmatpush2.bf16.msra.mxu0 %v3446
        %3691 = vmatprep.subr.bf16.mxu0 0
        %3692 = vmatpush2.bf16.msra.mxu0 %v3443
        %3693 = vmatprep.subr.bf16.mxu0 0
        %3694 = vmatpush2.bf16.msra.mxu0 %v3440
        %3695 = vmatprep.subr.bf16.mxu0 0
        %3696 = vmatpush2.bf16.msra.mxu0 %v3437
        %3697 = vmatprep.subr.bf16.mxu0 0
        %3698 = vmatpush2.bf16.msra.mxu0 %v3434
        %3699 = vmatprep.subr.bf16.mxu0 0
        %3700 = vmatpush2.bf16.msra.mxu0 %v3431
        %3701 = vmatprep.subr.bf16.mxu0 0
        %3702 = vmatpush2.bf16.msra.mxu0 %v3428
        %3703 = vmatprep.subr.bf16.mxu0 0
        %3704 = vmatpush2.bf16.msra.mxu0 %v3425
        %3705 = vmatprep.mubr.bf16.mxu0 %v1994
        %3706 = vmatmul.mubr.bf16.gmra.mxu0 %v1993
        %v3707 = vpop.f32.mrf.mxu0
        %v3708 = vadd.f32 %v3074, %v3707
        %v3709 = vpop.f32.mrf.mxu0
        %v3710 = vpop.f32.mrf.mxu0
        %v3711 = vpop.f32.mrf.mxu0
        %3712 = vdwg.mxu0
        %3713 = vmatprep.subr.bf16.mxu0 0
        %3714 = vmatpush1.bf16.msra.mxu0 %v3470
        %3715 = vmatprep.subr.bf16.mxu0 0
        %3716 = vmatpush1.bf16.msra.mxu0 %v3467
        %3717 = vmatprep.subr.bf16.mxu0 0
        %3718 = vmatpush1.bf16.msra.mxu0 %v3464
        %3719 = vmatprep.subr.bf16.mxu0 0
        %3720 = vmatpush1.bf16.msra.mxu0 %v3461
        %3721 = vmatprep.subr.bf16.mxu0 0
        %3722 = vmatpush1.bf16.msra.mxu0 %v3458
        %3723 = vmatprep.subr.bf16.mxu0 0
        %3724 = vmatpush1.bf16.msra.mxu0 %v3455
        %3725 = vmatprep.subr.bf16.mxu0 0
        %3726 = vmatpush1.bf16.msra.mxu0 %v3452
        %3727 = vmatprep.subr.bf16.mxu0 0
        %3728 = vmatpush1.bf16.msra.mxu0 %v3449
        %3729 = vmatprep.subr.bf16.mxu0 0
        %3730 = vmatpush2.bf16.msra.mxu0 %v3494
        %3731 = vmatprep.subr.bf16.mxu0 0
        %3732 = vmatpush2.bf16.msra.mxu0 %v3491
        %3733 = vmatprep.subr.bf16.mxu0 0
        %3734 = vmatpush2.bf16.msra.mxu0 %v3488
        %3735 = vmatprep.subr.bf16.mxu0 0
        %3736 = vmatpush2.bf16.msra.mxu0 %v3485
        %3737 = vmatprep.subr.bf16.mxu0 0
        %3738 = vmatpush2.bf16.msra.mxu0 %v3482
        %3739 = vmatprep.subr.bf16.mxu0 0
        %3740 = vmatpush2.bf16.msra.mxu0 %v3479
        %3741 = vmatprep.subr.bf16.mxu0 0
        %3742 = vmatpush2.bf16.msra.mxu0 %v3476
        %3743 = vmatprep.subr.bf16.mxu0 0
        %3744 = vmatpush2.bf16.msra.mxu0 %v3473
        %3745 = vmatprep.mubr.bf16.mxu0 %v1996
        %3746 = vmatmul.mubr.bf16.gmra.mxu0 %v1995
        %v3747 = vpop.f32.mrf.mxu0
        %v3748 = vadd.f32 %v3708, %v3747
        %v3749 = vpop.f32.mrf.mxu0
        %v3750 = vpop.f32.mrf.mxu0
        %v3751 = vpop.f32.mrf.mxu0
        %3752 = vdwg.mxu0
        %s3753 = scalar_lea.vmem [#allocation8], 16
        %v3754 = vld [vmem:[%s3753] sm:$0xff]
        %v3756 = vsel %vm1847, %v3754, 0
        %3758 = vmatprep.subr.mxu0 0.0
        %3759 = vmatpush1.msra.mxu0 0.0
        %3760 = vmatprep.subr.mxu0 0.0
        %3761 = vmatpush1.msra.mxu0 0.0
        %3762 = vmatprep.subr.mxu0 0.0
        %3763 = vmatpush1.msra.mxu0 0.0
        %3764 = vmatprep.subr.mxu0 0.0
        %3765 = vmatpush1.msra.mxu0 0.0
        %3766 = vmatprep.subr.mxu0 0.0
        %3767 = vmatpush1.msra.mxu0 0.0
        %3768 = vmatprep.subr.mxu0 0.0
        %3769 = vmatpush1.msra.mxu0 0.0
        %3770 = vmatprep.subr.mxu0 0.0
        %3771 = vmatpush1.msra.mxu0 0.0
        %3772 = vmatprep.subr.mxu0 0.0
        %3773 = vmatpush1.msra.mxu0 0.0
        %3774 = vmatprep.subr.mxu0 0.0
        %3775 = vmatpush1.msra.mxu0 0.0
        %3776 = vmatprep.subr.mxu0 0.0
        %3777 = vmatpush1.msra.mxu0 0.0
        %3778 = vmatprep.subr.mxu0 0.0
        %3779 = vmatpush1.msra.mxu0 0.0
        %3780 = vmatprep.subr.mxu0 0.0
        %3781 = vmatpush1.msra.mxu0 0.0
        %3782 = vmatprep.subr.mxu0 0.0
        %3783 = vmatpush1.msra.mxu0 0.0
        %3784 = vmatprep.subr.mxu0 0.0
        %3785 = vmatpush1.msra.mxu0 0.0
        %3786 = vmatprep.subr.mxu0 %v1843
        %3787 = vmatpush1.msra.mxu0 %v1842
        %3788 = vmatprep.subr.mxu0 %v1839
        %3789 = vmatpush1.msra.mxu0 %v1838
        %3790 = vmatprep.subr.mxu0 0.0
        %3791 = vmatpush2.msra.mxu0 0.0
        %3792 = vmatprep.subr.mxu0 0.0
        %3793 = vmatpush2.msra.mxu0 0.0
        %3794 = vmatprep.subr.mxu0 0.0
        %3795 = vmatpush2.msra.mxu0 0.0
        %3796 = vmatprep.subr.mxu0 0.0
        %3797 = vmatpush2.msra.mxu0 0.0
        %3798 = vmatprep.subr.mxu0 0.0
        %3799 = vmatpush2.msra.mxu0 0.0
        %3800 = vmatprep.subr.mxu0 0.0
        %3801 = vmatpush2.msra.mxu0 0.0
        %3802 = vmatprep.subr.mxu0 0.0
        %3803 = vmatpush2.msra.mxu0 0.0
        %3804 = vmatprep.subr.mxu0 0.0
        %3805 = vmatpush2.msra.mxu0 0.0
        %3806 = vmatprep.subr.mxu0 0.0
        %3807 = vmatpush2.msra.mxu0 0.0
        %3808 = vmatprep.subr.mxu0 0.0
        %3809 = vmatpush2.msra.mxu0 0.0
        %3810 = vmatprep.subr.mxu0 0.0
        %3811 = vmatpush2.msra.mxu0 0.0
        %3812 = vmatprep.subr.mxu0 0.0
        %3813 = vmatpush2.msra.mxu0 0.0
        %3814 = vmatprep.subr.mxu0 0.0
        %3815 = vmatpush2.msra.mxu0 0.0
        %3816 = vmatprep.subr.mxu0 0.0
        %3817 = vmatpush2.msra.mxu0 0.0
        %3818 = vmatprep.subr.mxu0 0.0
        %3819 = vmatpush2.msra.mxu0 0.0
        %3820 = vmatprep.subr.mxu0 0.0
        %3821 = vmatpush2.msra.mxu0 0.0
        %3822 = vmatprep.mubr.f32.mxu0 0.0
        %3823 = vmatmul.mubr.f32.gmra.mxu0 %v3756
        %v3824 = vpop.f32.mrf.mxu0
        %v3825 = vadd.f32 0.0, %v3824
        %v3826 = vpop.f32.mrf.mxu0
        %v3827 = vadd.f32 0.0, %v3826
        %3828 = vdwg.mxu0
        %3829 = vmatprep.subr.mxu0 0.0
        %3830 = vmatpush1.msra.mxu0 0.0
        %3831 = vmatprep.subr.mxu0 0.0
        %3832 = vmatpush1.msra.mxu0 0.0
        %3833 = vmatprep.subr.mxu0 0.0
        %3834 = vmatpush1.msra.mxu0 0.0
        %3835 = vmatprep.subr.mxu0 0.0
        %3836 = vmatpush1.msra.mxu0 0.0
        %3837 = vmatprep.subr.mxu0 0.0
        %3838 = vmatpush1.msra.mxu0 0.0
        %3839 = vmatprep.subr.mxu0 0.0
        %3840 = vmatpush1.msra.mxu0 0.0
        %3841 = vmatprep.subr.mxu0 0.0
        %3842 = vmatpush1.msra.mxu0 0.0
        %3843 = vmatprep.subr.mxu0 0.0
        %3844 = vmatpush1.msra.mxu0 0.0
        %3845 = vmatprep.subr.mxu0 0.0
        %3846 = vmatpush1.msra.mxu0 0.0
        %3847 = vmatprep.subr.mxu0 0.0
        %3848 = vmatpush1.msra.mxu0 0.0
        %3849 = vmatprep.subr.mxu0 0.0
        %3850 = vmatpush1.msra.mxu0 0.0
        %3851 = vmatprep.subr.mxu0 0.0
        %3852 = vmatpush1.msra.mxu0 0.0
        %3853 = vmatprep.subr.mxu0 0.0
        %3854 = vmatpush1.msra.mxu0 0.0
        %3855 = vmatprep.subr.mxu0 0.0
        %3856 = vmatpush1.msra.mxu0 0.0
        %3857 = vmatprep.subr.mxu0 %v1845
        %3858 = vmatpush1.msra.mxu0 %v1844
        %3859 = vmatprep.subr.mxu0 %v1841
        %3860 = vmatpush1.msra.mxu0 %v1840
        %3861 = vmatprep.subr.mxu0 0.0
        %3862 = vmatpush2.msra.mxu0 0.0
        %3863 = vmatprep.subr.mxu0 0.0
        %3864 = vmatpush2.msra.mxu0 0.0
        %3865 = vmatprep.subr.mxu0 0.0
        %3866 = vmatpush2.msra.mxu0 0.0
        %3867 = vmatprep.subr.mxu0 0.0
        %3868 = vmatpush2.msra.mxu0 0.0
        %3869 = vmatprep.subr.mxu0 0.0
        %3870 = vmatpush2.msra.mxu0 0.0
        %3871 = vmatprep.subr.mxu0 0.0
        %3872 = vmatpush2.msra.mxu0 0.0
        %3873 = vmatprep.subr.mxu0 0.0
        %3874 = vmatpush2.msra.mxu0 0.0
        %3875 = vmatprep.subr.mxu0 0.0
        %3876 = vmatpush2.msra.mxu0 0.0
        %3877 = vmatprep.subr.mxu0 0.0
        %3878 = vmatpush2.msra.mxu0 0.0
        %3879 = vmatprep.subr.mxu0 0.0
        %3880 = vmatpush2.msra.mxu0 0.0
        %3881 = vmatprep.subr.mxu0 0.0
        %3882 = vmatpush2.msra.mxu0 0.0
        %3883 = vmatprep.subr.mxu0 0.0
        %3884 = vmatpush2.msra.mxu0 0.0
        %3885 = vmatprep.subr.mxu0 0.0
        %3886 = vmatpush2.msra.mxu0 0.0
        %3887 = vmatprep.subr.mxu0 0.0
        %3888 = vmatpush2.msra.mxu0 0.0
        %3889 = vmatprep.subr.mxu0 0.0
        %3890 = vmatpush2.msra.mxu0 0.0
        %3891 = vmatprep.subr.mxu0 0.0
        %3892 = vmatpush2.msra.mxu0 0.0
        %3893 = vmatprep.mubr.f32.mxu0 0.0
        %3894 = vmatmul.mubr.f32.gmra.mxu0 %v3756
        %v3895 = vpop.f32.mrf.mxu0
        %v3896 = vadd.f32 0.0, %v3895
        %v3897 = vpop.f32.mrf.mxu0
        %v3898 = vadd.f32 0.0, %v3897
        %3899 = vdwg.mxu0
        %v3900 = vpack.c.bf16 %v3825, %v3825
        %v3901 = vpack.c.bf16 %v3827, %v3827
        %v3902 = vpack.c.bf16 %v3896, %v3896
        %v3903 = vpack.c.bf16 %v3898, %v3898
        %s3904 = scalar_lea.vmem [#allocation10], 1536
        %v3905 = vld [vmem:[%s3904] sm:$0xff]
        %v3906 = vld [vmem:[%s3904 + $0x8] sm:$0xf]
        %v3907 = vld [vmem:[%s3904 + $0xc] sm:$0xff]
        %v3908 = vld [vmem:[%s3904 + $0x14] sm:$0xf]
        %v3909 = vld [vmem:[%s3904 + $0x18] sm:$0xff]
        %v3910 = vld [vmem:[%s3904 + $0x20] sm:$0xf]
        %v3911 = vld [vmem:[%s3904 + $0x24] sm:$0xff]
        %v3912 = vld [vmem:[%s3904 + $0x2c] sm:$0xf]
        %v3913 = vld [vmem:[%s3904 + $0x30] sm:$0xff]
        %v3914 = vld [vmem:[%s3904 + $0x38] sm:$0xf]
        %v3915 = vld [vmem:[%s3904 + $0x3c] sm:$0xff]
        %v3916 = vld [vmem:[%s3904 + $0x44] sm:$0xf]
        %v3917 = vld [vmem:[%s3904 + $0x48] sm:$0xff]
        %v3918 = vld [vmem:[%s3904 + $0x50] sm:$0xf]
        %v3919 = vld [vmem:[%s3904 + $0x54] sm:$0xff]
        %v3920 = vld [vmem:[%s3904 + $0x5c] sm:$0xf]
        %v3921 = vld [vmem:[%s3904 + $0x60] sm:$0xff]
        %v3922 = vld [vmem:[%s3904 + $0x68] sm:$0xf]
        %v3923 = vld [vmem:[%s3904 + $0x6c] sm:$0xff]
        %v3924 = vld [vmem:[%s3904 + $0x74] sm:$0xf]
        %v3925 = vld [vmem:[%s3904 + $0x78] sm:$0xff]
        %v3926 = vld [vmem:[%s3904 + $0x80] sm:$0xf]
        %v3927 = vld [vmem:[%s3904 + $0x84] sm:$0xff]
        %v3928 = vld [vmem:[%s3904 + $0x8c] sm:$0xf]
        %v3929 = vld [vmem:[%s3904 + $0x90] sm:$0xff]
        %v3930 = vld [vmem:[%s3904 + $0x98] sm:$0xf]
        %v3931 = vld [vmem:[%s3904 + $0x9c] sm:$0xff]
        %v3932 = vld [vmem:[%s3904 + $0xa4] sm:$0xf]
        %v3933 = vld [vmem:[%s3904 + $0xa8] sm:$0xff]
        %v3934 = vld [vmem:[%s3904 + $0xb0] sm:$0xf]
        %v3935 = vld [vmem:[%s3904 + $0xb4] sm:$0xff]
        %v3936 = vld [vmem:[%s3904 + $0xbc] sm:$0xf]
        %v3937 = vld [vmem:[%s3904 + $0xc0] sm:$0xff]
        %v3938 = vld [vmem:[%s3904 + $0xc8] sm:$0xf]
        %v3939 = vld [vmem:[%s3904 + $0xcc] sm:$0xff]
        %v3940 = vld [vmem:[%s3904 + $0xd4] sm:$0xf]
        %v3941 = vld [vmem:[%s3904 + $0xd8] sm:$0xff]
        %v3942 = vld [vmem:[%s3904 + $0xe0] sm:$0xf]
        %v3943 = vld [vmem:[%s3904 + $0xe4] sm:$0xff]
        %v3944 = vld [vmem:[%s3904 + $0xec] sm:$0xf]
        %v3945 = vld [vmem:[%s3904 + $0xf0] sm:$0xff]
        %v3946 = vld [vmem:[%s3904 + $0xf8] sm:$0xf]
        %v3947 = vld [vmem:[%s3904 + $0xfc] sm:$0xff]
        %v3948 = vld [vmem:[%s3904 + $0x104] sm:$0xf]
        %v3949 = vld [vmem:[%s3904 + $0x108] sm:$0xff]
        %v3950 = vld [vmem:[%s3904 + $0x110] sm:$0xf]
        %v3951 = vld [vmem:[%s3904 + $0x114] sm:$0xff]
        %v3952 = vld [vmem:[%s3904 + $0x11c] sm:$0xf]
        %v3953 = vld [vmem:[%s3904 + $0x120] sm:$0xff]
        %v3954 = vld [vmem:[%s3904 + $0x128] sm:$0xf]
        %v3955 = vld [vmem:[%s3904 + $0x12c] sm:$0xff]
        %v3956 = vld [vmem:[%s3904 + $0x134] sm:$0xf]
        %v3957 = vld [vmem:[%s3904 + $0x138] sm:$0xff]
        %v3958 = vld [vmem:[%s3904 + $0x140] sm:$0xf]
        %v3959 = vld [vmem:[%s3904 + $0x144] sm:$0xff]
        %v3960 = vld [vmem:[%s3904 + $0x14c] sm:$0xf]
        %v3961 = vld [vmem:[%s3904 + $0x150] sm:$0xff]
        %v3962 = vld [vmem:[%s3904 + $0x158] sm:$0xf]
        %v3963 = vld [vmem:[%s3904 + $0x15c] sm:$0xff]
        %v3964 = vld [vmem:[%s3904 + $0x164] sm:$0xf]
        %v3965 = vld [vmem:[%s3904 + $0x168] sm:$0xff]
        %v3966 = vld [vmem:[%s3904 + $0x170] sm:$0xf]
        %v3967 = vld [vmem:[%s3904 + $0x174] sm:$0xff]
        %v3968 = vld [vmem:[%s3904 + $0x17c] sm:$0xf]
        %v3969 = vld [vmem:[%s3904 + $0x180] sm:$0xff]
        %v3970 = vld [vmem:[%s3904 + $0x188] sm:$0xf]
        %v3971 = vld [vmem:[%s3904 + $0x18c] sm:$0xff]
        %v3972 = vld [vmem:[%s3904 + $0x194] sm:$0xf]
        %v3973 = vld [vmem:[%s3904 + $0x198] sm:$0xff]
        %v3974 = vld [vmem:[%s3904 + $0x1a0] sm:$0xf]
        %v3975 = vld [vmem:[%s3904 + $0x1a4] sm:$0xff]
        %v3976 = vld [vmem:[%s3904 + $0x1ac] sm:$0xf]
        %v3977 = vld [vmem:[%s3904 + $0x1b0] sm:$0xff]
        %v3978 = vld [vmem:[%s3904 + $0x1b8] sm:$0xf]
        %v3979 = vld [vmem:[%s3904 + $0x1bc] sm:$0xff]
        %v3980 = vld [vmem:[%s3904 + $0x1c4] sm:$0xf]
        %v3981 = vld [vmem:[%s3904 + $0x1c8] sm:$0xff]
        %v3982 = vld [vmem:[%s3904 + $0x1d0] sm:$0xf]
        %v3983 = vld [vmem:[%s3904 + $0x1d4] sm:$0xff]
        %v3984 = vld [vmem:[%s3904 + $0x1dc] sm:$0xf]
        %v3985 = vld [vmem:[%s3904 + $0x1e0] sm:$0xff]
        %v3986 = vld [vmem:[%s3904 + $0x1e8] sm:$0xf]
        %v3987 = vld [vmem:[%s3904 + $0x1ec] sm:$0xff]
        %v3988 = vld [vmem:[%s3904 + $0x1f4] sm:$0xf]
        %v3989 = vld [vmem:[%s3904 + $0x1f8] sm:$0xff]
        %v3990 = vld [vmem:[%s3904 + $0x200] sm:$0xf]
        %v3991 = vld [vmem:[%s3904 + $0x204] sm:$0xff]
        %v3992 = vld [vmem:[%s3904 + $0x20c] sm:$0xf]
        %v3993 = vld [vmem:[%s3904 + $0x210] sm:$0xff]
        %v3994 = vld [vmem:[%s3904 + $0x218] sm:$0xf]
        %v3995 = vld [vmem:[%s3904 + $0x21c] sm:$0xff]
        %v3996 = vld [vmem:[%s3904 + $0x224] sm:$0xf]
        %v3997 = vld [vmem:[%s3904 + $0x228] sm:$0xff]
        %v3998 = vld [vmem:[%s3904 + $0x230] sm:$0xf]
        %v3999 = vld [vmem:[%s3904 + $0x234] sm:$0xff]
        %v4000 = vld [vmem:[%s3904 + $0x23c] sm:$0xf]
        %v4001 = vld [vmem:[%s3904 + $0x240] sm:$0xff]
        %v4002 = vld [vmem:[%s3904 + $0x248] sm:$0xf]
        %v4003 = vld [vmem:[%s3904 + $0x24c] sm:$0xff]
        %v4004 = vld [vmem:[%s3904 + $0x254] sm:$0xf]
        %v4005 = vld [vmem:[%s3904 + $0x258] sm:$0xff]
        %v4006 = vld [vmem:[%s3904 + $0x260] sm:$0xf]
        %v4007 = vld [vmem:[%s3904 + $0x264] sm:$0xff]
        %v4008 = vld [vmem:[%s3904 + $0x26c] sm:$0xf]
        %v4009 = vld [vmem:[%s3904 + $0x270] sm:$0xff]
        %v4010 = vld [vmem:[%s3904 + $0x278] sm:$0xf]
        %v4011 = vld [vmem:[%s3904 + $0x27c] sm:$0xff]
        %v4012 = vld [vmem:[%s3904 + $0x284] sm:$0xf]
        %v4013 = vld [vmem:[%s3904 + $0x288] sm:$0xff]
        %v4014 = vld [vmem:[%s3904 + $0x290] sm:$0xf]
        %v4015 = vld [vmem:[%s3904 + $0x294] sm:$0xff]
        %v4016 = vld [vmem:[%s3904 + $0x29c] sm:$0xf]
        %v4017 = vld [vmem:[%s3904 + $0x2a0] sm:$0xff]
        %v4018 = vld [vmem:[%s3904 + $0x2a8] sm:$0xf]
        %v4019 = vld [vmem:[%s3904 + $0x2ac] sm:$0xff]
        %v4020 = vld [vmem:[%s3904 + $0x2b4] sm:$0xf]
        %v4021 = vld [vmem:[%s3904 + $0x2b8] sm:$0xff]
        %v4022 = vld [vmem:[%s3904 + $0x2c0] sm:$0xf]
        %v4023 = vld [vmem:[%s3904 + $0x2c4] sm:$0xff]
        %v4024 = vld [vmem:[%s3904 + $0x2cc] sm:$0xf]
        %v4025 = vld [vmem:[%s3904 + $0x2d0] sm:$0xff]
        %v4026 = vld [vmem:[%s3904 + $0x2d8] sm:$0xf]
        %v4027 = vld [vmem:[%s3904 + $0x2dc] sm:$0xff]
        %v4028 = vld [vmem:[%s3904 + $0x2e4] sm:$0xf]
        %v4029 = vld [vmem:[%s3904 + $0x2e8] sm:$0xff]
        %v4030 = vld [vmem:[%s3904 + $0x2f0] sm:$0xf]
        %v4031 = vld [vmem:[%s3904 + $0x2f4] sm:$0xff]
        %v4032 = vld [vmem:[%s3904 + $0x2fc] sm:$0xf]
        %v4161 = vunpack.c.l.b16 %v3905
        %v4162 = vunpack.c.h.b16 %v3905
        %v4163 = vunpack.c.l.b16 %v3906
        %v4164 = vunpack.c.l.b16 %v3907
        %v4165 = vunpack.c.h.b16 %v3907
        %v4166 = vunpack.c.l.b16 %v3908
        %v4167 = vunpack.c.l.b16 %v3909
        %v4168 = vunpack.c.h.b16 %v3909
        %v4169 = vunpack.c.l.b16 %v3910
        %v4170 = vunpack.c.l.b16 %v3911
        %v4171 = vunpack.c.h.b16 %v3911
        %v4172 = vunpack.c.l.b16 %v3912
        %v4173 = vunpack.c.l.b16 %v3913
        %v4174 = vunpack.c.h.b16 %v3913
        %v4175 = vunpack.c.l.b16 %v3914
        %v4176 = vunpack.c.l.b16 %v3915
        %v4177 = vunpack.c.h.b16 %v3915
        %v4178 = vunpack.c.l.b16 %v3916
        %v4179 = vunpack.c.l.b16 %v3917
        %v4180 = vunpack.c.h.b16 %v3917
        %v4181 = vunpack.c.l.b16 %v3918
        %v4182 = vunpack.c.l.b16 %v3919
        %v4183 = vunpack.c.h.b16 %v3919
        %v4184 = vunpack.c.l.b16 %v3920
        %v4185 = vunpack.c.l.b16 %v3921
        %v4186 = vunpack.c.h.b16 %v3921
        %v4187 = vunpack.c.l.b16 %v3922
        %v4188 = vunpack.c.l.b16 %v3923
        %v4189 = vunpack.c.h.b16 %v3923
        %v4190 = vunpack.c.l.b16 %v3924
        %v4191 = vunpack.c.l.b16 %v3925
        %v4192 = vunpack.c.h.b16 %v3925
        %v4193 = vunpack.c.l.b16 %v3926
        %v4194 = vunpack.c.l.b16 %v3927
        %v4195 = vunpack.c.h.b16 %v3927
        %v4196 = vunpack.c.l.b16 %v3928
        %v4197 = vunpack.c.l.b16 %v3929
        %v4198 = vunpack.c.h.b16 %v3929
        %v4199 = vunpack.c.l.b16 %v3930
        %v4200 = vunpack.c.l.b16 %v3931
        %v4201 = vunpack.c.h.b16 %v3931
        %v4202 = vunpack.c.l.b16 %v3932
        %v4203 = vunpack.c.l.b16 %v3933
        %v4204 = vunpack.c.h.b16 %v3933
        %v4205 = vunpack.c.l.b16 %v3934
        %v4206 = vunpack.c.l.b16 %v3935
        %v4207 = vunpack.c.h.b16 %v3935
        %v4208 = vunpack.c.l.b16 %v3936
        %v4209 = vunpack.c.l.b16 %v3937
        %v4210 = vunpack.c.h.b16 %v3937
        %v4211 = vunpack.c.l.b16 %v3938
        %v4212 = vunpack.c.l.b16 %v3939
        %v4213 = vunpack.c.h.b16 %v3939
        %v4214 = vunpack.c.l.b16 %v3940
        %v4215 = vunpack.c.l.b16 %v3941
        %v4216 = vunpack.c.h.b16 %v3941
        %v4217 = vunpack.c.l.b16 %v3942
        %v4218 = vunpack.c.l.b16 %v3943
        %v4219 = vunpack.c.h.b16 %v3943
        %v4220 = vunpack.c.l.b16 %v3944
        %v4221 = vunpack.c.l.b16 %v3945
        %v4222 = vunpack.c.h.b16 %v3945
        %v4223 = vunpack.c.l.b16 %v3946
        %v4224 = vunpack.c.l.b16 %v3947
        %v4225 = vunpack.c.h.b16 %v3947
        %v4226 = vunpack.c.l.b16 %v3948
        %v4227 = vunpack.c.l.b16 %v3949
        %v4228 = vunpack.c.h.b16 %v3949
        %v4229 = vunpack.c.l.b16 %v3950
        %v4230 = vunpack.c.l.b16 %v3951
        %v4231 = vunpack.c.h.b16 %v3951
        %v4232 = vunpack.c.l.b16 %v3952
        %v4233 = vunpack.c.l.b16 %v3953
        %v4234 = vunpack.c.h.b16 %v3953
        %v4235 = vunpack.c.l.b16 %v3954
        %v4236 = vunpack.c.l.b16 %v3955
        %v4237 = vunpack.c.h.b16 %v3955
        %v4238 = vunpack.c.l.b16 %v3956
        %v4239 = vunpack.c.l.b16 %v3957
        %v4240 = vunpack.c.h.b16 %v3957
        %v4241 = vunpack.c.l.b16 %v3958
        %v4242 = vunpack.c.l.b16 %v3959
        %v4243 = vunpack.c.h.b16 %v3959
        %v4244 = vunpack.c.l.b16 %v3960
        %v4245 = vunpack.c.l.b16 %v3961
        %v4246 = vunpack.c.h.b16 %v3961
        %v4247 = vunpack.c.l.b16 %v3962
        %v4248 = vunpack.c.l.b16 %v3963
        %v4249 = vunpack.c.h.b16 %v3963
        %v4250 = vunpack.c.l.b16 %v3964
        %v4251 = vunpack.c.l.b16 %v3965
        %v4252 = vunpack.c.h.b16 %v3965
        %v4253 = vunpack.c.l.b16 %v3966
        %v4254 = vunpack.c.l.b16 %v3967
        %v4255 = vunpack.c.h.b16 %v3967
        %v4256 = vunpack.c.l.b16 %v3968
        %v4257 = vunpack.c.l.b16 %v3969
        %v4258 = vunpack.c.h.b16 %v3969
        %v4259 = vunpack.c.l.b16 %v3970
        %v4260 = vunpack.c.l.b16 %v3971
        %v4261 = vunpack.c.h.b16 %v3971
        %v4262 = vunpack.c.l.b16 %v3972
        %v4263 = vunpack.c.l.b16 %v3973
        %v4264 = vunpack.c.h.b16 %v3973
        %v4265 = vunpack.c.l.b16 %v3974
        %v4266 = vunpack.c.l.b16 %v3975
        %v4267 = vunpack.c.h.b16 %v3975
        %v4268 = vunpack.c.l.b16 %v3976
        %v4269 = vunpack.c.l.b16 %v3977
        %v4270 = vunpack.c.h.b16 %v3977
        %v4271 = vunpack.c.l.b16 %v3978
        %v4272 = vunpack.c.l.b16 %v3979
        %v4273 = vunpack.c.h.b16 %v3979
        %v4274 = vunpack.c.l.b16 %v3980
        %v4275 = vunpack.c.l.b16 %v3981
        %v4276 = vunpack.c.h.b16 %v3981
        %v4277 = vunpack.c.l.b16 %v3982
        %v4278 = vunpack.c.l.b16 %v3983
        %v4279 = vunpack.c.h.b16 %v3983
        %v4280 = vunpack.c.l.b16 %v3984
        %v4281 = vunpack.c.l.b16 %v3985
        %v4282 = vunpack.c.h.b16 %v3985
        %v4283 = vunpack.c.l.b16 %v3986
        %v4284 = vunpack.c.l.b16 %v3987
        %v4285 = vunpack.c.h.b16 %v3987
        %v4286 = vunpack.c.l.b16 %v3988
        %v4287 = vunpack.c.l.b16 %v3989
        %v4288 = vunpack.c.h.b16 %v3989
        %v4289 = vunpack.c.l.b16 %v3990
        %v4290 = vunpack.c.l.b16 %v3991
        %v4291 = vunpack.c.h.b16 %v3991
        %v4292 = vunpack.c.l.b16 %v3992
        %v4293 = vunpack.c.l.b16 %v3993
        %v4294 = vunpack.c.h.b16 %v3993
        %v4295 = vunpack.c.l.b16 %v3994
        %v4296 = vunpack.c.l.b16 %v3995
        %v4297 = vunpack.c.h.b16 %v3995
        %v4298 = vunpack.c.l.b16 %v3996
        %v4299 = vunpack.c.l.b16 %v3997
        %v4300 = vunpack.c.h.b16 %v3997
        %v4301 = vunpack.c.l.b16 %v3998
        %v4302 = vunpack.c.l.b16 %v3999
        %v4303 = vunpack.c.h.b16 %v3999
        %v4304 = vunpack.c.l.b16 %v4000
        %v4305 = vunpack.c.l.b16 %v4001
        %v4306 = vunpack.c.h.b16 %v4001
        %v4307 = vunpack.c.l.b16 %v4002
        %v4308 = vunpack.c.l.b16 %v4003
        %v4309 = vunpack.c.h.b16 %v4003
        %v4310 = vunpack.c.l.b16 %v4004
        %v4311 = vunpack.c.l.b16 %v4005
        %v4312 = vunpack.c.h.b16 %v4005
        %v4313 = vunpack.c.l.b16 %v4006
        %v4314 = vunpack.c.l.b16 %v4007
        %v4315 = vunpack.c.h.b16 %v4007
        %v4316 = vunpack.c.l.b16 %v4008
        %v4317 = vunpack.c.l.b16 %v4009
        %v4318 = vunpack.c.h.b16 %v4009
        %v4319 = vunpack.c.l.b16 %v4010
        %v4320 = vunpack.c.l.b16 %v4011
        %v4321 = vunpack.c.h.b16 %v4011
        %v4322 = vunpack.c.l.b16 %v4012
        %v4323 = vunpack.c.l.b16 %v4013
        %v4324 = vunpack.c.h.b16 %v4013
        %v4325 = vunpack.c.l.b16 %v4014
        %v4326 = vunpack.c.l.b16 %v4015
        %v4327 = vunpack.c.h.b16 %v4015
        %v4328 = vunpack.c.l.b16 %v4016
        %v4329 = vunpack.c.l.b16 %v4017
        %v4330 = vunpack.c.h.b16 %v4017
        %v4331 = vunpack.c.l.b16 %v4018
        %v4332 = vunpack.c.l.b16 %v4019
        %v4333 = vunpack.c.h.b16 %v4019
        %v4334 = vunpack.c.l.b16 %v4020
        %v4335 = vunpack.c.l.b16 %v4021
        %v4336 = vunpack.c.h.b16 %v4021
        %v4337 = vunpack.c.l.b16 %v4022
        %v4338 = vunpack.c.l.b16 %v4023
        %v4339 = vunpack.c.h.b16 %v4023
        %v4340 = vunpack.c.l.b16 %v4024
        %v4341 = vunpack.c.l.b16 %v4025
        %v4342 = vunpack.c.h.b16 %v4025
        %v4343 = vunpack.c.l.b16 %v4026
        %v4344 = vunpack.c.l.b16 %v4027
        %v4345 = vunpack.c.h.b16 %v4027
        %v4346 = vunpack.c.l.b16 %v4028
        %v4347 = vunpack.c.l.b16 %v4029
        %v4348 = vunpack.c.h.b16 %v4029
        %v4349 = vunpack.c.l.b16 %v4030
        %v4350 = vunpack.c.l.b16 %v4031
        %v4351 = vunpack.c.h.b16 %v4031
        %v4352 = vunpack.c.l.b16 %v4032
        %v4353 = vpack.c.b16 %v4164, %v4161
        %v4354 = vpack.c.b16 %v4165, %v4162
        %v4355 = vpack.c.b16 %v4166, %v4163
        %v4356 = vpack.c.b16 %v4170, %v4167
        %v4357 = vpack.c.b16 %v4171, %v4168
        %v4358 = vpack.c.b16 %v4172, %v4169
        %v4359 = vpack.c.b16 %v4176, %v4173
        %v4360 = vpack.c.b16 %v4177, %v4174
        %v4361 = vpack.c.b16 %v4178, %v4175
        %v4362 = vpack.c.b16 %v4182, %v4179
        %v4363 = vpack.c.b16 %v4183, %v4180
        %v4364 = vpack.c.b16 %v4184, %v4181
        %v4365 = vpack.c.b16 %v4188, %v4185
        %v4366 = vpack.c.b16 %v4189, %v4186
        %v4367 = vpack.c.b16 %v4190, %v4187
        %v4368 = vpack.c.b16 %v4194, %v4191
        %v4369 = vpack.c.b16 %v4195, %v4192
        %v4370 = vpack.c.b16 %v4196, %v4193
        %v4371 = vpack.c.b16 %v4200, %v4197
        %v4372 = vpack.c.b16 %v4201, %v4198
        %v4373 = vpack.c.b16 %v4202, %v4199
        %v4374 = vpack.c.b16 %v4206, %v4203
        %v4375 = vpack.c.b16 %v4207, %v4204
        %v4376 = vpack.c.b16 %v4208, %v4205
        %v4377 = vpack.c.b16 %v4212, %v4209
        %v4378 = vpack.c.b16 %v4213, %v4210
        %v4379 = vpack.c.b16 %v4214, %v4211
        %v4380 = vpack.c.b16 %v4218, %v4215
        %v4381 = vpack.c.b16 %v4219, %v4216
        %v4382 = vpack.c.b16 %v4220, %v4217
        %v4383 = vpack.c.b16 %v4224, %v4221
        %v4384 = vpack.c.b16 %v4225, %v4222
        %v4385 = vpack.c.b16 %v4226, %v4223
        %v4386 = vpack.c.b16 %v4230, %v4227
        %v4387 = vpack.c.b16 %v4231, %v4228
        %v4388 = vpack.c.b16 %v4232, %v4229
        %v4389 = vpack.c.b16 %v4236, %v4233
        %v4390 = vpack.c.b16 %v4237, %v4234
        %v4391 = vpack.c.b16 %v4238, %v4235
        %v4392 = vpack.c.b16 %v4242, %v4239
        %v4393 = vpack.c.b16 %v4243, %v4240
        %v4394 = vpack.c.b16 %v4244, %v4241
        %v4395 = vpack.c.b16 %v4248, %v4245
        %v4396 = vpack.c.b16 %v4249, %v4246
        %v4397 = vpack.c.b16 %v4250, %v4247
        %v4398 = vpack.c.b16 %v4254, %v4251
        %v4399 = vpack.c.b16 %v4255, %v4252
        %v4400 = vpack.c.b16 %v4256, %v4253
        %v4401 = vpack.c.b16 %v4260, %v4257
        %v4402 = vpack.c.b16 %v4261, %v4258
        %v4403 = vpack.c.b16 %v4262, %v4259
        %v4404 = vpack.c.b16 %v4266, %v4263
        %v4405 = vpack.c.b16 %v4267, %v4264
        %v4406 = vpack.c.b16 %v4268, %v4265
        %v4407 = vpack.c.b16 %v4272, %v4269
        %v4408 = vpack.c.b16 %v4273, %v4270
        %v4409 = vpack.c.b16 %v4274, %v4271
        %v4410 = vpack.c.b16 %v4278, %v4275
        %v4411 = vpack.c.b16 %v4279, %v4276
        %v4412 = vpack.c.b16 %v4280, %v4277
        %v4413 = vpack.c.b16 %v4284, %v4281
        %v4414 = vpack.c.b16 %v4285, %v4282
        %v4415 = vpack.c.b16 %v4286, %v4283
        %v4416 = vpack.c.b16 %v4290, %v4287
        %v4417 = vpack.c.b16 %v4291, %v4288
        %v4418 = vpack.c.b16 %v4292, %v4289
        %v4419 = vpack.c.b16 %v4296, %v4293
        %v4420 = vpack.c.b16 %v4297, %v4294
        %v4421 = vpack.c.b16 %v4298, %v4295
        %v4422 = vpack.c.b16 %v4302, %v4299
        %v4423 = vpack.c.b16 %v4303, %v4300
        %v4424 = vpack.c.b16 %v4304, %v4301
        %v4425 = vpack.c.b16 %v4308, %v4305
        %v4426 = vpack.c.b16 %v4309, %v4306
        %v4427 = vpack.c.b16 %v4310, %v4307
        %v4428 = vpack.c.b16 %v4314, %v4311
        %v4429 = vpack.c.b16 %v4315, %v4312
        %v4430 = vpack.c.b16 %v4316, %v4313
        %v4431 = vpack.c.b16 %v4320, %v4317
        %v4432 = vpack.c.b16 %v4321, %v4318
        %v4433 = vpack.c.b16 %v4322, %v4319
        %v4434 = vpack.c.b16 %v4326, %v4323
        %v4435 = vpack.c.b16 %v4327, %v4324
        %v4436 = vpack.c.b16 %v4328, %v4325
        %v4437 = vpack.c.b16 %v4332, %v4329
        %v4438 = vpack.c.b16 %v4333, %v4330
        %v4439 = vpack.c.b16 %v4334, %v4331
        %v4440 = vpack.c.b16 %v4338, %v4335
        %v4441 = vpack.c.b16 %v4339, %v4336
        %v4442 = vpack.c.b16 %v4340, %v4337
        %v4443 = vpack.c.b16 %v4344, %v4341
        %v4444 = vpack.c.b16 %v4345, %v4342
        %v4445 = vpack.c.b16 %v4346, %v4343
        %v4446 = vpack.c.b16 %v4350, %v4347
        %v4447 = vpack.c.b16 %v4351, %v4348
        %v4448 = vpack.c.b16 %v4352, %v4349
        %4545 = vmatprep.subr.bf16.mxu0 %v4375
        %4546 = vmatpush1.bf16.msra.mxu0 %v4374
        %4547 = vmatprep.subr.bf16.mxu0 %v4372
        %4548 = vmatpush1.bf16.msra.mxu0 %v4371
        %4549 = vmatprep.subr.bf16.mxu0 %v4369
        %4550 = vmatpush1.bf16.msra.mxu0 %v4368
        %4551 = vmatprep.subr.bf16.mxu0 %v4366
        %4552 = vmatpush1.bf16.msra.mxu0 %v4365
        %4553 = vmatprep.subr.bf16.mxu0 %v4363
        %4554 = vmatpush1.bf16.msra.mxu0 %v4362
        %4555 = vmatprep.subr.bf16.mxu0 %v4360
        %4556 = vmatpush1.bf16.msra.mxu0 %v4359
        %4557 = vmatprep.subr.bf16.mxu0 %v4357
        %4558 = vmatpush1.bf16.msra.mxu0 %v4356
        %4559 = vmatprep.subr.bf16.mxu0 %v4354
        %4560 = vmatpush1.bf16.msra.mxu0 %v4353
        %4561 = vmatprep.subr.bf16.mxu0 %v4399
        %4562 = vmatpush2.bf16.msra.mxu0 %v4398
        %4563 = vmatprep.subr.bf16.mxu0 %v4396
        %4564 = vmatpush2.bf16.msra.mxu0 %v4395
        %4565 = vmatprep.subr.bf16.mxu0 %v4393
        %4566 = vmatpush2.bf16.msra.mxu0 %v4392
        %4567 = vmatprep.subr.bf16.mxu0 %v4390
        %4568 = vmatpush2.bf16.msra.mxu0 %v4389
        %4569 = vmatprep.subr.bf16.mxu0 %v4387
        %4570 = vmatpush2.bf16.msra.mxu0 %v4386
        %4571 = vmatprep.subr.bf16.mxu0 %v4384
        %4572 = vmatpush2.bf16.msra.mxu0 %v4383
        %4573 = vmatprep.subr.bf16.mxu0 %v4381
        %4574 = vmatpush2.bf16.msra.mxu0 %v4380
        %4575 = vmatprep.subr.bf16.mxu0 %v4378
        %4576 = vmatpush2.bf16.msra.mxu0 %v4377
        %4577 = vmatprep.mubr.bf16.mxu0 %v3901
        %4578 = vmatmul.mubr.bf16.gmra.mxu0 %v3900
        %v4579 = vpop.f32.mrf.mxu0
        %v4580 = vadd.f32 0.0, %v4579
        %v4581 = vpop.f32.mrf.mxu0
        %v4582 = vadd.f32 0.0, %v4581
        %v4583 = vpop.f32.mrf.mxu0
        %v4584 = vpop.f32.mrf.mxu0
        %4585 = vdwg.mxu0
        %4586 = vmatprep.subr.bf16.mxu0 %v4423
        %4587 = vmatpush1.bf16.msra.mxu0 %v4422
        %4588 = vmatprep.subr.bf16.mxu0 %v4420
        %4589 = vmatpush1.bf16.msra.mxu0 %v4419
        %4590 = vmatprep.subr.bf16.mxu0 %v4417
        %4591 = vmatpush1.bf16.msra.mxu0 %v4416
        %4592 = vmatprep.subr.bf16.mxu0 %v4414
        %4593 = vmatpush1.bf16.msra.mxu0 %v4413
        %4594 = vmatprep.subr.bf16.mxu0 %v4411
        %4595 = vmatpush1.bf16.msra.mxu0 %v4410
        %4596 = vmatprep.subr.bf16.mxu0 %v4408
        %4597 = vmatpush1.bf16.msra.mxu0 %v4407
        %4598 = vmatprep.subr.bf16.mxu0 %v4405
        %4599 = vmatpush1.bf16.msra.mxu0 %v4404
        %4600 = vmatprep.subr.bf16.mxu0 %v4402
        %4601 = vmatpush1.bf16.msra.mxu0 %v4401
        %4602 = vmatprep.subr.bf16.mxu0 %v4447
        %4603 = vmatpush2.bf16.msra.mxu0 %v4446
        %4604 = vmatprep.subr.bf16.mxu0 %v4444
        %4605 = vmatpush2.bf16.msra.mxu0 %v4443
        %4606 = vmatprep.subr.bf16.mxu0 %v4441
        %4607 = vmatpush2.bf16.msra.mxu0 %v4440
        %4608 = vmatprep.subr.bf16.mxu0 %v4438
        %4609 = vmatpush2.bf16.msra.mxu0 %v4437
        %4610 = vmatprep.subr.bf16.mxu0 %v4435
        %4611 = vmatpush2.bf16.msra.mxu0 %v4434
        %4612 = vmatprep.subr.bf16.mxu0 %v4432
        %4613 = vmatpush2.bf16.msra.mxu0 %v4431
        %4614 = vmatprep.subr.bf16.mxu0 %v4429
        %4615 = vmatpush2.bf16.msra.mxu0 %v4428
        %4616 = vmatprep.subr.bf16.mxu0 %v4426
        %4617 = vmatpush2.bf16.msra.mxu0 %v4425
        %4618 = vmatprep.mubr.bf16.mxu0 %v3903
        %4619 = vmatmul.mubr.bf16.gmra.mxu0 %v3902
        %v4620 = vpop.f32.mrf.mxu0
        %v4621 = vadd.f32 %v4580, %v4620
        %v4622 = vpop.f32.mrf.mxu0
        %v4623 = vadd.f32 %v4582, %v4622
        %v4624 = vpop.f32.mrf.mxu0
        %v4625 = vpop.f32.mrf.mxu0
        %4626 = vdwg.mxu0
        %4627 = vmatprep.subr.bf16.mxu0 0
        %4628 = vmatpush1.bf16.msra.mxu0 %v4376
        %4629 = vmatprep.subr.bf16.mxu0 0
        %4630 = vmatpush1.bf16.msra.mxu0 %v4373
        %4631 = vmatprep.subr.bf16.mxu0 0
        %4632 = vmatpush1.bf16.msra.mxu0 %v4370
        %4633 = vmatprep.subr.bf16.mxu0 0
        %4634 = vmatpush1.bf16.msra.mxu0 %v4367
        %4635 = vmatprep.subr.bf16.mxu0 0
        %4636 = vmatpush1.bf16.msra.mxu0 %v4364
        %4637 = vmatprep.subr.bf16.mxu0 0
        %4638 = vmatpush1.bf16.msra.mxu0 %v4361
        %4639 = vmatprep.subr.bf16.mxu0 0
        %4640 = vmatpush1.bf16.msra.mxu0 %v4358
        %4641 = vmatprep.subr.bf16.mxu0 0
        %4642 = vmatpush1.bf16.msra.mxu0 %v4355
        %4643 = vmatprep.subr.bf16.mxu0 0
        %4644 = vmatpush2.bf16.msra.mxu0 %v4400
        %4645 = vmatprep.subr.bf16.mxu0 0
        %4646 = vmatpush2.bf16.msra.mxu0 %v4397
        %4647 = vmatprep.subr.bf16.mxu0 0
        %4648 = vmatpush2.bf16.msra.mxu0 %v4394
        %4649 = vmatprep.subr.bf16.mxu0 0
        %4650 = vmatpush2.bf16.msra.mxu0 %v4391
        %4651 = vmatprep.subr.bf16.mxu0 0
        %4652 = vmatpush2.bf16.msra.mxu0 %v4388
        %4653 = vmatprep.subr.bf16.mxu0 0
        %4654 = vmatpush2.bf16.msra.mxu0 %v4385
        %4655 = vmatprep.subr.bf16.mxu0 0
        %4656 = vmatpush2.bf16.msra.mxu0 %v4382
        %4657 = vmatprep.subr.bf16.mxu0 0
        %4658 = vmatpush2.bf16.msra.mxu0 %v4379
        %4659 = vmatprep.mubr.bf16.mxu0 %v3901
        %4660 = vmatmul.mubr.bf16.gmra.mxu0 %v3900
        %v4661 = vpop.f32.mrf.mxu0
        %v4662 = vadd.f32 0.0, %v4661
        %v4663 = vpop.f32.mrf.mxu0
        %v4664 = vpop.f32.mrf.mxu0
        %v4665 = vpop.f32.mrf.mxu0
        %4666 = vdwg.mxu0
        %4667 = vmatprep.subr.bf16.mxu0 0
        %4668 = vmatpush1.bf16.msra.mxu0 %v4424
        %4669 = vmatprep.subr.bf16.mxu0 0
        %4670 = vmatpush1.bf16.msra.mxu0 %v4421
        %4671 = vmatprep.subr.bf16.mxu0 0
        %4672 = vmatpush1.bf16.msra.mxu0 %v4418
        %4673 = vmatprep.subr.bf16.mxu0 0
        %4674 = vmatpush1.bf16.msra.mxu0 %v4415
        %4675 = vmatprep.subr.bf16.mxu0 0
        %4676 = vmatpush1.bf16.msra.mxu0 %v4412
        %4677 = vmatprep.subr.bf16.mxu0 0
        %4678 = vmatpush1.bf16.msra.mxu0 %v4409
        %4679 = vmatprep.subr.bf16.mxu0 0
        %4680 = vmatpush1.bf16.msra.mxu0 %v4406
        %4681 = vmatprep.subr.bf16.mxu0 0
        %4682 = vmatpush1.bf16.msra.mxu0 %v4403
        %4683 = vmatprep.subr.bf16.mxu0 0
        %4684 = vmatpush2.bf16.msra.mxu0 %v4448
        %4685 = vmatprep.subr.bf16.mxu0 0
        %4686 = vmatpush2.bf16.msra.mxu0 %v4445
        %4687 = vmatprep.subr.bf16.mxu0 0
        %4688 = vmatpush2.bf16.msra.mxu0 %v4442
        %4689 = vmatprep.subr.bf16.mxu0 0
        %4690 = vmatpush2.bf16.msra.mxu0 %v4439
        %4691 = vmatprep.subr.bf16.mxu0 0
        %4692 = vmatpush2.bf16.msra.mxu0 %v4436
        %4693 = vmatprep.subr.bf16.mxu0 0
        %4694 = vmatpush2.bf16.msra.mxu0 %v4433
        %4695 = vmatprep.subr.bf16.mxu0 0
        %4696 = vmatpush2.bf16.msra.mxu0 %v4430
        %4697 = vmatprep.subr.bf16.mxu0 0
        %4698 = vmatpush2.bf16.msra.mxu0 %v4427
        %4699 = vmatprep.mubr.bf16.mxu0 %v3903
        %4700 = vmatmul.mubr.bf16.gmra.mxu0 %v3902
        %v4701 = vpop.f32.mrf.mxu0
        %v4702 = vadd.f32 %v4662, %v4701
        %v4703 = vpop.f32.mrf.mxu0
        %v4704 = vpop.f32.mrf.mxu0
        %v4705 = vpop.f32.mrf.mxu0
        %4706 = vdwg.mxu0
        %v4707 = vadd.f32 %v3667, %v4621
        %v4708 = vadd.f32 %v3669, %v4623
        %v4709 = vadd.f32 %v3748, %v4702
        %v4710 = vld [vmem:[#allocation11] sm:$0x7]
        %v4712 = vlaneseq
        %v4713 = vshrl.u32 %v4712, 7
        %v4714 = vsub.s32 0, %v4713
        %v4715 = vrot.slane %v4710, %v4714
        %v4716 = vlaneseq
        %v4717 = vshrl.u32 %v4716, 7
        %v4718 = vsub.s32 1, %v4717
        %v4719 = vrot.slane %v4710, %v4718
        %v4720 = vlaneseq
        %v4721 = vshrl.u32 %v4720, 7
        %v4722 = vsub.s32 2, %v4721
        %v4723 = vrot.slane %v4710, %v4722
        %v4727 = vadd.f32 %v4707, %v4715
        %v4728 = vadd.f32 %v4708, %v4719
        %v4729 = vadd.f32 %v4709, %v4723
        %v4730 = vmax.f32 %v4727, 0.0
        %v4731 = vmax.f32 %v4728, 0.0
        %v4732 = vmax.f32 %v4729, 0.0
        %v4733 = vpack.c.bf16 %v4730, %v4730
        %v4734 = vpack.c.bf16 %v4731, %v4731
        %v4735 = vpack.c.bf16 %v4732, %v4732
        %v4736 = vunpack.c.l.bf16 %v4733
        %v4737 = vunpack.c.l.bf16 %v4734
        %v4738 = vunpack.c.l.bf16 %v4735
        %v4739 = vld [vmem:[#allocation13] sm:$0xf]
        %vm4740 = vcmask 64512
        %v4742 = vsel %vm4740, %v4739, 0
        %4744 = vmatprep.subr.mxu0 0.0
        %4745 = vmatpush1.msra.mxu0 0.0
        %4746 = vmatprep.subr.mxu0 0.0
        %4747 = vmatpush1.msra.mxu0 0.0
        %4748 = vmatprep.subr.mxu0 0.0
        %4749 = vmatpush1.msra.mxu0 0.0
        %4750 = vmatprep.subr.mxu0 0.0
        %4751 = vmatpush1.msra.mxu0 0.0
        %4752 = vmatprep.subr.mxu0 0.0
        %4753 = vmatpush1.msra.mxu0 0.0
        %4754 = vmatprep.subr.mxu0 0.0
        %4755 = vmatpush1.msra.mxu0 0.0
        %4756 = vmatprep.subr.mxu0 0.0
        %4757 = vmatpush1.msra.mxu0 0.0
        %4758 = vmatprep.subr.mxu0 0.0
        %4759 = vmatpush1.msra.mxu0 0.0
        %4760 = vmatprep.subr.mxu0 0.0
        %4761 = vmatpush1.msra.mxu0 0.0
        %4762 = vmatprep.subr.mxu0 0.0
        %4763 = vmatpush1.msra.mxu0 0.0
        %4764 = vmatprep.subr.mxu0 0.0
        %4765 = vmatpush1.msra.mxu0 0.0
        %4766 = vmatprep.subr.mxu0 0.0
        %4767 = vmatpush1.msra.mxu0 0.0
        %4768 = vmatprep.subr.mxu0 0.0
        %4769 = vmatpush1.msra.mxu0 0.0
        %4770 = vmatprep.subr.mxu0 0.0
        %4771 = vmatpush1.msra.mxu0 0.0
        %4772 = vmatprep.subr.mxu0 0.0
        %4773 = vmatpush1.msra.mxu0 0.0
        %4774 = vmatprep.subr.mxu0 %v4737
        %4775 = vmatpush1.msra.mxu0 %v4736
        %4776 = vmatprep.subr.mxu0 0.0
        %4777 = vmatpush2.msra.mxu0 0.0
        %4778 = vmatprep.subr.mxu0 0.0
        %4779 = vmatpush2.msra.mxu0 0.0
        %4780 = vmatprep.subr.mxu0 0.0
        %4781 = vmatpush2.msra.mxu0 0.0
        %4782 = vmatprep.subr.mxu0 0.0
        %4783 = vmatpush2.msra.mxu0 0.0
        %4784 = vmatprep.subr.mxu0 0.0
        %4785 = vmatpush2.msra.mxu0 0.0
        %4786 = vmatprep.subr.mxu0 0.0
        %4787 = vmatpush2.msra.mxu0 0.0
        %4788 = vmatprep.subr.mxu0 0.0
        %4789 = vmatpush2.msra.mxu0 0.0
        %4790 = vmatprep.subr.mxu0 0.0
        %4791 = vmatpush2.msra.mxu0 0.0
        %4792 = vmatprep.subr.mxu0 0.0
        %4793 = vmatpush2.msra.mxu0 0.0
        %4794 = vmatprep.subr.mxu0 0.0
        %4795 = vmatpush2.msra.mxu0 0.0
        %4796 = vmatprep.subr.mxu0 0.0
        %4797 = vmatpush2.msra.mxu0 0.0
        %4798 = vmatprep.subr.mxu0 0.0
        %4799 = vmatpush2.msra.mxu0 0.0
        %4800 = vmatprep.subr.mxu0 0.0
        %4801 = vmatpush2.msra.mxu0 0.0
        %4802 = vmatprep.subr.mxu0 0.0
        %4803 = vmatpush2.msra.mxu0 0.0
        %4804 = vmatprep.subr.mxu0 0.0
        %4805 = vmatpush2.msra.mxu0 0.0
        %4806 = vmatprep.subr.mxu0 0.0
        %4807 = vmatpush2.msra.mxu0 0.0
        %4808 = vmatprep.mubr.f32.mxu0 0.0
        %4809 = vmatmul.mubr.f32.gmra.mxu0 %v4742
        %v4810 = vpop.f32.mrf.mxu0
        %v4811 = vadd.f32 0.0, %v4810
        %v4812 = vpop.f32.mrf.mxu0
        %v4813 = vadd.f32 0.0, %v4812
        %4814 = vdwg.mxu0
        %4815 = vmatprep.subr.mxu0 0.0
        %4816 = vmatpush1.msra.mxu0 0.0
        %4817 = vmatprep.subr.mxu0 0.0
        %4818 = vmatpush1.msra.mxu0 0.0
        %4819 = vmatprep.subr.mxu0 0.0
        %4820 = vmatpush1.msra.mxu0 0.0
        %4821 = vmatprep.subr.mxu0 0.0
        %4822 = vmatpush1.msra.mxu0 0.0
        %4823 = vmatprep.subr.mxu0 0.0
        %4824 = vmatpush1.msra.mxu0 0.0
        %4825 = vmatprep.subr.mxu0 0.0
        %4826 = vmatpush1.msra.mxu0 0.0
        %4827 = vmatprep.subr.mxu0 0.0
        %4828 = vmatpush1.msra.mxu0 0.0
        %4829 = vmatprep.subr.mxu0 0.0
        %4830 = vmatpush1.msra.mxu0 0.0
        %4831 = vmatprep.subr.mxu0 0.0
        %4832 = vmatpush1.msra.mxu0 0.0
        %4833 = vmatprep.subr.mxu0 0.0
        %4834 = vmatpush1.msra.mxu0 0.0
        %4835 = vmatprep.subr.mxu0 0.0
        %4836 = vmatpush1.msra.mxu0 0.0
        %4837 = vmatprep.subr.mxu0 0.0
        %4838 = vmatpush1.msra.mxu0 0.0
        %4839 = vmatprep.subr.mxu0 0.0
        %4840 = vmatpush1.msra.mxu0 0.0
        %4841 = vmatprep.subr.mxu0 0.0
        %4842 = vmatpush1.msra.mxu0 0.0
        %4843 = vmatprep.subr.mxu0 0.0
        %4844 = vmatpush1.msra.mxu0 0.0
        %4845 = vmatprep.subr.mxu0 0.0
        %4846 = vmatpush1.msra.mxu0 %v4738
        %4847 = vmatprep.subr.mxu0 0.0
        %4848 = vmatpush2.msra.mxu0 0.0
        %4849 = vmatprep.subr.mxu0 0.0
        %4850 = vmatpush2.msra.mxu0 0.0
        %4851 = vmatprep.subr.mxu0 0.0
        %4852 = vmatpush2.msra.mxu0 0.0
        %4853 = vmatprep.subr.mxu0 0.0
        %4854 = vmatpush2.msra.mxu0 0.0
        %4855 = vmatprep.subr.mxu0 0.0
        %4856 = vmatpush2.msra.mxu0 0.0
        %4857 = vmatprep.subr.mxu0 0.0
        %4858 = vmatpush2.msra.mxu0 0.0
        %4859 = vmatprep.subr.mxu0 0.0
        %4860 = vmatpush2.msra.mxu0 0.0
        %4861 = vmatprep.subr.mxu0 0.0
        %4862 = vmatpush2.msra.mxu0 0.0
        %4863 = vmatprep.subr.mxu0 0.0
        %4864 = vmatpush2.msra.mxu0 0.0
        %4865 = vmatprep.subr.mxu0 0.0
        %4866 = vmatpush2.msra.mxu0 0.0
        %4867 = vmatprep.subr.mxu0 0.0
        %4868 = vmatpush2.msra.mxu0 0.0
        %4869 = vmatprep.subr.mxu0 0.0
        %4870 = vmatpush2.msra.mxu0 0.0
        %4871 = vmatprep.subr.mxu0 0.0
        %4872 = vmatpush2.msra.mxu0 0.0
        %4873 = vmatprep.subr.mxu0 0.0
        %4874 = vmatpush2.msra.mxu0 0.0
        %4875 = vmatprep.subr.mxu0 0.0
        %4876 = vmatpush2.msra.mxu0 0.0
        %4877 = vmatprep.subr.mxu0 0.0
        %4878 = vmatpush2.msra.mxu0 0.0
        %4879 = vmatprep.mubr.f32.mxu0 0.0
        %4880 = vmatmul.mubr.f32.gmra.mxu0 %v4742
        %v4881 = vpop.f32.mrf.mxu0
        %v4882 = vadd.f32 0.0, %v4881
        %v4883 = vpop.f32.mrf.mxu0
        %4884 = vdwg.mxu0
        %v4885 = vpack.c.bf16 %v4811, %v4811
        %v4886 = vpack.c.bf16 %v4813, %v4813
        %v4887 = vpack.c.bf16 %v4882, %v4882
        %v4888 = vld [vmem:[#allocation14] sm:$0xff]
        %v4889 = vld [vmem:[#allocation14 + $0x8] sm:$0xff]
        %v4890 = vld [vmem:[#allocation14 + $0x10] sm:$0xff]
        %v4891 = vld [vmem:[#allocation14 + $0x18] sm:$0xff]
        %v4892 = vld [vmem:[#allocation14 + $0x20] sm:$0xff]
        %v4893 = vld [vmem:[#allocation14 + $0x28] sm:$0xff]
        %v4894 = vld [vmem:[#allocation14 + $0x30] sm:$0xff]
        %v4895 = vld [vmem:[#allocation14 + $0x38] sm:$0xff]
        %v4896 = vld [vmem:[#allocation14 + $0x40] sm:$0xff]
        %v4897 = vld [vmem:[#allocation14 + $0x48] sm:$0xff]
        %v4898 = vld [vmem:[#allocation14 + $0x50] sm:$0xff]
        %v4899 = vld [vmem:[#allocation14 + $0x58] sm:$0xff]
        %v4900 = vld [vmem:[#allocation14 + $0x60] sm:$0xff]
        %v4901 = vld [vmem:[#allocation14 + $0x68] sm:$0xff]
        %v4902 = vld [vmem:[#allocation14 + $0x70] sm:$0xff]
        %v4903 = vld [vmem:[#allocation14 + $0x78] sm:$0xff]
        %v4904 = vld [vmem:[#allocation14 + $0x80] sm:$0xff]
        %v4905 = vld [vmem:[#allocation14 + $0x88] sm:$0xff]
        %v4906 = vld [vmem:[#allocation14 + $0x90] sm:$0xff]
        %v4907 = vld [vmem:[#allocation14 + $0x98] sm:$0xff]
        %v4908 = vld [vmem:[#allocation14 + $0xa0] sm:$0xff]
        %v4909 = vld [vmem:[#allocation14 + $0xa8] sm:$0xff]
        %v4910 = vld [vmem:[#allocation14 + $0xb0] sm:$0xff]
        %v4911 = vld [vmem:[#allocation14 + $0xb8] sm:$0xff]
        %v4912 = vld [vmem:[#allocation14 + $0xc0] sm:$0xff]
        %v4913 = vld [vmem:[#allocation14 + $0xc8] sm:$0xff]
        %v4914 = vld [vmem:[#allocation14 + $0xd0] sm:$0xff]
        %v4915 = vld [vmem:[#allocation14 + $0xd8] sm:$0xff]
        %v4916 = vld [vmem:[#allocation14 + $0xe0] sm:$0xff]
        %v4917 = vld [vmem:[#allocation14 + $0xe8] sm:$0xff]
        %v4918 = vld [vmem:[#allocation14 + $0xf0] sm:$0xff]
        %v4919 = vld [vmem:[#allocation14 + $0xf8] sm:$0xff]
        %v4920 = vld [vmem:[#allocation14 + $0x100] sm:$0xff]
        %v4921 = vld [vmem:[#allocation14 + $0x108] sm:$0xff]
        %v4922 = vld [vmem:[#allocation14 + $0x110] sm:$0xff]
        %v4923 = vld [vmem:[#allocation14 + $0x118] sm:$0xff]
        %v4924 = vld [vmem:[#allocation14 + $0x120] sm:$0xff]
        %v4925 = vld [vmem:[#allocation14 + $0x128] sm:$0xff]
        %v4926 = vld [vmem:[#allocation14 + $0x130] sm:$0xff]
        %v4927 = vld [vmem:[#allocation14 + $0x138] sm:$0xff]
        %v4928 = vld [vmem:[#allocation14 + $0x140] sm:$0xff]
        %v4929 = vld [vmem:[#allocation14 + $0x148] sm:$0xff]
        %v4930 = vld [vmem:[#allocation14 + $0x150] sm:$0xff]
        %v4931 = vld [vmem:[#allocation14 + $0x158] sm:$0xff]
        %v4932 = vld [vmem:[#allocation14 + $0x160] sm:$0xff]
        %v4933 = vld [vmem:[#allocation14 + $0x168] sm:$0xff]
        %v4934 = vld [vmem:[#allocation14 + $0x170] sm:$0xff]
        %v4935 = vld [vmem:[#allocation14 + $0x178] sm:$0xff]
        %v4936 = vld [vmem:[#allocation14 + $0x180] sm:$0xff]
        %v4937 = vld [vmem:[#allocation14 + $0x188] sm:$0xff]
        %v4938 = vld [vmem:[#allocation14 + $0x190] sm:$0xff]
        %v4939 = vld [vmem:[#allocation14 + $0x198] sm:$0xff]
        %v4940 = vld [vmem:[#allocation14 + $0x1a0] sm:$0xff]
        %v4941 = vld [vmem:[#allocation14 + $0x1a8] sm:$0xff]
        %v4942 = vld [vmem:[#allocation14 + $0x1b0] sm:$0xff]
        %v4943 = vld [vmem:[#allocation14 + $0x1b8] sm:$0xff]
        %v4944 = vld [vmem:[#allocation14 + $0x1c0] sm:$0xff]
        %v4945 = vld [vmem:[#allocation14 + $0x1c8] sm:$0xff]
        %v4946 = vld [vmem:[#allocation14 + $0x1d0] sm:$0xff]
        %v4947 = vld [vmem:[#allocation14 + $0x1d8] sm:$0xff]
        %v4948 = vld [vmem:[#allocation14 + $0x1e0] sm:$0xff]
        %v4949 = vld [vmem:[#allocation14 + $0x1e8] sm:$0xff]
        %v4950 = vld [vmem:[#allocation14 + $0x1f0] sm:$0xff]
        %v4951 = vld [vmem:[#allocation14 + $0x1f8] sm:$0xff]
        %v4952 = vld [vmem:[#allocation14 + $0x200] sm:$0xff]
        %v4953 = vld [vmem:[#allocation14 + $0x208] sm:$0xff]
        %v4954 = vld [vmem:[#allocation14 + $0x210] sm:$0xff]
        %v4955 = vld [vmem:[#allocation14 + $0x218] sm:$0xff]
        %v4956 = vld [vmem:[#allocation14 + $0x220] sm:$0xff]
        %v4957 = vld [vmem:[#allocation14 + $0x228] sm:$0xff]
        %v4958 = vld [vmem:[#allocation14 + $0x230] sm:$0xff]
        %v4959 = vld [vmem:[#allocation14 + $0x238] sm:$0xff]
        %v4960 = vld [vmem:[#allocation14 + $0x240] sm:$0xff]
        %v4961 = vld [vmem:[#allocation14 + $0x248] sm:$0xff]
        %v4962 = vld [vmem:[#allocation14 + $0x250] sm:$0xff]
        %v4963 = vld [vmem:[#allocation14 + $0x258] sm:$0xff]
        %v4964 = vld [vmem:[#allocation14 + $0x260] sm:$0xff]
        %v4965 = vld [vmem:[#allocation14 + $0x268] sm:$0xff]
        %v4966 = vld [vmem:[#allocation14 + $0x270] sm:$0xff]
        %v4967 = vld [vmem:[#allocation14 + $0x278] sm:$0xff]
        %v4968 = vld [vmem:[#allocation14 + $0x280] sm:$0xff]
        %v4969 = vld [vmem:[#allocation14 + $0x288] sm:$0xff]
        %v4970 = vld [vmem:[#allocation14 + $0x290] sm:$0xff]
        %v4971 = vld [vmem:[#allocation14 + $0x298] sm:$0xff]
        %v4972 = vld [vmem:[#allocation14 + $0x2a0] sm:$0xff]
        %v4973 = vld [vmem:[#allocation14 + $0x2a8] sm:$0xff]
        %v4974 = vld [vmem:[#allocation14 + $0x2b0] sm:$0xff]
        %v4975 = vld [vmem:[#allocation14 + $0x2b8] sm:$0xff]
        %v4976 = vld [vmem:[#allocation14 + $0x2c0] sm:$0xff]
        %v4977 = vld [vmem:[#allocation14 + $0x2c8] sm:$0xff]
        %v4978 = vld [vmem:[#allocation14 + $0x2d0] sm:$0xff]
        %v4979 = vld [vmem:[#allocation14 + $0x2d8] sm:$0xff]
        %v4980 = vld [vmem:[#allocation14 + $0x2e0] sm:$0xff]
        %v4981 = vld [vmem:[#allocation14 + $0x2e8] sm:$0xff]
        %v4982 = vld [vmem:[#allocation14 + $0x2f0] sm:$0xff]
        %v4983 = vld [vmem:[#allocation14 + $0x2f8] sm:$0xff]
        %s4984 = scalar_lea.vmem [#allocation13], 4
        %v4985 = vld [vmem:[%s4984] sm:$0xf]
        %v4987 = vsel %vm4740, %v4985, 0
        %4989 = vmatprep.subr.mxu0 0.0
        %4990 = vmatpush1.msra.mxu0 0.0
        %4991 = vmatprep.subr.mxu0 0.0
        %4992 = vmatpush1.msra.mxu0 0.0
        %4993 = vmatprep.subr.mxu0 0.0
        %4994 = vmatpush1.msra.mxu0 0.0
        %4995 = vmatprep.subr.mxu0 0.0
        %4996 = vmatpush1.msra.mxu0 0.0
        %4997 = vmatprep.subr.mxu0 0.0
        %4998 = vmatpush1.msra.mxu0 0.0
        %4999 = vmatprep.subr.mxu0 0.0
        %5000 = vmatpush1.msra.mxu0 0.0
        %5001 = vmatprep.subr.mxu0 0.0
        %5002 = vmatpush1.msra.mxu0 0.0
        %5003 = vmatprep.subr.mxu0 0.0
        %5004 = vmatpush1.msra.mxu0 0.0
        %5005 = vmatprep.subr.mxu0 0.0
        %5006 = vmatpush1.msra.mxu0 0.0
        %5007 = vmatprep.subr.mxu0 0.0
        %5008 = vmatpush1.msra.mxu0 0.0
        %5009 = vmatprep.subr.mxu0 0.0
        %5010 = vmatpush1.msra.mxu0 0.0
        %5011 = vmatprep.subr.mxu0 0.0
        %5012 = vmatpush1.msra.mxu0 0.0
        %5013 = vmatprep.subr.mxu0 0.0
        %5014 = vmatpush1.msra.mxu0 0.0
        %5015 = vmatprep.subr.mxu0 0.0
        %5016 = vmatpush1.msra.mxu0 0.0
        %5017 = vmatprep.subr.mxu0 0.0
        %5018 = vmatpush1.msra.mxu0 0.0
        %5019 = vmatprep.subr.mxu0 %v4737
        %5020 = vmatpush1.msra.mxu0 %v4736
        %5021 = vmatprep.subr.mxu0 0.0
        %5022 = vmatpush2.msra.mxu0 0.0
        %5023 = vmatprep.subr.mxu0 0.0
        %5024 = vmatpush2.msra.mxu0 0.0
        %5025 = vmatprep.subr.mxu0 0.0
        %5026 = vmatpush2.msra.mxu0 0.0
        %5027 = vmatprep.subr.mxu0 0.0
        %5028 = vmatpush2.msra.mxu0 0.0
        %5029 = vmatprep.subr.mxu0 0.0
        %5030 = vmatpush2.msra.mxu0 0.0
        %5031 = vmatprep.subr.mxu0 0.0
        %5032 = vmatpush2.msra.mxu0 0.0
        %5033 = vmatprep.subr.mxu0 0.0
        %5034 = vmatpush2.msra.mxu0 0.0
        %5035 = vmatprep.subr.mxu0 0.0
        %5036 = vmatpush2.msra.mxu0 0.0
        %5037 = vmatprep.subr.mxu0 0.0
        %5038 = vmatpush2.msra.mxu0 0.0
        %5039 = vmatprep.subr.mxu0 0.0
        %5040 = vmatpush2.msra.mxu0 0.0
        %5041 = vmatprep.subr.mxu0 0.0
        %5042 = vmatpush2.msra.mxu0 0.0
        %5043 = vmatprep.subr.mxu0 0.0
        %5044 = vmatpush2.msra.mxu0 0.0
        %5045 = vmatprep.subr.mxu0 0.0
        %5046 = vmatpush2.msra.mxu0 0.0
        %5047 = vmatprep.subr.mxu0 0.0
        %5048 = vmatpush2.msra.mxu0 0.0
        %5049 = vmatprep.subr.mxu0 0.0
        %5050 = vmatpush2.msra.mxu0 0.0
        %5051 = vmatprep.subr.mxu0 0.0
        %5052 = vmatpush2.msra.mxu0 0.0
        %5053 = vmatprep.mubr.f32.mxu0 0.0
        %5054 = vmatmul.mubr.f32.gmra.mxu0 %v4987
        %v5055 = vpop.f32.mrf.mxu0
        %v5056 = vadd.f32 0.0, %v5055
        %v5057 = vpop.f32.mrf.mxu0
        %v5058 = vadd.f32 0.0, %v5057
        %5059 = vdwg.mxu0
        %5060 = vmatprep.subr.mxu0 0.0
        %5061 = vmatpush1.msra.mxu0 0.0
        %5062 = vmatprep.subr.mxu0 0.0
        %5063 = vmatpush1.msra.mxu0 0.0
        %5064 = vmatprep.subr.mxu0 0.0
        %5065 = vmatpush1.msra.mxu0 0.0
        %5066 = vmatprep.subr.mxu0 0.0
        %5067 = vmatpush1.msra.mxu0 0.0
        %5068 = vmatprep.subr.mxu0 0.0
        %5069 = vmatpush1.msra.mxu0 0.0
        %5070 = vmatprep.subr.mxu0 0.0
        %5071 = vmatpush1.msra.mxu0 0.0
        %5072 = vmatprep.subr.mxu0 0.0
        %5073 = vmatpush1.msra.mxu0 0.0
        %5074 = vmatprep.subr.mxu0 0.0
        %5075 = vmatpush1.msra.mxu0 0.0
        %5076 = vmatprep.subr.mxu0 0.0
        %5077 = vmatpush1.msra.mxu0 0.0
        %5078 = vmatprep.subr.mxu0 0.0
        %5079 = vmatpush1.msra.mxu0 0.0
        %5080 = vmatprep.subr.mxu0 0.0
        %5081 = vmatpush1.msra.mxu0 0.0
        %5082 = vmatprep.subr.mxu0 0.0
        %5083 = vmatpush1.msra.mxu0 0.0
        %5084 = vmatprep.subr.mxu0 0.0
        %5085 = vmatpush1.msra.mxu0 0.0
        %5086 = vmatprep.subr.mxu0 0.0
        %5087 = vmatpush1.msra.mxu0 0.0
        %5088 = vmatprep.subr.mxu0 0.0
        %5089 = vmatpush1.msra.mxu0 0.0
        %5090 = vmatprep.subr.mxu0 0.0
        %5091 = vmatpush1.msra.mxu0 %v4738
        %5092 = vmatprep.subr.mxu0 0.0
        %5093 = vmatpush2.msra.mxu0 0.0
        %5094 = vmatprep.subr.mxu0 0.0
        %5095 = vmatpush2.msra.mxu0 0.0
        %5096 = vmatprep.subr.mxu0 0.0
        %5097 = vmatpush2.msra.mxu0 0.0
        %5098 = vmatprep.subr.mxu0 0.0
        %5099 = vmatpush2.msra.mxu0 0.0
        %5100 = vmatprep.subr.mxu0 0.0
        %5101 = vmatpush2.msra.mxu0 0.0
        %5102 = vmatprep.subr.mxu0 0.0
        %5103 = vmatpush2.msra.mxu0 0.0
        %5104 = vmatprep.subr.mxu0 0.0
        %5105 = vmatpush2.msra.mxu0 0.0
        %5106 = vmatprep.subr.mxu0 0.0
        %5107 = vmatpush2.msra.mxu0 0.0
        %5108 = vmatprep.subr.mxu0 0.0
        %5109 = vmatpush2.msra.mxu0 0.0
        %5110 = vmatprep.subr.mxu0 0.0
        %5111 = vmatpush2.msra.mxu0 0.0
        %5112 = vmatprep.subr.mxu0 0.0
        %5113 = vmatpush2.msra.mxu0 0.0
        %5114 = vmatprep.subr.mxu0 0.0
        %5115 = vmatpush2.msra.mxu0 0.0
        %5116 = vmatprep.subr.mxu0 0.0
        %5117 = vmatpush2.msra.mxu0 0.0
        %5118 = vmatprep.subr.mxu0 0.0
        %5119 = vmatpush2.msra.mxu0 0.0
        %5120 = vmatprep.subr.mxu0 0.0
        %5121 = vmatpush2.msra.mxu0 0.0
        %5122 = vmatprep.subr.mxu0 0.0
        %5123 = vmatpush2.msra.mxu0 0.0
        %5124 = vmatprep.mubr.f32.mxu0 0.0
        %5125 = vmatmul.mubr.f32.gmra.mxu0 %v4987
        %v5126 = vpop.f32.mrf.mxu0
        %v5127 = vadd.f32 0.0, %v5126
        %v5128 = vpop.f32.mrf.mxu0
        %5129 = vdwg.mxu0
        %v5130 = vpack.c.bf16 %v5056, %v5056
        %v5131 = vpack.c.bf16 %v5058, %v5058
        %v5132 = vpack.c.bf16 %v5127, %v5127
        %s5133 = scalar_lea.vmem [#allocation14], 768
        %v5134 = vld [vmem:[%s5133] sm:$0xff]
        %v5135 = vld [vmem:[%s5133 + $0x8] sm:$0xff]
        %v5136 = vld [vmem:[%s5133 + $0x10] sm:$0xff]
        %v5137 = vld [vmem:[%s5133 + $0x18] sm:$0xff]
        %v5138 = vld [vmem:[%s5133 + $0x20] sm:$0xff]
        %v5139 = vld [vmem:[%s5133 + $0x28] sm:$0xff]
        %v5140 = vld [vmem:[%s5133 + $0x30] sm:$0xff]
        %v5141 = vld [vmem:[%s5133 + $0x38] sm:$0xff]
        %v5142 = vld [vmem:[%s5133 + $0x40] sm:$0xff]
        %v5143 = vld [vmem:[%s5133 + $0x48] sm:$0xff]
        %v5144 = vld [vmem:[%s5133 + $0x50] sm:$0xff]
        %v5145 = vld [vmem:[%s5133 + $0x58] sm:$0xff]
        %v5146 = vld [vmem:[%s5133 + $0x60] sm:$0xff]
        %v5147 = vld [vmem:[%s5133 + $0x68] sm:$0xff]
        %v5148 = vld [vmem:[%s5133 + $0x70] sm:$0xff]
        %v5149 = vld [vmem:[%s5133 + $0x78] sm:$0xff]
        %v5150 = vld [vmem:[%s5133 + $0x80] sm:$0xff]
        %v5151 = vld [vmem:[%s5133 + $0x88] sm:$0xff]
        %v5152 = vld [vmem:[%s5133 + $0x90] sm:$0xff]
        %v5153 = vld [vmem:[%s5133 + $0x98] sm:$0xff]
        %v5154 = vld [vmem:[%s5133 + $0xa0] sm:$0xff]
        %v5155 = vld [vmem:[%s5133 + $0xa8] sm:$0xff]
        %v5156 = vld [vmem:[%s5133 + $0xb0] sm:$0xff]
        %v5157 = vld [vmem:[%s5133 + $0xb8] sm:$0xff]
        %v5158 = vld [vmem:[%s5133 + $0xc0] sm:$0xff]
        %v5159 = vld [vmem:[%s5133 + $0xc8] sm:$0xff]
        %v5160 = vld [vmem:[%s5133 + $0xd0] sm:$0xff]
        %v5161 = vld [vmem:[%s5133 + $0xd8] sm:$0xff]
        %v5162 = vld [vmem:[%s5133 + $0xe0] sm:$0xff]
        %v5163 = vld [vmem:[%s5133 + $0xe8] sm:$0xff]
        %v5164 = vld [vmem:[%s5133 + $0xf0] sm:$0xff]
        %v5165 = vld [vmem:[%s5133 + $0xf8] sm:$0xff]
        %v5166 = vld [vmem:[%s5133 + $0x100] sm:$0xff]
        %v5167 = vld [vmem:[%s5133 + $0x108] sm:$0xff]
        %v5168 = vld [vmem:[%s5133 + $0x110] sm:$0xff]
        %v5169 = vld [vmem:[%s5133 + $0x118] sm:$0xff]
        %v5170 = vld [vmem:[%s5133 + $0x120] sm:$0xff]
        %v5171 = vld [vmem:[%s5133 + $0x128] sm:$0xff]
        %v5172 = vld [vmem:[%s5133 + $0x130] sm:$0xff]
        %v5173 = vld [vmem:[%s5133 + $0x138] sm:$0xff]
        %v5174 = vld [vmem:[%s5133 + $0x140] sm:$0xff]
        %v5175 = vld [vmem:[%s5133 + $0x148] sm:$0xff]
        %v5176 = vld [vmem:[%s5133 + $0x150] sm:$0xff]
        %v5177 = vld [vmem:[%s5133 + $0x158] sm:$0xff]
        %v5178 = vld [vmem:[%s5133 + $0x160] sm:$0xff]
        %v5179 = vld [vmem:[%s5133 + $0x168] sm:$0xff]
        %v5180 = vld [vmem:[%s5133 + $0x170] sm:$0xff]
        %v5181 = vld [vmem:[%s5133 + $0x178] sm:$0xff]
        %v5182 = vld [vmem:[%s5133 + $0x180] sm:$0xff]
        %v5183 = vld [vmem:[%s5133 + $0x188] sm:$0xff]
        %v5184 = vld [vmem:[%s5133 + $0x190] sm:$0xff]
        %v5185 = vld [vmem:[%s5133 + $0x198] sm:$0xff]
        %v5186 = vld [vmem:[%s5133 + $0x1a0] sm:$0xff]
        %v5187 = vld [vmem:[%s5133 + $0x1a8] sm:$0xff]
        %v5188 = vld [vmem:[%s5133 + $0x1b0] sm:$0xff]
        %v5189 = vld [vmem:[%s5133 + $0x1b8] sm:$0xff]
        %v5190 = vld [vmem:[%s5133 + $0x1c0] sm:$0xff]
        %v5191 = vld [vmem:[%s5133 + $0x1c8] sm:$0xff]
        %v5192 = vld [vmem:[%s5133 + $0x1d0] sm:$0xff]
        %v5193 = vld [vmem:[%s5133 + $0x1d8] sm:$0xff]
        %v5194 = vld [vmem:[%s5133 + $0x1e0] sm:$0xff]
        %v5195 = vld [vmem:[%s5133 + $0x1e8] sm:$0xff]
        %v5196 = vld [vmem:[%s5133 + $0x1f0] sm:$0xff]
        %v5197 = vld [vmem:[%s5133 + $0x1f8] sm:$0xff]
        %v5198 = vld [vmem:[%s5133 + $0x200] sm:$0xff]
        %v5199 = vld [vmem:[%s5133 + $0x208] sm:$0xff]
        %v5200 = vld [vmem:[%s5133 + $0x210] sm:$0xff]
        %v5201 = vld [vmem:[%s5133 + $0x218] sm:$0xff]
        %v5202 = vld [vmem:[%s5133 + $0x220] sm:$0xff]
        %v5203 = vld [vmem:[%s5133 + $0x228] sm:$0xff]
        %v5204 = vld [vmem:[%s5133 + $0x230] sm:$0xff]
        %v5205 = vld [vmem:[%s5133 + $0x238] sm:$0xff]
        %v5206 = vld [vmem:[%s5133 + $0x240] sm:$0xff]
        %v5207 = vld [vmem:[%s5133 + $0x248] sm:$0xff]
        %v5208 = vld [vmem:[%s5133 + $0x250] sm:$0xff]
        %v5209 = vld [vmem:[%s5133 + $0x258] sm:$0xff]
        %v5210 = vld [vmem:[%s5133 + $0x260] sm:$0xff]
        %v5211 = vld [vmem:[%s5133 + $0x268] sm:$0xff]
        %v5212 = vld [vmem:[%s5133 + $0x270] sm:$0xff]
        %v5213 = vld [vmem:[%s5133 + $0x278] sm:$0xff]
        %v5214 = vld [vmem:[%s5133 + $0x280] sm:$0xff]
        %v5215 = vld [vmem:[%s5133 + $0x288] sm:$0xff]
        %v5216 = vld [vmem:[%s5133 + $0x290] sm:$0xff]
        %v5217 = vld [vmem:[%s5133 + $0x298] sm:$0xff]
        %v5218 = vld [vmem:[%s5133 + $0x2a0] sm:$0xff]
        %v5219 = vld [vmem:[%s5133 + $0x2a8] sm:$0xff]
        %v5220 = vld [vmem:[%s5133 + $0x2b0] sm:$0xff]
        %v5221 = vld [vmem:[%s5133 + $0x2b8] sm:$0xff]
        %v5222 = vld [vmem:[%s5133 + $0x2c0] sm:$0xff]
        %v5223 = vld [vmem:[%s5133 + $0x2c8] sm:$0xff]
        %v5224 = vld [vmem:[%s5133 + $0x2d0] sm:$0xff]
        %v5225 = vld [vmem:[%s5133 + $0x2d8] sm:$0xff]
        %v5226 = vld [vmem:[%s5133 + $0x2e0] sm:$0xff]
        %v5227 = vld [vmem:[%s5133 + $0x2e8] sm:$0xff]
        %v5228 = vld [vmem:[%s5133 + $0x2f0] sm:$0xff]
        %v5229 = vld [vmem:[%s5133 + $0x2f8] sm:$0xff]
        %v5326 = vunpack.c.l.b16 %v5134
        %v5327 = vunpack.c.h.b16 %v5134
        %v5328 = vunpack.c.l.b16 %v5135
        %v5329 = vunpack.c.h.b16 %v5135
        %v5330 = vunpack.c.l.b16 %v5136
        %v5331 = vunpack.c.h.b16 %v5136
        %v5332 = vunpack.c.l.b16 %v5137
        %v5333 = vunpack.c.h.b16 %v5137
        %v5334 = vunpack.c.l.b16 %v5138
        %v5335 = vunpack.c.h.b16 %v5138
        %v5336 = vunpack.c.l.b16 %v5139
        %v5337 = vunpack.c.h.b16 %v5139
        %v5338 = vunpack.c.l.b16 %v5140
        %v5339 = vunpack.c.h.b16 %v5140
        %v5340 = vunpack.c.l.b16 %v5141
        %v5341 = vunpack.c.h.b16 %v5141
        %v5342 = vunpack.c.l.b16 %v5142
        %v5343 = vunpack.c.h.b16 %v5142
        %v5344 = vunpack.c.l.b16 %v5143
        %v5345 = vunpack.c.h.b16 %v5143
        %v5346 = vunpack.c.l.b16 %v5144
        %v5347 = vunpack.c.h.b16 %v5144
        %v5348 = vunpack.c.l.b16 %v5145
        %v5349 = vunpack.c.h.b16 %v5145
        %v5350 = vunpack.c.l.b16 %v5146
        %v5351 = vunpack.c.h.b16 %v5146
        %v5352 = vunpack.c.l.b16 %v5147
        %v5353 = vunpack.c.h.b16 %v5147
        %v5354 = vunpack.c.l.b16 %v5148
        %v5355 = vunpack.c.h.b16 %v5148
        %v5356 = vunpack.c.l.b16 %v5149
        %v5357 = vunpack.c.h.b16 %v5149
        %v5358 = vunpack.c.l.b16 %v5150
        %v5359 = vunpack.c.h.b16 %v5150
        %v5360 = vunpack.c.l.b16 %v5151
        %v5361 = vunpack.c.h.b16 %v5151
        %v5362 = vunpack.c.l.b16 %v5152
        %v5363 = vunpack.c.h.b16 %v5152
        %v5364 = vunpack.c.l.b16 %v5153
        %v5365 = vunpack.c.h.b16 %v5153
        %v5366 = vunpack.c.l.b16 %v5154
        %v5367 = vunpack.c.h.b16 %v5154
        %v5368 = vunpack.c.l.b16 %v5155
        %v5369 = vunpack.c.h.b16 %v5155
        %v5370 = vunpack.c.l.b16 %v5156
        %v5371 = vunpack.c.h.b16 %v5156
        %v5372 = vunpack.c.l.b16 %v5157
        %v5373 = vunpack.c.h.b16 %v5157
        %v5374 = vunpack.c.l.b16 %v5158
        %v5375 = vunpack.c.h.b16 %v5158
        %v5376 = vunpack.c.l.b16 %v5159
        %v5377 = vunpack.c.h.b16 %v5159
        %v5378 = vunpack.c.l.b16 %v5160
        %v5379 = vunpack.c.h.b16 %v5160
        %v5380 = vunpack.c.l.b16 %v5161
        %v5381 = vunpack.c.h.b16 %v5161
        %v5382 = vunpack.c.l.b16 %v5162
        %v5383 = vunpack.c.h.b16 %v5162
        %v5384 = vunpack.c.l.b16 %v5163
        %v5385 = vunpack.c.h.b16 %v5163
        %v5386 = vunpack.c.l.b16 %v5164
        %v5387 = vunpack.c.h.b16 %v5164
        %v5388 = vunpack.c.l.b16 %v5165
        %v5389 = vunpack.c.h.b16 %v5165
        %v5390 = vunpack.c.l.b16 %v5166
        %v5391 = vunpack.c.h.b16 %v5166
        %v5392 = vunpack.c.l.b16 %v5167
        %v5393 = vunpack.c.h.b16 %v5167
        %v5394 = vunpack.c.l.b16 %v5168
        %v5395 = vunpack.c.h.b16 %v5168
        %v5396 = vunpack.c.l.b16 %v5169
        %v5397 = vunpack.c.h.b16 %v5169
        %v5398 = vunpack.c.l.b16 %v5170
        %v5399 = vunpack.c.h.b16 %v5170
        %v5400 = vunpack.c.l.b16 %v5171
        %v5401 = vunpack.c.h.b16 %v5171
        %v5402 = vunpack.c.l.b16 %v5172
        %v5403 = vunpack.c.h.b16 %v5172
        %v5404 = vunpack.c.l.b16 %v5173
        %v5405 = vunpack.c.h.b16 %v5173
        %v5406 = vunpack.c.l.b16 %v5174
        %v5407 = vunpack.c.h.b16 %v5174
        %v5408 = vunpack.c.l.b16 %v5175
        %v5409 = vunpack.c.h.b16 %v5175
        %v5410 = vunpack.c.l.b16 %v5176
        %v5411 = vunpack.c.h.b16 %v5176
        %v5412 = vunpack.c.l.b16 %v5177
        %v5413 = vunpack.c.h.b16 %v5177
        %v5414 = vunpack.c.l.b16 %v5178
        %v5415 = vunpack.c.h.b16 %v5178
        %v5416 = vunpack.c.l.b16 %v5179
        %v5417 = vunpack.c.h.b16 %v5179
        %v5418 = vunpack.c.l.b16 %v5180
        %v5419 = vunpack.c.h.b16 %v5180
        %v5420 = vunpack.c.l.b16 %v5181
        %v5421 = vunpack.c.h.b16 %v5181
        %v5422 = vunpack.c.l.b16 %v5182
        %v5423 = vunpack.c.h.b16 %v5182
        %v5424 = vunpack.c.l.b16 %v5183
        %v5425 = vunpack.c.h.b16 %v5183
        %v5426 = vunpack.c.l.b16 %v5184
        %v5427 = vunpack.c.h.b16 %v5184
        %v5428 = vunpack.c.l.b16 %v5185
        %v5429 = vunpack.c.h.b16 %v5185
        %v5430 = vunpack.c.l.b16 %v5186
        %v5431 = vunpack.c.h.b16 %v5186
        %v5432 = vunpack.c.l.b16 %v5187
        %v5433 = vunpack.c.h.b16 %v5187
        %v5434 = vunpack.c.l.b16 %v5188
        %v5435 = vunpack.c.h.b16 %v5188
        %v5436 = vunpack.c.l.b16 %v5189
        %v5437 = vunpack.c.h.b16 %v5189
        %v5438 = vunpack.c.l.b16 %v5190
        %v5439 = vunpack.c.h.b16 %v5190
        %v5440 = vunpack.c.l.b16 %v5191
        %v5441 = vunpack.c.h.b16 %v5191
        %v5442 = vunpack.c.l.b16 %v5192
        %v5443 = vunpack.c.h.b16 %v5192
        %v5444 = vunpack.c.l.b16 %v5193
        %v5445 = vunpack.c.h.b16 %v5193
        %v5446 = vunpack.c.l.b16 %v5194
        %v5447 = vunpack.c.h.b16 %v5194
        %v5448 = vunpack.c.l.b16 %v5195
        %v5449 = vunpack.c.h.b16 %v5195
        %v5450 = vunpack.c.l.b16 %v5196
        %v5451 = vunpack.c.h.b16 %v5196
        %v5452 = vunpack.c.l.b16 %v5197
        %v5453 = vunpack.c.h.b16 %v5197
        %v5454 = vunpack.c.l.b16 %v5198
        %v5455 = vunpack.c.h.b16 %v5198
        %v5456 = vunpack.c.l.b16 %v5199
        %v5457 = vunpack.c.h.b16 %v5199
        %v5458 = vunpack.c.l.b16 %v5200
        %v5459 = vunpack.c.h.b16 %v5200
        %v5460 = vunpack.c.l.b16 %v5201
        %v5461 = vunpack.c.h.b16 %v5201
        %v5462 = vunpack.c.l.b16 %v5202
        %v5463 = vunpack.c.h.b16 %v5202
        %v5464 = vunpack.c.l.b16 %v5203
        %v5465 = vunpack.c.h.b16 %v5203
        %v5466 = vunpack.c.l.b16 %v5204
        %v5467 = vunpack.c.h.b16 %v5204
        %v5468 = vunpack.c.l.b16 %v5205
        %v5469 = vunpack.c.h.b16 %v5205
        %v5470 = vunpack.c.l.b16 %v5206
        %v5471 = vunpack.c.h.b16 %v5206
        %v5472 = vunpack.c.l.b16 %v5207
        %v5473 = vunpack.c.h.b16 %v5207
        %v5474 = vunpack.c.l.b16 %v5208
        %v5475 = vunpack.c.h.b16 %v5208
        %v5476 = vunpack.c.l.b16 %v5209
        %v5477 = vunpack.c.h.b16 %v5209
        %v5478 = vunpack.c.l.b16 %v5210
        %v5479 = vunpack.c.h.b16 %v5210
        %v5480 = vunpack.c.l.b16 %v5211
        %v5481 = vunpack.c.h.b16 %v5211
        %v5482 = vunpack.c.l.b16 %v5212
        %v5483 = vunpack.c.h.b16 %v5212
        %v5484 = vunpack.c.l.b16 %v5213
        %v5485 = vunpack.c.h.b16 %v5213
        %v5486 = vunpack.c.l.b16 %v5214
        %v5487 = vunpack.c.h.b16 %v5214
        %v5488 = vunpack.c.l.b16 %v5215
        %v5489 = vunpack.c.h.b16 %v5215
        %v5490 = vunpack.c.l.b16 %v5216
        %v5491 = vunpack.c.h.b16 %v5216
        %v5492 = vunpack.c.l.b16 %v5217
        %v5493 = vunpack.c.h.b16 %v5217
        %v5494 = vunpack.c.l.b16 %v5218
        %v5495 = vunpack.c.h.b16 %v5218
        %v5496 = vunpack.c.l.b16 %v5219
        %v5497 = vunpack.c.h.b16 %v5219
        %v5498 = vunpack.c.l.b16 %v5220
        %v5499 = vunpack.c.h.b16 %v5220
        %v5500 = vunpack.c.l.b16 %v5221
        %v5501 = vunpack.c.h.b16 %v5221
        %v5502 = vunpack.c.l.b16 %v5222
        %v5503 = vunpack.c.h.b16 %v5222
        %v5504 = vunpack.c.l.b16 %v5223
        %v5505 = vunpack.c.h.b16 %v5223
        %v5506 = vunpack.c.l.b16 %v5224
        %v5507 = vunpack.c.h.b16 %v5224
        %v5508 = vunpack.c.l.b16 %v5225
        %v5509 = vunpack.c.h.b16 %v5225
        %v5510 = vunpack.c.l.b16 %v5226
        %v5511 = vunpack.c.h.b16 %v5226
        %v5512 = vunpack.c.l.b16 %v5227
        %v5513 = vunpack.c.h.b16 %v5227
        %v5514 = vunpack.c.l.b16 %v5228
        %v5515 = vunpack.c.h.b16 %v5228
        %v5516 = vunpack.c.l.b16 %v5229
        %v5517 = vunpack.c.h.b16 %v5229
        %v5518 = vpack.c.b16 %v5330, %v5326
        %v5519 = vpack.c.b16 %v5331, %v5327
        %v5520 = vpack.c.b16 %v5332, %v5328
        %v5521 = vpack.c.b16 %v5333, %v5329
        %v5522 = vpack.c.b16 %v5338, %v5334
        %v5523 = vpack.c.b16 %v5339, %v5335
        %v5524 = vpack.c.b16 %v5340, %v5336
        %v5525 = vpack.c.b16 %v5341, %v5337
        %v5526 = vpack.c.b16 %v5346, %v5342
        %v5527 = vpack.c.b16 %v5347, %v5343
        %v5528 = vpack.c.b16 %v5348, %v5344
        %v5529 = vpack.c.b16 %v5349, %v5345
        %v5530 = vpack.c.b16 %v5354, %v5350
        %v5531 = vpack.c.b16 %v5355, %v5351
        %v5532 = vpack.c.b16 %v5356, %v5352
        %v5533 = vpack.c.b16 %v5357, %v5353
        %v5534 = vpack.c.b16 %v5362, %v5358
        %v5535 = vpack.c.b16 %v5363, %v5359
        %v5536 = vpack.c.b16 %v5364, %v5360
        %v5537 = vpack.c.b16 %v5365, %v5361
        %v5538 = vpack.c.b16 %v5370, %v5366
        %v5539 = vpack.c.b16 %v5371, %v5367
        %v5540 = vpack.c.b16 %v5372, %v5368
        %v5541 = vpack.c.b16 %v5373, %v5369
        %v5542 = vpack.c.b16 %v5378, %v5374
        %v5543 = vpack.c.b16 %v5379, %v5375
        %v5544 = vpack.c.b16 %v5380, %v5376
        %v5545 = vpack.c.b16 %v5381, %v5377
        %v5546 = vpack.c.b16 %v5386, %v5382
        %v5547 = vpack.c.b16 %v5387, %v5383
        %v5548 = vpack.c.b16 %v5388, %v5384
        %v5549 = vpack.c.b16 %v5389, %v5385
        %v5550 = vpack.c.b16 %v5394, %v5390
        %v5551 = vpack.c.b16 %v5395, %v5391
        %v5552 = vpack.c.b16 %v5396, %v5392
        %v5553 = vpack.c.b16 %v5397, %v5393
        %v5554 = vpack.c.b16 %v5402, %v5398
        %v5555 = vpack.c.b16 %v5403, %v5399
        %v5556 = vpack.c.b16 %v5404, %v5400
        %v5557 = vpack.c.b16 %v5405, %v5401
        %v5558 = vpack.c.b16 %v5410, %v5406
        %v5559 = vpack.c.b16 %v5411, %v5407
        %v5560 = vpack.c.b16 %v5412, %v5408
        %v5561 = vpack.c.b16 %v5413, %v5409
        %v5562 = vpack.c.b16 %v5418, %v5414
        %v5563 = vpack.c.b16 %v5419, %v5415
        %v5564 = vpack.c.b16 %v5420, %v5416
        %v5565 = vpack.c.b16 %v5421, %v5417
        %v5566 = vpack.c.b16 %v5426, %v5422
        %v5567 = vpack.c.b16 %v5427, %v5423
        %v5568 = vpack.c.b16 %v5428, %v5424
        %v5569 = vpack.c.b16 %v5429, %v5425
        %v5570 = vpack.c.b16 %v5434, %v5430
        %v5571 = vpack.c.b16 %v5435, %v5431
        %v5572 = vpack.c.b16 %v5436, %v5432
        %v5573 = vpack.c.b16 %v5437, %v5433
        %v5574 = vpack.c.b16 %v5442, %v5438
        %v5575 = vpack.c.b16 %v5443, %v5439
        %v5576 = vpack.c.b16 %v5444, %v5440
        %v5577 = vpack.c.b16 %v5445, %v5441
        %v5578 = vpack.c.b16 %v5450, %v5446
        %v5579 = vpack.c.b16 %v5451, %v5447
        %v5580 = vpack.c.b16 %v5452, %v5448
        %v5581 = vpack.c.b16 %v5453, %v5449
        %v5582 = vpack.c.b16 %v5458, %v5454
        %v5583 = vpack.c.b16 %v5459, %v5455
        %v5584 = vpack.c.b16 %v5460, %v5456
        %v5585 = vpack.c.b16 %v5461, %v5457
        %v5586 = vpack.c.b16 %v5466, %v5462
        %v5587 = vpack.c.b16 %v5467, %v5463
        %v5588 = vpack.c.b16 %v5468, %v5464
        %v5589 = vpack.c.b16 %v5469, %v5465
        %v5590 = vpack.c.b16 %v5474, %v5470
        %v5591 = vpack.c.b16 %v5475, %v5471
        %v5592 = vpack.c.b16 %v5476, %v5472
        %v5593 = vpack.c.b16 %v5477, %v5473
        %v5594 = vpack.c.b16 %v5482, %v5478
        %v5595 = vpack.c.b16 %v5483, %v5479
        %v5596 = vpack.c.b16 %v5484, %v5480
        %v5597 = vpack.c.b16 %v5485, %v5481
        %v5598 = vpack.c.b16 %v5490, %v5486
        %v5599 = vpack.c.b16 %v5491, %v5487
        %v5600 = vpack.c.b16 %v5492, %v5488
        %v5601 = vpack.c.b16 %v5493, %v5489
        %v5602 = vpack.c.b16 %v5498, %v5494
        %v5603 = vpack.c.b16 %v5499, %v5495
        %v5604 = vpack.c.b16 %v5500, %v5496
        %v5605 = vpack.c.b16 %v5501, %v5497
        %v5606 = vpack.c.b16 %v5506, %v5502
        %v5607 = vpack.c.b16 %v5507, %v5503
        %v5608 = vpack.c.b16 %v5508, %v5504
        %v5609 = vpack.c.b16 %v5509, %v5505
        %v5610 = vpack.c.b16 %v5514, %v5510
        %v5611 = vpack.c.b16 %v5515, %v5511
        %v5612 = vpack.c.b16 %v5516, %v5512
        %v5613 = vpack.c.b16 %v5517, %v5513
        %5710 = vmatprep.subr.bf16.mxu0 %v5547
        %5711 = vmatpush1.bf16.msra.mxu0 %v5546
        %5712 = vmatprep.subr.bf16.mxu0 %v5543
        %5713 = vmatpush1.bf16.msra.mxu0 %v5542
        %5714 = vmatprep.subr.bf16.mxu0 %v5539
        %5715 = vmatpush1.bf16.msra.mxu0 %v5538
        %5716 = vmatprep.subr.bf16.mxu0 %v5535
        %5717 = vmatpush1.bf16.msra.mxu0 %v5534
        %5718 = vmatprep.subr.bf16.mxu0 %v5531
        %5719 = vmatpush1.bf16.msra.mxu0 %v5530
        %5720 = vmatprep.subr.bf16.mxu0 %v5527
        %5721 = vmatpush1.bf16.msra.mxu0 %v5526
        %5722 = vmatprep.subr.bf16.mxu0 %v5523
        %5723 = vmatpush1.bf16.msra.mxu0 %v5522
        %5724 = vmatprep.subr.bf16.mxu0 %v5519
        %5725 = vmatpush1.bf16.msra.mxu0 %v5518
        %5726 = vmatprep.subr.bf16.mxu0 %v5579
        %5727 = vmatpush2.bf16.msra.mxu0 %v5578
        %5728 = vmatprep.subr.bf16.mxu0 %v5575
        %5729 = vmatpush2.bf16.msra.mxu0 %v5574
        %5730 = vmatprep.subr.bf16.mxu0 %v5571
        %5731 = vmatpush2.bf16.msra.mxu0 %v5570
        %5732 = vmatprep.subr.bf16.mxu0 %v5567
        %5733 = vmatpush2.bf16.msra.mxu0 %v5566
        %5734 = vmatprep.subr.bf16.mxu0 %v5563
        %5735 = vmatpush2.bf16.msra.mxu0 %v5562
        %5736 = vmatprep.subr.bf16.mxu0 %v5559
        %5737 = vmatpush2.bf16.msra.mxu0 %v5558
        %5738 = vmatprep.subr.bf16.mxu0 %v5555
        %5739 = vmatpush2.bf16.msra.mxu0 %v5554
        %5740 = vmatprep.subr.bf16.mxu0 %v5551
        %5741 = vmatpush2.bf16.msra.mxu0 %v5550
        %5742 = vmatprep.mubr.bf16.mxu0 %v5131
        %5743 = vmatmul.mubr.bf16.gmra.mxu0 %v5130
        %v5744 = vpop.f32.mrf.mxu0
        %v5745 = vadd.f32 0.0, %v5744
        %v5746 = vpop.f32.mrf.mxu0
        %v5747 = vadd.f32 0.0, %v5746
        %v5748 = vpop.f32.mrf.mxu0
        %v5749 = vpop.f32.mrf.mxu0
        %5750 = vdwg.mxu0
        %5751 = vmatprep.subr.bf16.mxu0 %v5611
        %5752 = vmatpush1.bf16.msra.mxu0 %v5610
        %5753 = vmatprep.subr.bf16.mxu0 %v5607
        %5754 = vmatpush1.bf16.msra.mxu0 %v5606
        %5755 = vmatprep.subr.bf16.mxu0 %v5603
        %5756 = vmatpush1.bf16.msra.mxu0 %v5602
        %5757 = vmatprep.subr.bf16.mxu0 %v5599
        %5758 = vmatpush1.bf16.msra.mxu0 %v5598
        %5759 = vmatprep.subr.bf16.mxu0 %v5595
        %5760 = vmatpush1.bf16.msra.mxu0 %v5594
        %5761 = vmatprep.subr.bf16.mxu0 %v5591
        %5762 = vmatpush1.bf16.msra.mxu0 %v5590
        %5763 = vmatprep.subr.bf16.mxu0 %v5587
        %5764 = vmatpush1.bf16.msra.mxu0 %v5586
        %5765 = vmatprep.subr.bf16.mxu0 %v5583
        %5766 = vmatpush1.bf16.msra.mxu0 %v5582
        %5767 = vmatprep.subr.bf16.mxu0 0
        %5768 = vmatpush2.bf16.msra.mxu0 0
        %5769 = vmatprep.subr.bf16.mxu0 0
        %5770 = vmatpush2.bf16.msra.mxu0 0
        %5771 = vmatprep.subr.bf16.mxu0 0
        %5772 = vmatpush2.bf16.msra.mxu0 0
        %5773 = vmatprep.subr.bf16.mxu0 0
        %5774 = vmatpush2.bf16.msra.mxu0 0
        %5775 = vmatprep.subr.bf16.mxu0 0
        %5776 = vmatpush2.bf16.msra.mxu0 0
        %5777 = vmatprep.subr.bf16.mxu0 0
        %5778 = vmatpush2.bf16.msra.mxu0 0
        %5779 = vmatprep.subr.bf16.mxu0 0
        %5780 = vmatpush2.bf16.msra.mxu0 0
        %5781 = vmatprep.subr.bf16.mxu0 0
        %5782 = vmatpush2.bf16.msra.mxu0 0
        %5783 = vmatprep.mubr.bf16.mxu0 0
        %5784 = vmatmul.mubr.bf16.gmra.mxu0 %v5132
        %v5785 = vpop.f32.mrf.mxu0
        %v5786 = vadd.f32 %v5745, %v5785
        %v5787 = vpop.f32.mrf.mxu0
        %v5788 = vadd.f32 %v5747, %v5787
        %v5789 = vpop.f32.mrf.mxu0
        %v5790 = vpop.f32.mrf.mxu0
        %5791 = vdwg.mxu0
        %5792 = vmatprep.subr.bf16.mxu0 %v5549
        %5793 = vmatpush1.bf16.msra.mxu0 %v5548
        %5794 = vmatprep.subr.bf16.mxu0 %v5545
        %5795 = vmatpush1.bf16.msra.mxu0 %v5544
        %5796 = vmatprep.subr.bf16.mxu0 %v5541
        %5797 = vmatpush1.bf16.msra.mxu0 %v5540
        %5798 = vmatprep.subr.bf16.mxu0 %v5537
        %5799 = vmatpush1.bf16.msra.mxu0 %v5536
        %5800 = vmatprep.subr.bf16.mxu0 %v5533
        %5801 = vmatpush1.bf16.msra.mxu0 %v5532
        %5802 = vmatprep.subr.bf16.mxu0 %v5529
        %5803 = vmatpush1.bf16.msra.mxu0 %v5528
        %5804 = vmatprep.subr.bf16.mxu0 %v5525
        %5805 = vmatpush1.bf16.msra.mxu0 %v5524
        %5806 = vmatprep.subr.bf16.mxu0 %v5521
        %5807 = vmatpush1.bf16.msra.mxu0 %v5520
        %5808 = vmatprep.subr.bf16.mxu0 %v5581
        %5809 = vmatpush2.bf16.msra.mxu0 %v5580
        %5810 = vmatprep.subr.bf16.mxu0 %v5577
        %5811 = vmatpush2.bf16.msra.mxu0 %v5576
        %5812 = vmatprep.subr.bf16.mxu0 %v5573
        %5813 = vmatpush2.bf16.msra.mxu0 %v5572
        %5814 = vmatprep.subr.bf16.mxu0 %v5569
        %5815 = vmatpush2.bf16.msra.mxu0 %v5568
        %5816 = vmatprep.subr.bf16.mxu0 %v5565
        %5817 = vmatpush2.bf16.msra.mxu0 %v5564
        %5818 = vmatprep.subr.bf16.mxu0 %v5561
        %5819 = vmatpush2.bf16.msra.mxu0 %v5560
        %5820 = vmatprep.subr.bf16.mxu0 %v5557
        %5821 = vmatpush2.bf16.msra.mxu0 %v5556
        %5822 = vmatprep.subr.bf16.mxu0 %v5553
        %5823 = vmatpush2.bf16.msra.mxu0 %v5552
        %5824 = vmatprep.mubr.bf16.mxu0 %v5131
        %5825 = vmatmul.mubr.bf16.gmra.mxu0 %v5130
        %v5826 = vpop.f32.mrf.mxu0
        %v5827 = vadd.f32 0.0, %v5826
        %v5828 = vpop.f32.mrf.mxu0
        %v5829 = vadd.f32 0.0, %v5828
        %v5830 = vpop.f32.mrf.mxu0
        %v5831 = vpop.f32.mrf.mxu0
        %5832 = vdwg.mxu0
        %5833 = vmatprep.subr.bf16.mxu0 %v5613
        %5834 = vmatpush1.bf16.msra.mxu0 %v5612
        %5835 = vmatprep.subr.bf16.mxu0 %v5609
        %5836 = vmatpush1.bf16.msra.mxu0 %v5608
        %5837 = vmatprep.subr.bf16.mxu0 %v5605
        %5838 = vmatpush1.bf16.msra.mxu0 %v5604
        %5839 = vmatprep.subr.bf16.mxu0 %v5601
        %5840 = vmatpush1.bf16.msra.mxu0 %v5600
        %5841 = vmatprep.subr.bf16.mxu0 %v5597
        %5842 = vmatpush1.bf16.msra.mxu0 %v5596
        %5843 = vmatprep.subr.bf16.mxu0 %v5593
        %5844 = vmatpush1.bf16.msra.mxu0 %v5592
        %5845 = vmatprep.subr.bf16.mxu0 %v5589
        %5846 = vmatpush1.bf16.msra.mxu0 %v5588
        %5847 = vmatprep.subr.bf16.mxu0 %v5585
        %5848 = vmatpush1.bf16.msra.mxu0 %v5584
        %5849 = vmatprep.subr.bf16.mxu0 0
        %5850 = vmatpush2.bf16.msra.mxu0 0
        %5851 = vmatprep.subr.bf16.mxu0 0
        %5852 = vmatpush2.bf16.msra.mxu0 0
        %5853 = vmatprep.subr.bf16.mxu0 0
        %5854 = vmatpush2.bf16.msra.mxu0 0
        %5855 = vmatprep.subr.bf16.mxu0 0
        %5856 = vmatpush2.bf16.msra.mxu0 0
        %5857 = vmatprep.subr.bf16.mxu0 0
        %5858 = vmatpush2.bf16.msra.mxu0 0
        %5859 = vmatprep.subr.bf16.mxu0 0
        %5860 = vmatpush2.bf16.msra.mxu0 0
        %5861 = vmatprep.subr.bf16.mxu0 0
        %5862 = vmatpush2.bf16.msra.mxu0 0
        %5863 = vmatprep.subr.bf16.mxu0 0
        %5864 = vmatpush2.bf16.msra.mxu0 0
        %5865 = vmatprep.mubr.bf16.mxu0 0
        %5866 = vmatmul.mubr.bf16.gmra.mxu0 %v5132
        %v5867 = vpop.f32.mrf.mxu0
        %v5868 = vadd.f32 %v5827, %v5867
        %v5869 = vpop.f32.mrf.mxu0
        %v5870 = vadd.f32 %v5829, %v5869
        %v5871 = vpop.f32.mrf.mxu0
        %v5872 = vpop.f32.mrf.mxu0
        %5873 = vdwg.mxu0
        %v5970 = vunpack.c.l.b16 %v4888
        %v5971 = vunpack.c.h.b16 %v4888
        %v5972 = vunpack.c.l.b16 %v4889
        %v5973 = vunpack.c.h.b16 %v4889
        %v5974 = vunpack.c.l.b16 %v4890
        %v5975 = vunpack.c.h.b16 %v4890
        %v5976 = vunpack.c.l.b16 %v4891
        %v5977 = vunpack.c.h.b16 %v4891
        %v5978 = vunpack.c.l.b16 %v4892
        %v5979 = vunpack.c.h.b16 %v4892
        %v5980 = vunpack.c.l.b16 %v4893
        %v5981 = vunpack.c.h.b16 %v4893
        %v5982 = vunpack.c.l.b16 %v4894
        %v5983 = vunpack.c.h.b16 %v4894
        %v5984 = vunpack.c.l.b16 %v4895
        %v5985 = vunpack.c.h.b16 %v4895
        %v5986 = vunpack.c.l.b16 %v4896
        %v5987 = vunpack.c.h.b16 %v4896
        %v5988 = vunpack.c.l.b16 %v4897
        %v5989 = vunpack.c.h.b16 %v4897
        %v5990 = vunpack.c.l.b16 %v4898
        %v5991 = vunpack.c.h.b16 %v4898
        %v5992 = vunpack.c.l.b16 %v4899
        %v5993 = vunpack.c.h.b16 %v4899
        %v5994 = vunpack.c.l.b16 %v4900
        %v5995 = vunpack.c.h.b16 %v4900
        %v5996 = vunpack.c.l.b16 %v4901
        %v5997 = vunpack.c.h.b16 %v4901
        %v5998 = vunpack.c.l.b16 %v4902
        %v5999 = vunpack.c.h.b16 %v4902
        %v6000 = vunpack.c.l.b16 %v4903
        %v6001 = vunpack.c.h.b16 %v4903
        %v6002 = vunpack.c.l.b16 %v4904
        %v6003 = vunpack.c.h.b16 %v4904
        %v6004 = vunpack.c.l.b16 %v4905
        %v6005 = vunpack.c.h.b16 %v4905
        %v6006 = vunpack.c.l.b16 %v4906
        %v6007 = vunpack.c.h.b16 %v4906
        %v6008 = vunpack.c.l.b16 %v4907
        %v6009 = vunpack.c.h.b16 %v4907
        %v6010 = vunpack.c.l.b16 %v4908
        %v6011 = vunpack.c.h.b16 %v4908
        %v6012 = vunpack.c.l.b16 %v4909
        %v6013 = vunpack.c.h.b16 %v4909
        %v6014 = vunpack.c.l.b16 %v4910
        %v6015 = vunpack.c.h.b16 %v4910
        %v6016 = vunpack.c.l.b16 %v4911
        %v6017 = vunpack.c.h.b16 %v4911
        %v6018 = vunpack.c.l.b16 %v4912
        %v6019 = vunpack.c.h.b16 %v4912
        %v6020 = vunpack.c.l.b16 %v4913
        %v6021 = vunpack.c.h.b16 %v4913
        %v6022 = vunpack.c.l.b16 %v4914
        %v6023 = vunpack.c.h.b16 %v4914
        %v6024 = vunpack.c.l.b16 %v4915
        %v6025 = vunpack.c.h.b16 %v4915
        %v6026 = vunpack.c.l.b16 %v4916
        %v6027 = vunpack.c.h.b16 %v4916
        %v6028 = vunpack.c.l.b16 %v4917
        %v6029 = vunpack.c.h.b16 %v4917
        %v6030 = vunpack.c.l.b16 %v4918
        %v6031 = vunpack.c.h.b16 %v4918
        %v6032 = vunpack.c.l.b16 %v4919
        %v6033 = vunpack.c.h.b16 %v4919
        %v6034 = vunpack.c.l.b16 %v4920
        %v6035 = vunpack.c.h.b16 %v4920
        %v6036 = vunpack.c.l.b16 %v4921
        %v6037 = vunpack.c.h.b16 %v4921
        %v6038 = vunpack.c.l.b16 %v4922
        %v6039 = vunpack.c.h.b16 %v4922
        %v6040 = vunpack.c.l.b16 %v4923
        %v6041 = vunpack.c.h.b16 %v4923
        %v6042 = vunpack.c.l.b16 %v4924
        %v6043 = vunpack.c.h.b16 %v4924
        %v6044 = vunpack.c.l.b16 %v4925
        %v6045 = vunpack.c.h.b16 %v4925
        %v6046 = vunpack.c.l.b16 %v4926
        %v6047 = vunpack.c.h.b16 %v4926
        %v6048 = vunpack.c.l.b16 %v4927
        %v6049 = vunpack.c.h.b16 %v4927
        %v6050 = vunpack.c.l.b16 %v4928
        %v6051 = vunpack.c.h.b16 %v4928
        %v6052 = vunpack.c.l.b16 %v4929
        %v6053 = vunpack.c.h.b16 %v4929
        %v6054 = vunpack.c.l.b16 %v4930
        %v6055 = vunpack.c.h.b16 %v4930
        %v6056 = vunpack.c.l.b16 %v4931
        %v6057 = vunpack.c.h.b16 %v4931
        %v6058 = vunpack.c.l.b16 %v4932
        %v6059 = vunpack.c.h.b16 %v4932
        %v6060 = vunpack.c.l.b16 %v4933
        %v6061 = vunpack.c.h.b16 %v4933
        %v6062 = vunpack.c.l.b16 %v4934
        %v6063 = vunpack.c.h.b16 %v4934
        %v6064 = vunpack.c.l.b16 %v4935
        %v6065 = vunpack.c.h.b16 %v4935
        %v6066 = vunpack.c.l.b16 %v4936
        %v6067 = vunpack.c.h.b16 %v4936
        %v6068 = vunpack.c.l.b16 %v4937
        %v6069 = vunpack.c.h.b16 %v4937
        %v6070 = vunpack.c.l.b16 %v4938
        %v6071 = vunpack.c.h.b16 %v4938
        %v6072 = vunpack.c.l.b16 %v4939
        %v6073 = vunpack.c.h.b16 %v4939
        %v6074 = vunpack.c.l.b16 %v4940
        %v6075 = vunpack.c.h.b16 %v4940
        %v6076 = vunpack.c.l.b16 %v4941
        %v6077 = vunpack.c.h.b16 %v4941
        %v6078 = vunpack.c.l.b16 %v4942
        %v6079 = vunpack.c.h.b16 %v4942
        %v6080 = vunpack.c.l.b16 %v4943
        %v6081 = vunpack.c.h.b16 %v4943
        %v6082 = vunpack.c.l.b16 %v4944
        %v6083 = vunpack.c.h.b16 %v4944
        %v6084 = vunpack.c.l.b16 %v4945
        %v6085 = vunpack.c.h.b16 %v4945
        %v6086 = vunpack.c.l.b16 %v4946
        %v6087 = vunpack.c.h.b16 %v4946
        %v6088 = vunpack.c.l.b16 %v4947
        %v6089 = vunpack.c.h.b16 %v4947
        %v6090 = vunpack.c.l.b16 %v4948
        %v6091 = vunpack.c.h.b16 %v4948
        %v6092 = vunpack.c.l.b16 %v4949
        %v6093 = vunpack.c.h.b16 %v4949
        %v6094 = vunpack.c.l.b16 %v4950
        %v6095 = vunpack.c.h.b16 %v4950
        %v6096 = vunpack.c.l.b16 %v4951
        %v6097 = vunpack.c.h.b16 %v4951
        %v6098 = vunpack.c.l.b16 %v4952
        %v6099 = vunpack.c.h.b16 %v4952
        %v6100 = vunpack.c.l.b16 %v4953
        %v6101 = vunpack.c.h.b16 %v4953
        %v6102 = vunpack.c.l.b16 %v4954
        %v6103 = vunpack.c.h.b16 %v4954
        %v6104 = vunpack.c.l.b16 %v4955
        %v6105 = vunpack.c.h.b16 %v4955
        %v6106 = vunpack.c.l.b16 %v4956
        %v6107 = vunpack.c.h.b16 %v4956
        %v6108 = vunpack.c.l.b16 %v4957
        %v6109 = vunpack.c.h.b16 %v4957
        %v6110 = vunpack.c.l.b16 %v4958
        %v6111 = vunpack.c.h.b16 %v4958
        %v6112 = vunpack.c.l.b16 %v4959
        %v6113 = vunpack.c.h.b16 %v4959
        %v6114 = vunpack.c.l.b16 %v4960
        %v6115 = vunpack.c.h.b16 %v4960
        %v6116 = vunpack.c.l.b16 %v4961
        %v6117 = vunpack.c.h.b16 %v4961
        %v6118 = vunpack.c.l.b16 %v4962
        %v6119 = vunpack.c.h.b16 %v4962
        %v6120 = vunpack.c.l.b16 %v4963
        %v6121 = vunpack.c.h.b16 %v4963
        %v6122 = vunpack.c.l.b16 %v4964
        %v6123 = vunpack.c.h.b16 %v4964
        %v6124 = vunpack.c.l.b16 %v4965
        %v6125 = vunpack.c.h.b16 %v4965
        %v6126 = vunpack.c.l.b16 %v4966
        %v6127 = vunpack.c.h.b16 %v4966
        %v6128 = vunpack.c.l.b16 %v4967
        %v6129 = vunpack.c.h.b16 %v4967
        %v6130 = vunpack.c.l.b16 %v4968
        %v6131 = vunpack.c.h.b16 %v4968
        %v6132 = vunpack.c.l.b16 %v4969
        %v6133 = vunpack.c.h.b16 %v4969
        %v6134 = vunpack.c.l.b16 %v4970
        %v6135 = vunpack.c.h.b16 %v4970
        %v6136 = vunpack.c.l.b16 %v4971
        %v6137 = vunpack.c.h.b16 %v4971
        %v6138 = vunpack.c.l.b16 %v4972
        %v6139 = vunpack.c.h.b16 %v4972
        %v6140 = vunpack.c.l.b16 %v4973
        %v6141 = vunpack.c.h.b16 %v4973
        %v6142 = vunpack.c.l.b16 %v4974
        %v6143 = vunpack.c.h.b16 %v4974
        %v6144 = vunpack.c.l.b16 %v4975
        %v6145 = vunpack.c.h.b16 %v4975
        %v6146 = vunpack.c.l.b16 %v4976
        %v6147 = vunpack.c.h.b16 %v4976
        %v6148 = vunpack.c.l.b16 %v4977
        %v6149 = vunpack.c.h.b16 %v4977
        %v6150 = vunpack.c.l.b16 %v4978
        %v6151 = vunpack.c.h.b16 %v4978
        %v6152 = vunpack.c.l.b16 %v4979
        %v6153 = vunpack.c.h.b16 %v4979
        %v6154 = vunpack.c.l.b16 %v4980
        %v6155 = vunpack.c.h.b16 %v4980
        %v6156 = vunpack.c.l.b16 %v4981
        %v6157 = vunpack.c.h.b16 %v4981
        %v6158 = vunpack.c.l.b16 %v4982
        %v6159 = vunpack.c.h.b16 %v4982
        %v6160 = vunpack.c.l.b16 %v4983
        %v6161 = vunpack.c.h.b16 %v4983
        %v6162 = vpack.c.b16 %v5974, %v5970
        %v6163 = vpack.c.b16 %v5975, %v5971
        %v6164 = vpack.c.b16 %v5976, %v5972
        %v6165 = vpack.c.b16 %v5977, %v5973
        %v6166 = vpack.c.b16 %v5982, %v5978
        %v6167 = vpack.c.b16 %v5983, %v5979
        %v6168 = vpack.c.b16 %v5984, %v5980
        %v6169 = vpack.c.b16 %v5985, %v5981
        %v6170 = vpack.c.b16 %v5990, %v5986
        %v6171 = vpack.c.b16 %v5991, %v5987
        %v6172 = vpack.c.b16 %v5992, %v5988
        %v6173 = vpack.c.b16 %v5993, %v5989
        %v6174 = vpack.c.b16 %v5998, %v5994
        %v6175 = vpack.c.b16 %v5999, %v5995
        %v6176 = vpack.c.b16 %v6000, %v5996
        %v6177 = vpack.c.b16 %v6001, %v5997
        %v6178 = vpack.c.b16 %v6006, %v6002
        %v6179 = vpack.c.b16 %v6007, %v6003
        %v6180 = vpack.c.b16 %v6008, %v6004
        %v6181 = vpack.c.b16 %v6009, %v6005
        %v6182 = vpack.c.b16 %v6014, %v6010
        %v6183 = vpack.c.b16 %v6015, %v6011
        %v6184 = vpack.c.b16 %v6016, %v6012
        %v6185 = vpack.c.b16 %v6017, %v6013
        %v6186 = vpack.c.b16 %v6022, %v6018
        %v6187 = vpack.c.b16 %v6023, %v6019
        %v6188 = vpack.c.b16 %v6024, %v6020
        %v6189 = vpack.c.b16 %v6025, %v6021
        %v6190 = vpack.c.b16 %v6030, %v6026
        %v6191 = vpack.c.b16 %v6031, %v6027
        %v6192 = vpack.c.b16 %v6032, %v6028
        %v6193 = vpack.c.b16 %v6033, %v6029
        %v6194 = vpack.c.b16 %v6038, %v6034
        %v6195 = vpack.c.b16 %v6039, %v6035
        %v6196 = vpack.c.b16 %v6040, %v6036
        %v6197 = vpack.c.b16 %v6041, %v6037
        %v6198 = vpack.c.b16 %v6046, %v6042
        %v6199 = vpack.c.b16 %v6047, %v6043
        %v6200 = vpack.c.b16 %v6048, %v6044
        %v6201 = vpack.c.b16 %v6049, %v6045
        %v6202 = vpack.c.b16 %v6054, %v6050
        %v6203 = vpack.c.b16 %v6055, %v6051
        %v6204 = vpack.c.b16 %v6056, %v6052
        %v6205 = vpack.c.b16 %v6057, %v6053
        %v6206 = vpack.c.b16 %v6062, %v6058
        %v6207 = vpack.c.b16 %v6063, %v6059
        %v6208 = vpack.c.b16 %v6064, %v6060
        %v6209 = vpack.c.b16 %v6065, %v6061
        %v6210 = vpack.c.b16 %v6070, %v6066
        %v6211 = vpack.c.b16 %v6071, %v6067
        %v6212 = vpack.c.b16 %v6072, %v6068
        %v6213 = vpack.c.b16 %v6073, %v6069
        %v6214 = vpack.c.b16 %v6078, %v6074
        %v6215 = vpack.c.b16 %v6079, %v6075
        %v6216 = vpack.c.b16 %v6080, %v6076
        %v6217 = vpack.c.b16 %v6081, %v6077
        %v6218 = vpack.c.b16 %v6086, %v6082
        %v6219 = vpack.c.b16 %v6087, %v6083
        %v6220 = vpack.c.b16 %v6088, %v6084
        %v6221 = vpack.c.b16 %v6089, %v6085
        %v6222 = vpack.c.b16 %v6094, %v6090
        %v6223 = vpack.c.b16 %v6095, %v6091
        %v6224 = vpack.c.b16 %v6096, %v6092
        %v6225 = vpack.c.b16 %v6097, %v6093
        %v6226 = vpack.c.b16 %v6102, %v6098
        %v6227 = vpack.c.b16 %v6103, %v6099
        %v6228 = vpack.c.b16 %v6104, %v6100
        %v6229 = vpack.c.b16 %v6105, %v6101
        %v6230 = vpack.c.b16 %v6110, %v6106
        %v6231 = vpack.c.b16 %v6111, %v6107
        %v6232 = vpack.c.b16 %v6112, %v6108
        %v6233 = vpack.c.b16 %v6113, %v6109
        %v6234 = vpack.c.b16 %v6118, %v6114
        %v6235 = vpack.c.b16 %v6119, %v6115
        %v6236 = vpack.c.b16 %v6120, %v6116
        %v6237 = vpack.c.b16 %v6121, %v6117
        %v6238 = vpack.c.b16 %v6126, %v6122
        %v6239 = vpack.c.b16 %v6127, %v6123
        %v6240 = vpack.c.b16 %v6128, %v6124
        %v6241 = vpack.c.b16 %v6129, %v6125
        %v6242 = vpack.c.b16 %v6134, %v6130
        %v6243 = vpack.c.b16 %v6135, %v6131
        %v6244 = vpack.c.b16 %v6136, %v6132
        %v6245 = vpack.c.b16 %v6137, %v6133
        %v6246 = vpack.c.b16 %v6142, %v6138
        %v6247 = vpack.c.b16 %v6143, %v6139
        %v6248 = vpack.c.b16 %v6144, %v6140
        %v6249 = vpack.c.b16 %v6145, %v6141
        %v6250 = vpack.c.b16 %v6150, %v6146
        %v6251 = vpack.c.b16 %v6151, %v6147
        %v6252 = vpack.c.b16 %v6152, %v6148
        %v6253 = vpack.c.b16 %v6153, %v6149
        %v6254 = vpack.c.b16 %v6158, %v6154
        %v6255 = vpack.c.b16 %v6159, %v6155
        %v6256 = vpack.c.b16 %v6160, %v6156
        %v6257 = vpack.c.b16 %v6161, %v6157
        %6354 = vmatprep.subr.bf16.mxu0 %v6191
        %6355 = vmatpush1.bf16.msra.mxu0 %v6190
        %6356 = vmatprep.subr.bf16.mxu0 %v6187
        %6357 = vmatpush1.bf16.msra.mxu0 %v6186
        %6358 = vmatprep.subr.bf16.mxu0 %v6183
        %6359 = vmatpush1.bf16.msra.mxu0 %v6182
        %6360 = vmatprep.subr.bf16.mxu0 %v6179
        %6361 = vmatpush1.bf16.msra.mxu0 %v6178
        %6362 = vmatprep.subr.bf16.mxu0 %v6175
        %6363 = vmatpush1.bf16.msra.mxu0 %v6174
        %6364 = vmatprep.subr.bf16.mxu0 %v6171
        %6365 = vmatpush1.bf16.msra.mxu0 %v6170
        %6366 = vmatprep.subr.bf16.mxu0 %v6167
        %6367 = vmatpush1.bf16.msra.mxu0 %v6166
        %6368 = vmatprep.subr.bf16.mxu0 %v6163
        %6369 = vmatpush1.bf16.msra.mxu0 %v6162
        %6370 = vmatprep.subr.bf16.mxu0 %v6223
        %6371 = vmatpush2.bf16.msra.mxu0 %v6222
        %6372 = vmatprep.subr.bf16.mxu0 %v6219
        %6373 = vmatpush2.bf16.msra.mxu0 %v6218
        %6374 = vmatprep.subr.bf16.mxu0 %v6215
        %6375 = vmatpush2.bf16.msra.mxu0 %v6214
        %6376 = vmatprep.subr.bf16.mxu0 %v6211
        %6377 = vmatpush2.bf16.msra.mxu0 %v6210
        %6378 = vmatprep.subr.bf16.mxu0 %v6207
        %6379 = vmatpush2.bf16.msra.mxu0 %v6206
        %6380 = vmatprep.subr.bf16.mxu0 %v6203
        %6381 = vmatpush2.bf16.msra.mxu0 %v6202
        %6382 = vmatprep.subr.bf16.mxu0 %v6199
        %6383 = vmatpush2.bf16.msra.mxu0 %v6198
        %6384 = vmatprep.subr.bf16.mxu0 %v6195
        %6385 = vmatpush2.bf16.msra.mxu0 %v6194
        %6386 = vmatprep.mubr.bf16.mxu0 %v4886
        %6387 = vmatmul.mubr.bf16.gmra.mxu0 %v4885
        %v6388 = vpop.f32.mrf.mxu0
        %v6389 = vadd.f32 %v5786, %v6388
        %v6390 = vpop.f32.mrf.mxu0
        %v6391 = vadd.f32 %v5788, %v6390
        %v6392 = vpop.f32.mrf.mxu0
        %v6393 = vpop.f32.mrf.mxu0
        %6394 = vdwg.mxu0
        %6395 = vmatprep.subr.bf16.mxu0 %v6255
        %6396 = vmatpush1.bf16.msra.mxu0 %v6254
        %6397 = vmatprep.subr.bf16.mxu0 %v6251
        %6398 = vmatpush1.bf16.msra.mxu0 %v6250
        %6399 = vmatprep.subr.bf16.mxu0 %v6247
        %6400 = vmatpush1.bf16.msra.mxu0 %v6246
        %6401 = vmatprep.subr.bf16.mxu0 %v6243
        %6402 = vmatpush1.bf16.msra.mxu0 %v6242
        %6403 = vmatprep.subr.bf16.mxu0 %v6239
        %6404 = vmatpush1.bf16.msra.mxu0 %v6238
        %6405 = vmatprep.subr.bf16.mxu0 %v6235
        %6406 = vmatpush1.bf16.msra.mxu0 %v6234
        %6407 = vmatprep.subr.bf16.mxu0 %v6231
        %6408 = vmatpush1.bf16.msra.mxu0 %v6230
        %6409 = vmatprep.subr.bf16.mxu0 %v6227
        %6410 = vmatpush1.bf16.msra.mxu0 %v6226
        %6411 = vmatprep.subr.bf16.mxu0 0
        %6412 = vmatpush2.bf16.msra.mxu0 0
        %6413 = vmatprep.subr.bf16.mxu0 0
        %6414 = vmatpush2.bf16.msra.mxu0 0
        %6415 = vmatprep.subr.bf16.mxu0 0
        %6416 = vmatpush2.bf16.msra.mxu0 0
        %6417 = vmatprep.subr.bf16.mxu0 0
        %6418 = vmatpush2.bf16.msra.mxu0 0
        %6419 = vmatprep.subr.bf16.mxu0 0
        %6420 = vmatpush2.bf16.msra.mxu0 0
        %6421 = vmatprep.subr.bf16.mxu0 0
        %6422 = vmatpush2.bf16.msra.mxu0 0
        %6423 = vmatprep.subr.bf16.mxu0 0
        %6424 = vmatpush2.bf16.msra.mxu0 0
        %6425 = vmatprep.subr.bf16.mxu0 0
        %6426 = vmatpush2.bf16.msra.mxu0 0
        %6427 = vmatprep.mubr.bf16.mxu0 0
        %6428 = vmatmul.mubr.bf16.gmra.mxu0 %v4887
        %v6429 = vpop.f32.mrf.mxu0
        %v6430 = vadd.f32 %v6389, %v6429
        %v6431 = vpop.f32.mrf.mxu0
        %v6432 = vadd.f32 %v6391, %v6431
        %v6433 = vpop.f32.mrf.mxu0
        %v6434 = vpop.f32.mrf.mxu0
        %6435 = vdwg.mxu0
        %6436 = vmatprep.subr.bf16.mxu0 %v6193
        %6437 = vmatpush1.bf16.msra.mxu0 %v6192
        %6438 = vmatprep.subr.bf16.mxu0 %v6189
        %6439 = vmatpush1.bf16.msra.mxu0 %v6188
        %6440 = vmatprep.subr.bf16.mxu0 %v6185
        %6441 = vmatpush1.bf16.msra.mxu0 %v6184
        %6442 = vmatprep.subr.bf16.mxu0 %v6181
        %6443 = vmatpush1.bf16.msra.mxu0 %v6180
        %6444 = vmatprep.subr.bf16.mxu0 %v6177
        %6445 = vmatpush1.bf16.msra.mxu0 %v6176
        %6446 = vmatprep.subr.bf16.mxu0 %v6173
        %6447 = vmatpush1.bf16.msra.mxu0 %v6172
        %6448 = vmatprep.subr.bf16.mxu0 %v6169
        %6449 = vmatpush1.bf16.msra.mxu0 %v6168
        %6450 = vmatprep.subr.bf16.mxu0 %v6165
        %6451 = vmatpush1.bf16.msra.mxu0 %v6164
        %6452 = vmatprep.subr.bf16.mxu0 %v6225
        %6453 = vmatpush2.bf16.msra.mxu0 %v6224
        %6454 = vmatprep.subr.bf16.mxu0 %v6221
        %6455 = vmatpush2.bf16.msra.mxu0 %v6220
        %6456 = vmatprep.subr.bf16.mxu0 %v6217
        %6457 = vmatpush2.bf16.msra.mxu0 %v6216
        %6458 = vmatprep.subr.bf16.mxu0 %v6213
        %6459 = vmatpush2.bf16.msra.mxu0 %v6212
        %6460 = vmatprep.subr.bf16.mxu0 %v6209
        %6461 = vmatpush2.bf16.msra.mxu0 %v6208
        %6462 = vmatprep.subr.bf16.mxu0 %v6205
        %6463 = vmatpush2.bf16.msra.mxu0 %v6204
        %6464 = vmatprep.subr.bf16.mxu0 %v6201
        %6465 = vmatpush2.bf16.msra.mxu0 %v6200
        %6466 = vmatprep.subr.bf16.mxu0 %v6197
        %6467 = vmatpush2.bf16.msra.mxu0 %v6196
        %6468 = vmatprep.mubr.bf16.mxu0 %v4886
        %6469 = vmatmul.mubr.bf16.gmra.mxu0 %v4885
        %v6470 = vpop.f32.mrf.mxu0
        %v6471 = vadd.f32 %v5868, %v6470
        %v6472 = vpop.f32.mrf.mxu0
        %v6473 = vadd.f32 %v5870, %v6472
        %v6474 = vpop.f32.mrf.mxu0
        %v6475 = vpop.f32.mrf.mxu0
        %6476 = vdwg.mxu0
        %6477 = vmatprep.subr.bf16.mxu0 %v6257
        %6478 = vmatpush1.bf16.msra.mxu0 %v6256
        %6479 = vmatprep.subr.bf16.mxu0 %v6253
        %6480 = vmatpush1.bf16.msra.mxu0 %v6252
        %6481 = vmatprep.subr.bf16.mxu0 %v6249
        %6482 = vmatpush1.bf16.msra.mxu0 %v6248
        %6483 = vmatprep.subr.bf16.mxu0 %v6245
        %6484 = vmatpush1.bf16.msra.mxu0 %v6244
        %6485 = vmatprep.subr.bf16.mxu0 %v6241
        %6486 = vmatpush1.bf16.msra.mxu0 %v6240
        %6487 = vmatprep.subr.bf16.mxu0 %v6237
        %6488 = vmatpush1.bf16.msra.mxu0 %v6236
        %6489 = vmatprep.subr.bf16.mxu0 %v6233
        %6490 = vmatpush1.bf16.msra.mxu0 %v6232
        %6491 = vmatprep.subr.bf16.mxu0 %v6229
        %6492 = vmatpush1.bf16.msra.mxu0 %v6228
        %6493 = vmatprep.subr.bf16.mxu0 0
        %6494 = vmatpush2.bf16.msra.mxu0 0
        %6495 = vmatprep.subr.bf16.mxu0 0
        %6496 = vmatpush2.bf16.msra.mxu0 0
        %6497 = vmatprep.subr.bf16.mxu0 0
        %6498 = vmatpush2.bf16.msra.mxu0 0
        %6499 = vmatprep.subr.bf16.mxu0 0
        %6500 = vmatpush2.bf16.msra.mxu0 0
        %6501 = vmatprep.subr.bf16.mxu0 0
        %6502 = vmatpush2.bf16.msra.mxu0 0
        %6503 = vmatprep.subr.bf16.mxu0 0
        %6504 = vmatpush2.bf16.msra.mxu0 0
        %6505 = vmatprep.subr.bf16.mxu0 0
        %6506 = vmatpush2.bf16.msra.mxu0 0
        %6507 = vmatprep.subr.bf16.mxu0 0
        %6508 = vmatpush2.bf16.msra.mxu0 0
        %6509 = vmatprep.mubr.bf16.mxu0 0
        %6510 = vmatmul.mubr.bf16.gmra.mxu0 %v4887
        %v6511 = vpop.f32.mrf.mxu0
        %v6512 = vadd.f32 %v6471, %v6511
        %v6513 = vpop.f32.mrf.mxu0
        %v6514 = vadd.f32 %v6473, %v6513
        %v6515 = vpop.f32.mrf.mxu0
        %v6516 = vpop.f32.mrf.mxu0
        %6517 = vdwg.mxu0
        %s6518 = scalar_lea.vmem [#allocation13], 8
        %v6519 = vld [vmem:[%s6518] sm:$0xf]
        %v6521 = vsel %vm4740, %v6519, 0
        %6523 = vmatprep.subr.mxu0 0.0
        %6524 = vmatpush1.msra.mxu0 0.0
        %6525 = vmatprep.subr.mxu0 0.0
        %6526 = vmatpush1.msra.mxu0 0.0
        %6527 = vmatprep.subr.mxu0 0.0
        %6528 = vmatpush1.msra.mxu0 0.0
        %6529 = vmatprep.subr.mxu0 0.0
        %6530 = vmatpush1.msra.mxu0 0.0
        %6531 = vmatprep.subr.mxu0 0.0
        %6532 = vmatpush1.msra.mxu0 0.0
        %6533 = vmatprep.subr.mxu0 0.0
        %6534 = vmatpush1.msra.mxu0 0.0
        %6535 = vmatprep.subr.mxu0 0.0
        %6536 = vmatpush1.msra.mxu0 0.0
        %6537 = vmatprep.subr.mxu0 0.0
        %6538 = vmatpush1.msra.mxu0 0.0
        %6539 = vmatprep.subr.mxu0 0.0
        %6540 = vmatpush1.msra.mxu0 0.0
        %6541 = vmatprep.subr.mxu0 0.0
        %6542 = vmatpush1.msra.mxu0 0.0
        %6543 = vmatprep.subr.mxu0 0.0
        %6544 = vmatpush1.msra.mxu0 0.0
        %6545 = vmatprep.subr.mxu0 0.0
        %6546 = vmatpush1.msra.mxu0 0.0
        %6547 = vmatprep.subr.mxu0 0.0
        %6548 = vmatpush1.msra.mxu0 0.0
        %6549 = vmatprep.subr.mxu0 0.0
        %6550 = vmatpush1.msra.mxu0 0.0
        %6551 = vmatprep.subr.mxu0 0.0
        %6552 = vmatpush1.msra.mxu0 0.0
        %6553 = vmatprep.subr.mxu0 %v4737
        %6554 = vmatpush1.msra.mxu0 %v4736
        %6555 = vmatprep.subr.mxu0 0.0
        %6556 = vmatpush2.msra.mxu0 0.0
        %6557 = vmatprep.subr.mxu0 0.0
        %6558 = vmatpush2.msra.mxu0 0.0
        %6559 = vmatprep.subr.mxu0 0.0
        %6560 = vmatpush2.msra.mxu0 0.0
        %6561 = vmatprep.subr.mxu0 0.0
        %6562 = vmatpush2.msra.mxu0 0.0
        %6563 = vmatprep.subr.mxu0 0.0
        %6564 = vmatpush2.msra.mxu0 0.0
        %6565 = vmatprep.subr.mxu0 0.0
        %6566 = vmatpush2.msra.mxu0 0.0
        %6567 = vmatprep.subr.mxu0 0.0
        %6568 = vmatpush2.msra.mxu0 0.0
        %6569 = vmatprep.subr.mxu0 0.0
        %6570 = vmatpush2.msra.mxu0 0.0
        %6571 = vmatprep.subr.mxu0 0.0
        %6572 = vmatpush2.msra.mxu0 0.0
        %6573 = vmatprep.subr.mxu0 0.0
        %6574 = vmatpush2.msra.mxu0 0.0
        %6575 = vmatprep.subr.mxu0 0.0
        %6576 = vmatpush2.msra.mxu0 0.0
        %6577 = vmatprep.subr.mxu0 0.0
        %6578 = vmatpush2.msra.mxu0 0.0
        %6579 = vmatprep.subr.mxu0 0.0
        %6580 = vmatpush2.msra.mxu0 0.0
        %6581 = vmatprep.subr.mxu0 0.0
        %6582 = vmatpush2.msra.mxu0 0.0
        %6583 = vmatprep.subr.mxu0 0.0
        %6584 = vmatpush2.msra.mxu0 0.0
        %6585 = vmatprep.subr.mxu0 0.0
        %6586 = vmatpush2.msra.mxu0 0.0
        %6587 = vmatprep.mubr.f32.mxu0 0.0
        %6588 = vmatmul.mubr.f32.gmra.mxu0 %v6521
        %v6589 = vpop.f32.mrf.mxu0
        %v6590 = vadd.f32 0.0, %v6589
        %v6591 = vpop.f32.mrf.mxu0
        %v6592 = vadd.f32 0.0, %v6591
        %6593 = vdwg.mxu0
        %6594 = vmatprep.subr.mxu0 0.0
        %6595 = vmatpush1.msra.mxu0 0.0
        %6596 = vmatprep.subr.mxu0 0.0
        %6597 = vmatpush1.msra.mxu0 0.0
        %6598 = vmatprep.subr.mxu0 0.0
        %6599 = vmatpush1.msra.mxu0 0.0
        %6600 = vmatprep.subr.mxu0 0.0
        %6601 = vmatpush1.msra.mxu0 0.0
        %6602 = vmatprep.subr.mxu0 0.0
        %6603 = vmatpush1.msra.mxu0 0.0
        %6604 = vmatprep.subr.mxu0 0.0
        %6605 = vmatpush1.msra.mxu0 0.0
        %6606 = vmatprep.subr.mxu0 0.0
        %6607 = vmatpush1.msra.mxu0 0.0
        %6608 = vmatprep.subr.mxu0 0.0
        %6609 = vmatpush1.msra.mxu0 0.0
        %6610 = vmatprep.subr.mxu0 0.0
        %6611 = vmatpush1.msra.mxu0 0.0
        %6612 = vmatprep.subr.mxu0 0.0
        %6613 = vmatpush1.msra.mxu0 0.0
        %6614 = vmatprep.subr.mxu0 0.0
        %6615 = vmatpush1.msra.mxu0 0.0
        %6616 = vmatprep.subr.mxu0 0.0
        %6617 = vmatpush1.msra.mxu0 0.0
        %6618 = vmatprep.subr.mxu0 0.0
        %6619 = vmatpush1.msra.mxu0 0.0
        %6620 = vmatprep.subr.mxu0 0.0
        %6621 = vmatpush1.msra.mxu0 0.0
        %6622 = vmatprep.subr.mxu0 0.0
        %6623 = vmatpush1.msra.mxu0 0.0
        %6624 = vmatprep.subr.mxu0 0.0
        %6625 = vmatpush1.msra.mxu0 %v4738
        %6626 = vmatprep.subr.mxu0 0.0
        %6627 = vmatpush2.msra.mxu0 0.0
        %6628 = vmatprep.subr.mxu0 0.0
        %6629 = vmatpush2.msra.mxu0 0.0
        %6630 = vmatprep.subr.mxu0 0.0
        %6631 = vmatpush2.msra.mxu0 0.0
        %6632 = vmatprep.subr.mxu0 0.0
        %6633 = vmatpush2.msra.mxu0 0.0
        %6634 = vmatprep.subr.mxu0 0.0
        %6635 = vmatpush2.msra.mxu0 0.0
        %6636 = vmatprep.subr.mxu0 0.0
        %6637 = vmatpush2.msra.mxu0 0.0
        %6638 = vmatprep.subr.mxu0 0.0
        %6639 = vmatpush2.msra.mxu0 0.0
        %6640 = vmatprep.subr.mxu0 0.0
        %6641 = vmatpush2.msra.mxu0 0.0
        %6642 = vmatprep.subr.mxu0 0.0
        %6643 = vmatpush2.msra.mxu0 0.0
        %6644 = vmatprep.subr.mxu0 0.0
        %6645 = vmatpush2.msra.mxu0 0.0
        %6646 = vmatprep.subr.mxu0 0.0
        %6647 = vmatpush2.msra.mxu0 0.0
        %6648 = vmatprep.subr.mxu0 0.0
        %6649 = vmatpush2.msra.mxu0 0.0
        %6650 = vmatprep.subr.mxu0 0.0
        %6651 = vmatpush2.msra.mxu0 0.0
        %6652 = vmatprep.subr.mxu0 0.0
        %6653 = vmatpush2.msra.mxu0 0.0
        %6654 = vmatprep.subr.mxu0 0.0
        %6655 = vmatpush2.msra.mxu0 0.0
        %6656 = vmatprep.subr.mxu0 0.0
        %6657 = vmatpush2.msra.mxu0 0.0
        %6658 = vmatprep.mubr.f32.mxu0 0.0
        %6659 = vmatmul.mubr.f32.gmra.mxu0 %v6521
        %v6660 = vpop.f32.mrf.mxu0
        %v6661 = vadd.f32 0.0, %v6660
        %v6662 = vpop.f32.mrf.mxu0
        %6663 = vdwg.mxu0
        %v6664 = vpack.c.bf16 %v6590, %v6590
        %v6665 = vpack.c.bf16 %v6592, %v6592
        %v6666 = vpack.c.bf16 %v6661, %v6661
        %s6667 = scalar_lea.vmem [#allocation14], 1536
        %v6668 = vld [vmem:[%s6667] sm:$0xff]
        %v6669 = vld [vmem:[%s6667 + $0x8] sm:$0xff]
        %v6670 = vld [vmem:[%s6667 + $0x10] sm:$0xff]
        %v6671 = vld [vmem:[%s6667 + $0x18] sm:$0xff]
        %v6672 = vld [vmem:[%s6667 + $0x20] sm:$0xff]
        %v6673 = vld [vmem:[%s6667 + $0x28] sm:$0xff]
        %v6674 = vld [vmem:[%s6667 + $0x30] sm:$0xff]
        %v6675 = vld [vmem:[%s6667 + $0x38] sm:$0xff]
        %v6676 = vld [vmem:[%s6667 + $0x40] sm:$0xff]
        %v6677 = vld [vmem:[%s6667 + $0x48] sm:$0xff]
        %v6678 = vld [vmem:[%s6667 + $0x50] sm:$0xff]
        %v6679 = vld [vmem:[%s6667 + $0x58] sm:$0xff]
        %v6680 = vld [vmem:[%s6667 + $0x60] sm:$0xff]
        %v6681 = vld [vmem:[%s6667 + $0x68] sm:$0xff]
        %v6682 = vld [vmem:[%s6667 + $0x70] sm:$0xff]
        %v6683 = vld [vmem:[%s6667 + $0x78] sm:$0xff]
        %v6684 = vld [vmem:[%s6667 + $0x80] sm:$0xff]
        %v6685 = vld [vmem:[%s6667 + $0x88] sm:$0xff]
        %v6686 = vld [vmem:[%s6667 + $0x90] sm:$0xff]
        %v6687 = vld [vmem:[%s6667 + $0x98] sm:$0xff]
        %v6688 = vld [vmem:[%s6667 + $0xa0] sm:$0xff]
        %v6689 = vld [vmem:[%s6667 + $0xa8] sm:$0xff]
        %v6690 = vld [vmem:[%s6667 + $0xb0] sm:$0xff]
        %v6691 = vld [vmem:[%s6667 + $0xb8] sm:$0xff]
        %v6692 = vld [vmem:[%s6667 + $0xc0] sm:$0xff]
        %v6693 = vld [vmem:[%s6667 + $0xc8] sm:$0xff]
        %v6694 = vld [vmem:[%s6667 + $0xd0] sm:$0xff]
        %v6695 = vld [vmem:[%s6667 + $0xd8] sm:$0xff]
        %v6696 = vld [vmem:[%s6667 + $0xe0] sm:$0xff]
        %v6697 = vld [vmem:[%s6667 + $0xe8] sm:$0xff]
        %v6698 = vld [vmem:[%s6667 + $0xf0] sm:$0xff]
        %v6699 = vld [vmem:[%s6667 + $0xf8] sm:$0xff]
        %v6700 = vld [vmem:[%s6667 + $0x100] sm:$0xff]
        %v6701 = vld [vmem:[%s6667 + $0x108] sm:$0xff]
        %v6702 = vld [vmem:[%s6667 + $0x110] sm:$0xff]
        %v6703 = vld [vmem:[%s6667 + $0x118] sm:$0xff]
        %v6704 = vld [vmem:[%s6667 + $0x120] sm:$0xff]
        %v6705 = vld [vmem:[%s6667 + $0x128] sm:$0xff]
        %v6706 = vld [vmem:[%s6667 + $0x130] sm:$0xff]
        %v6707 = vld [vmem:[%s6667 + $0x138] sm:$0xff]
        %v6708 = vld [vmem:[%s6667 + $0x140] sm:$0xff]
        %v6709 = vld [vmem:[%s6667 + $0x148] sm:$0xff]
        %v6710 = vld [vmem:[%s6667 + $0x150] sm:$0xff]
        %v6711 = vld [vmem:[%s6667 + $0x158] sm:$0xff]
        %v6712 = vld [vmem:[%s6667 + $0x160] sm:$0xff]
        %v6713 = vld [vmem:[%s6667 + $0x168] sm:$0xff]
        %v6714 = vld [vmem:[%s6667 + $0x170] sm:$0xff]
        %v6715 = vld [vmem:[%s6667 + $0x178] sm:$0xff]
        %v6716 = vld [vmem:[%s6667 + $0x180] sm:$0xff]
        %v6717 = vld [vmem:[%s6667 + $0x188] sm:$0xff]
        %v6718 = vld [vmem:[%s6667 + $0x190] sm:$0xff]
        %v6719 = vld [vmem:[%s6667 + $0x198] sm:$0xff]
        %v6720 = vld [vmem:[%s6667 + $0x1a0] sm:$0xff]
        %v6721 = vld [vmem:[%s6667 + $0x1a8] sm:$0xff]
        %v6722 = vld [vmem:[%s6667 + $0x1b0] sm:$0xff]
        %v6723 = vld [vmem:[%s6667 + $0x1b8] sm:$0xff]
        %v6724 = vld [vmem:[%s6667 + $0x1c0] sm:$0xff]
        %v6725 = vld [vmem:[%s6667 + $0x1c8] sm:$0xff]
        %v6726 = vld [vmem:[%s6667 + $0x1d0] sm:$0xff]
        %v6727 = vld [vmem:[%s6667 + $0x1d8] sm:$0xff]
        %v6728 = vld [vmem:[%s6667 + $0x1e0] sm:$0xff]
        %v6729 = vld [vmem:[%s6667 + $0x1e8] sm:$0xff]
        %v6730 = vld [vmem:[%s6667 + $0x1f0] sm:$0xff]
        %v6731 = vld [vmem:[%s6667 + $0x1f8] sm:$0xff]
        %v6732 = vld [vmem:[%s6667 + $0x200] sm:$0xff]
        %v6733 = vld [vmem:[%s6667 + $0x208] sm:$0xff]
        %v6734 = vld [vmem:[%s6667 + $0x210] sm:$0xff]
        %v6735 = vld [vmem:[%s6667 + $0x218] sm:$0xff]
        %v6736 = vld [vmem:[%s6667 + $0x220] sm:$0xff]
        %v6737 = vld [vmem:[%s6667 + $0x228] sm:$0xff]
        %v6738 = vld [vmem:[%s6667 + $0x230] sm:$0xff]
        %v6739 = vld [vmem:[%s6667 + $0x238] sm:$0xff]
        %v6740 = vld [vmem:[%s6667 + $0x240] sm:$0xff]
        %v6741 = vld [vmem:[%s6667 + $0x248] sm:$0xff]
        %v6742 = vld [vmem:[%s6667 + $0x250] sm:$0xff]
        %v6743 = vld [vmem:[%s6667 + $0x258] sm:$0xff]
        %v6744 = vld [vmem:[%s6667 + $0x260] sm:$0xff]
        %v6745 = vld [vmem:[%s6667 + $0x268] sm:$0xff]
        %v6746 = vld [vmem:[%s6667 + $0x270] sm:$0xff]
        %v6747 = vld [vmem:[%s6667 + $0x278] sm:$0xff]
        %v6748 = vld [vmem:[%s6667 + $0x280] sm:$0xff]
        %v6749 = vld [vmem:[%s6667 + $0x288] sm:$0xff]
        %v6750 = vld [vmem:[%s6667 + $0x290] sm:$0xff]
        %v6751 = vld [vmem:[%s6667 + $0x298] sm:$0xff]
        %v6752 = vld [vmem:[%s6667 + $0x2a0] sm:$0xff]
        %v6753 = vld [vmem:[%s6667 + $0x2a8] sm:$0xff]
        %v6754 = vld [vmem:[%s6667 + $0x2b0] sm:$0xff]
        %v6755 = vld [vmem:[%s6667 + $0x2b8] sm:$0xff]
        %v6756 = vld [vmem:[%s6667 + $0x2c0] sm:$0xff]
        %v6757 = vld [vmem:[%s6667 + $0x2c8] sm:$0xff]
        %v6758 = vld [vmem:[%s6667 + $0x2d0] sm:$0xff]
        %v6759 = vld [vmem:[%s6667 + $0x2d8] sm:$0xff]
        %v6760 = vld [vmem:[%s6667 + $0x2e0] sm:$0xff]
        %v6761 = vld [vmem:[%s6667 + $0x2e8] sm:$0xff]
        %v6762 = vld [vmem:[%s6667 + $0x2f0] sm:$0xff]
        %v6763 = vld [vmem:[%s6667 + $0x2f8] sm:$0xff]
        %v6860 = vunpack.c.l.b16 %v6668
        %v6861 = vunpack.c.h.b16 %v6668
        %v6862 = vunpack.c.l.b16 %v6669
        %v6863 = vunpack.c.h.b16 %v6669
        %v6864 = vunpack.c.l.b16 %v6670
        %v6865 = vunpack.c.h.b16 %v6670
        %v6866 = vunpack.c.l.b16 %v6671
        %v6867 = vunpack.c.h.b16 %v6671
        %v6868 = vunpack.c.l.b16 %v6672
        %v6869 = vunpack.c.h.b16 %v6672
        %v6870 = vunpack.c.l.b16 %v6673
        %v6871 = vunpack.c.h.b16 %v6673
        %v6872 = vunpack.c.l.b16 %v6674
        %v6873 = vunpack.c.h.b16 %v6674
        %v6874 = vunpack.c.l.b16 %v6675
        %v6875 = vunpack.c.h.b16 %v6675
        %v6876 = vunpack.c.l.b16 %v6676
        %v6877 = vunpack.c.h.b16 %v6676
        %v6878 = vunpack.c.l.b16 %v6677
        %v6879 = vunpack.c.h.b16 %v6677
        %v6880 = vunpack.c.l.b16 %v6678
        %v6881 = vunpack.c.h.b16 %v6678
        %v6882 = vunpack.c.l.b16 %v6679
        %v6883 = vunpack.c.h.b16 %v6679
        %v6884 = vunpack.c.l.b16 %v6680
        %v6885 = vunpack.c.h.b16 %v6680
        %v6886 = vunpack.c.l.b16 %v6681
        %v6887 = vunpack.c.h.b16 %v6681
        %v6888 = vunpack.c.l.b16 %v6682
        %v6889 = vunpack.c.h.b16 %v6682
        %v6890 = vunpack.c.l.b16 %v6683
        %v6891 = vunpack.c.h.b16 %v6683
        %v6892 = vunpack.c.l.b16 %v6684
        %v6893 = vunpack.c.h.b16 %v6684
        %v6894 = vunpack.c.l.b16 %v6685
        %v6895 = vunpack.c.h.b16 %v6685
        %v6896 = vunpack.c.l.b16 %v6686
        %v6897 = vunpack.c.h.b16 %v6686
        %v6898 = vunpack.c.l.b16 %v6687
        %v6899 = vunpack.c.h.b16 %v6687
        %v6900 = vunpack.c.l.b16 %v6688
        %v6901 = vunpack.c.h.b16 %v6688
        %v6902 = vunpack.c.l.b16 %v6689
        %v6903 = vunpack.c.h.b16 %v6689
        %v6904 = vunpack.c.l.b16 %v6690
        %v6905 = vunpack.c.h.b16 %v6690
        %v6906 = vunpack.c.l.b16 %v6691
        %v6907 = vunpack.c.h.b16 %v6691
        %v6908 = vunpack.c.l.b16 %v6692
        %v6909 = vunpack.c.h.b16 %v6692
        %v6910 = vunpack.c.l.b16 %v6693
        %v6911 = vunpack.c.h.b16 %v6693
        %v6912 = vunpack.c.l.b16 %v6694
        %v6913 = vunpack.c.h.b16 %v6694
        %v6914 = vunpack.c.l.b16 %v6695
        %v6915 = vunpack.c.h.b16 %v6695
        %v6916 = vunpack.c.l.b16 %v6696
        %v6917 = vunpack.c.h.b16 %v6696
        %v6918 = vunpack.c.l.b16 %v6697
        %v6919 = vunpack.c.h.b16 %v6697
        %v6920 = vunpack.c.l.b16 %v6698
        %v6921 = vunpack.c.h.b16 %v6698
        %v6922 = vunpack.c.l.b16 %v6699
        %v6923 = vunpack.c.h.b16 %v6699
        %v6924 = vunpack.c.l.b16 %v6700
        %v6925 = vunpack.c.h.b16 %v6700
        %v6926 = vunpack.c.l.b16 %v6701
        %v6927 = vunpack.c.h.b16 %v6701
        %v6928 = vunpack.c.l.b16 %v6702
        %v6929 = vunpack.c.h.b16 %v6702
        %v6930 = vunpack.c.l.b16 %v6703
        %v6931 = vunpack.c.h.b16 %v6703
        %v6932 = vunpack.c.l.b16 %v6704
        %v6933 = vunpack.c.h.b16 %v6704
        %v6934 = vunpack.c.l.b16 %v6705
        %v6935 = vunpack.c.h.b16 %v6705
        %v6936 = vunpack.c.l.b16 %v6706
        %v6937 = vunpack.c.h.b16 %v6706
        %v6938 = vunpack.c.l.b16 %v6707
        %v6939 = vunpack.c.h.b16 %v6707
        %v6940 = vunpack.c.l.b16 %v6708
        %v6941 = vunpack.c.h.b16 %v6708
        %v6942 = vunpack.c.l.b16 %v6709
        %v6943 = vunpack.c.h.b16 %v6709
        %v6944 = vunpack.c.l.b16 %v6710
        %v6945 = vunpack.c.h.b16 %v6710
        %v6946 = vunpack.c.l.b16 %v6711
        %v6947 = vunpack.c.h.b16 %v6711
        %v6948 = vunpack.c.l.b16 %v6712
        %v6949 = vunpack.c.h.b16 %v6712
        %v6950 = vunpack.c.l.b16 %v6713
        %v6951 = vunpack.c.h.b16 %v6713
        %v6952 = vunpack.c.l.b16 %v6714
        %v6953 = vunpack.c.h.b16 %v6714
        %v6954 = vunpack.c.l.b16 %v6715
        %v6955 = vunpack.c.h.b16 %v6715
        %v6956 = vunpack.c.l.b16 %v6716
        %v6957 = vunpack.c.h.b16 %v6716
        %v6958 = vunpack.c.l.b16 %v6717
        %v6959 = vunpack.c.h.b16 %v6717
        %v6960 = vunpack.c.l.b16 %v6718
        %v6961 = vunpack.c.h.b16 %v6718
        %v6962 = vunpack.c.l.b16 %v6719
        %v6963 = vunpack.c.h.b16 %v6719
        %v6964 = vunpack.c.l.b16 %v6720
        %v6965 = vunpack.c.h.b16 %v6720
        %v6966 = vunpack.c.l.b16 %v6721
        %v6967 = vunpack.c.h.b16 %v6721
        %v6968 = vunpack.c.l.b16 %v6722
        %v6969 = vunpack.c.h.b16 %v6722
        %v6970 = vunpack.c.l.b16 %v6723
        %v6971 = vunpack.c.h.b16 %v6723
        %v6972 = vunpack.c.l.b16 %v6724
        %v6973 = vunpack.c.h.b16 %v6724
        %v6974 = vunpack.c.l.b16 %v6725
        %v6975 = vunpack.c.h.b16 %v6725
        %v6976 = vunpack.c.l.b16 %v6726
        %v6977 = vunpack.c.h.b16 %v6726
        %v6978 = vunpack.c.l.b16 %v6727
        %v6979 = vunpack.c.h.b16 %v6727
        %v6980 = vunpack.c.l.b16 %v6728
        %v6981 = vunpack.c.h.b16 %v6728
        %v6982 = vunpack.c.l.b16 %v6729
        %v6983 = vunpack.c.h.b16 %v6729
        %v6984 = vunpack.c.l.b16 %v6730
        %v6985 = vunpack.c.h.b16 %v6730
        %v6986 = vunpack.c.l.b16 %v6731
        %v6987 = vunpack.c.h.b16 %v6731
        %v6988 = vunpack.c.l.b16 %v6732
        %v6989 = vunpack.c.h.b16 %v6732
        %v6990 = vunpack.c.l.b16 %v6733
        %v6991 = vunpack.c.h.b16 %v6733
        %v6992 = vunpack.c.l.b16 %v6734
        %v6993 = vunpack.c.h.b16 %v6734
        %v6994 = vunpack.c.l.b16 %v6735
        %v6995 = vunpack.c.h.b16 %v6735
        %v6996 = vunpack.c.l.b16 %v6736
        %v6997 = vunpack.c.h.b16 %v6736
        %v6998 = vunpack.c.l.b16 %v6737
        %v6999 = vunpack.c.h.b16 %v6737
        %v7000 = vunpack.c.l.b16 %v6738
        %v7001 = vunpack.c.h.b16 %v6738
        %v7002 = vunpack.c.l.b16 %v6739
        %v7003 = vunpack.c.h.b16 %v6739
        %v7004 = vunpack.c.l.b16 %v6740
        %v7005 = vunpack.c.h.b16 %v6740
        %v7006 = vunpack.c.l.b16 %v6741
        %v7007 = vunpack.c.h.b16 %v6741
        %v7008 = vunpack.c.l.b16 %v6742
        %v7009 = vunpack.c.h.b16 %v6742
        %v7010 = vunpack.c.l.b16 %v6743
        %v7011 = vunpack.c.h.b16 %v6743
        %v7012 = vunpack.c.l.b16 %v6744
        %v7013 = vunpack.c.h.b16 %v6744
        %v7014 = vunpack.c.l.b16 %v6745
        %v7015 = vunpack.c.h.b16 %v6745
        %v7016 = vunpack.c.l.b16 %v6746
        %v7017 = vunpack.c.h.b16 %v6746
        %v7018 = vunpack.c.l.b16 %v6747
        %v7019 = vunpack.c.h.b16 %v6747
        %v7020 = vunpack.c.l.b16 %v6748
        %v7021 = vunpack.c.h.b16 %v6748
        %v7022 = vunpack.c.l.b16 %v6749
        %v7023 = vunpack.c.h.b16 %v6749
        %v7024 = vunpack.c.l.b16 %v6750
        %v7025 = vunpack.c.h.b16 %v6750
        %v7026 = vunpack.c.l.b16 %v6751
        %v7027 = vunpack.c.h.b16 %v6751
        %v7028 = vunpack.c.l.b16 %v6752
        %v7029 = vunpack.c.h.b16 %v6752
        %v7030 = vunpack.c.l.b16 %v6753
        %v7031 = vunpack.c.h.b16 %v6753
        %v7032 = vunpack.c.l.b16 %v6754
        %v7033 = vunpack.c.h.b16 %v6754
        %v7034 = vunpack.c.l.b16 %v6755
        %v7035 = vunpack.c.h.b16 %v6755
        %v7036 = vunpack.c.l.b16 %v6756
        %v7037 = vunpack.c.h.b16 %v6756
        %v7038 = vunpack.c.l.b16 %v6757
        %v7039 = vunpack.c.h.b16 %v6757
        %v7040 = vunpack.c.l.b16 %v6758
        %v7041 = vunpack.c.h.b16 %v6758
        %v7042 = vunpack.c.l.b16 %v6759
        %v7043 = vunpack.c.h.b16 %v6759
        %v7044 = vunpack.c.l.b16 %v6760
        %v7045 = vunpack.c.h.b16 %v6760
        %v7046 = vunpack.c.l.b16 %v6761
        %v7047 = vunpack.c.h.b16 %v6761
        %v7048 = vunpack.c.l.b16 %v6762
        %v7049 = vunpack.c.h.b16 %v6762
        %v7050 = vunpack.c.l.b16 %v6763
        %v7051 = vunpack.c.h.b16 %v6763
        %v7052 = vpack.c.b16 %v6864, %v6860
        %v7053 = vpack.c.b16 %v6865, %v6861
        %v7054 = vpack.c.b16 %v6866, %v6862
        %v7055 = vpack.c.b16 %v6867, %v6863
        %v7056 = vpack.c.b16 %v6872, %v6868
        %v7057 = vpack.c.b16 %v6873, %v6869
        %v7058 = vpack.c.b16 %v6874, %v6870
        %v7059 = vpack.c.b16 %v6875, %v6871
        %v7060 = vpack.c.b16 %v6880, %v6876
        %v7061 = vpack.c.b16 %v6881, %v6877
        %v7062 = vpack.c.b16 %v6882, %v6878
        %v7063 = vpack.c.b16 %v6883, %v6879
        %v7064 = vpack.c.b16 %v6888, %v6884
        %v7065 = vpack.c.b16 %v6889, %v6885
        %v7066 = vpack.c.b16 %v6890, %v6886
        %v7067 = vpack.c.b16 %v6891, %v6887
        %v7068 = vpack.c.b16 %v6896, %v6892
        %v7069 = vpack.c.b16 %v6897, %v6893
        %v7070 = vpack.c.b16 %v6898, %v6894
        %v7071 = vpack.c.b16 %v6899, %v6895
        %v7072 = vpack.c.b16 %v6904, %v6900
        %v7073 = vpack.c.b16 %v6905, %v6901
        %v7074 = vpack.c.b16 %v6906, %v6902
        %v7075 = vpack.c.b16 %v6907, %v6903
        %v7076 = vpack.c.b16 %v6912, %v6908
        %v7077 = vpack.c.b16 %v6913, %v6909
        %v7078 = vpack.c.b16 %v6914, %v6910
        %v7079 = vpack.c.b16 %v6915, %v6911
        %v7080 = vpack.c.b16 %v6920, %v6916
        %v7081 = vpack.c.b16 %v6921, %v6917
        %v7082 = vpack.c.b16 %v6922, %v6918
        %v7083 = vpack.c.b16 %v6923, %v6919
        %v7084 = vpack.c.b16 %v6928, %v6924
        %v7085 = vpack.c.b16 %v6929, %v6925
        %v7086 = vpack.c.b16 %v6930, %v6926
        %v7087 = vpack.c.b16 %v6931, %v6927
        %v7088 = vpack.c.b16 %v6936, %v6932
        %v7089 = vpack.c.b16 %v6937, %v6933
        %v7090 = vpack.c.b16 %v6938, %v6934
        %v7091 = vpack.c.b16 %v6939, %v6935
        %v7092 = vpack.c.b16 %v6944, %v6940
        %v7093 = vpack.c.b16 %v6945, %v6941
        %v7094 = vpack.c.b16 %v6946, %v6942
        %v7095 = vpack.c.b16 %v6947, %v6943
        %v7096 = vpack.c.b16 %v6952, %v6948
        %v7097 = vpack.c.b16 %v6953, %v6949
        %v7098 = vpack.c.b16 %v6954, %v6950
        %v7099 = vpack.c.b16 %v6955, %v6951
        %v7100 = vpack.c.b16 %v6960, %v6956
        %v7101 = vpack.c.b16 %v6961, %v6957
        %v7102 = vpack.c.b16 %v6962, %v6958
        %v7103 = vpack.c.b16 %v6963, %v6959
        %v7104 = vpack.c.b16 %v6968, %v6964
        %v7105 = vpack.c.b16 %v6969, %v6965
        %v7106 = vpack.c.b16 %v6970, %v6966
        %v7107 = vpack.c.b16 %v6971, %v6967
        %v7108 = vpack.c.b16 %v6976, %v6972
        %v7109 = vpack.c.b16 %v6977, %v6973
        %v7110 = vpack.c.b16 %v6978, %v6974
        %v7111 = vpack.c.b16 %v6979, %v6975
        %v7112 = vpack.c.b16 %v6984, %v6980
        %v7113 = vpack.c.b16 %v6985, %v6981
        %v7114 = vpack.c.b16 %v6986, %v6982
        %v7115 = vpack.c.b16 %v6987, %v6983
        %v7116 = vpack.c.b16 %v6992, %v6988
        %v7117 = vpack.c.b16 %v6993, %v6989
        %v7118 = vpack.c.b16 %v6994, %v6990
        %v7119 = vpack.c.b16 %v6995, %v6991
        %v7120 = vpack.c.b16 %v7000, %v6996
        %v7121 = vpack.c.b16 %v7001, %v6997
        %v7122 = vpack.c.b16 %v7002, %v6998
        %v7123 = vpack.c.b16 %v7003, %v6999
        %v7124 = vpack.c.b16 %v7008, %v7004
        %v7125 = vpack.c.b16 %v7009, %v7005
        %v7126 = vpack.c.b16 %v7010, %v7006
        %v7127 = vpack.c.b16 %v7011, %v7007
        %v7128 = vpack.c.b16 %v7016, %v7012
        %v7129 = vpack.c.b16 %v7017, %v7013
        %v7130 = vpack.c.b16 %v7018, %v7014
        %v7131 = vpack.c.b16 %v7019, %v7015
        %v7132 = vpack.c.b16 %v7024, %v7020
        %v7133 = vpack.c.b16 %v7025, %v7021
        %v7134 = vpack.c.b16 %v7026, %v7022
        %v7135 = vpack.c.b16 %v7027, %v7023
        %v7136 = vpack.c.b16 %v7032, %v7028
        %v7137 = vpack.c.b16 %v7033, %v7029
        %v7138 = vpack.c.b16 %v7034, %v7030
        %v7139 = vpack.c.b16 %v7035, %v7031
        %v7140 = vpack.c.b16 %v7040, %v7036
        %v7141 = vpack.c.b16 %v7041, %v7037
        %v7142 = vpack.c.b16 %v7042, %v7038
        %v7143 = vpack.c.b16 %v7043, %v7039
        %v7144 = vpack.c.b16 %v7048, %v7044
        %v7145 = vpack.c.b16 %v7049, %v7045
        %v7146 = vpack.c.b16 %v7050, %v7046
        %v7147 = vpack.c.b16 %v7051, %v7047
        %7244 = vmatprep.subr.bf16.mxu0 %v7081
        %7245 = vmatpush1.bf16.msra.mxu0 %v7080
        %7246 = vmatprep.subr.bf16.mxu0 %v7077
        %7247 = vmatpush1.bf16.msra.mxu0 %v7076
        %7248 = vmatprep.subr.bf16.mxu0 %v7073
        %7249 = vmatpush1.bf16.msra.mxu0 %v7072
        %7250 = vmatprep.subr.bf16.mxu0 %v7069
        %7251 = vmatpush1.bf16.msra.mxu0 %v7068
        %7252 = vmatprep.subr.bf16.mxu0 %v7065
        %7253 = vmatpush1.bf16.msra.mxu0 %v7064
        %7254 = vmatprep.subr.bf16.mxu0 %v7061
        %7255 = vmatpush1.bf16.msra.mxu0 %v7060
        %7256 = vmatprep.subr.bf16.mxu0 %v7057
        %7257 = vmatpush1.bf16.msra.mxu0 %v7056
        %7258 = vmatprep.subr.bf16.mxu0 %v7053
        %7259 = vmatpush1.bf16.msra.mxu0 %v7052
        %7260 = vmatprep.subr.bf16.mxu0 %v7113
        %7261 = vmatpush2.bf16.msra.mxu0 %v7112
        %7262 = vmatprep.subr.bf16.mxu0 %v7109
        %7263 = vmatpush2.bf16.msra.mxu0 %v7108
        %7264 = vmatprep.subr.bf16.mxu0 %v7105
        %7265 = vmatpush2.bf16.msra.mxu0 %v7104
        %7266 = vmatprep.subr.bf16.mxu0 %v7101
        %7267 = vmatpush2.bf16.msra.mxu0 %v7100
        %7268 = vmatprep.subr.bf16.mxu0 %v7097
        %7269 = vmatpush2.bf16.msra.mxu0 %v7096
        %7270 = vmatprep.subr.bf16.mxu0 %v7093
        %7271 = vmatpush2.bf16.msra.mxu0 %v7092
        %7272 = vmatprep.subr.bf16.mxu0 %v7089
        %7273 = vmatpush2.bf16.msra.mxu0 %v7088
        %7274 = vmatprep.subr.bf16.mxu0 %v7085
        %7275 = vmatpush2.bf16.msra.mxu0 %v7084
        %7276 = vmatprep.mubr.bf16.mxu0 %v6665
        %7277 = vmatmul.mubr.bf16.gmra.mxu0 %v6664
        %v7278 = vpop.f32.mrf.mxu0
        %v7279 = vadd.f32 0.0, %v7278
        %v7280 = vpop.f32.mrf.mxu0
        %v7281 = vadd.f32 0.0, %v7280
        %v7282 = vpop.f32.mrf.mxu0
        %v7283 = vpop.f32.mrf.mxu0
        %7284 = vdwg.mxu0
        %7285 = vmatprep.subr.bf16.mxu0 %v7145
        %7286 = vmatpush1.bf16.msra.mxu0 %v7144
        %7287 = vmatprep.subr.bf16.mxu0 %v7141
        %7288 = vmatpush1.bf16.msra.mxu0 %v7140
        %7289 = vmatprep.subr.bf16.mxu0 %v7137
        %7290 = vmatpush1.bf16.msra.mxu0 %v7136
        %7291 = vmatprep.subr.bf16.mxu0 %v7133
        %7292 = vmatpush1.bf16.msra.mxu0 %v7132
        %7293 = vmatprep.subr.bf16.mxu0 %v7129
        %7294 = vmatpush1.bf16.msra.mxu0 %v7128
        %7295 = vmatprep.subr.bf16.mxu0 %v7125
        %7296 = vmatpush1.bf16.msra.mxu0 %v7124
        %7297 = vmatprep.subr.bf16.mxu0 %v7121
        %7298 = vmatpush1.bf16.msra.mxu0 %v7120
        %7299 = vmatprep.subr.bf16.mxu0 %v7117
        %7300 = vmatpush1.bf16.msra.mxu0 %v7116
        %7301 = vmatprep.subr.bf16.mxu0 0
        %7302 = vmatpush2.bf16.msra.mxu0 0
        %7303 = vmatprep.subr.bf16.mxu0 0
        %7304 = vmatpush2.bf16.msra.mxu0 0
        %7305 = vmatprep.subr.bf16.mxu0 0
        %7306 = vmatpush2.bf16.msra.mxu0 0
        %7307 = vmatprep.subr.bf16.mxu0 0
        %7308 = vmatpush2.bf16.msra.mxu0 0
        %7309 = vmatprep.subr.bf16.mxu0 0
        %7310 = vmatpush2.bf16.msra.mxu0 0
        %7311 = vmatprep.subr.bf16.mxu0 0
        %7312 = vmatpush2.bf16.msra.mxu0 0
        %7313 = vmatprep.subr.bf16.mxu0 0
        %7314 = vmatpush2.bf16.msra.mxu0 0
        %7315 = vmatprep.subr.bf16.mxu0 0
        %7316 = vmatpush2.bf16.msra.mxu0 0
        %7317 = vmatprep.mubr.bf16.mxu0 0
        %7318 = vmatmul.mubr.bf16.gmra.mxu0 %v6666
        %v7319 = vpop.f32.mrf.mxu0
        %v7320 = vadd.f32 %v7279, %v7319
        %v7321 = vpop.f32.mrf.mxu0
        %v7322 = vadd.f32 %v7281, %v7321
        %v7323 = vpop.f32.mrf.mxu0
        %v7324 = vpop.f32.mrf.mxu0
        %7325 = vdwg.mxu0
        %7326 = vmatprep.subr.bf16.mxu0 %v7083
        %7327 = vmatpush1.bf16.msra.mxu0 %v7082
        %7328 = vmatprep.subr.bf16.mxu0 %v7079
        %7329 = vmatpush1.bf16.msra.mxu0 %v7078
        %7330 = vmatprep.subr.bf16.mxu0 %v7075
        %7331 = vmatpush1.bf16.msra.mxu0 %v7074
        %7332 = vmatprep.subr.bf16.mxu0 %v7071
        %7333 = vmatpush1.bf16.msra.mxu0 %v7070
        %7334 = vmatprep.subr.bf16.mxu0 %v7067
        %7335 = vmatpush1.bf16.msra.mxu0 %v7066
        %7336 = vmatprep.subr.bf16.mxu0 %v7063
        %7337 = vmatpush1.bf16.msra.mxu0 %v7062
        %7338 = vmatprep.subr.bf16.mxu0 %v7059
        %7339 = vmatpush1.bf16.msra.mxu0 %v7058
        %7340 = vmatprep.subr.bf16.mxu0 %v7055
        %7341 = vmatpush1.bf16.msra.mxu0 %v7054
        %7342 = vmatprep.subr.bf16.mxu0 %v7115
        %7343 = vmatpush2.bf16.msra.mxu0 %v7114
        %7344 = vmatprep.subr.bf16.mxu0 %v7111
        %7345 = vmatpush2.bf16.msra.mxu0 %v7110
        %7346 = vmatprep.subr.bf16.mxu0 %v7107
        %7347 = vmatpush2.bf16.msra.mxu0 %v7106
        %7348 = vmatprep.subr.bf16.mxu0 %v7103
        %7349 = vmatpush2.bf16.msra.mxu0 %v7102
        %7350 = vmatprep.subr.bf16.mxu0 %v7099
        %7351 = vmatpush2.bf16.msra.mxu0 %v7098
        %7352 = vmatprep.subr.bf16.mxu0 %v7095
        %7353 = vmatpush2.bf16.msra.mxu0 %v7094
        %7354 = vmatprep.subr.bf16.mxu0 %v7091
        %7355 = vmatpush2.bf16.msra.mxu0 %v7090
        %7356 = vmatprep.subr.bf16.mxu0 %v7087
        %7357 = vmatpush2.bf16.msra.mxu0 %v7086
        %7358 = vmatprep.mubr.bf16.mxu0 %v6665
        %7359 = vmatmul.mubr.bf16.gmra.mxu0 %v6664
        %v7360 = vpop.f32.mrf.mxu0
        %v7361 = vadd.f32 0.0, %v7360
        %v7362 = vpop.f32.mrf.mxu0
        %v7363 = vadd.f32 0.0, %v7362
        %v7364 = vpop.f32.mrf.mxu0
        %v7365 = vpop.f32.mrf.mxu0
        %7366 = vdwg.mxu0
        %7367 = vmatprep.subr.bf16.mxu0 %v7147
        %7368 = vmatpush1.bf16.msra.mxu0 %v7146
        %7369 = vmatprep.subr.bf16.mxu0 %v7143
        %7370 = vmatpush1.bf16.msra.mxu0 %v7142
        %7371 = vmatprep.subr.bf16.mxu0 %v7139
        %7372 = vmatpush1.bf16.msra.mxu0 %v7138
        %7373 = vmatprep.subr.bf16.mxu0 %v7135
        %7374 = vmatpush1.bf16.msra.mxu0 %v7134
        %7375 = vmatprep.subr.bf16.mxu0 %v7131
        %7376 = vmatpush1.bf16.msra.mxu0 %v7130
        %7377 = vmatprep.subr.bf16.mxu0 %v7127
        %7378 = vmatpush1.bf16.msra.mxu0 %v7126
        %7379 = vmatprep.subr.bf16.mxu0 %v7123
        %7380 = vmatpush1.bf16.msra.mxu0 %v7122
        %7381 = vmatprep.subr.bf16.mxu0 %v7119
        %7382 = vmatpush1.bf16.msra.mxu0 %v7118
        %7383 = vmatprep.subr.bf16.mxu0 0
        %7384 = vmatpush2.bf16.msra.mxu0 0
        %7385 = vmatprep.subr.bf16.mxu0 0
        %7386 = vmatpush2.bf16.msra.mxu0 0
        %7387 = vmatprep.subr.bf16.mxu0 0
        %7388 = vmatpush2.bf16.msra.mxu0 0
        %7389 = vmatprep.subr.bf16.mxu0 0
        %7390 = vmatpush2.bf16.msra.mxu0 0
        %7391 = vmatprep.subr.bf16.mxu0 0
        %7392 = vmatpush2.bf16.msra.mxu0 0
        %7393 = vmatprep.subr.bf16.mxu0 0
        %7394 = vmatpush2.bf16.msra.mxu0 0
        %7395 = vmatprep.subr.bf16.mxu0 0
        %7396 = vmatpush2.bf16.msra.mxu0 0
        %7397 = vmatprep.subr.bf16.mxu0 0
        %7398 = vmatpush2.bf16.msra.mxu0 0
        %7399 = vmatprep.mubr.bf16.mxu0 0
        %7400 = vmatmul.mubr.bf16.gmra.mxu0 %v6666
        %v7401 = vpop.f32.mrf.mxu0
        %v7402 = vadd.f32 %v7361, %v7401
        %v7403 = vpop.f32.mrf.mxu0
        %v7404 = vadd.f32 %v7363, %v7403
        %v7405 = vpop.f32.mrf.mxu0
        %v7406 = vpop.f32.mrf.mxu0
        %7407 = vdwg.mxu0
        %v7408 = vadd.f32 %v6430, %v7320
        %v7409 = vadd.f32 %v6432, %v7322
        %v7410 = vadd.f32 %v6512, %v7402
        %v7411 = vadd.f32 %v6514, %v7404
        %v7412 = vld [vmem:[#allocation16] sm:$0xf]
        %v7414 = vlaneseq
        %v7415 = vshrl.u32 %v7414, 7
        %v7416 = vsub.s32 0, %v7415
        %v7417 = vrot.slane %v7412, %v7416
        %v7418 = vlaneseq
        %v7419 = vshrl.u32 %v7418, 7
        %v7420 = vsub.s32 1, %v7419
        %v7421 = vrot.slane %v7412, %v7420
        %v7422 = vlaneseq
        %v7423 = vshrl.u32 %v7422, 7
        %v7424 = vsub.s32 2, %v7423
        %v7425 = vrot.slane %v7412, %v7424
        %v7426 = vlaneseq
        %v7427 = vshrl.u32 %v7426, 7
        %v7428 = vsub.s32 3, %v7427
        %v7429 = vrot.slane %v7412, %v7428
        %v7434 = vadd.f32 %v7408, %v7417
        %v7435 = vadd.f32 %v7409, %v7421
        %v7436 = vadd.f32 %v7410, %v7425
        %v7437 = vadd.f32 %v7411, %v7429
        %v7438 = vmax.f32 %v7434, 0.0
        %v7439 = vmax.f32 %v7435, 0.0
        %v7440 = vmax.f32 %v7436, 0.0
        %v7441 = vmax.f32 %v7437, 0.0
        %v7442 = vpack.c.bf16 %v7438, %v7438
        %v7443 = vpack.c.bf16 %v7439, %v7439
        %v7444 = vpack.c.bf16 %v7440, %v7440
        %v7445 = vpack.c.bf16 %v7441, %v7441
        %v7446 = vunpack.c.l.bf16 %v7442
        %v7447 = vunpack.c.l.bf16 %v7443
        %v7448 = vunpack.c.l.bf16 %v7444
        %v7449 = vunpack.c.l.bf16 %v7445
        %v7450 = vld [vmem:[#allocation17] sm:$0xf]
        %vm7451 = vcmask 31744
        %v7453 = vsel %vm7451, %v7450, 0
        %vm7455 = vcmask 1043456
        %v7457 = vsel %vm7455, %v7446, 0
        %v7460 = vsel %vm7455, %v7447, 0
        %v7463 = vsel %vm7455, %v7448, 0
        %v7466 = vsel %vm7455, %v7449, 0
        %7468 = vmatprep.subr.mxu0 0.0
        %7469 = vmatpush1.msra.mxu0 0.0
        %7470 = vmatprep.subr.mxu0 0.0
        %7471 = vmatpush1.msra.mxu0 0.0
        %7472 = vmatprep.subr.mxu0 0.0
        %7473 = vmatpush1.msra.mxu0 0.0
        %7474 = vmatprep.subr.mxu0 0.0
        %7475 = vmatpush1.msra.mxu0 0.0
        %7476 = vmatprep.subr.mxu0 0.0
        %7477 = vmatpush1.msra.mxu0 0.0
        %7478 = vmatprep.subr.mxu0 0.0
        %7479 = vmatpush1.msra.mxu0 0.0
        %7480 = vmatprep.subr.mxu0 0.0
        %7481 = vmatpush1.msra.mxu0 0.0
        %7482 = vmatprep.subr.mxu0 0.0
        %7483 = vmatpush1.msra.mxu0 0.0
        %7484 = vmatprep.subr.mxu0 0.0
        %7485 = vmatpush1.msra.mxu0 0.0
        %7486 = vmatprep.subr.mxu0 0.0
        %7487 = vmatpush1.msra.mxu0 0.0
        %7488 = vmatprep.subr.mxu0 0.0
        %7489 = vmatpush1.msra.mxu0 0.0
        %7490 = vmatprep.subr.mxu0 0.0
        %7491 = vmatpush1.msra.mxu0 0.0
        %7492 = vmatprep.subr.mxu0 0.0
        %7493 = vmatpush1.msra.mxu0 0.0
        %7494 = vmatprep.subr.mxu0 0.0
        %7495 = vmatpush1.msra.mxu0 0.0
        %7496 = vmatprep.subr.mxu0 0.0
        %7497 = vmatpush1.msra.mxu0 0.0
        %7498 = vmatprep.subr.mxu0 %v7460
        %7499 = vmatpush1.msra.mxu0 %v7457
        %7500 = vmatprep.subr.mxu0 0.0
        %7501 = vmatpush2.msra.mxu0 0.0
        %7502 = vmatprep.subr.mxu0 0.0
        %7503 = vmatpush2.msra.mxu0 0.0
        %7504 = vmatprep.subr.mxu0 0.0
        %7505 = vmatpush2.msra.mxu0 0.0
        %7506 = vmatprep.subr.mxu0 0.0
        %7507 = vmatpush2.msra.mxu0 0.0
        %7508 = vmatprep.subr.mxu0 0.0
        %7509 = vmatpush2.msra.mxu0 0.0
        %7510 = vmatprep.subr.mxu0 0.0
        %7511 = vmatpush2.msra.mxu0 0.0
        %7512 = vmatprep.subr.mxu0 0.0
        %7513 = vmatpush2.msra.mxu0 0.0
        %7514 = vmatprep.subr.mxu0 0.0
        %7515 = vmatpush2.msra.mxu0 0.0
        %7516 = vmatprep.subr.mxu0 0.0
        %7517 = vmatpush2.msra.mxu0 0.0
        %7518 = vmatprep.subr.mxu0 0.0
        %7519 = vmatpush2.msra.mxu0 0.0
        %7520 = vmatprep.subr.mxu0 0.0
        %7521 = vmatpush2.msra.mxu0 0.0
        %7522 = vmatprep.subr.mxu0 0.0
        %7523 = vmatpush2.msra.mxu0 0.0
        %7524 = vmatprep.subr.mxu0 0.0
        %7525 = vmatpush2.msra.mxu0 0.0
        %7526 = vmatprep.subr.mxu0 0.0
        %7527 = vmatpush2.msra.mxu0 0.0
        %7528 = vmatprep.subr.mxu0 0.0
        %7529 = vmatpush2.msra.mxu0 0.0
        %7530 = vmatprep.subr.mxu0 0.0
        %7531 = vmatpush2.msra.mxu0 0.0
        %7532 = vmatprep.mubr.f32.mxu0 0.0
        %7533 = vmatmul.mubr.f32.gmra.mxu0 %v7453
        %v7534 = vpop.f32.mrf.mxu0
        %v7535 = vadd.f32 0.0, %v7534
        %v7536 = vpop.f32.mrf.mxu0
        %v7537 = vadd.f32 0.0, %v7536
        %7538 = vdwg.mxu0
        %7539 = vmatprep.subr.mxu0 0.0
        %7540 = vmatpush1.msra.mxu0 0.0
        %7541 = vmatprep.subr.mxu0 0.0
        %7542 = vmatpush1.msra.mxu0 0.0
        %7543 = vmatprep.subr.mxu0 0.0
        %7544 = vmatpush1.msra.mxu0 0.0
        %7545 = vmatprep.subr.mxu0 0.0
        %7546 = vmatpush1.msra.mxu0 0.0
        %7547 = vmatprep.subr.mxu0 0.0
        %7548 = vmatpush1.msra.mxu0 0.0
        %7549 = vmatprep.subr.mxu0 0.0
        %7550 = vmatpush1.msra.mxu0 0.0
        %7551 = vmatprep.subr.mxu0 0.0
        %7552 = vmatpush1.msra.mxu0 0.0
        %7553 = vmatprep.subr.mxu0 0.0
        %7554 = vmatpush1.msra.mxu0 0.0
        %7555 = vmatprep.subr.mxu0 0.0
        %7556 = vmatpush1.msra.mxu0 0.0
        %7557 = vmatprep.subr.mxu0 0.0
        %7558 = vmatpush1.msra.mxu0 0.0
        %7559 = vmatprep.subr.mxu0 0.0
        %7560 = vmatpush1.msra.mxu0 0.0
        %7561 = vmatprep.subr.mxu0 0.0
        %7562 = vmatpush1.msra.mxu0 0.0
        %7563 = vmatprep.subr.mxu0 0.0
        %7564 = vmatpush1.msra.mxu0 0.0
        %7565 = vmatprep.subr.mxu0 0.0
        %7566 = vmatpush1.msra.mxu0 0.0
        %7567 = vmatprep.subr.mxu0 0.0
        %7568 = vmatpush1.msra.mxu0 0.0
        %7569 = vmatprep.subr.mxu0 %v7466
        %7570 = vmatpush1.msra.mxu0 %v7463
        %7571 = vmatprep.subr.mxu0 0.0
        %7572 = vmatpush2.msra.mxu0 0.0
        %7573 = vmatprep.subr.mxu0 0.0
        %7574 = vmatpush2.msra.mxu0 0.0
        %7575 = vmatprep.subr.mxu0 0.0
        %7576 = vmatpush2.msra.mxu0 0.0
        %7577 = vmatprep.subr.mxu0 0.0
        %7578 = vmatpush2.msra.mxu0 0.0
        %7579 = vmatprep.subr.mxu0 0.0
        %7580 = vmatpush2.msra.mxu0 0.0
        %7581 = vmatprep.subr.mxu0 0.0
        %7582 = vmatpush2.msra.mxu0 0.0
        %7583 = vmatprep.subr.mxu0 0.0
        %7584 = vmatpush2.msra.mxu0 0.0
        %7585 = vmatprep.subr.mxu0 0.0
        %7586 = vmatpush2.msra.mxu0 0.0
        %7587 = vmatprep.subr.mxu0 0.0
        %7588 = vmatpush2.msra.mxu0 0.0
        %7589 = vmatprep.subr.mxu0 0.0
        %7590 = vmatpush2.msra.mxu0 0.0
        %7591 = vmatprep.subr.mxu0 0.0
        %7592 = vmatpush2.msra.mxu0 0.0
        %7593 = vmatprep.subr.mxu0 0.0
        %7594 = vmatpush2.msra.mxu0 0.0
        %7595 = vmatprep.subr.mxu0 0.0
        %7596 = vmatpush2.msra.mxu0 0.0
        %7597 = vmatprep.subr.mxu0 0.0
        %7598 = vmatpush2.msra.mxu0 0.0
        %7599 = vmatprep.subr.mxu0 0.0
        %7600 = vmatpush2.msra.mxu0 0.0
        %7601 = vmatprep.subr.mxu0 0.0
        %7602 = vmatpush2.msra.mxu0 0.0
        %7603 = vmatprep.mubr.f32.mxu0 0.0
        %7604 = vmatmul.mubr.f32.gmra.mxu0 %v7453
        %v7605 = vpop.f32.mrf.mxu0
        %v7606 = vadd.f32 0.0, %v7605
        %v7607 = vpop.f32.mrf.mxu0
        %v7608 = vadd.f32 0.0, %v7607
        %7609 = vdwg.mxu0
        %v7610 = vpack.c.bf16 %v7535, %v7535
        %v7611 = vpack.c.bf16 %v7537, %v7537
        %v7612 = vpack.c.bf16 %v7606, %v7606
        %v7613 = vpack.c.bf16 %v7608, %v7608
        %v7614 = vld [vmem:[#allocation19] sm:$0xff]
        %v7615 = vld [vmem:[#allocation19 + $0x8] sm:$0xff]
        %v7616 = vld [vmem:[#allocation19 + $0x10] sm:$0xff]
        %v7617 = vld [vmem:[#allocation19 + $0x18] sm:$0xff]
        %v7618 = vld [vmem:[#allocation19 + $0x20] sm:$0xff]
        %v7619 = vld [vmem:[#allocation19 + $0x28] sm:$0xff]
        %v7620 = vld [vmem:[#allocation19 + $0x30] sm:$0xff]
        %v7621 = vld [vmem:[#allocation19 + $0x38] sm:$0xff]
        %v7622 = vld [vmem:[#allocation19 + $0x40] sm:$0xff]
        %v7623 = vld [vmem:[#allocation19 + $0x48] sm:$0xff]
        %v7624 = vld [vmem:[#allocation19 + $0x50] sm:$0xff]
        %v7625 = vld [vmem:[#allocation19 + $0x58] sm:$0xff]
        %v7626 = vld [vmem:[#allocation19 + $0x60] sm:$0xff]
        %v7627 = vld [vmem:[#allocation19 + $0x68] sm:$0xff]
        %v7628 = vld [vmem:[#allocation19 + $0x70] sm:$0xff]
        %v7629 = vld [vmem:[#allocation19 + $0x78] sm:$0xff]
        %v7630 = vld [vmem:[#allocation19 + $0x80] sm:$0xff]
        %v7631 = vld [vmem:[#allocation19 + $0x88] sm:$0xff]
        %v7632 = vld [vmem:[#allocation19 + $0x90] sm:$0xff]
        %v7633 = vld [vmem:[#allocation19 + $0x98] sm:$0xff]
        %v7634 = vld [vmem:[#allocation19 + $0xa0] sm:$0xff]
        %v7635 = vld [vmem:[#allocation19 + $0xa8] sm:$0xff]
        %v7636 = vld [vmem:[#allocation19 + $0xb0] sm:$0xff]
        %v7637 = vld [vmem:[#allocation19 + $0xb8] sm:$0xff]
        %v7638 = vld [vmem:[#allocation19 + $0xc0] sm:$0xff]
        %v7639 = vld [vmem:[#allocation19 + $0xc8] sm:$0xff]
        %v7640 = vld [vmem:[#allocation19 + $0xd0] sm:$0xff]
        %v7641 = vld [vmem:[#allocation19 + $0xd8] sm:$0xff]
        %v7642 = vld [vmem:[#allocation19 + $0xe0] sm:$0xff]
        %v7643 = vld [vmem:[#allocation19 + $0xe8] sm:$0xff]
        %v7644 = vld [vmem:[#allocation19 + $0xf0] sm:$0xff]
        %v7645 = vld [vmem:[#allocation19 + $0xf8] sm:$0xff]
        %v7646 = vld [vmem:[#allocation19 + $0x100] sm:$0xff]
        %v7647 = vld [vmem:[#allocation19 + $0x108] sm:$0xff]
        %v7648 = vld [vmem:[#allocation19 + $0x110] sm:$0xff]
        %v7649 = vld [vmem:[#allocation19 + $0x118] sm:$0xff]
        %v7650 = vld [vmem:[#allocation19 + $0x120] sm:$0xff]
        %v7651 = vld [vmem:[#allocation19 + $0x128] sm:$0xff]
        %v7652 = vld [vmem:[#allocation19 + $0x130] sm:$0xff]
        %v7653 = vld [vmem:[#allocation19 + $0x138] sm:$0xff]
        %v7654 = vld [vmem:[#allocation19 + $0x140] sm:$0xff]
        %v7655 = vld [vmem:[#allocation19 + $0x148] sm:$0xff]
        %v7656 = vld [vmem:[#allocation19 + $0x150] sm:$0xff]
        %v7657 = vld [vmem:[#allocation19 + $0x158] sm:$0xff]
        %v7658 = vld [vmem:[#allocation19 + $0x160] sm:$0xff]
        %v7659 = vld [vmem:[#allocation19 + $0x168] sm:$0xff]
        %v7660 = vld [vmem:[#allocation19 + $0x170] sm:$0xff]
        %v7661 = vld [vmem:[#allocation19 + $0x178] sm:$0xff]
        %v7662 = vld [vmem:[#allocation19 + $0x180] sm:$0xff]
        %v7663 = vld [vmem:[#allocation19 + $0x188] sm:$0xff]
        %v7664 = vld [vmem:[#allocation19 + $0x190] sm:$0xff]
        %v7665 = vld [vmem:[#allocation19 + $0x198] sm:$0xff]
        %v7666 = vld [vmem:[#allocation19 + $0x1a0] sm:$0xff]
        %v7667 = vld [vmem:[#allocation19 + $0x1a8] sm:$0xff]
        %v7668 = vld [vmem:[#allocation19 + $0x1b0] sm:$0xff]
        %v7669 = vld [vmem:[#allocation19 + $0x1b8] sm:$0xff]
        %v7670 = vld [vmem:[#allocation19 + $0x1c0] sm:$0xff]
        %v7671 = vld [vmem:[#allocation19 + $0x1c8] sm:$0xff]
        %v7672 = vld [vmem:[#allocation19 + $0x1d0] sm:$0xff]
        %v7673 = vld [vmem:[#allocation19 + $0x1d8] sm:$0xff]
        %v7674 = vld [vmem:[#allocation19 + $0x1e0] sm:$0xff]
        %v7675 = vld [vmem:[#allocation19 + $0x1e8] sm:$0xff]
        %v7676 = vld [vmem:[#allocation19 + $0x1f0] sm:$0xff]
        %v7677 = vld [vmem:[#allocation19 + $0x1f8] sm:$0xff]
        %v7678 = vld [vmem:[#allocation19 + $0x200] sm:$0xff]
        %v7679 = vld [vmem:[#allocation19 + $0x208] sm:$0xff]
        %v7680 = vld [vmem:[#allocation19 + $0x210] sm:$0xff]
        %v7681 = vld [vmem:[#allocation19 + $0x218] sm:$0xff]
        %v7682 = vld [vmem:[#allocation19 + $0x220] sm:$0xff]
        %v7683 = vld [vmem:[#allocation19 + $0x228] sm:$0xff]
        %v7684 = vld [vmem:[#allocation19 + $0x230] sm:$0xff]
        %v7685 = vld [vmem:[#allocation19 + $0x238] sm:$0xff]
        %v7686 = vld [vmem:[#allocation19 + $0x240] sm:$0xff]
        %v7687 = vld [vmem:[#allocation19 + $0x248] sm:$0xff]
        %v7688 = vld [vmem:[#allocation19 + $0x250] sm:$0xff]
        %v7689 = vld [vmem:[#allocation19 + $0x258] sm:$0xff]
        %v7690 = vld [vmem:[#allocation19 + $0x260] sm:$0xff]
        %v7691 = vld [vmem:[#allocation19 + $0x268] sm:$0xff]
        %v7692 = vld [vmem:[#allocation19 + $0x270] sm:$0xff]
        %v7693 = vld [vmem:[#allocation19 + $0x278] sm:$0xff]
        %v7694 = vld [vmem:[#allocation19 + $0x280] sm:$0xff]
        %v7695 = vld [vmem:[#allocation19 + $0x288] sm:$0xff]
        %v7696 = vld [vmem:[#allocation19 + $0x290] sm:$0xff]
        %v7697 = vld [vmem:[#allocation19 + $0x298] sm:$0xff]
        %v7698 = vld [vmem:[#allocation19 + $0x2a0] sm:$0xff]
        %v7699 = vld [vmem:[#allocation19 + $0x2a8] sm:$0xff]
        %v7700 = vld [vmem:[#allocation19 + $0x2b0] sm:$0xff]
        %v7701 = vld [vmem:[#allocation19 + $0x2b8] sm:$0xff]
        %v7702 = vld [vmem:[#allocation19 + $0x2c0] sm:$0xff]
        %v7703 = vld [vmem:[#allocation19 + $0x2c8] sm:$0xff]
        %v7704 = vld [vmem:[#allocation19 + $0x2d0] sm:$0xff]
        %v7705 = vld [vmem:[#allocation19 + $0x2d8] sm:$0xff]
        %v7706 = vld [vmem:[#allocation19 + $0x2e0] sm:$0xff]
        %v7707 = vld [vmem:[#allocation19 + $0x2e8] sm:$0xff]
        %v7708 = vld [vmem:[#allocation19 + $0x2f0] sm:$0xff]
        %v7709 = vld [vmem:[#allocation19 + $0x2f8] sm:$0xff]
        %v7710 = vld [vmem:[#allocation19 + $0x300] sm:$0xff]
        %v7711 = vld [vmem:[#allocation19 + $0x308] sm:$0xff]
        %v7712 = vld [vmem:[#allocation19 + $0x310] sm:$0xff]
        %v7713 = vld [vmem:[#allocation19 + $0x318] sm:$0xff]
        %v7714 = vld [vmem:[#allocation19 + $0x320] sm:$0xff]
        %v7715 = vld [vmem:[#allocation19 + $0x328] sm:$0xff]
        %v7716 = vld [vmem:[#allocation19 + $0x330] sm:$0xff]
        %v7717 = vld [vmem:[#allocation19 + $0x338] sm:$0xff]
        %v7718 = vld [vmem:[#allocation19 + $0x340] sm:$0xff]
        %v7719 = vld [vmem:[#allocation19 + $0x348] sm:$0xff]
        %v7720 = vld [vmem:[#allocation19 + $0x350] sm:$0xff]
        %v7721 = vld [vmem:[#allocation19 + $0x358] sm:$0xff]
        %v7722 = vld [vmem:[#allocation19 + $0x360] sm:$0xff]
        %v7723 = vld [vmem:[#allocation19 + $0x368] sm:$0xff]
        %v7724 = vld [vmem:[#allocation19 + $0x370] sm:$0xff]
        %v7725 = vld [vmem:[#allocation19 + $0x378] sm:$0xff]
        %v7726 = vld [vmem:[#allocation19 + $0x380] sm:$0xff]
        %v7727 = vld [vmem:[#allocation19 + $0x388] sm:$0xff]
        %v7728 = vld [vmem:[#allocation19 + $0x390] sm:$0xff]
        %v7729 = vld [vmem:[#allocation19 + $0x398] sm:$0xff]
        %v7730 = vld [vmem:[#allocation19 + $0x3a0] sm:$0xff]
        %v7731 = vld [vmem:[#allocation19 + $0x3a8] sm:$0xff]
        %v7732 = vld [vmem:[#allocation19 + $0x3b0] sm:$0xff]
        %v7733 = vld [vmem:[#allocation19 + $0x3b8] sm:$0xff]
        %v7734 = vld [vmem:[#allocation19 + $0x3c0] sm:$0xff]
        %v7735 = vld [vmem:[#allocation19 + $0x3c8] sm:$0xff]
        %v7736 = vld [vmem:[#allocation19 + $0x3d0] sm:$0xff]
        %v7737 = vld [vmem:[#allocation19 + $0x3d8] sm:$0xff]
        %v7738 = vld [vmem:[#allocation19 + $0x3e0] sm:$0xff]
        %v7739 = vld [vmem:[#allocation19 + $0x3e8] sm:$0xff]
        %v7740 = vld [vmem:[#allocation19 + $0x3f0] sm:$0xff]
        %v7741 = vld [vmem:[#allocation19 + $0x3f8] sm:$0xff]
        %s7742 = scalar_lea.vmem [#allocation17], 4
        %v7743 = vld [vmem:[%s7742] sm:$0xf]
        %v7745 = vsel %vm7451, %v7743, 0
        %7747 = vmatprep.subr.mxu0 0.0
        %7748 = vmatpush1.msra.mxu0 0.0
        %7749 = vmatprep.subr.mxu0 0.0
        %7750 = vmatpush1.msra.mxu0 0.0
        %7751 = vmatprep.subr.mxu0 0.0
        %7752 = vmatpush1.msra.mxu0 0.0
        %7753 = vmatprep.subr.mxu0 0.0
        %7754 = vmatpush1.msra.mxu0 0.0
        %7755 = vmatprep.subr.mxu0 0.0
        %7756 = vmatpush1.msra.mxu0 0.0
        %7757 = vmatprep.subr.mxu0 0.0
        %7758 = vmatpush1.msra.mxu0 0.0
        %7759 = vmatprep.subr.mxu0 0.0
        %7760 = vmatpush1.msra.mxu0 0.0
        %7761 = vmatprep.subr.mxu0 0.0
        %7762 = vmatpush1.msra.mxu0 0.0
        %7763 = vmatprep.subr.mxu0 0.0
        %7764 = vmatpush1.msra.mxu0 0.0
        %7765 = vmatprep.subr.mxu0 0.0
        %7766 = vmatpush1.msra.mxu0 0.0
        %7767 = vmatprep.subr.mxu0 0.0
        %7768 = vmatpush1.msra.mxu0 0.0
        %7769 = vmatprep.subr.mxu0 0.0
        %7770 = vmatpush1.msra.mxu0 0.0
        %7771 = vmatprep.subr.mxu0 0.0
        %7772 = vmatpush1.msra.mxu0 0.0
        %7773 = vmatprep.subr.mxu0 0.0
        %7774 = vmatpush1.msra.mxu0 0.0
        %7775 = vmatprep.subr.mxu0 0.0
        %7776 = vmatpush1.msra.mxu0 0.0
        %7777 = vmatprep.subr.mxu0 %v7460
        %7778 = vmatpush1.msra.mxu0 %v7457
        %7779 = vmatprep.subr.mxu0 0.0
        %7780 = vmatpush2.msra.mxu0 0.0
        %7781 = vmatprep.subr.mxu0 0.0
        %7782 = vmatpush2.msra.mxu0 0.0
        %7783 = vmatprep.subr.mxu0 0.0
        %7784 = vmatpush2.msra.mxu0 0.0
        %7785 = vmatprep.subr.mxu0 0.0
        %7786 = vmatpush2.msra.mxu0 0.0
        %7787 = vmatprep.subr.mxu0 0.0
        %7788 = vmatpush2.msra.mxu0 0.0
        %7789 = vmatprep.subr.mxu0 0.0
        %7790 = vmatpush2.msra.mxu0 0.0
        %7791 = vmatprep.subr.mxu0 0.0
        %7792 = vmatpush2.msra.mxu0 0.0
        %7793 = vmatprep.subr.mxu0 0.0
        %7794 = vmatpush2.msra.mxu0 0.0
        %7795 = vmatprep.subr.mxu0 0.0
        %7796 = vmatpush2.msra.mxu0 0.0
        %7797 = vmatprep.subr.mxu0 0.0
        %7798 = vmatpush2.msra.mxu0 0.0
        %7799 = vmatprep.subr.mxu0 0.0
        %7800 = vmatpush2.msra.mxu0 0.0
        %7801 = vmatprep.subr.mxu0 0.0
        %7802 = vmatpush2.msra.mxu0 0.0
        %7803 = vmatprep.subr.mxu0 0.0
        %7804 = vmatpush2.msra.mxu0 0.0
        %7805 = vmatprep.subr.mxu0 0.0
        %7806 = vmatpush2.msra.mxu0 0.0
        %7807 = vmatprep.subr.mxu0 0.0
        %7808 = vmatpush2.msra.mxu0 0.0
        %7809 = vmatprep.subr.mxu0 0.0
        %7810 = vmatpush2.msra.mxu0 0.0
        %7811 = vmatprep.mubr.f32.mxu0 0.0
        %7812 = vmatmul.mubr.f32.gmra.mxu0 %v7745
        %v7813 = vpop.f32.mrf.mxu0
        %v7814 = vadd.f32 0.0, %v7813
        %v7815 = vpop.f32.mrf.mxu0
        %v7816 = vadd.f32 0.0, %v7815
        %7817 = vdwg.mxu0
        %7818 = vmatprep.subr.mxu0 0.0
        %7819 = vmatpush1.msra.mxu0 0.0
        %7820 = vmatprep.subr.mxu0 0.0
        %7821 = vmatpush1.msra.mxu0 0.0
        %7822 = vmatprep.subr.mxu0 0.0
        %7823 = vmatpush1.msra.mxu0 0.0
        %7824 = vmatprep.subr.mxu0 0.0
        %7825 = vmatpush1.msra.mxu0 0.0
        %7826 = vmatprep.subr.mxu0 0.0
        %7827 = vmatpush1.msra.mxu0 0.0
        %7828 = vmatprep.subr.mxu0 0.0
        %7829 = vmatpush1.msra.mxu0 0.0
        %7830 = vmatprep.subr.mxu0 0.0
        %7831 = vmatpush1.msra.mxu0 0.0
        %7832 = vmatprep.subr.mxu0 0.0
        %7833 = vmatpush1.msra.mxu0 0.0
        %7834 = vmatprep.subr.mxu0 0.0
        %7835 = vmatpush1.msra.mxu0 0.0
        %7836 = vmatprep.subr.mxu0 0.0
        %7837 = vmatpush1.msra.mxu0 0.0
        %7838 = vmatprep.subr.mxu0 0.0
        %7839 = vmatpush1.msra.mxu0 0.0
        %7840 = vmatprep.subr.mxu0 0.0
        %7841 = vmatpush1.msra.mxu0 0.0
        %7842 = vmatprep.subr.mxu0 0.0
        %7843 = vmatpush1.msra.mxu0 0.0
        %7844 = vmatprep.subr.mxu0 0.0
        %7845 = vmatpush1.msra.mxu0 0.0
        %7846 = vmatprep.subr.mxu0 0.0
        %7847 = vmatpush1.msra.mxu0 0.0
        %7848 = vmatprep.subr.mxu0 %v7466
        %7849 = vmatpush1.msra.mxu0 %v7463
        %7850 = vmatprep.subr.mxu0 0.0
        %7851 = vmatpush2.msra.mxu0 0.0
        %7852 = vmatprep.subr.mxu0 0.0
        %7853 = vmatpush2.msra.mxu0 0.0
        %7854 = vmatprep.subr.mxu0 0.0
        %7855 = vmatpush2.msra.mxu0 0.0
        %7856 = vmatprep.subr.mxu0 0.0
        %7857 = vmatpush2.msra.mxu0 0.0
        %7858 = vmatprep.subr.mxu0 0.0
        %7859 = vmatpush2.msra.mxu0 0.0
        %7860 = vmatprep.subr.mxu0 0.0
        %7861 = vmatpush2.msra.mxu0 0.0
        %7862 = vmatprep.subr.mxu0 0.0
        %7863 = vmatpush2.msra.mxu0 0.0
        %7864 = vmatprep.subr.mxu0 0.0
        %7865 = vmatpush2.msra.mxu0 0.0
        %7866 = vmatprep.subr.mxu0 0.0
        %7867 = vmatpush2.msra.mxu0 0.0
        %7868 = vmatprep.subr.mxu0 0.0
        %7869 = vmatpush2.msra.mxu0 0.0
        %7870 = vmatprep.subr.mxu0 0.0
        %7871 = vmatpush2.msra.mxu0 0.0
        %7872 = vmatprep.subr.mxu0 0.0
        %7873 = vmatpush2.msra.mxu0 0.0
        %7874 = vmatprep.subr.mxu0 0.0
        %7875 = vmatpush2.msra.mxu0 0.0
        %7876 = vmatprep.subr.mxu0 0.0
        %7877 = vmatpush2.msra.mxu0 0.0
        %7878 = vmatprep.subr.mxu0 0.0
        %7879 = vmatpush2.msra.mxu0 0.0
        %7880 = vmatprep.subr.mxu0 0.0
        %7881 = vmatpush2.msra.mxu0 0.0
        %7882 = vmatprep.mubr.f32.mxu0 0.0
        %7883 = vmatmul.mubr.f32.gmra.mxu0 %v7745
        %v7884 = vpop.f32.mrf.mxu0
        %v7885 = vadd.f32 0.0, %v7884
        %v7886 = vpop.f32.mrf.mxu0
        %v7887 = vadd.f32 0.0, %v7886
        %7888 = vdwg.mxu0
        %v7889 = vpack.c.bf16 %v7814, %v7814
        %v7890 = vpack.c.bf16 %v7816, %v7816
        %v7891 = vpack.c.bf16 %v7885, %v7885
        %v7892 = vpack.c.bf16 %v7887, %v7887
        %s7893 = scalar_lea.vmem [#allocation19], 1024
        %v7894 = vld [vmem:[%s7893] sm:$0xff]
        %v7895 = vld [vmem:[%s7893 + $0x8] sm:$0xff]
        %v7896 = vld [vmem:[%s7893 + $0x10] sm:$0xff]
        %v7897 = vld [vmem:[%s7893 + $0x18] sm:$0xff]
        %v7898 = vld [vmem:[%s7893 + $0x20] sm:$0xff]
        %v7899 = vld [vmem:[%s7893 + $0x28] sm:$0xff]
        %v7900 = vld [vmem:[%s7893 + $0x30] sm:$0xff]
        %v7901 = vld [vmem:[%s7893 + $0x38] sm:$0xff]
        %v7902 = vld [vmem:[%s7893 + $0x40] sm:$0xff]
        %v7903 = vld [vmem:[%s7893 + $0x48] sm:$0xff]
        %v7904 = vld [vmem:[%s7893 + $0x50] sm:$0xff]
        %v7905 = vld [vmem:[%s7893 + $0x58] sm:$0xff]
        %v7906 = vld [vmem:[%s7893 + $0x60] sm:$0xff]
        %v7907 = vld [vmem:[%s7893 + $0x68] sm:$0xff]
        %v7908 = vld [vmem:[%s7893 + $0x70] sm:$0xff]
        %v7909 = vld [vmem:[%s7893 + $0x78] sm:$0xff]
        %v7910 = vld [vmem:[%s7893 + $0x80] sm:$0xff]
        %v7911 = vld [vmem:[%s7893 + $0x88] sm:$0xff]
        %v7912 = vld [vmem:[%s7893 + $0x90] sm:$0xff]
        %v7913 = vld [vmem:[%s7893 + $0x98] sm:$0xff]
        %v7914 = vld [vmem:[%s7893 + $0xa0] sm:$0xff]
        %v7915 = vld [vmem:[%s7893 + $0xa8] sm:$0xff]
        %v7916 = vld [vmem:[%s7893 + $0xb0] sm:$0xff]
        %v7917 = vld [vmem:[%s7893 + $0xb8] sm:$0xff]
        %v7918 = vld [vmem:[%s7893 + $0xc0] sm:$0xff]
        %v7919 = vld [vmem:[%s7893 + $0xc8] sm:$0xff]
        %v7920 = vld [vmem:[%s7893 + $0xd0] sm:$0xff]
        %v7921 = vld [vmem:[%s7893 + $0xd8] sm:$0xff]
        %v7922 = vld [vmem:[%s7893 + $0xe0] sm:$0xff]
        %v7923 = vld [vmem:[%s7893 + $0xe8] sm:$0xff]
        %v7924 = vld [vmem:[%s7893 + $0xf0] sm:$0xff]
        %v7925 = vld [vmem:[%s7893 + $0xf8] sm:$0xff]
        %v7926 = vld [vmem:[%s7893 + $0x100] sm:$0xff]
        %v7927 = vld [vmem:[%s7893 + $0x108] sm:$0xff]
        %v7928 = vld [vmem:[%s7893 + $0x110] sm:$0xff]
        %v7929 = vld [vmem:[%s7893 + $0x118] sm:$0xff]
        %v7930 = vld [vmem:[%s7893 + $0x120] sm:$0xff]
        %v7931 = vld [vmem:[%s7893 + $0x128] sm:$0xff]
        %v7932 = vld [vmem:[%s7893 + $0x130] sm:$0xff]
        %v7933 = vld [vmem:[%s7893 + $0x138] sm:$0xff]
        %v7934 = vld [vmem:[%s7893 + $0x140] sm:$0xff]
        %v7935 = vld [vmem:[%s7893 + $0x148] sm:$0xff]
        %v7936 = vld [vmem:[%s7893 + $0x150] sm:$0xff]
        %v7937 = vld [vmem:[%s7893 + $0x158] sm:$0xff]
        %v7938 = vld [vmem:[%s7893 + $0x160] sm:$0xff]
        %v7939 = vld [vmem:[%s7893 + $0x168] sm:$0xff]
        %v7940 = vld [vmem:[%s7893 + $0x170] sm:$0xff]
        %v7941 = vld [vmem:[%s7893 + $0x178] sm:$0xff]
        %v7942 = vld [vmem:[%s7893 + $0x180] sm:$0xff]
        %v7943 = vld [vmem:[%s7893 + $0x188] sm:$0xff]
        %v7944 = vld [vmem:[%s7893 + $0x190] sm:$0xff]
        %v7945 = vld [vmem:[%s7893 + $0x198] sm:$0xff]
        %v7946 = vld [vmem:[%s7893 + $0x1a0] sm:$0xff]
        %v7947 = vld [vmem:[%s7893 + $0x1a8] sm:$0xff]
        %v7948 = vld [vmem:[%s7893 + $0x1b0] sm:$0xff]
        %v7949 = vld [vmem:[%s7893 + $0x1b8] sm:$0xff]
        %v7950 = vld [vmem:[%s7893 + $0x1c0] sm:$0xff]
        %v7951 = vld [vmem:[%s7893 + $0x1c8] sm:$0xff]
        %v7952 = vld [vmem:[%s7893 + $0x1d0] sm:$0xff]
        %v7953 = vld [vmem:[%s7893 + $0x1d8] sm:$0xff]
        %v7954 = vld [vmem:[%s7893 + $0x1e0] sm:$0xff]
        %v7955 = vld [vmem:[%s7893 + $0x1e8] sm:$0xff]
        %v7956 = vld [vmem:[%s7893 + $0x1f0] sm:$0xff]
        %v7957 = vld [vmem:[%s7893 + $0x1f8] sm:$0xff]
        %v7958 = vld [vmem:[%s7893 + $0x200] sm:$0xff]
        %v7959 = vld [vmem:[%s7893 + $0x208] sm:$0xff]
        %v7960 = vld [vmem:[%s7893 + $0x210] sm:$0xff]
        %v7961 = vld [vmem:[%s7893 + $0x218] sm:$0xff]
        %v7962 = vld [vmem:[%s7893 + $0x220] sm:$0xff]
        %v7963 = vld [vmem:[%s7893 + $0x228] sm:$0xff]
        %v7964 = vld [vmem:[%s7893 + $0x230] sm:$0xff]
        %v7965 = vld [vmem:[%s7893 + $0x238] sm:$0xff]
        %v7966 = vld [vmem:[%s7893 + $0x240] sm:$0xff]
        %v7967 = vld [vmem:[%s7893 + $0x248] sm:$0xff]
        %v7968 = vld [vmem:[%s7893 + $0x250] sm:$0xff]
        %v7969 = vld [vmem:[%s7893 + $0x258] sm:$0xff]
        %v7970 = vld [vmem:[%s7893 + $0x260] sm:$0xff]
        %v7971 = vld [vmem:[%s7893 + $0x268] sm:$0xff]
        %v7972 = vld [vmem:[%s7893 + $0x270] sm:$0xff]
        %v7973 = vld [vmem:[%s7893 + $0x278] sm:$0xff]
        %v7974 = vld [vmem:[%s7893 + $0x280] sm:$0xff]
        %v7975 = vld [vmem:[%s7893 + $0x288] sm:$0xff]
        %v7976 = vld [vmem:[%s7893 + $0x290] sm:$0xff]
        %v7977 = vld [vmem:[%s7893 + $0x298] sm:$0xff]
        %v7978 = vld [vmem:[%s7893 + $0x2a0] sm:$0xff]
        %v7979 = vld [vmem:[%s7893 + $0x2a8] sm:$0xff]
        %v7980 = vld [vmem:[%s7893 + $0x2b0] sm:$0xff]
        %v7981 = vld [vmem:[%s7893 + $0x2b8] sm:$0xff]
        %v7982 = vld [vmem:[%s7893 + $0x2c0] sm:$0xff]
        %v7983 = vld [vmem:[%s7893 + $0x2c8] sm:$0xff]
        %v7984 = vld [vmem:[%s7893 + $0x2d0] sm:$0xff]
        %v7985 = vld [vmem:[%s7893 + $0x2d8] sm:$0xff]
        %v7986 = vld [vmem:[%s7893 + $0x2e0] sm:$0xff]
        %v7987 = vld [vmem:[%s7893 + $0x2e8] sm:$0xff]
        %v7988 = vld [vmem:[%s7893 + $0x2f0] sm:$0xff]
        %v7989 = vld [vmem:[%s7893 + $0x2f8] sm:$0xff]
        %v7990 = vld [vmem:[%s7893 + $0x300] sm:$0xff]
        %v7991 = vld [vmem:[%s7893 + $0x308] sm:$0xff]
        %v7992 = vld [vmem:[%s7893 + $0x310] sm:$0xff]
        %v7993 = vld [vmem:[%s7893 + $0x318] sm:$0xff]
        %v7994 = vld [vmem:[%s7893 + $0x320] sm:$0xff]
        %v7995 = vld [vmem:[%s7893 + $0x328] sm:$0xff]
        %v7996 = vld [vmem:[%s7893 + $0x330] sm:$0xff]
        %v7997 = vld [vmem:[%s7893 + $0x338] sm:$0xff]
        %v7998 = vld [vmem:[%s7893 + $0x340] sm:$0xff]
        %v7999 = vld [vmem:[%s7893 + $0x348] sm:$0xff]
        %v8000 = vld [vmem:[%s7893 + $0x350] sm:$0xff]
        %v8001 = vld [vmem:[%s7893 + $0x358] sm:$0xff]
        %v8002 = vld [vmem:[%s7893 + $0x360] sm:$0xff]
        %v8003 = vld [vmem:[%s7893 + $0x368] sm:$0xff]
        %v8004 = vld [vmem:[%s7893 + $0x370] sm:$0xff]
        %v8005 = vld [vmem:[%s7893 + $0x378] sm:$0xff]
        %v8006 = vld [vmem:[%s7893 + $0x380] sm:$0xff]
        %v8007 = vld [vmem:[%s7893 + $0x388] sm:$0xff]
        %v8008 = vld [vmem:[%s7893 + $0x390] sm:$0xff]
        %v8009 = vld [vmem:[%s7893 + $0x398] sm:$0xff]
        %v8010 = vld [vmem:[%s7893 + $0x3a0] sm:$0xff]
        %v8011 = vld [vmem:[%s7893 + $0x3a8] sm:$0xff]
        %v8012 = vld [vmem:[%s7893 + $0x3b0] sm:$0xff]
        %v8013 = vld [vmem:[%s7893 + $0x3b8] sm:$0xff]
        %v8014 = vld [vmem:[%s7893 + $0x3c0] sm:$0xff]
        %v8015 = vld [vmem:[%s7893 + $0x3c8] sm:$0xff]
        %v8016 = vld [vmem:[%s7893 + $0x3d0] sm:$0xff]
        %v8017 = vld [vmem:[%s7893 + $0x3d8] sm:$0xff]
        %v8018 = vld [vmem:[%s7893 + $0x3e0] sm:$0xff]
        %v8019 = vld [vmem:[%s7893 + $0x3e8] sm:$0xff]
        %v8020 = vld [vmem:[%s7893 + $0x3f0] sm:$0xff]
        %v8021 = vld [vmem:[%s7893 + $0x3f8] sm:$0xff]
        %v8150 = vunpack.c.l.b16 %v7894
        %v8151 = vunpack.c.h.b16 %v7894
        %v8152 = vunpack.c.l.b16 %v7895
        %v8153 = vunpack.c.h.b16 %v7895
        %v8154 = vunpack.c.l.b16 %v7896
        %v8155 = vunpack.c.h.b16 %v7896
        %v8156 = vunpack.c.l.b16 %v7897
        %v8157 = vunpack.c.h.b16 %v7897
        %v8158 = vunpack.c.l.b16 %v7898
        %v8159 = vunpack.c.h.b16 %v7898
        %v8160 = vunpack.c.l.b16 %v7899
        %v8161 = vunpack.c.h.b16 %v7899
        %v8162 = vunpack.c.l.b16 %v7900
        %v8163 = vunpack.c.h.b16 %v7900
        %v8164 = vunpack.c.l.b16 %v7901
        %v8165 = vunpack.c.h.b16 %v7901
        %v8166 = vunpack.c.l.b16 %v7902
        %v8167 = vunpack.c.h.b16 %v7902
        %v8168 = vunpack.c.l.b16 %v7903
        %v8169 = vunpack.c.h.b16 %v7903
        %v8170 = vunpack.c.l.b16 %v7904
        %v8171 = vunpack.c.h.b16 %v7904
        %v8172 = vunpack.c.l.b16 %v7905
        %v8173 = vunpack.c.h.b16 %v7905
        %v8174 = vunpack.c.l.b16 %v7906
        %v8175 = vunpack.c.h.b16 %v7906
        %v8176 = vunpack.c.l.b16 %v7907
        %v8177 = vunpack.c.h.b16 %v7907
        %v8178 = vunpack.c.l.b16 %v7908
        %v8179 = vunpack.c.h.b16 %v7908
        %v8180 = vunpack.c.l.b16 %v7909
        %v8181 = vunpack.c.h.b16 %v7909
        %v8182 = vunpack.c.l.b16 %v7910
        %v8183 = vunpack.c.h.b16 %v7910
        %v8184 = vunpack.c.l.b16 %v7911
        %v8185 = vunpack.c.h.b16 %v7911
        %v8186 = vunpack.c.l.b16 %v7912
        %v8187 = vunpack.c.h.b16 %v7912
        %v8188 = vunpack.c.l.b16 %v7913
        %v8189 = vunpack.c.h.b16 %v7913
        %v8190 = vunpack.c.l.b16 %v7914
        %v8191 = vunpack.c.h.b16 %v7914
        %v8192 = vunpack.c.l.b16 %v7915
        %v8193 = vunpack.c.h.b16 %v7915
        %v8194 = vunpack.c.l.b16 %v7916
        %v8195 = vunpack.c.h.b16 %v7916
        %v8196 = vunpack.c.l.b16 %v7917
        %v8197 = vunpack.c.h.b16 %v7917
        %v8198 = vunpack.c.l.b16 %v7918
        %v8199 = vunpack.c.h.b16 %v7918
        %v8200 = vunpack.c.l.b16 %v7919
        %v8201 = vunpack.c.h.b16 %v7919
        %v8202 = vunpack.c.l.b16 %v7920
        %v8203 = vunpack.c.h.b16 %v7920
        %v8204 = vunpack.c.l.b16 %v7921
        %v8205 = vunpack.c.h.b16 %v7921
        %v8206 = vunpack.c.l.b16 %v7922
        %v8207 = vunpack.c.h.b16 %v7922
        %v8208 = vunpack.c.l.b16 %v7923
        %v8209 = vunpack.c.h.b16 %v7923
        %v8210 = vunpack.c.l.b16 %v7924
        %v8211 = vunpack.c.h.b16 %v7924
        %v8212 = vunpack.c.l.b16 %v7925
        %v8213 = vunpack.c.h.b16 %v7925
        %v8214 = vunpack.c.l.b16 %v7926
        %v8215 = vunpack.c.h.b16 %v7926
        %v8216 = vunpack.c.l.b16 %v7927
        %v8217 = vunpack.c.h.b16 %v7927
        %v8218 = vunpack.c.l.b16 %v7928
        %v8219 = vunpack.c.h.b16 %v7928
        %v8220 = vunpack.c.l.b16 %v7929
        %v8221 = vunpack.c.h.b16 %v7929
        %v8222 = vunpack.c.l.b16 %v7930
        %v8223 = vunpack.c.h.b16 %v7930
        %v8224 = vunpack.c.l.b16 %v7931
        %v8225 = vunpack.c.h.b16 %v7931
        %v8226 = vunpack.c.l.b16 %v7932
        %v8227 = vunpack.c.h.b16 %v7932
        %v8228 = vunpack.c.l.b16 %v7933
        %v8229 = vunpack.c.h.b16 %v7933
        %v8230 = vunpack.c.l.b16 %v7934
        %v8231 = vunpack.c.h.b16 %v7934
        %v8232 = vunpack.c.l.b16 %v7935
        %v8233 = vunpack.c.h.b16 %v7935
        %v8234 = vunpack.c.l.b16 %v7936
        %v8235 = vunpack.c.h.b16 %v7936
        %v8236 = vunpack.c.l.b16 %v7937
        %v8237 = vunpack.c.h.b16 %v7937
        %v8238 = vunpack.c.l.b16 %v7938
        %v8239 = vunpack.c.h.b16 %v7938
        %v8240 = vunpack.c.l.b16 %v7939
        %v8241 = vunpack.c.h.b16 %v7939
        %v8242 = vunpack.c.l.b16 %v7940
        %v8243 = vunpack.c.h.b16 %v7940
        %v8244 = vunpack.c.l.b16 %v7941
        %v8245 = vunpack.c.h.b16 %v7941
        %v8246 = vunpack.c.l.b16 %v7942
        %v8247 = vunpack.c.h.b16 %v7942
        %v8248 = vunpack.c.l.b16 %v7943
        %v8249 = vunpack.c.h.b16 %v7943
        %v8250 = vunpack.c.l.b16 %v7944
        %v8251 = vunpack.c.h.b16 %v7944
        %v8252 = vunpack.c.l.b16 %v7945
        %v8253 = vunpack.c.h.b16 %v7945
        %v8254 = vunpack.c.l.b16 %v7946
        %v8255 = vunpack.c.h.b16 %v7946
        %v8256 = vunpack.c.l.b16 %v7947
        %v8257 = vunpack.c.h.b16 %v7947
        %v8258 = vunpack.c.l.b16 %v7948
        %v8259 = vunpack.c.h.b16 %v7948
        %v8260 = vunpack.c.l.b16 %v7949
        %v8261 = vunpack.c.h.b16 %v7949
        %v8262 = vunpack.c.l.b16 %v7950
        %v8263 = vunpack.c.h.b16 %v7950
        %v8264 = vunpack.c.l.b16 %v7951
        %v8265 = vunpack.c.h.b16 %v7951
        %v8266 = vunpack.c.l.b16 %v7952
        %v8267 = vunpack.c.h.b16 %v7952
        %v8268 = vunpack.c.l.b16 %v7953
        %v8269 = vunpack.c.h.b16 %v7953
        %v8270 = vunpack.c.l.b16 %v7954
        %v8271 = vunpack.c.h.b16 %v7954
        %v8272 = vunpack.c.l.b16 %v7955
        %v8273 = vunpack.c.h.b16 %v7955
        %v8274 = vunpack.c.l.b16 %v7956
        %v8275 = vunpack.c.h.b16 %v7956
        %v8276 = vunpack.c.l.b16 %v7957
        %v8277 = vunpack.c.h.b16 %v7957
        %v8278 = vunpack.c.l.b16 %v7958
        %v8279 = vunpack.c.h.b16 %v7958
        %v8280 = vunpack.c.l.b16 %v7959
        %v8281 = vunpack.c.h.b16 %v7959
        %v8282 = vunpack.c.l.b16 %v7960
        %v8283 = vunpack.c.h.b16 %v7960
        %v8284 = vunpack.c.l.b16 %v7961
        %v8285 = vunpack.c.h.b16 %v7961
        %v8286 = vunpack.c.l.b16 %v7962
        %v8287 = vunpack.c.h.b16 %v7962
        %v8288 = vunpack.c.l.b16 %v7963
        %v8289 = vunpack.c.h.b16 %v7963
        %v8290 = vunpack.c.l.b16 %v7964
        %v8291 = vunpack.c.h.b16 %v7964
        %v8292 = vunpack.c.l.b16 %v7965
        %v8293 = vunpack.c.h.b16 %v7965
        %v8294 = vunpack.c.l.b16 %v7966
        %v8295 = vunpack.c.h.b16 %v7966
        %v8296 = vunpack.c.l.b16 %v7967
        %v8297 = vunpack.c.h.b16 %v7967
        %v8298 = vunpack.c.l.b16 %v7968
        %v8299 = vunpack.c.h.b16 %v7968
        %v8300 = vunpack.c.l.b16 %v7969
        %v8301 = vunpack.c.h.b16 %v7969
        %v8302 = vunpack.c.l.b16 %v7970
        %v8303 = vunpack.c.h.b16 %v7970
        %v8304 = vunpack.c.l.b16 %v7971
        %v8305 = vunpack.c.h.b16 %v7971
        %v8306 = vunpack.c.l.b16 %v7972
        %v8307 = vunpack.c.h.b16 %v7972
        %v8308 = vunpack.c.l.b16 %v7973
        %v8309 = vunpack.c.h.b16 %v7973
        %v8310 = vunpack.c.l.b16 %v7974
        %v8311 = vunpack.c.h.b16 %v7974
        %v8312 = vunpack.c.l.b16 %v7975
        %v8313 = vunpack.c.h.b16 %v7975
        %v8314 = vunpack.c.l.b16 %v7976
        %v8315 = vunpack.c.h.b16 %v7976
        %v8316 = vunpack.c.l.b16 %v7977
        %v8317 = vunpack.c.h.b16 %v7977
        %v8318 = vunpack.c.l.b16 %v7978
        %v8319 = vunpack.c.h.b16 %v7978
        %v8320 = vunpack.c.l.b16 %v7979
        %v8321 = vunpack.c.h.b16 %v7979
        %v8322 = vunpack.c.l.b16 %v7980
        %v8323 = vunpack.c.h.b16 %v7980
        %v8324 = vunpack.c.l.b16 %v7981
        %v8325 = vunpack.c.h.b16 %v7981
        %v8326 = vunpack.c.l.b16 %v7982
        %v8327 = vunpack.c.h.b16 %v7982
        %v8328 = vunpack.c.l.b16 %v7983
        %v8329 = vunpack.c.h.b16 %v7983
        %v8330 = vunpack.c.l.b16 %v7984
        %v8331 = vunpack.c.h.b16 %v7984
        %v8332 = vunpack.c.l.b16 %v7985
        %v8333 = vunpack.c.h.b16 %v7985
        %v8334 = vunpack.c.l.b16 %v7986
        %v8335 = vunpack.c.h.b16 %v7986
        %v8336 = vunpack.c.l.b16 %v7987
        %v8337 = vunpack.c.h.b16 %v7987
        %v8338 = vunpack.c.l.b16 %v7988
        %v8339 = vunpack.c.h.b16 %v7988
        %v8340 = vunpack.c.l.b16 %v7989
        %v8341 = vunpack.c.h.b16 %v7989
        %v8342 = vunpack.c.l.b16 %v7990
        %v8343 = vunpack.c.h.b16 %v7990
        %v8344 = vunpack.c.l.b16 %v7991
        %v8345 = vunpack.c.h.b16 %v7991
        %v8346 = vunpack.c.l.b16 %v7992
        %v8347 = vunpack.c.h.b16 %v7992
        %v8348 = vunpack.c.l.b16 %v7993
        %v8349 = vunpack.c.h.b16 %v7993
        %v8350 = vunpack.c.l.b16 %v7994
        %v8351 = vunpack.c.h.b16 %v7994
        %v8352 = vunpack.c.l.b16 %v7995
        %v8353 = vunpack.c.h.b16 %v7995
        %v8354 = vunpack.c.l.b16 %v7996
        %v8355 = vunpack.c.h.b16 %v7996
        %v8356 = vunpack.c.l.b16 %v7997
        %v8357 = vunpack.c.h.b16 %v7997
        %v8358 = vunpack.c.l.b16 %v7998
        %v8359 = vunpack.c.h.b16 %v7998
        %v8360 = vunpack.c.l.b16 %v7999
        %v8361 = vunpack.c.h.b16 %v7999
        %v8362 = vunpack.c.l.b16 %v8000
        %v8363 = vunpack.c.h.b16 %v8000
        %v8364 = vunpack.c.l.b16 %v8001
        %v8365 = vunpack.c.h.b16 %v8001
        %v8366 = vunpack.c.l.b16 %v8002
        %v8367 = vunpack.c.h.b16 %v8002
        %v8368 = vunpack.c.l.b16 %v8003
        %v8369 = vunpack.c.h.b16 %v8003
        %v8370 = vunpack.c.l.b16 %v8004
        %v8371 = vunpack.c.h.b16 %v8004
        %v8372 = vunpack.c.l.b16 %v8005
        %v8373 = vunpack.c.h.b16 %v8005
        %v8374 = vunpack.c.l.b16 %v8006
        %v8375 = vunpack.c.h.b16 %v8006
        %v8376 = vunpack.c.l.b16 %v8007
        %v8377 = vunpack.c.h.b16 %v8007
        %v8378 = vunpack.c.l.b16 %v8008
        %v8379 = vunpack.c.h.b16 %v8008
        %v8380 = vunpack.c.l.b16 %v8009
        %v8381 = vunpack.c.h.b16 %v8009
        %v8382 = vunpack.c.l.b16 %v8010
        %v8383 = vunpack.c.h.b16 %v8010
        %v8384 = vunpack.c.l.b16 %v8011
        %v8385 = vunpack.c.h.b16 %v8011
        %v8386 = vunpack.c.l.b16 %v8012
        %v8387 = vunpack.c.h.b16 %v8012
        %v8388 = vunpack.c.l.b16 %v8013
        %v8389 = vunpack.c.h.b16 %v8013
        %v8390 = vunpack.c.l.b16 %v8014
        %v8391 = vunpack.c.h.b16 %v8014
        %v8392 = vunpack.c.l.b16 %v8015
        %v8393 = vunpack.c.h.b16 %v8015
        %v8394 = vunpack.c.l.b16 %v8016
        %v8395 = vunpack.c.h.b16 %v8016
        %v8396 = vunpack.c.l.b16 %v8017
        %v8397 = vunpack.c.h.b16 %v8017
        %v8398 = vunpack.c.l.b16 %v8018
        %v8399 = vunpack.c.h.b16 %v8018
        %v8400 = vunpack.c.l.b16 %v8019
        %v8401 = vunpack.c.h.b16 %v8019
        %v8402 = vunpack.c.l.b16 %v8020
        %v8403 = vunpack.c.h.b16 %v8020
        %v8404 = vunpack.c.l.b16 %v8021
        %v8405 = vunpack.c.h.b16 %v8021
        %v8406 = vpack.c.b16 %v8154, %v8150
        %v8407 = vpack.c.b16 %v8155, %v8151
        %v8408 = vpack.c.b16 %v8156, %v8152
        %v8409 = vpack.c.b16 %v8157, %v8153
        %v8410 = vpack.c.b16 %v8162, %v8158
        %v8411 = vpack.c.b16 %v8163, %v8159
        %v8412 = vpack.c.b16 %v8164, %v8160
        %v8413 = vpack.c.b16 %v8165, %v8161
        %v8414 = vpack.c.b16 %v8170, %v8166
        %v8415 = vpack.c.b16 %v8171, %v8167
        %v8416 = vpack.c.b16 %v8172, %v8168
        %v8417 = vpack.c.b16 %v8173, %v8169
        %v8418 = vpack.c.b16 %v8178, %v8174
        %v8419 = vpack.c.b16 %v8179, %v8175
        %v8420 = vpack.c.b16 %v8180, %v8176
        %v8421 = vpack.c.b16 %v8181, %v8177
        %v8422 = vpack.c.b16 %v8186, %v8182
        %v8423 = vpack.c.b16 %v8187, %v8183
        %v8424 = vpack.c.b16 %v8188, %v8184
        %v8425 = vpack.c.b16 %v8189, %v8185
        %v8426 = vpack.c.b16 %v8194, %v8190
        %v8427 = vpack.c.b16 %v8195, %v8191
        %v8428 = vpack.c.b16 %v8196, %v8192
        %v8429 = vpack.c.b16 %v8197, %v8193
        %v8430 = vpack.c.b16 %v8202, %v8198
        %v8431 = vpack.c.b16 %v8203, %v8199
        %v8432 = vpack.c.b16 %v8204, %v8200
        %v8433 = vpack.c.b16 %v8205, %v8201
        %v8434 = vpack.c.b16 %v8210, %v8206
        %v8435 = vpack.c.b16 %v8211, %v8207
        %v8436 = vpack.c.b16 %v8212, %v8208
        %v8437 = vpack.c.b16 %v8213, %v8209
        %v8438 = vpack.c.b16 %v8218, %v8214
        %v8439 = vpack.c.b16 %v8219, %v8215
        %v8440 = vpack.c.b16 %v8220, %v8216
        %v8441 = vpack.c.b16 %v8221, %v8217
        %v8442 = vpack.c.b16 %v8226, %v8222
        %v8443 = vpack.c.b16 %v8227, %v8223
        %v8444 = vpack.c.b16 %v8228, %v8224
        %v8445 = vpack.c.b16 %v8229, %v8225
        %v8446 = vpack.c.b16 %v8234, %v8230
        %v8447 = vpack.c.b16 %v8235, %v8231
        %v8448 = vpack.c.b16 %v8236, %v8232
        %v8449 = vpack.c.b16 %v8237, %v8233
        %v8450 = vpack.c.b16 %v8242, %v8238
        %v8451 = vpack.c.b16 %v8243, %v8239
        %v8452 = vpack.c.b16 %v8244, %v8240
        %v8453 = vpack.c.b16 %v8245, %v8241
        %v8454 = vpack.c.b16 %v8250, %v8246
        %v8455 = vpack.c.b16 %v8251, %v8247
        %v8456 = vpack.c.b16 %v8252, %v8248
        %v8457 = vpack.c.b16 %v8253, %v8249
        %v8458 = vpack.c.b16 %v8258, %v8254
        %v8459 = vpack.c.b16 %v8259, %v8255
        %v8460 = vpack.c.b16 %v8260, %v8256
        %v8461 = vpack.c.b16 %v8261, %v8257
        %v8462 = vpack.c.b16 %v8266, %v8262
        %v8463 = vpack.c.b16 %v8267, %v8263
        %v8464 = vpack.c.b16 %v8268, %v8264
        %v8465 = vpack.c.b16 %v8269, %v8265
        %v8466 = vpack.c.b16 %v8274, %v8270
        %v8467 = vpack.c.b16 %v8275, %v8271
        %v8468 = vpack.c.b16 %v8276, %v8272
        %v8469 = vpack.c.b16 %v8277, %v8273
        %v8470 = vpack.c.b16 %v8282, %v8278
        %v8471 = vpack.c.b16 %v8283, %v8279
        %v8472 = vpack.c.b16 %v8284, %v8280
        %v8473 = vpack.c.b16 %v8285, %v8281
        %v8474 = vpack.c.b16 %v8290, %v8286
        %v8475 = vpack.c.b16 %v8291, %v8287
        %v8476 = vpack.c.b16 %v8292, %v8288
        %v8477 = vpack.c.b16 %v8293, %v8289
        %v8478 = vpack.c.b16 %v8298, %v8294
        %v8479 = vpack.c.b16 %v8299, %v8295
        %v8480 = vpack.c.b16 %v8300, %v8296
        %v8481 = vpack.c.b16 %v8301, %v8297
        %v8482 = vpack.c.b16 %v8306, %v8302
        %v8483 = vpack.c.b16 %v8307, %v8303
        %v8484 = vpack.c.b16 %v8308, %v8304
        %v8485 = vpack.c.b16 %v8309, %v8305
        %v8486 = vpack.c.b16 %v8314, %v8310
        %v8487 = vpack.c.b16 %v8315, %v8311
        %v8488 = vpack.c.b16 %v8316, %v8312
        %v8489 = vpack.c.b16 %v8317, %v8313
        %v8490 = vpack.c.b16 %v8322, %v8318
        %v8491 = vpack.c.b16 %v8323, %v8319
        %v8492 = vpack.c.b16 %v8324, %v8320
        %v8493 = vpack.c.b16 %v8325, %v8321
        %v8494 = vpack.c.b16 %v8330, %v8326
        %v8495 = vpack.c.b16 %v8331, %v8327
        %v8496 = vpack.c.b16 %v8332, %v8328
        %v8497 = vpack.c.b16 %v8333, %v8329
        %v8498 = vpack.c.b16 %v8338, %v8334
        %v8499 = vpack.c.b16 %v8339, %v8335
        %v8500 = vpack.c.b16 %v8340, %v8336
        %v8501 = vpack.c.b16 %v8341, %v8337
        %v8502 = vpack.c.b16 %v8346, %v8342
        %v8503 = vpack.c.b16 %v8347, %v8343
        %v8504 = vpack.c.b16 %v8348, %v8344
        %v8505 = vpack.c.b16 %v8349, %v8345
        %v8506 = vpack.c.b16 %v8354, %v8350
        %v8507 = vpack.c.b16 %v8355, %v8351
        %v8508 = vpack.c.b16 %v8356, %v8352
        %v8509 = vpack.c.b16 %v8357, %v8353
        %v8510 = vpack.c.b16 %v8362, %v8358
        %v8511 = vpack.c.b16 %v8363, %v8359
        %v8512 = vpack.c.b16 %v8364, %v8360
        %v8513 = vpack.c.b16 %v8365, %v8361
        %v8514 = vpack.c.b16 %v8370, %v8366
        %v8515 = vpack.c.b16 %v8371, %v8367
        %v8516 = vpack.c.b16 %v8372, %v8368
        %v8517 = vpack.c.b16 %v8373, %v8369
        %v8518 = vpack.c.b16 %v8378, %v8374
        %v8519 = vpack.c.b16 %v8379, %v8375
        %v8520 = vpack.c.b16 %v8380, %v8376
        %v8521 = vpack.c.b16 %v8381, %v8377
        %v8522 = vpack.c.b16 %v8386, %v8382
        %v8523 = vpack.c.b16 %v8387, %v8383
        %v8524 = vpack.c.b16 %v8388, %v8384
        %v8525 = vpack.c.b16 %v8389, %v8385
        %v8526 = vpack.c.b16 %v8394, %v8390
        %v8527 = vpack.c.b16 %v8395, %v8391
        %v8528 = vpack.c.b16 %v8396, %v8392
        %v8529 = vpack.c.b16 %v8397, %v8393
        %v8530 = vpack.c.b16 %v8402, %v8398
        %v8531 = vpack.c.b16 %v8403, %v8399
        %v8532 = vpack.c.b16 %v8404, %v8400
        %v8533 = vpack.c.b16 %v8405, %v8401
        %8662 = vmatprep.subr.bf16.mxu0 %v8435
        %8663 = vmatpush1.bf16.msra.mxu0 %v8434
        %8664 = vmatprep.subr.bf16.mxu0 %v8431
        %8665 = vmatpush1.bf16.msra.mxu0 %v8430
        %8666 = vmatprep.subr.bf16.mxu0 %v8427
        %8667 = vmatpush1.bf16.msra.mxu0 %v8426
        %8668 = vmatprep.subr.bf16.mxu0 %v8423
        %8669 = vmatpush1.bf16.msra.mxu0 %v8422
        %8670 = vmatprep.subr.bf16.mxu0 %v8419
        %8671 = vmatpush1.bf16.msra.mxu0 %v8418
        %8672 = vmatprep.subr.bf16.mxu0 %v8415
        %8673 = vmatpush1.bf16.msra.mxu0 %v8414
        %8674 = vmatprep.subr.bf16.mxu0 %v8411
        %8675 = vmatpush1.bf16.msra.mxu0 %v8410
        %8676 = vmatprep.subr.bf16.mxu0 %v8407
        %8677 = vmatpush1.bf16.msra.mxu0 %v8406
        %8678 = vmatprep.subr.bf16.mxu0 %v8467
        %8679 = vmatpush2.bf16.msra.mxu0 %v8466
        %8680 = vmatprep.subr.bf16.mxu0 %v8463
        %8681 = vmatpush2.bf16.msra.mxu0 %v8462
        %8682 = vmatprep.subr.bf16.mxu0 %v8459
        %8683 = vmatpush2.bf16.msra.mxu0 %v8458
        %8684 = vmatprep.subr.bf16.mxu0 %v8455
        %8685 = vmatpush2.bf16.msra.mxu0 %v8454
        %8686 = vmatprep.subr.bf16.mxu0 %v8451
        %8687 = vmatpush2.bf16.msra.mxu0 %v8450
        %8688 = vmatprep.subr.bf16.mxu0 %v8447
        %8689 = vmatpush2.bf16.msra.mxu0 %v8446
        %8690 = vmatprep.subr.bf16.mxu0 %v8443
        %8691 = vmatpush2.bf16.msra.mxu0 %v8442
        %8692 = vmatprep.subr.bf16.mxu0 %v8439
        %8693 = vmatpush2.bf16.msra.mxu0 %v8438
        %8694 = vmatprep.mubr.bf16.mxu0 %v7890
        %8695 = vmatmul.mubr.bf16.gmra.mxu0 %v7889
        %v8696 = vpop.f32.mrf.mxu0
        %v8697 = vadd.f32 0.0, %v8696
        %v8698 = vpop.f32.mrf.mxu0
        %v8699 = vadd.f32 0.0, %v8698
        %v8700 = vpop.f32.mrf.mxu0
        %v8701 = vpop.f32.mrf.mxu0
        %8702 = vdwg.mxu0
        %8703 = vmatprep.subr.bf16.mxu0 %v8499
        %8704 = vmatpush1.bf16.msra.mxu0 %v8498
        %8705 = vmatprep.subr.bf16.mxu0 %v8495
        %8706 = vmatpush1.bf16.msra.mxu0 %v8494
        %8707 = vmatprep.subr.bf16.mxu0 %v8491
        %8708 = vmatpush1.bf16.msra.mxu0 %v8490
        %8709 = vmatprep.subr.bf16.mxu0 %v8487
        %8710 = vmatpush1.bf16.msra.mxu0 %v8486
        %8711 = vmatprep.subr.bf16.mxu0 %v8483
        %8712 = vmatpush1.bf16.msra.mxu0 %v8482
        %8713 = vmatprep.subr.bf16.mxu0 %v8479
        %8714 = vmatpush1.bf16.msra.mxu0 %v8478
        %8715 = vmatprep.subr.bf16.mxu0 %v8475
        %8716 = vmatpush1.bf16.msra.mxu0 %v8474
        %8717 = vmatprep.subr.bf16.mxu0 %v8471
        %8718 = vmatpush1.bf16.msra.mxu0 %v8470
        %8719 = vmatprep.subr.bf16.mxu0 %v8531
        %8720 = vmatpush2.bf16.msra.mxu0 %v8530
        %8721 = vmatprep.subr.bf16.mxu0 %v8527
        %8722 = vmatpush2.bf16.msra.mxu0 %v8526
        %8723 = vmatprep.subr.bf16.mxu0 %v8523
        %8724 = vmatpush2.bf16.msra.mxu0 %v8522
        %8725 = vmatprep.subr.bf16.mxu0 %v8519
        %8726 = vmatpush2.bf16.msra.mxu0 %v8518
        %8727 = vmatprep.subr.bf16.mxu0 %v8515
        %8728 = vmatpush2.bf16.msra.mxu0 %v8514
        %8729 = vmatprep.subr.bf16.mxu0 %v8511
        %8730 = vmatpush2.bf16.msra.mxu0 %v8510
        %8731 = vmatprep.subr.bf16.mxu0 %v8507
        %8732 = vmatpush2.bf16.msra.mxu0 %v8506
        %8733 = vmatprep.subr.bf16.mxu0 %v8503
        %8734 = vmatpush2.bf16.msra.mxu0 %v8502
        %8735 = vmatprep.mubr.bf16.mxu0 %v7892
        %8736 = vmatmul.mubr.bf16.gmra.mxu0 %v7891
        %v8737 = vpop.f32.mrf.mxu0
        %v8738 = vadd.f32 %v8697, %v8737
        %v8739 = vpop.f32.mrf.mxu0
        %v8740 = vadd.f32 %v8699, %v8739
        %v8741 = vpop.f32.mrf.mxu0
        %v8742 = vpop.f32.mrf.mxu0
        %8743 = vdwg.mxu0
        %8744 = vmatprep.subr.bf16.mxu0 %v8437
        %8745 = vmatpush1.bf16.msra.mxu0 %v8436
        %8746 = vmatprep.subr.bf16.mxu0 %v8433
        %8747 = vmatpush1.bf16.msra.mxu0 %v8432
        %8748 = vmatprep.subr.bf16.mxu0 %v8429
        %8749 = vmatpush1.bf16.msra.mxu0 %v8428
        %8750 = vmatprep.subr.bf16.mxu0 %v8425
        %8751 = vmatpush1.bf16.msra.mxu0 %v8424
        %8752 = vmatprep.subr.bf16.mxu0 %v8421
        %8753 = vmatpush1.bf16.msra.mxu0 %v8420
        %8754 = vmatprep.subr.bf16.mxu0 %v8417
        %8755 = vmatpush1.bf16.msra.mxu0 %v8416
        %8756 = vmatprep.subr.bf16.mxu0 %v8413
        %8757 = vmatpush1.bf16.msra.mxu0 %v8412
        %8758 = vmatprep.subr.bf16.mxu0 %v8409
        %8759 = vmatpush1.bf16.msra.mxu0 %v8408
        %8760 = vmatprep.subr.bf16.mxu0 %v8469
        %8761 = vmatpush2.bf16.msra.mxu0 %v8468
        %8762 = vmatprep.subr.bf16.mxu0 %v8465
        %8763 = vmatpush2.bf16.msra.mxu0 %v8464
        %8764 = vmatprep.subr.bf16.mxu0 %v8461
        %8765 = vmatpush2.bf16.msra.mxu0 %v8460
        %8766 = vmatprep.subr.bf16.mxu0 %v8457
        %8767 = vmatpush2.bf16.msra.mxu0 %v8456
        %8768 = vmatprep.subr.bf16.mxu0 %v8453
        %8769 = vmatpush2.bf16.msra.mxu0 %v8452
        %8770 = vmatprep.subr.bf16.mxu0 %v8449
        %8771 = vmatpush2.bf16.msra.mxu0 %v8448
        %8772 = vmatprep.subr.bf16.mxu0 %v8445
        %8773 = vmatpush2.bf16.msra.mxu0 %v8444
        %8774 = vmatprep.subr.bf16.mxu0 %v8441
        %8775 = vmatpush2.bf16.msra.mxu0 %v8440
        %8776 = vmatprep.mubr.bf16.mxu0 %v7890
        %8777 = vmatmul.mubr.bf16.gmra.mxu0 %v7889
        %v8778 = vpop.f32.mrf.mxu0
        %v8779 = vadd.f32 0.0, %v8778
        %v8780 = vpop.f32.mrf.mxu0
        %v8781 = vadd.f32 0.0, %v8780
        %v8782 = vpop.f32.mrf.mxu0
        %v8783 = vpop.f32.mrf.mxu0
        %8784 = vdwg.mxu0
        %8785 = vmatprep.subr.bf16.mxu0 %v8501
        %8786 = vmatpush1.bf16.msra.mxu0 %v8500
        %8787 = vmatprep.subr.bf16.mxu0 %v8497
        %8788 = vmatpush1.bf16.msra.mxu0 %v8496
        %8789 = vmatprep.subr.bf16.mxu0 %v8493
        %8790 = vmatpush1.bf16.msra.mxu0 %v8492
        %8791 = vmatprep.subr.bf16.mxu0 %v8489
        %8792 = vmatpush1.bf16.msra.mxu0 %v8488
        %8793 = vmatprep.subr.bf16.mxu0 %v8485
        %8794 = vmatpush1.bf16.msra.mxu0 %v8484
        %8795 = vmatprep.subr.bf16.mxu0 %v8481
        %8796 = vmatpush1.bf16.msra.mxu0 %v8480
        %8797 = vmatprep.subr.bf16.mxu0 %v8477
        %8798 = vmatpush1.bf16.msra.mxu0 %v8476
        %8799 = vmatprep.subr.bf16.mxu0 %v8473
        %8800 = vmatpush1.bf16.msra.mxu0 %v8472
        %8801 = vmatprep.subr.bf16.mxu0 %v8533
        %8802 = vmatpush2.bf16.msra.mxu0 %v8532
        %8803 = vmatprep.subr.bf16.mxu0 %v8529
        %8804 = vmatpush2.bf16.msra.mxu0 %v8528
        %8805 = vmatprep.subr.bf16.mxu0 %v8525
        %8806 = vmatpush2.bf16.msra.mxu0 %v8524
        %8807 = vmatprep.subr.bf16.mxu0 %v8521
        %8808 = vmatpush2.bf16.msra.mxu0 %v8520
        %8809 = vmatprep.subr.bf16.mxu0 %v8517
        %8810 = vmatpush2.bf16.msra.mxu0 %v8516
        %8811 = vmatprep.subr.bf16.mxu0 %v8513
        %8812 = vmatpush2.bf16.msra.mxu0 %v8512
        %8813 = vmatprep.subr.bf16.mxu0 %v8509
        %8814 = vmatpush2.bf16.msra.mxu0 %v8508
        %8815 = vmatprep.subr.bf16.mxu0 %v8505
        %8816 = vmatpush2.bf16.msra.mxu0 %v8504
        %8817 = vmatprep.mubr.bf16.mxu0 %v7892
        %8818 = vmatmul.mubr.bf16.gmra.mxu0 %v7891
        %v8819 = vpop.f32.mrf.mxu0
        %v8820 = vadd.f32 %v8779, %v8819
        %v8821 = vpop.f32.mrf.mxu0
        %v8822 = vadd.f32 %v8781, %v8821
        %v8823 = vpop.f32.mrf.mxu0
        %v8824 = vpop.f32.mrf.mxu0
        %8825 = vdwg.mxu0
        %v8954 = vunpack.c.l.b16 %v7614
        %v8955 = vunpack.c.h.b16 %v7614
        %v8956 = vunpack.c.l.b16 %v7615
        %v8957 = vunpack.c.h.b16 %v7615
        %v8958 = vunpack.c.l.b16 %v7616
        %v8959 = vunpack.c.h.b16 %v7616
        %v8960 = vunpack.c.l.b16 %v7617
        %v8961 = vunpack.c.h.b16 %v7617
        %v8962 = vunpack.c.l.b16 %v7618
        %v8963 = vunpack.c.h.b16 %v7618
        %v8964 = vunpack.c.l.b16 %v7619
        %v8965 = vunpack.c.h.b16 %v7619
        %v8966 = vunpack.c.l.b16 %v7620
        %v8967 = vunpack.c.h.b16 %v7620
        %v8968 = vunpack.c.l.b16 %v7621
        %v8969 = vunpack.c.h.b16 %v7621
        %v8970 = vunpack.c.l.b16 %v7622
        %v8971 = vunpack.c.h.b16 %v7622
        %v8972 = vunpack.c.l.b16 %v7623
        %v8973 = vunpack.c.h.b16 %v7623
        %v8974 = vunpack.c.l.b16 %v7624
        %v8975 = vunpack.c.h.b16 %v7624
        %v8976 = vunpack.c.l.b16 %v7625
        %v8977 = vunpack.c.h.b16 %v7625
        %v8978 = vunpack.c.l.b16 %v7626
        %v8979 = vunpack.c.h.b16 %v7626
        %v8980 = vunpack.c.l.b16 %v7627
        %v8981 = vunpack.c.h.b16 %v7627
        %v8982 = vunpack.c.l.b16 %v7628
        %v8983 = vunpack.c.h.b16 %v7628
        %v8984 = vunpack.c.l.b16 %v7629
        %v8985 = vunpack.c.h.b16 %v7629
        %v8986 = vunpack.c.l.b16 %v7630
        %v8987 = vunpack.c.h.b16 %v7630
        %v8988 = vunpack.c.l.b16 %v7631
        %v8989 = vunpack.c.h.b16 %v7631
        %v8990 = vunpack.c.l.b16 %v7632
        %v8991 = vunpack.c.h.b16 %v7632
        %v8992 = vunpack.c.l.b16 %v7633
        %v8993 = vunpack.c.h.b16 %v7633
        %v8994 = vunpack.c.l.b16 %v7634
        %v8995 = vunpack.c.h.b16 %v7634
        %v8996 = vunpack.c.l.b16 %v7635
        %v8997 = vunpack.c.h.b16 %v7635
        %v8998 = vunpack.c.l.b16 %v7636
        %v8999 = vunpack.c.h.b16 %v7636
        %v9000 = vunpack.c.l.b16 %v7637
        %v9001 = vunpack.c.h.b16 %v7637
        %v9002 = vunpack.c.l.b16 %v7638
        %v9003 = vunpack.c.h.b16 %v7638
        %v9004 = vunpack.c.l.b16 %v7639
        %v9005 = vunpack.c.h.b16 %v7639
        %v9006 = vunpack.c.l.b16 %v7640
        %v9007 = vunpack.c.h.b16 %v7640
        %v9008 = vunpack.c.l.b16 %v7641
        %v9009 = vunpack.c.h.b16 %v7641
        %v9010 = vunpack.c.l.b16 %v7642
        %v9011 = vunpack.c.h.b16 %v7642
        %v9012 = vunpack.c.l.b16 %v7643
        %v9013 = vunpack.c.h.b16 %v7643
        %v9014 = vunpack.c.l.b16 %v7644
        %v9015 = vunpack.c.h.b16 %v7644
        %v9016 = vunpack.c.l.b16 %v7645
        %v9017 = vunpack.c.h.b16 %v7645
        %v9018 = vunpack.c.l.b16 %v7646
        %v9019 = vunpack.c.h.b16 %v7646
        %v9020 = vunpack.c.l.b16 %v7647
        %v9021 = vunpack.c.h.b16 %v7647
        %v9022 = vunpack.c.l.b16 %v7648
        %v9023 = vunpack.c.h.b16 %v7648
        %v9024 = vunpack.c.l.b16 %v7649
        %v9025 = vunpack.c.h.b16 %v7649
        %v9026 = vunpack.c.l.b16 %v7650
        %v9027 = vunpack.c.h.b16 %v7650
        %v9028 = vunpack.c.l.b16 %v7651
        %v9029 = vunpack.c.h.b16 %v7651
        %v9030 = vunpack.c.l.b16 %v7652
        %v9031 = vunpack.c.h.b16 %v7652
        %v9032 = vunpack.c.l.b16 %v7653
        %v9033 = vunpack.c.h.b16 %v7653
        %v9034 = vunpack.c.l.b16 %v7654
        %v9035 = vunpack.c.h.b16 %v7654
        %v9036 = vunpack.c.l.b16 %v7655
        %v9037 = vunpack.c.h.b16 %v7655
        %v9038 = vunpack.c.l.b16 %v7656
        %v9039 = vunpack.c.h.b16 %v7656
        %v9040 = vunpack.c.l.b16 %v7657
        %v9041 = vunpack.c.h.b16 %v7657
        %v9042 = vunpack.c.l.b16 %v7658
        %v9043 = vunpack.c.h.b16 %v7658
        %v9044 = vunpack.c.l.b16 %v7659
        %v9045 = vunpack.c.h.b16 %v7659
        %v9046 = vunpack.c.l.b16 %v7660
        %v9047 = vunpack.c.h.b16 %v7660
        %v9048 = vunpack.c.l.b16 %v7661
        %v9049 = vunpack.c.h.b16 %v7661
        %v9050 = vunpack.c.l.b16 %v7662
        %v9051 = vunpack.c.h.b16 %v7662
        %v9052 = vunpack.c.l.b16 %v7663
        %v9053 = vunpack.c.h.b16 %v7663
        %v9054 = vunpack.c.l.b16 %v7664
        %v9055 = vunpack.c.h.b16 %v7664
        %v9056 = vunpack.c.l.b16 %v7665
        %v9057 = vunpack.c.h.b16 %v7665
        %v9058 = vunpack.c.l.b16 %v7666
        %v9059 = vunpack.c.h.b16 %v7666
        %v9060 = vunpack.c.l.b16 %v7667
        %v9061 = vunpack.c.h.b16 %v7667
        %v9062 = vunpack.c.l.b16 %v7668
        %v9063 = vunpack.c.h.b16 %v7668
        %v9064 = vunpack.c.l.b16 %v7669
        %v9065 = vunpack.c.h.b16 %v7669
        %v9066 = vunpack.c.l.b16 %v7670
        %v9067 = vunpack.c.h.b16 %v7670
        %v9068 = vunpack.c.l.b16 %v7671
        %v9069 = vunpack.c.h.b16 %v7671
        %v9070 = vunpack.c.l.b16 %v7672
        %v9071 = vunpack.c.h.b16 %v7672
        %v9072 = vunpack.c.l.b16 %v7673
        %v9073 = vunpack.c.h.b16 %v7673
        %v9074 = vunpack.c.l.b16 %v7674
        %v9075 = vunpack.c.h.b16 %v7674
        %v9076 = vunpack.c.l.b16 %v7675
        %v9077 = vunpack.c.h.b16 %v7675
        %v9078 = vunpack.c.l.b16 %v7676
        %v9079 = vunpack.c.h.b16 %v7676
        %v9080 = vunpack.c.l.b16 %v7677
        %v9081 = vunpack.c.h.b16 %v7677
        %v9082 = vunpack.c.l.b16 %v7678
        %v9083 = vunpack.c.h.b16 %v7678
        %v9084 = vunpack.c.l.b16 %v7679
        %v9085 = vunpack.c.h.b16 %v7679
        %v9086 = vunpack.c.l.b16 %v7680
        %v9087 = vunpack.c.h.b16 %v7680
        %v9088 = vunpack.c.l.b16 %v7681
        %v9089 = vunpack.c.h.b16 %v7681
        %v9090 = vunpack.c.l.b16 %v7682
        %v9091 = vunpack.c.h.b16 %v7682
        %v9092 = vunpack.c.l.b16 %v7683
        %v9093 = vunpack.c.h.b16 %v7683
        %v9094 = vunpack.c.l.b16 %v7684
        %v9095 = vunpack.c.h.b16 %v7684
        %v9096 = vunpack.c.l.b16 %v7685
        %v9097 = vunpack.c.h.b16 %v7685
        %v9098 = vunpack.c.l.b16 %v7686
        %v9099 = vunpack.c.h.b16 %v7686
        %v9100 = vunpack.c.l.b16 %v7687
        %v9101 = vunpack.c.h.b16 %v7687
        %v9102 = vunpack.c.l.b16 %v7688
        %v9103 = vunpack.c.h.b16 %v7688
        %v9104 = vunpack.c.l.b16 %v7689
        %v9105 = vunpack.c.h.b16 %v7689
        %v9106 = vunpack.c.l.b16 %v7690
        %v9107 = vunpack.c.h.b16 %v7690
        %v9108 = vunpack.c.l.b16 %v7691
        %v9109 = vunpack.c.h.b16 %v7691
        %v9110 = vunpack.c.l.b16 %v7692
        %v9111 = vunpack.c.h.b16 %v7692
        %v9112 = vunpack.c.l.b16 %v7693
        %v9113 = vunpack.c.h.b16 %v7693
        %v9114 = vunpack.c.l.b16 %v7694
        %v9115 = vunpack.c.h.b16 %v7694
        %v9116 = vunpack.c.l.b16 %v7695
        %v9117 = vunpack.c.h.b16 %v7695
        %v9118 = vunpack.c.l.b16 %v7696
        %v9119 = vunpack.c.h.b16 %v7696
        %v9120 = vunpack.c.l.b16 %v7697
        %v9121 = vunpack.c.h.b16 %v7697
        %v9122 = vunpack.c.l.b16 %v7698
        %v9123 = vunpack.c.h.b16 %v7698
        %v9124 = vunpack.c.l.b16 %v7699
        %v9125 = vunpack.c.h.b16 %v7699
        %v9126 = vunpack.c.l.b16 %v7700
        %v9127 = vunpack.c.h.b16 %v7700
        %v9128 = vunpack.c.l.b16 %v7701
        %v9129 = vunpack.c.h.b16 %v7701
        %v9130 = vunpack.c.l.b16 %v7702
        %v9131 = vunpack.c.h.b16 %v7702
        %v9132 = vunpack.c.l.b16 %v7703
        %v9133 = vunpack.c.h.b16 %v7703
        %v9134 = vunpack.c.l.b16 %v7704
        %v9135 = vunpack.c.h.b16 %v7704
        %v9136 = vunpack.c.l.b16 %v7705
        %v9137 = vunpack.c.h.b16 %v7705
        %v9138 = vunpack.c.l.b16 %v7706
        %v9139 = vunpack.c.h.b16 %v7706
        %v9140 = vunpack.c.l.b16 %v7707
        %v9141 = vunpack.c.h.b16 %v7707
        %v9142 = vunpack.c.l.b16 %v7708
        %v9143 = vunpack.c.h.b16 %v7708
        %v9144 = vunpack.c.l.b16 %v7709
        %v9145 = vunpack.c.h.b16 %v7709
        %v9146 = vunpack.c.l.b16 %v7710
        %v9147 = vunpack.c.h.b16 %v7710
        %v9148 = vunpack.c.l.b16 %v7711
        %v9149 = vunpack.c.h.b16 %v7711
        %v9150 = vunpack.c.l.b16 %v7712
        %v9151 = vunpack.c.h.b16 %v7712
        %v9152 = vunpack.c.l.b16 %v7713
        %v9153 = vunpack.c.h.b16 %v7713
        %v9154 = vunpack.c.l.b16 %v7714
        %v9155 = vunpack.c.h.b16 %v7714
        %v9156 = vunpack.c.l.b16 %v7715
        %v9157 = vunpack.c.h.b16 %v7715
        %v9158 = vunpack.c.l.b16 %v7716
        %v9159 = vunpack.c.h.b16 %v7716
        %v9160 = vunpack.c.l.b16 %v7717
        %v9161 = vunpack.c.h.b16 %v7717
        %v9162 = vunpack.c.l.b16 %v7718
        %v9163 = vunpack.c.h.b16 %v7718
        %v9164 = vunpack.c.l.b16 %v7719
        %v9165 = vunpack.c.h.b16 %v7719
        %v9166 = vunpack.c.l.b16 %v7720
        %v9167 = vunpack.c.h.b16 %v7720
        %v9168 = vunpack.c.l.b16 %v7721
        %v9169 = vunpack.c.h.b16 %v7721
        %v9170 = vunpack.c.l.b16 %v7722
        %v9171 = vunpack.c.h.b16 %v7722
        %v9172 = vunpack.c.l.b16 %v7723
        %v9173 = vunpack.c.h.b16 %v7723
        %v9174 = vunpack.c.l.b16 %v7724
        %v9175 = vunpack.c.h.b16 %v7724
        %v9176 = vunpack.c.l.b16 %v7725
        %v9177 = vunpack.c.h.b16 %v7725
        %v9178 = vunpack.c.l.b16 %v7726
        %v9179 = vunpack.c.h.b16 %v7726
        %v9180 = vunpack.c.l.b16 %v7727
        %v9181 = vunpack.c.h.b16 %v7727
        %v9182 = vunpack.c.l.b16 %v7728
        %v9183 = vunpack.c.h.b16 %v7728
        %v9184 = vunpack.c.l.b16 %v7729
        %v9185 = vunpack.c.h.b16 %v7729
        %v9186 = vunpack.c.l.b16 %v7730
        %v9187 = vunpack.c.h.b16 %v7730
        %v9188 = vunpack.c.l.b16 %v7731
        %v9189 = vunpack.c.h.b16 %v7731
        %v9190 = vunpack.c.l.b16 %v7732
        %v9191 = vunpack.c.h.b16 %v7732
        %v9192 = vunpack.c.l.b16 %v7733
        %v9193 = vunpack.c.h.b16 %v7733
        %v9194 = vunpack.c.l.b16 %v7734
        %v9195 = vunpack.c.h.b16 %v7734
        %v9196 = vunpack.c.l.b16 %v7735
        %v9197 = vunpack.c.h.b16 %v7735
        %v9198 = vunpack.c.l.b16 %v7736
        %v9199 = vunpack.c.h.b16 %v7736
        %v9200 = vunpack.c.l.b16 %v7737
        %v9201 = vunpack.c.h.b16 %v7737
        %v9202 = vunpack.c.l.b16 %v7738
        %v9203 = vunpack.c.h.b16 %v7738
        %v9204 = vunpack.c.l.b16 %v7739
        %v9205 = vunpack.c.h.b16 %v7739
        %v9206 = vunpack.c.l.b16 %v7740
        %v9207 = vunpack.c.h.b16 %v7740
        %v9208 = vunpack.c.l.b16 %v7741
        %v9209 = vunpack.c.h.b16 %v7741
        %v9210 = vpack.c.b16 %v8958, %v8954
        %v9211 = vpack.c.b16 %v8959, %v8955
        %v9212 = vpack.c.b16 %v8960, %v8956
        %v9213 = vpack.c.b16 %v8961, %v8957
        %v9214 = vpack.c.b16 %v8966, %v8962
        %v9215 = vpack.c.b16 %v8967, %v8963
        %v9216 = vpack.c.b16 %v8968, %v8964
        %v9217 = vpack.c.b16 %v8969, %v8965
        %v9218 = vpack.c.b16 %v8974, %v8970
        %v9219 = vpack.c.b16 %v8975, %v8971
        %v9220 = vpack.c.b16 %v8976, %v8972
        %v9221 = vpack.c.b16 %v8977, %v8973
        %v9222 = vpack.c.b16 %v8982, %v8978
        %v9223 = vpack.c.b16 %v8983, %v8979
        %v9224 = vpack.c.b16 %v8984, %v8980
        %v9225 = vpack.c.b16 %v8985, %v8981
        %v9226 = vpack.c.b16 %v8990, %v8986
        %v9227 = vpack.c.b16 %v8991, %v8987
        %v9228 = vpack.c.b16 %v8992, %v8988
        %v9229 = vpack.c.b16 %v8993, %v8989
        %v9230 = vpack.c.b16 %v8998, %v8994
        %v9231 = vpack.c.b16 %v8999, %v8995
        %v9232 = vpack.c.b16 %v9000, %v8996
        %v9233 = vpack.c.b16 %v9001, %v8997
        %v9234 = vpack.c.b16 %v9006, %v9002
        %v9235 = vpack.c.b16 %v9007, %v9003
        %v9236 = vpack.c.b16 %v9008, %v9004
        %v9237 = vpack.c.b16 %v9009, %v9005
        %v9238 = vpack.c.b16 %v9014, %v9010
        %v9239 = vpack.c.b16 %v9015, %v9011
        %v9240 = vpack.c.b16 %v9016, %v9012
        %v9241 = vpack.c.b16 %v9017, %v9013
        %v9242 = vpack.c.b16 %v9022, %v9018
        %v9243 = vpack.c.b16 %v9023, %v9019
        %v9244 = vpack.c.b16 %v9024, %v9020
        %v9245 = vpack.c.b16 %v9025, %v9021
        %v9246 = vpack.c.b16 %v9030, %v9026
        %v9247 = vpack.c.b16 %v9031, %v9027
        %v9248 = vpack.c.b16 %v9032, %v9028
        %v9249 = vpack.c.b16 %v9033, %v9029
        %v9250 = vpack.c.b16 %v9038, %v9034
        %v9251 = vpack.c.b16 %v9039, %v9035
        %v9252 = vpack.c.b16 %v9040, %v9036
        %v9253 = vpack.c.b16 %v9041, %v9037
        %v9254 = vpack.c.b16 %v9046, %v9042
        %v9255 = vpack.c.b16 %v9047, %v9043
        %v9256 = vpack.c.b16 %v9048, %v9044
        %v9257 = vpack.c.b16 %v9049, %v9045
        %v9258 = vpack.c.b16 %v9054, %v9050
        %v9259 = vpack.c.b16 %v9055, %v9051
        %v9260 = vpack.c.b16 %v9056, %v9052
        %v9261 = vpack.c.b16 %v9057, %v9053
        %v9262 = vpack.c.b16 %v9062, %v9058
        %v9263 = vpack.c.b16 %v9063, %v9059
        %v9264 = vpack.c.b16 %v9064, %v9060
        %v9265 = vpack.c.b16 %v9065, %v9061
        %v9266 = vpack.c.b16 %v9070, %v9066
        %v9267 = vpack.c.b16 %v9071, %v9067
        %v9268 = vpack.c.b16 %v9072, %v9068
        %v9269 = vpack.c.b16 %v9073, %v9069
        %v9270 = vpack.c.b16 %v9078, %v9074
        %v9271 = vpack.c.b16 %v9079, %v9075
        %v9272 = vpack.c.b16 %v9080, %v9076
        %v9273 = vpack.c.b16 %v9081, %v9077
        %v9274 = vpack.c.b16 %v9086, %v9082
        %v9275 = vpack.c.b16 %v9087, %v9083
        %v9276 = vpack.c.b16 %v9088, %v9084
        %v9277 = vpack.c.b16 %v9089, %v9085
        %v9278 = vpack.c.b16 %v9094, %v9090
        %v9279 = vpack.c.b16 %v9095, %v9091
        %v9280 = vpack.c.b16 %v9096, %v9092
        %v9281 = vpack.c.b16 %v9097, %v9093
        %v9282 = vpack.c.b16 %v9102, %v9098
        %v9283 = vpack.c.b16 %v9103, %v9099
        %v9284 = vpack.c.b16 %v9104, %v9100
        %v9285 = vpack.c.b16 %v9105, %v9101
        %v9286 = vpack.c.b16 %v9110, %v9106
        %v9287 = vpack.c.b16 %v9111, %v9107
        %v9288 = vpack.c.b16 %v9112, %v9108
        %v9289 = vpack.c.b16 %v9113, %v9109
        %v9290 = vpack.c.b16 %v9118, %v9114
        %v9291 = vpack.c.b16 %v9119, %v9115
        %v9292 = vpack.c.b16 %v9120, %v9116
        %v9293 = vpack.c.b16 %v9121, %v9117
        %v9294 = vpack.c.b16 %v9126, %v9122
        %v9295 = vpack.c.b16 %v9127, %v9123
        %v9296 = vpack.c.b16 %v9128, %v9124
        %v9297 = vpack.c.b16 %v9129, %v9125
        %v9298 = vpack.c.b16 %v9134, %v9130
        %v9299 = vpack.c.b16 %v9135, %v9131
        %v9300 = vpack.c.b16 %v9136, %v9132
        %v9301 = vpack.c.b16 %v9137, %v9133
        %v9302 = vpack.c.b16 %v9142, %v9138
        %v9303 = vpack.c.b16 %v9143, %v9139
        %v9304 = vpack.c.b16 %v9144, %v9140
        %v9305 = vpack.c.b16 %v9145, %v9141
        %v9306 = vpack.c.b16 %v9150, %v9146
        %v9307 = vpack.c.b16 %v9151, %v9147
        %v9308 = vpack.c.b16 %v9152, %v9148
        %v9309 = vpack.c.b16 %v9153, %v9149
        %v9310 = vpack.c.b16 %v9158, %v9154
        %v9311 = vpack.c.b16 %v9159, %v9155
        %v9312 = vpack.c.b16 %v9160, %v9156
        %v9313 = vpack.c.b16 %v9161, %v9157
        %v9314 = vpack.c.b16 %v9166, %v9162
        %v9315 = vpack.c.b16 %v9167, %v9163
        %v9316 = vpack.c.b16 %v9168, %v9164
        %v9317 = vpack.c.b16 %v9169, %v9165
        %v9318 = vpack.c.b16 %v9174, %v9170
        %v9319 = vpack.c.b16 %v9175, %v9171
        %v9320 = vpack.c.b16 %v9176, %v9172
        %v9321 = vpack.c.b16 %v9177, %v9173
        %v9322 = vpack.c.b16 %v9182, %v9178
        %v9323 = vpack.c.b16 %v9183, %v9179
        %v9324 = vpack.c.b16 %v9184, %v9180
        %v9325 = vpack.c.b16 %v9185, %v9181
        %v9326 = vpack.c.b16 %v9190, %v9186
        %v9327 = vpack.c.b16 %v9191, %v9187
        %v9328 = vpack.c.b16 %v9192, %v9188
        %v9329 = vpack.c.b16 %v9193, %v9189
        %v9330 = vpack.c.b16 %v9198, %v9194
        %v9331 = vpack.c.b16 %v9199, %v9195
        %v9332 = vpack.c.b16 %v9200, %v9196
        %v9333 = vpack.c.b16 %v9201, %v9197
        %v9334 = vpack.c.b16 %v9206, %v9202
        %v9335 = vpack.c.b16 %v9207, %v9203
        %v9336 = vpack.c.b16 %v9208, %v9204
        %v9337 = vpack.c.b16 %v9209, %v9205
        %9466 = vmatprep.subr.bf16.mxu0 %v9239
        %9467 = vmatpush1.bf16.msra.mxu0 %v9238
        %9468 = vmatprep.subr.bf16.mxu0 %v9235
        %9469 = vmatpush1.bf16.msra.mxu0 %v9234
        %9470 = vmatprep.subr.bf16.mxu0 %v9231
        %9471 = vmatpush1.bf16.msra.mxu0 %v9230
        %9472 = vmatprep.subr.bf16.mxu0 %v9227
        %9473 = vmatpush1.bf16.msra.mxu0 %v9226
        %9474 = vmatprep.subr.bf16.mxu0 %v9223
        %9475 = vmatpush1.bf16.msra.mxu0 %v9222
        %9476 = vmatprep.subr.bf16.mxu0 %v9219
        %9477 = vmatpush1.bf16.msra.mxu0 %v9218
        %9478 = vmatprep.subr.bf16.mxu0 %v9215
        %9479 = vmatpush1.bf16.msra.mxu0 %v9214
        %9480 = vmatprep.subr.bf16.mxu0 %v9211
        %9481 = vmatpush1.bf16.msra.mxu0 %v9210
        %9482 = vmatprep.subr.bf16.mxu0 %v9271
        %9483 = vmatpush2.bf16.msra.mxu0 %v9270
        %9484 = vmatprep.subr.bf16.mxu0 %v9267
        %9485 = vmatpush2.bf16.msra.mxu0 %v9266
        %9486 = vmatprep.subr.bf16.mxu0 %v9263
        %9487 = vmatpush2.bf16.msra.mxu0 %v9262
        %9488 = vmatprep.subr.bf16.mxu0 %v9259
        %9489 = vmatpush2.bf16.msra.mxu0 %v9258
        %9490 = vmatprep.subr.bf16.mxu0 %v9255
        %9491 = vmatpush2.bf16.msra.mxu0 %v9254
        %9492 = vmatprep.subr.bf16.mxu0 %v9251
        %9493 = vmatpush2.bf16.msra.mxu0 %v9250
        %9494 = vmatprep.subr.bf16.mxu0 %v9247
        %9495 = vmatpush2.bf16.msra.mxu0 %v9246
        %9496 = vmatprep.subr.bf16.mxu0 %v9243
        %9497 = vmatpush2.bf16.msra.mxu0 %v9242
        %9498 = vmatprep.mubr.bf16.mxu0 %v7611
        %9499 = vmatmul.mubr.bf16.gmra.mxu0 %v7610
        %v9500 = vpop.f32.mrf.mxu0
        %v9501 = vadd.f32 %v8738, %v9500
        %v9502 = vpop.f32.mrf.mxu0
        %v9503 = vadd.f32 %v8740, %v9502
        %v9504 = vpop.f32.mrf.mxu0
        %v9505 = vpop.f32.mrf.mxu0
        %9506 = vdwg.mxu0
        %9507 = vmatprep.subr.bf16.mxu0 %v9303
        %9508 = vmatpush1.bf16.msra.mxu0 %v9302
        %9509 = vmatprep.subr.bf16.mxu0 %v9299
        %9510 = vmatpush1.bf16.msra.mxu0 %v9298
        %9511 = vmatprep.subr.bf16.mxu0 %v9295
        %9512 = vmatpush1.bf16.msra.mxu0 %v9294
        %9513 = vmatprep.subr.bf16.mxu0 %v9291
        %9514 = vmatpush1.bf16.msra.mxu0 %v9290
        %9515 = vmatprep.subr.bf16.mxu0 %v9287
        %9516 = vmatpush1.bf16.msra.mxu0 %v9286
        %9517 = vmatprep.subr.bf16.mxu0 %v9283
        %9518 = vmatpush1.bf16.msra.mxu0 %v9282
        %9519 = vmatprep.subr.bf16.mxu0 %v9279
        %9520 = vmatpush1.bf16.msra.mxu0 %v9278
        %9521 = vmatprep.subr.bf16.mxu0 %v9275
        %9522 = vmatpush1.bf16.msra.mxu0 %v9274
        %9523 = vmatprep.subr.bf16.mxu0 %v9335
        %9524 = vmatpush2.bf16.msra.mxu0 %v9334
        %9525 = vmatprep.subr.bf16.mxu0 %v9331
        %9526 = vmatpush2.bf16.msra.mxu0 %v9330
        %9527 = vmatprep.subr.bf16.mxu0 %v9327
        %9528 = vmatpush2.bf16.msra.mxu0 %v9326
        %9529 = vmatprep.subr.bf16.mxu0 %v9323
        %9530 = vmatpush2.bf16.msra.mxu0 %v9322
        %9531 = vmatprep.subr.bf16.mxu0 %v9319
        %9532 = vmatpush2.bf16.msra.mxu0 %v9318
        %9533 = vmatprep.subr.bf16.mxu0 %v9315
        %9534 = vmatpush2.bf16.msra.mxu0 %v9314
        %9535 = vmatprep.subr.bf16.mxu0 %v9311
        %9536 = vmatpush2.bf16.msra.mxu0 %v9310
        %9537 = vmatprep.subr.bf16.mxu0 %v9307
        %9538 = vmatpush2.bf16.msra.mxu0 %v9306
        %9539 = vmatprep.mubr.bf16.mxu0 %v7613
        %9540 = vmatmul.mubr.bf16.gmra.mxu0 %v7612
        %v9541 = vpop.f32.mrf.mxu0
        %v9542 = vadd.f32 %v9501, %v9541
        %v9543 = vpop.f32.mrf.mxu0
        %v9544 = vadd.f32 %v9503, %v9543
        %v9545 = vpop.f32.mrf.mxu0
        %v9546 = vpop.f32.mrf.mxu0
        %9547 = vdwg.mxu0
        %9548 = vmatprep.subr.bf16.mxu0 %v9241
        %9549 = vmatpush1.bf16.msra.mxu0 %v9240
        %9550 = vmatprep.subr.bf16.mxu0 %v9237
        %9551 = vmatpush1.bf16.msra.mxu0 %v9236
        %9552 = vmatprep.subr.bf16.mxu0 %v9233
        %9553 = vmatpush1.bf16.msra.mxu0 %v9232
        %9554 = vmatprep.subr.bf16.mxu0 %v9229
        %9555 = vmatpush1.bf16.msra.mxu0 %v9228
        %9556 = vmatprep.subr.bf16.mxu0 %v9225
        %9557 = vmatpush1.bf16.msra.mxu0 %v9224
        %9558 = vmatprep.subr.bf16.mxu0 %v9221
        %9559 = vmatpush1.bf16.msra.mxu0 %v9220
        %9560 = vmatprep.subr.bf16.mxu0 %v9217
        %9561 = vmatpush1.bf16.msra.mxu0 %v9216
        %9562 = vmatprep.subr.bf16.mxu0 %v9213
        %9563 = vmatpush1.bf16.msra.mxu0 %v9212
        %9564 = vmatprep.subr.bf16.mxu0 %v9273
        %9565 = vmatpush2.bf16.msra.mxu0 %v9272
        %9566 = vmatprep.subr.bf16.mxu0 %v9269
        %9567 = vmatpush2.bf16.msra.mxu0 %v9268
        %9568 = vmatprep.subr.bf16.mxu0 %v9265
        %9569 = vmatpush2.bf16.msra.mxu0 %v9264
        %9570 = vmatprep.subr.bf16.mxu0 %v9261
        %9571 = vmatpush2.bf16.msra.mxu0 %v9260
        %9572 = vmatprep.subr.bf16.mxu0 %v9257
        %9573 = vmatpush2.bf16.msra.mxu0 %v9256
        %9574 = vmatprep.subr.bf16.mxu0 %v9253
        %9575 = vmatpush2.bf16.msra.mxu0 %v9252
        %9576 = vmatprep.subr.bf16.mxu0 %v9249
        %9577 = vmatpush2.bf16.msra.mxu0 %v9248
        %9578 = vmatprep.subr.bf16.mxu0 %v9245
        %9579 = vmatpush2.bf16.msra.mxu0 %v9244
        %9580 = vmatprep.mubr.bf16.mxu0 %v7611
        %9581 = vmatmul.mubr.bf16.gmra.mxu0 %v7610
        %v9582 = vpop.f32.mrf.mxu0
        %v9583 = vadd.f32 %v8820, %v9582
        %v9584 = vpop.f32.mrf.mxu0
        %v9585 = vadd.f32 %v8822, %v9584
        %v9586 = vpop.f32.mrf.mxu0
        %v9587 = vpop.f32.mrf.mxu0
        %9588 = vdwg.mxu0
        %9589 = vmatprep.subr.bf16.mxu0 %v9305
        %9590 = vmatpush1.bf16.msra.mxu0 %v9304
        %9591 = vmatprep.subr.bf16.mxu0 %v9301
        %9592 = vmatpush1.bf16.msra.mxu0 %v9300
        %9593 = vmatprep.subr.bf16.mxu0 %v9297
        %9594 = vmatpush1.bf16.msra.mxu0 %v9296
        %9595 = vmatprep.subr.bf16.mxu0 %v9293
        %9596 = vmatpush1.bf16.msra.mxu0 %v9292
        %9597 = vmatprep.subr.bf16.mxu0 %v9289
        %9598 = vmatpush1.bf16.msra.mxu0 %v9288
        %9599 = vmatprep.subr.bf16.mxu0 %v9285
        %9600 = vmatpush1.bf16.msra.mxu0 %v9284
        %9601 = vmatprep.subr.bf16.mxu0 %v9281
        %9602 = vmatpush1.bf16.msra.mxu0 %v9280
        %9603 = vmatprep.subr.bf16.mxu0 %v9277
        %9604 = vmatpush1.bf16.msra.mxu0 %v9276
        %9605 = vmatprep.subr.bf16.mxu0 %v9337
        %9606 = vmatpush2.bf16.msra.mxu0 %v9336
        %9607 = vmatprep.subr.bf16.mxu0 %v9333
        %9608 = vmatpush2.bf16.msra.mxu0 %v9332
        %9609 = vmatprep.subr.bf16.mxu0 %v9329
        %9610 = vmatpush2.bf16.msra.mxu0 %v9328
        %9611 = vmatprep.subr.bf16.mxu0 %v9325
        %9612 = vmatpush2.bf16.msra.mxu0 %v9324
        %9613 = vmatprep.subr.bf16.mxu0 %v9321
        %9614 = vmatpush2.bf16.msra.mxu0 %v9320
        %9615 = vmatprep.subr.bf16.mxu0 %v9317
        %9616 = vmatpush2.bf16.msra.mxu0 %v9316
        %9617 = vmatprep.subr.bf16.mxu0 %v9313
        %9618 = vmatpush2.bf16.msra.mxu0 %v9312
        %9619 = vmatprep.subr.bf16.mxu0 %v9309
        %9620 = vmatpush2.bf16.msra.mxu0 %v9308
        %9621 = vmatprep.mubr.bf16.mxu0 %v7613
        %9622 = vmatmul.mubr.bf16.gmra.mxu0 %v7612
        %v9623 = vpop.f32.mrf.mxu0
        %v9624 = vadd.f32 %v9583, %v9623
        %v9625 = vpop.f32.mrf.mxu0
        %v9626 = vadd.f32 %v9585, %v9625
        %v9627 = vpop.f32.mrf.mxu0
        %v9628 = vpop.f32.mrf.mxu0
        %9629 = vdwg.mxu0
        %s9630 = scalar_lea.vmem [#allocation17], 8
        %v9631 = vld [vmem:[%s9630] sm:$0xf]
        %v9633 = vsel %vm7451, %v9631, 0
        %9635 = vmatprep.subr.mxu0 0.0
        %9636 = vmatpush1.msra.mxu0 0.0
        %9637 = vmatprep.subr.mxu0 0.0
        %9638 = vmatpush1.msra.mxu0 0.0
        %9639 = vmatprep.subr.mxu0 0.0
        %9640 = vmatpush1.msra.mxu0 0.0
        %9641 = vmatprep.subr.mxu0 0.0
        %9642 = vmatpush1.msra.mxu0 0.0
        %9643 = vmatprep.subr.mxu0 0.0
        %9644 = vmatpush1.msra.mxu0 0.0
        %9645 = vmatprep.subr.mxu0 0.0
        %9646 = vmatpush1.msra.mxu0 0.0
        %9647 = vmatprep.subr.mxu0 0.0
        %9648 = vmatpush1.msra.mxu0 0.0
        %9649 = vmatprep.subr.mxu0 0.0
        %9650 = vmatpush1.msra.mxu0 0.0
        %9651 = vmatprep.subr.mxu0 0.0
        %9652 = vmatpush1.msra.mxu0 0.0
        %9653 = vmatprep.subr.mxu0 0.0
        %9654 = vmatpush1.msra.mxu0 0.0
        %9655 = vmatprep.subr.mxu0 0.0
        %9656 = vmatpush1.msra.mxu0 0.0
        %9657 = vmatprep.subr.mxu0 0.0
        %9658 = vmatpush1.msra.mxu0 0.0
        %9659 = vmatprep.subr.mxu0 0.0
        %9660 = vmatpush1.msra.mxu0 0.0
        %9661 = vmatprep.subr.mxu0 0.0
        %9662 = vmatpush1.msra.mxu0 0.0
        %9663 = vmatprep.subr.mxu0 0.0
        %9664 = vmatpush1.msra.mxu0 0.0
        %9665 = vmatprep.subr.mxu0 %v7460
        %9666 = vmatpush1.msra.mxu0 %v7457
        %9667 = vmatprep.subr.mxu0 0.0
        %9668 = vmatpush2.msra.mxu0 0.0
        %9669 = vmatprep.subr.mxu0 0.0
        %9670 = vmatpush2.msra.mxu0 0.0
        %9671 = vmatprep.subr.mxu0 0.0
        %9672 = vmatpush2.msra.mxu0 0.0
        %9673 = vmatprep.subr.mxu0 0.0
        %9674 = vmatpush2.msra.mxu0 0.0
        %9675 = vmatprep.subr.mxu0 0.0
        %9676 = vmatpush2.msra.mxu0 0.0
        %9677 = vmatprep.subr.mxu0 0.0
        %9678 = vmatpush2.msra.mxu0 0.0
        %9679 = vmatprep.subr.mxu0 0.0
        %9680 = vmatpush2.msra.mxu0 0.0
        %9681 = vmatprep.subr.mxu0 0.0
        %9682 = vmatpush2.msra.mxu0 0.0
        %9683 = vmatprep.subr.mxu0 0.0
        %9684 = vmatpush2.msra.mxu0 0.0
        %9685 = vmatprep.subr.mxu0 0.0
        %9686 = vmatpush2.msra.mxu0 0.0
        %9687 = vmatprep.subr.mxu0 0.0
        %9688 = vmatpush2.msra.mxu0 0.0
        %9689 = vmatprep.subr.mxu0 0.0
        %9690 = vmatpush2.msra.mxu0 0.0
        %9691 = vmatprep.subr.mxu0 0.0
        %9692 = vmatpush2.msra.mxu0 0.0
        %9693 = vmatprep.subr.mxu0 0.0
        %9694 = vmatpush2.msra.mxu0 0.0
        %9695 = vmatprep.subr.mxu0 0.0
        %9696 = vmatpush2.msra.mxu0 0.0
        %9697 = vmatprep.subr.mxu0 0.0
        %9698 = vmatpush2.msra.mxu0 0.0
        %9699 = vmatprep.mubr.f32.mxu0 0.0
        %9700 = vmatmul.mubr.f32.gmra.mxu0 %v9633
        %v9701 = vpop.f32.mrf.mxu0
        %v9702 = vadd.f32 0.0, %v9701
        %v9703 = vpop.f32.mrf.mxu0
        %v9704 = vadd.f32 0.0, %v9703
        %9705 = vdwg.mxu0
        %9706 = vmatprep.subr.mxu0 0.0
        %9707 = vmatpush1.msra.mxu0 0.0
        %9708 = vmatprep.subr.mxu0 0.0
        %9709 = vmatpush1.msra.mxu0 0.0
        %9710 = vmatprep.subr.mxu0 0.0
        %9711 = vmatpush1.msra.mxu0 0.0
        %9712 = vmatprep.subr.mxu0 0.0
        %9713 = vmatpush1.msra.mxu0 0.0
        %9714 = vmatprep.subr.mxu0 0.0
        %9715 = vmatpush1.msra.mxu0 0.0
        %9716 = vmatprep.subr.mxu0 0.0
        %9717 = vmatpush1.msra.mxu0 0.0
        %9718 = vmatprep.subr.mxu0 0.0
        %9719 = vmatpush1.msra.mxu0 0.0
        %9720 = vmatprep.subr.mxu0 0.0
        %9721 = vmatpush1.msra.mxu0 0.0
        %9722 = vmatprep.subr.mxu0 0.0
        %9723 = vmatpush1.msra.mxu0 0.0
        %9724 = vmatprep.subr.mxu0 0.0
        %9725 = vmatpush1.msra.mxu0 0.0
        %9726 = vmatprep.subr.mxu0 0.0
        %9727 = vmatpush1.msra.mxu0 0.0
        %9728 = vmatprep.subr.mxu0 0.0
        %9729 = vmatpush1.msra.mxu0 0.0
        %9730 = vmatprep.subr.mxu0 0.0
        %9731 = vmatpush1.msra.mxu0 0.0
        %9732 = vmatprep.subr.mxu0 0.0
        %9733 = vmatpush1.msra.mxu0 0.0
        %9734 = vmatprep.subr.mxu0 0.0
        %9735 = vmatpush1.msra.mxu0 0.0
        %9736 = vmatprep.subr.mxu0 %v7466
        %9737 = vmatpush1.msra.mxu0 %v7463
        %9738 = vmatprep.subr.mxu0 0.0
        %9739 = vmatpush2.msra.mxu0 0.0
        %9740 = vmatprep.subr.mxu0 0.0
        %9741 = vmatpush2.msra.mxu0 0.0
        %9742 = vmatprep.subr.mxu0 0.0
        %9743 = vmatpush2.msra.mxu0 0.0
        %9744 = vmatprep.subr.mxu0 0.0
        %9745 = vmatpush2.msra.mxu0 0.0
        %9746 = vmatprep.subr.mxu0 0.0
        %9747 = vmatpush2.msra.mxu0 0.0
        %9748 = vmatprep.subr.mxu0 0.0
        %9749 = vmatpush2.msra.mxu0 0.0
        %9750 = vmatprep.subr.mxu0 0.0
        %9751 = vmatpush2.msra.mxu0 0.0
        %9752 = vmatprep.subr.mxu0 0.0
        %9753 = vmatpush2.msra.mxu0 0.0
        %9754 = vmatprep.subr.mxu0 0.0
        %9755 = vmatpush2.msra.mxu0 0.0
        %9756 = vmatprep.subr.mxu0 0.0
        %9757 = vmatpush2.msra.mxu0 0.0
        %9758 = vmatprep.subr.mxu0 0.0
        %9759 = vmatpush2.msra.mxu0 0.0
        %9760 = vmatprep.subr.mxu0 0.0
        %9761 = vmatpush2.msra.mxu0 0.0
        %9762 = vmatprep.subr.mxu0 0.0
        %9763 = vmatpush2.msra.mxu0 0.0
        %9764 = vmatprep.subr.mxu0 0.0
        %9765 = vmatpush2.msra.mxu0 0.0
        %9766 = vmatprep.subr.mxu0 0.0
        %9767 = vmatpush2.msra.mxu0 0.0
        %9768 = vmatprep.subr.mxu0 0.0
        %9769 = vmatpush2.msra.mxu0 0.0
        %9770 = vmatprep.mubr.f32.mxu0 0.0
        %9771 = vmatmul.mubr.f32.gmra.mxu0 %v9633
        %v9772 = vpop.f32.mrf.mxu0
        %v9773 = vadd.f32 0.0, %v9772
        %v9774 = vpop.f32.mrf.mxu0
        %v9775 = vadd.f32 0.0, %v9774
        %9776 = vdwg.mxu0
        %v9777 = vpack.c.bf16 %v9702, %v9702
        %v9778 = vpack.c.bf16 %v9704, %v9704
        %v9779 = vpack.c.bf16 %v9773, %v9773
        %v9780 = vpack.c.bf16 %v9775, %v9775
        %s9781 = scalar_lea.vmem [#allocation19], 2048
        %v9782 = vld [vmem:[%s9781] sm:$0xff]
        %v9783 = vld [vmem:[%s9781 + $0x8] sm:$0xff]
        %v9784 = vld [vmem:[%s9781 + $0x10] sm:$0xff]
        %v9785 = vld [vmem:[%s9781 + $0x18] sm:$0xff]
        %v9786 = vld [vmem:[%s9781 + $0x20] sm:$0xff]
        %v9787 = vld [vmem:[%s9781 + $0x28] sm:$0xff]
        %v9788 = vld [vmem:[%s9781 + $0x30] sm:$0xff]
        %v9789 = vld [vmem:[%s9781 + $0x38] sm:$0xff]
        %v9790 = vld [vmem:[%s9781 + $0x40] sm:$0xff]
        %v9791 = vld [vmem:[%s9781 + $0x48] sm:$0xff]
        %v9792 = vld [vmem:[%s9781 + $0x50] sm:$0xff]
        %v9793 = vld [vmem:[%s9781 + $0x58] sm:$0xff]
        %v9794 = vld [vmem:[%s9781 + $0x60] sm:$0xff]
        %v9795 = vld [vmem:[%s9781 + $0x68] sm:$0xff]
        %v9796 = vld [vmem:[%s9781 + $0x70] sm:$0xff]
        %v9797 = vld [vmem:[%s9781 + $0x78] sm:$0xff]
        %v9798 = vld [vmem:[%s9781 + $0x80] sm:$0xff]
        %v9799 = vld [vmem:[%s9781 + $0x88] sm:$0xff]
        %v9800 = vld [vmem:[%s9781 + $0x90] sm:$0xff]
        %v9801 = vld [vmem:[%s9781 + $0x98] sm:$0xff]
        %v9802 = vld [vmem:[%s9781 + $0xa0] sm:$0xff]
        %v9803 = vld [vmem:[%s9781 + $0xa8] sm:$0xff]
        %v9804 = vld [vmem:[%s9781 + $0xb0] sm:$0xff]
        %v9805 = vld [vmem:[%s9781 + $0xb8] sm:$0xff]
        %v9806 = vld [vmem:[%s9781 + $0xc0] sm:$0xff]
        %v9807 = vld [vmem:[%s9781 + $0xc8] sm:$0xff]
        %v9808 = vld [vmem:[%s9781 + $0xd0] sm:$0xff]
        %v9809 = vld [vmem:[%s9781 + $0xd8] sm:$0xff]
        %v9810 = vld [vmem:[%s9781 + $0xe0] sm:$0xff]
        %v9811 = vld [vmem:[%s9781 + $0xe8] sm:$0xff]
        %v9812 = vld [vmem:[%s9781 + $0xf0] sm:$0xff]
        %v9813 = vld [vmem:[%s9781 + $0xf8] sm:$0xff]
        %v9814 = vld [vmem:[%s9781 + $0x100] sm:$0xff]
        %v9815 = vld [vmem:[%s9781 + $0x108] sm:$0xff]
        %v9816 = vld [vmem:[%s9781 + $0x110] sm:$0xff]
        %v9817 = vld [vmem:[%s9781 + $0x118] sm:$0xff]
        %v9818 = vld [vmem:[%s9781 + $0x120] sm:$0xff]
        %v9819 = vld [vmem:[%s9781 + $0x128] sm:$0xff]
        %v9820 = vld [vmem:[%s9781 + $0x130] sm:$0xff]
        %v9821 = vld [vmem:[%s9781 + $0x138] sm:$0xff]
        %v9822 = vld [vmem:[%s9781 + $0x140] sm:$0xff]
        %v9823 = vld [vmem:[%s9781 + $0x148] sm:$0xff]
        %v9824 = vld [vmem:[%s9781 + $0x150] sm:$0xff]
        %v9825 = vld [vmem:[%s9781 + $0x158] sm:$0xff]
        %v9826 = vld [vmem:[%s9781 + $0x160] sm:$0xff]
        %v9827 = vld [vmem:[%s9781 + $0x168] sm:$0xff]
        %v9828 = vld [vmem:[%s9781 + $0x170] sm:$0xff]
        %v9829 = vld [vmem:[%s9781 + $0x178] sm:$0xff]
        %v9830 = vld [vmem:[%s9781 + $0x180] sm:$0xff]
        %v9831 = vld [vmem:[%s9781 + $0x188] sm:$0xff]
        %v9832 = vld [vmem:[%s9781 + $0x190] sm:$0xff]
        %v9833 = vld [vmem:[%s9781 + $0x198] sm:$0xff]
        %v9834 = vld [vmem:[%s9781 + $0x1a0] sm:$0xff]
        %v9835 = vld [vmem:[%s9781 + $0x1a8] sm:$0xff]
        %v9836 = vld [vmem:[%s9781 + $0x1b0] sm:$0xff]
        %v9837 = vld [vmem:[%s9781 + $0x1b8] sm:$0xff]
        %v9838 = vld [vmem:[%s9781 + $0x1c0] sm:$0xff]
        %v9839 = vld [vmem:[%s9781 + $0x1c8] sm:$0xff]
        %v9840 = vld [vmem:[%s9781 + $0x1d0] sm:$0xff]
        %v9841 = vld [vmem:[%s9781 + $0x1d8] sm:$0xff]
        %v9842 = vld [vmem:[%s9781 + $0x1e0] sm:$0xff]
        %v9843 = vld [vmem:[%s9781 + $0x1e8] sm:$0xff]
        %v9844 = vld [vmem:[%s9781 + $0x1f0] sm:$0xff]
        %v9845 = vld [vmem:[%s9781 + $0x1f8] sm:$0xff]
        %v9846 = vld [vmem:[%s9781 + $0x200] sm:$0xff]
        %v9847 = vld [vmem:[%s9781 + $0x208] sm:$0xff]
        %v9848 = vld [vmem:[%s9781 + $0x210] sm:$0xff]
        %v9849 = vld [vmem:[%s9781 + $0x218] sm:$0xff]
        %v9850 = vld [vmem:[%s9781 + $0x220] sm:$0xff]
        %v9851 = vld [vmem:[%s9781 + $0x228] sm:$0xff]
        %v9852 = vld [vmem:[%s9781 + $0x230] sm:$0xff]
        %v9853 = vld [vmem:[%s9781 + $0x238] sm:$0xff]
        %v9854 = vld [vmem:[%s9781 + $0x240] sm:$0xff]
        %v9855 = vld [vmem:[%s9781 + $0x248] sm:$0xff]
        %v9856 = vld [vmem:[%s9781 + $0x250] sm:$0xff]
        %v9857 = vld [vmem:[%s9781 + $0x258] sm:$0xff]
        %v9858 = vld [vmem:[%s9781 + $0x260] sm:$0xff]
        %v9859 = vld [vmem:[%s9781 + $0x268] sm:$0xff]
        %v9860 = vld [vmem:[%s9781 + $0x270] sm:$0xff]
        %v9861 = vld [vmem:[%s9781 + $0x278] sm:$0xff]
        %v9862 = vld [vmem:[%s9781 + $0x280] sm:$0xff]
        %v9863 = vld [vmem:[%s9781 + $0x288] sm:$0xff]
        %v9864 = vld [vmem:[%s9781 + $0x290] sm:$0xff]
        %v9865 = vld [vmem:[%s9781 + $0x298] sm:$0xff]
        %v9866 = vld [vmem:[%s9781 + $0x2a0] sm:$0xff]
        %v9867 = vld [vmem:[%s9781 + $0x2a8] sm:$0xff]
        %v9868 = vld [vmem:[%s9781 + $0x2b0] sm:$0xff]
        %v9869 = vld [vmem:[%s9781 + $0x2b8] sm:$0xff]
        %v9870 = vld [vmem:[%s9781 + $0x2c0] sm:$0xff]
        %v9871 = vld [vmem:[%s9781 + $0x2c8] sm:$0xff]
        %v9872 = vld [vmem:[%s9781 + $0x2d0] sm:$0xff]
        %v9873 = vld [vmem:[%s9781 + $0x2d8] sm:$0xff]
        %v9874 = vld [vmem:[%s9781 + $0x2e0] sm:$0xff]
        %v9875 = vld [vmem:[%s9781 + $0x2e8] sm:$0xff]
        %v9876 = vld [vmem:[%s9781 + $0x2f0] sm:$0xff]
        %v9877 = vld [vmem:[%s9781 + $0x2f8] sm:$0xff]
        %v9878 = vld [vmem:[%s9781 + $0x300] sm:$0xff]
        %v9879 = vld [vmem:[%s9781 + $0x308] sm:$0xff]
        %v9880 = vld [vmem:[%s9781 + $0x310] sm:$0xff]
        %v9881 = vld [vmem:[%s9781 + $0x318] sm:$0xff]
        %v9882 = vld [vmem:[%s9781 + $0x320] sm:$0xff]
        %v9883 = vld [vmem:[%s9781 + $0x328] sm:$0xff]
        %v9884 = vld [vmem:[%s9781 + $0x330] sm:$0xff]
        %v9885 = vld [vmem:[%s9781 + $0x338] sm:$0xff]
        %v9886 = vld [vmem:[%s9781 + $0x340] sm:$0xff]
        %v9887 = vld [vmem:[%s9781 + $0x348] sm:$0xff]
        %v9888 = vld [vmem:[%s9781 + $0x350] sm:$0xff]
        %v9889 = vld [vmem:[%s9781 + $0x358] sm:$0xff]
        %v9890 = vld [vmem:[%s9781 + $0x360] sm:$0xff]
        %v9891 = vld [vmem:[%s9781 + $0x368] sm:$0xff]
        %v9892 = vld [vmem:[%s9781 + $0x370] sm:$0xff]
        %v9893 = vld [vmem:[%s9781 + $0x378] sm:$0xff]
        %v9894 = vld [vmem:[%s9781 + $0x380] sm:$0xff]
        %v9895 = vld [vmem:[%s9781 + $0x388] sm:$0xff]
        %v9896 = vld [vmem:[%s9781 + $0x390] sm:$0xff]
        %v9897 = vld [vmem:[%s9781 + $0x398] sm:$0xff]
        %v9898 = vld [vmem:[%s9781 + $0x3a0] sm:$0xff]
        %v9899 = vld [vmem:[%s9781 + $0x3a8] sm:$0xff]
        %v9900 = vld [vmem:[%s9781 + $0x3b0] sm:$0xff]
        %v9901 = vld [vmem:[%s9781 + $0x3b8] sm:$0xff]
        %v9902 = vld [vmem:[%s9781 + $0x3c0] sm:$0xff]
        %v9903 = vld [vmem:[%s9781 + $0x3c8] sm:$0xff]
        %v9904 = vld [vmem:[%s9781 + $0x3d0] sm:$0xff]
        %v9905 = vld [vmem:[%s9781 + $0x3d8] sm:$0xff]
        %v9906 = vld [vmem:[%s9781 + $0x3e0] sm:$0xff]
        %v9907 = vld [vmem:[%s9781 + $0x3e8] sm:$0xff]
        %v9908 = vld [vmem:[%s9781 + $0x3f0] sm:$0xff]
        %v9909 = vld [vmem:[%s9781 + $0x3f8] sm:$0xff]
        %v10038 = vunpack.c.l.b16 %v9782
        %v10039 = vunpack.c.h.b16 %v9782
        %v10040 = vunpack.c.l.b16 %v9783
        %v10041 = vunpack.c.h.b16 %v9783
        %v10042 = vunpack.c.l.b16 %v9784
        %v10043 = vunpack.c.h.b16 %v9784
        %v10044 = vunpack.c.l.b16 %v9785
        %v10045 = vunpack.c.h.b16 %v9785
        %v10046 = vunpack.c.l.b16 %v9786
        %v10047 = vunpack.c.h.b16 %v9786
        %v10048 = vunpack.c.l.b16 %v9787
        %v10049 = vunpack.c.h.b16 %v9787
        %v10050 = vunpack.c.l.b16 %v9788
        %v10051 = vunpack.c.h.b16 %v9788
        %v10052 = vunpack.c.l.b16 %v9789
        %v10053 = vunpack.c.h.b16 %v9789
        %v10054 = vunpack.c.l.b16 %v9790
        %v10055 = vunpack.c.h.b16 %v9790
        %v10056 = vunpack.c.l.b16 %v9791
        %v10057 = vunpack.c.h.b16 %v9791
        %v10058 = vunpack.c.l.b16 %v9792
        %v10059 = vunpack.c.h.b16 %v9792
        %v10060 = vunpack.c.l.b16 %v9793
        %v10061 = vunpack.c.h.b16 %v9793
        %v10062 = vunpack.c.l.b16 %v9794
        %v10063 = vunpack.c.h.b16 %v9794
        %v10064 = vunpack.c.l.b16 %v9795
        %v10065 = vunpack.c.h.b16 %v9795
        %v10066 = vunpack.c.l.b16 %v9796
        %v10067 = vunpack.c.h.b16 %v9796
        %v10068 = vunpack.c.l.b16 %v9797
        %v10069 = vunpack.c.h.b16 %v9797
        %v10070 = vunpack.c.l.b16 %v9798
        %v10071 = vunpack.c.h.b16 %v9798
        %v10072 = vunpack.c.l.b16 %v9799
        %v10073 = vunpack.c.h.b16 %v9799
        %v10074 = vunpack.c.l.b16 %v9800
        %v10075 = vunpack.c.h.b16 %v9800
        %v10076 = vunpack.c.l.b16 %v9801
        %v10077 = vunpack.c.h.b16 %v9801
        %v10078 = vunpack.c.l.b16 %v9802
        %v10079 = vunpack.c.h.b16 %v9802
        %v10080 = vunpack.c.l.b16 %v9803
        %v10081 = vunpack.c.h.b16 %v9803
        %v10082 = vunpack.c.l.b16 %v9804
        %v10083 = vunpack.c.h.b16 %v9804
        %v10084 = vunpack.c.l.b16 %v9805
        %v10085 = vunpack.c.h.b16 %v9805
        %v10086 = vunpack.c.l.b16 %v9806
        %v10087 = vunpack.c.h.b16 %v9806
        %v10088 = vunpack.c.l.b16 %v9807
        %v10089 = vunpack.c.h.b16 %v9807
        %v10090 = vunpack.c.l.b16 %v9808
        %v10091 = vunpack.c.h.b16 %v9808
        %v10092 = vunpack.c.l.b16 %v9809
        %v10093 = vunpack.c.h.b16 %v9809
        %v10094 = vunpack.c.l.b16 %v9810
        %v10095 = vunpack.c.h.b16 %v9810
        %v10096 = vunpack.c.l.b16 %v9811
        %v10097 = vunpack.c.h.b16 %v9811
        %v10098 = vunpack.c.l.b16 %v9812
        %v10099 = vunpack.c.h.b16 %v9812
        %v10100 = vunpack.c.l.b16 %v9813
        %v10101 = vunpack.c.h.b16 %v9813
        %v10102 = vunpack.c.l.b16 %v9814
        %v10103 = vunpack.c.h.b16 %v9814
        %v10104 = vunpack.c.l.b16 %v9815
        %v10105 = vunpack.c.h.b16 %v9815
        %v10106 = vunpack.c.l.b16 %v9816
        %v10107 = vunpack.c.h.b16 %v9816
        %v10108 = vunpack.c.l.b16 %v9817
        %v10109 = vunpack.c.h.b16 %v9817
        %v10110 = vunpack.c.l.b16 %v9818
        %v10111 = vunpack.c.h.b16 %v9818
        %v10112 = vunpack.c.l.b16 %v9819
        %v10113 = vunpack.c.h.b16 %v9819
        %v10114 = vunpack.c.l.b16 %v9820
        %v10115 = vunpack.c.h.b16 %v9820
        %v10116 = vunpack.c.l.b16 %v9821
        %v10117 = vunpack.c.h.b16 %v9821
        %v10118 = vunpack.c.l.b16 %v9822
        %v10119 = vunpack.c.h.b16 %v9822
        %v10120 = vunpack.c.l.b16 %v9823
        %v10121 = vunpack.c.h.b16 %v9823
        %v10122 = vunpack.c.l.b16 %v9824
        %v10123 = vunpack.c.h.b16 %v9824
        %v10124 = vunpack.c.l.b16 %v9825
        %v10125 = vunpack.c.h.b16 %v9825
        %v10126 = vunpack.c.l.b16 %v9826
        %v10127 = vunpack.c.h.b16 %v9826
        %v10128 = vunpack.c.l.b16 %v9827
        %v10129 = vunpack.c.h.b16 %v9827
        %v10130 = vunpack.c.l.b16 %v9828
        %v10131 = vunpack.c.h.b16 %v9828
        %v10132 = vunpack.c.l.b16 %v9829
        %v10133 = vunpack.c.h.b16 %v9829
        %v10134 = vunpack.c.l.b16 %v9830
        %v10135 = vunpack.c.h.b16 %v9830
        %v10136 = vunpack.c.l.b16 %v9831
        %v10137 = vunpack.c.h.b16 %v9831
        %v10138 = vunpack.c.l.b16 %v9832
        %v10139 = vunpack.c.h.b16 %v9832
        %v10140 = vunpack.c.l.b16 %v9833
        %v10141 = vunpack.c.h.b16 %v9833
        %v10142 = vunpack.c.l.b16 %v9834
        %v10143 = vunpack.c.h.b16 %v9834
        %v10144 = vunpack.c.l.b16 %v9835
        %v10145 = vunpack.c.h.b16 %v9835
        %v10146 = vunpack.c.l.b16 %v9836
        %v10147 = vunpack.c.h.b16 %v9836
        %v10148 = vunpack.c.l.b16 %v9837
        %v10149 = vunpack.c.h.b16 %v9837
        %v10150 = vunpack.c.l.b16 %v9838
        %v10151 = vunpack.c.h.b16 %v9838
        %v10152 = vunpack.c.l.b16 %v9839
        %v10153 = vunpack.c.h.b16 %v9839
        %v10154 = vunpack.c.l.b16 %v9840
        %v10155 = vunpack.c.h.b16 %v9840
        %v10156 = vunpack.c.l.b16 %v9841
        %v10157 = vunpack.c.h.b16 %v9841
        %v10158 = vunpack.c.l.b16 %v9842
        %v10159 = vunpack.c.h.b16 %v9842
        %v10160 = vunpack.c.l.b16 %v9843
        %v10161 = vunpack.c.h.b16 %v9843
        %v10162 = vunpack.c.l.b16 %v9844
        %v10163 = vunpack.c.h.b16 %v9844
        %v10164 = vunpack.c.l.b16 %v9845
        %v10165 = vunpack.c.h.b16 %v9845
        %v10166 = vunpack.c.l.b16 %v9846
        %v10167 = vunpack.c.h.b16 %v9846
        %v10168 = vunpack.c.l.b16 %v9847
        %v10169 = vunpack.c.h.b16 %v9847
        %v10170 = vunpack.c.l.b16 %v9848
        %v10171 = vunpack.c.h.b16 %v9848
        %v10172 = vunpack.c.l.b16 %v9849
        %v10173 = vunpack.c.h.b16 %v9849
        %v10174 = vunpack.c.l.b16 %v9850
        %v10175 = vunpack.c.h.b16 %v9850
        %v10176 = vunpack.c.l.b16 %v9851
        %v10177 = vunpack.c.h.b16 %v9851
        %v10178 = vunpack.c.l.b16 %v9852
        %v10179 = vunpack.c.h.b16 %v9852
        %v10180 = vunpack.c.l.b16 %v9853
        %v10181 = vunpack.c.h.b16 %v9853
        %v10182 = vunpack.c.l.b16 %v9854
        %v10183 = vunpack.c.h.b16 %v9854
        %v10184 = vunpack.c.l.b16 %v9855
        %v10185 = vunpack.c.h.b16 %v9855
        %v10186 = vunpack.c.l.b16 %v9856
        %v10187 = vunpack.c.h.b16 %v9856
        %v10188 = vunpack.c.l.b16 %v9857
        %v10189 = vunpack.c.h.b16 %v9857
        %v10190 = vunpack.c.l.b16 %v9858
        %v10191 = vunpack.c.h.b16 %v9858
        %v10192 = vunpack.c.l.b16 %v9859
        %v10193 = vunpack.c.h.b16 %v9859
        %v10194 = vunpack.c.l.b16 %v9860
        %v10195 = vunpack.c.h.b16 %v9860
        %v10196 = vunpack.c.l.b16 %v9861
        %v10197 = vunpack.c.h.b16 %v9861
        %v10198 = vunpack.c.l.b16 %v9862
        %v10199 = vunpack.c.h.b16 %v9862
        %v10200 = vunpack.c.l.b16 %v9863
        %v10201 = vunpack.c.h.b16 %v9863
        %v10202 = vunpack.c.l.b16 %v9864
        %v10203 = vunpack.c.h.b16 %v9864
        %v10204 = vunpack.c.l.b16 %v9865
        %v10205 = vunpack.c.h.b16 %v9865
        %v10206 = vunpack.c.l.b16 %v9866
        %v10207 = vunpack.c.h.b16 %v9866
        %v10208 = vunpack.c.l.b16 %v9867
        %v10209 = vunpack.c.h.b16 %v9867
        %v10210 = vunpack.c.l.b16 %v9868
        %v10211 = vunpack.c.h.b16 %v9868
        %v10212 = vunpack.c.l.b16 %v9869
        %v10213 = vunpack.c.h.b16 %v9869
        %v10214 = vunpack.c.l.b16 %v9870
        %v10215 = vunpack.c.h.b16 %v9870
        %v10216 = vunpack.c.l.b16 %v9871
        %v10217 = vunpack.c.h.b16 %v9871
        %v10218 = vunpack.c.l.b16 %v9872
        %v10219 = vunpack.c.h.b16 %v9872
        %v10220 = vunpack.c.l.b16 %v9873
        %v10221 = vunpack.c.h.b16 %v9873
        %v10222 = vunpack.c.l.b16 %v9874
        %v10223 = vunpack.c.h.b16 %v9874
        %v10224 = vunpack.c.l.b16 %v9875
        %v10225 = vunpack.c.h.b16 %v9875
        %v10226 = vunpack.c.l.b16 %v9876
        %v10227 = vunpack.c.h.b16 %v9876
        %v10228 = vunpack.c.l.b16 %v9877
        %v10229 = vunpack.c.h.b16 %v9877
        %v10230 = vunpack.c.l.b16 %v9878
        %v10231 = vunpack.c.h.b16 %v9878
        %v10232 = vunpack.c.l.b16 %v9879
        %v10233 = vunpack.c.h.b16 %v9879
        %v10234 = vunpack.c.l.b16 %v9880
        %v10235 = vunpack.c.h.b16 %v9880
        %v10236 = vunpack.c.l.b16 %v9881
        %v10237 = vunpack.c.h.b16 %v9881
        %v10238 = vunpack.c.l.b16 %v9882
        %v10239 = vunpack.c.h.b16 %v9882
        %v10240 = vunpack.c.l.b16 %v9883
        %v10241 = vunpack.c.h.b16 %v9883
        %v10242 = vunpack.c.l.b16 %v9884
        %v10243 = vunpack.c.h.b16 %v9884
        %v10244 = vunpack.c.l.b16 %v9885
        %v10245 = vunpack.c.h.b16 %v9885
        %v10246 = vunpack.c.l.b16 %v9886
        %v10247 = vunpack.c.h.b16 %v9886
        %v10248 = vunpack.c.l.b16 %v9887
        %v10249 = vunpack.c.h.b16 %v9887
        %v10250 = vunpack.c.l.b16 %v9888
        %v10251 = vunpack.c.h.b16 %v9888
        %v10252 = vunpack.c.l.b16 %v9889
        %v10253 = vunpack.c.h.b16 %v9889
        %v10254 = vunpack.c.l.b16 %v9890
        %v10255 = vunpack.c.h.b16 %v9890
        %v10256 = vunpack.c.l.b16 %v9891
        %v10257 = vunpack.c.h.b16 %v9891
        %v10258 = vunpack.c.l.b16 %v9892
        %v10259 = vunpack.c.h.b16 %v9892
        %v10260 = vunpack.c.l.b16 %v9893
        %v10261 = vunpack.c.h.b16 %v9893
        %v10262 = vunpack.c.l.b16 %v9894
        %v10263 = vunpack.c.h.b16 %v9894
        %v10264 = vunpack.c.l.b16 %v9895
        %v10265 = vunpack.c.h.b16 %v9895
        %v10266 = vunpack.c.l.b16 %v9896
        %v10267 = vunpack.c.h.b16 %v9896
        %v10268 = vunpack.c.l.b16 %v9897
        %v10269 = vunpack.c.h.b16 %v9897
        %v10270 = vunpack.c.l.b16 %v9898
        %v10271 = vunpack.c.h.b16 %v9898
        %v10272 = vunpack.c.l.b16 %v9899
        %v10273 = vunpack.c.h.b16 %v9899
        %v10274 = vunpack.c.l.b16 %v9900
        %v10275 = vunpack.c.h.b16 %v9900
        %v10276 = vunpack.c.l.b16 %v9901
        %v10277 = vunpack.c.h.b16 %v9901
        %v10278 = vunpack.c.l.b16 %v9902
        %v10279 = vunpack.c.h.b16 %v9902
        %v10280 = vunpack.c.l.b16 %v9903
        %v10281 = vunpack.c.h.b16 %v9903
        %v10282 = vunpack.c.l.b16 %v9904
        %v10283 = vunpack.c.h.b16 %v9904
        %v10284 = vunpack.c.l.b16 %v9905
        %v10285 = vunpack.c.h.b16 %v9905
        %v10286 = vunpack.c.l.b16 %v9906
        %v10287 = vunpack.c.h.b16 %v9906
        %v10288 = vunpack.c.l.b16 %v9907
        %v10289 = vunpack.c.h.b16 %v9907
        %v10290 = vunpack.c.l.b16 %v9908
        %v10291 = vunpack.c.h.b16 %v9908
        %v10292 = vunpack.c.l.b16 %v9909
        %v10293 = vunpack.c.h.b16 %v9909
        %v10294 = vpack.c.b16 %v10042, %v10038
        %v10295 = vpack.c.b16 %v10043, %v10039
        %v10296 = vpack.c.b16 %v10044, %v10040
        %v10297 = vpack.c.b16 %v10045, %v10041
        %v10298 = vpack.c.b16 %v10050, %v10046
        %v10299 = vpack.c.b16 %v10051, %v10047
        %v10300 = vpack.c.b16 %v10052, %v10048
        %v10301 = vpack.c.b16 %v10053, %v10049
        %v10302 = vpack.c.b16 %v10058, %v10054
        %v10303 = vpack.c.b16 %v10059, %v10055
        %v10304 = vpack.c.b16 %v10060, %v10056
        %v10305 = vpack.c.b16 %v10061, %v10057
        %v10306 = vpack.c.b16 %v10066, %v10062
        %v10307 = vpack.c.b16 %v10067, %v10063
        %v10308 = vpack.c.b16 %v10068, %v10064
        %v10309 = vpack.c.b16 %v10069, %v10065
        %v10310 = vpack.c.b16 %v10074, %v10070
        %v10311 = vpack.c.b16 %v10075, %v10071
        %v10312 = vpack.c.b16 %v10076, %v10072
        %v10313 = vpack.c.b16 %v10077, %v10073
        %v10314 = vpack.c.b16 %v10082, %v10078
        %v10315 = vpack.c.b16 %v10083, %v10079
        %v10316 = vpack.c.b16 %v10084, %v10080
        %v10317 = vpack.c.b16 %v10085, %v10081
        %v10318 = vpack.c.b16 %v10090, %v10086
        %v10319 = vpack.c.b16 %v10091, %v10087
        %v10320 = vpack.c.b16 %v10092, %v10088
        %v10321 = vpack.c.b16 %v10093, %v10089
        %v10322 = vpack.c.b16 %v10098, %v10094
        %v10323 = vpack.c.b16 %v10099, %v10095
        %v10324 = vpack.c.b16 %v10100, %v10096
        %v10325 = vpack.c.b16 %v10101, %v10097
        %v10326 = vpack.c.b16 %v10106, %v10102
        %v10327 = vpack.c.b16 %v10107, %v10103
        %v10328 = vpack.c.b16 %v10108, %v10104
        %v10329 = vpack.c.b16 %v10109, %v10105
        %v10330 = vpack.c.b16 %v10114, %v10110
        %v10331 = vpack.c.b16 %v10115, %v10111
        %v10332 = vpack.c.b16 %v10116, %v10112
        %v10333 = vpack.c.b16 %v10117, %v10113
        %v10334 = vpack.c.b16 %v10122, %v10118
        %v10335 = vpack.c.b16 %v10123, %v10119
        %v10336 = vpack.c.b16 %v10124, %v10120
        %v10337 = vpack.c.b16 %v10125, %v10121
        %v10338 = vpack.c.b16 %v10130, %v10126
        %v10339 = vpack.c.b16 %v10131, %v10127
        %v10340 = vpack.c.b16 %v10132, %v10128
        %v10341 = vpack.c.b16 %v10133, %v10129
        %v10342 = vpack.c.b16 %v10138, %v10134
        %v10343 = vpack.c.b16 %v10139, %v10135
        %v10344 = vpack.c.b16 %v10140, %v10136
        %v10345 = vpack.c.b16 %v10141, %v10137
        %v10346 = vpack.c.b16 %v10146, %v10142
        %v10347 = vpack.c.b16 %v10147, %v10143
        %v10348 = vpack.c.b16 %v10148, %v10144
        %v10349 = vpack.c.b16 %v10149, %v10145
        %v10350 = vpack.c.b16 %v10154, %v10150
        %v10351 = vpack.c.b16 %v10155, %v10151
        %v10352 = vpack.c.b16 %v10156, %v10152
        %v10353 = vpack.c.b16 %v10157, %v10153
        %v10354 = vpack.c.b16 %v10162, %v10158
        %v10355 = vpack.c.b16 %v10163, %v10159
        %v10356 = vpack.c.b16 %v10164, %v10160
        %v10357 = vpack.c.b16 %v10165, %v10161
        %v10358 = vpack.c.b16 %v10170, %v10166
        %v10359 = vpack.c.b16 %v10171, %v10167
        %v10360 = vpack.c.b16 %v10172, %v10168
        %v10361 = vpack.c.b16 %v10173, %v10169
        %v10362 = vpack.c.b16 %v10178, %v10174
        %v10363 = vpack.c.b16 %v10179, %v10175
        %v10364 = vpack.c.b16 %v10180, %v10176
        %v10365 = vpack.c.b16 %v10181, %v10177
        %v10366 = vpack.c.b16 %v10186, %v10182
        %v10367 = vpack.c.b16 %v10187, %v10183
        %v10368 = vpack.c.b16 %v10188, %v10184
        %v10369 = vpack.c.b16 %v10189, %v10185
        %v10370 = vpack.c.b16 %v10194, %v10190
        %v10371 = vpack.c.b16 %v10195, %v10191
        %v10372 = vpack.c.b16 %v10196, %v10192
        %v10373 = vpack.c.b16 %v10197, %v10193
        %v10374 = vpack.c.b16 %v10202, %v10198
        %v10375 = vpack.c.b16 %v10203, %v10199
        %v10376 = vpack.c.b16 %v10204, %v10200
        %v10377 = vpack.c.b16 %v10205, %v10201
        %v10378 = vpack.c.b16 %v10210, %v10206
        %v10379 = vpack.c.b16 %v10211, %v10207
        %v10380 = vpack.c.b16 %v10212, %v10208
        %v10381 = vpack.c.b16 %v10213, %v10209
        %v10382 = vpack.c.b16 %v10218, %v10214
        %v10383 = vpack.c.b16 %v10219, %v10215
        %v10384 = vpack.c.b16 %v10220, %v10216
        %v10385 = vpack.c.b16 %v10221, %v10217
        %v10386 = vpack.c.b16 %v10226, %v10222
        %v10387 = vpack.c.b16 %v10227, %v10223
        %v10388 = vpack.c.b16 %v10228, %v10224
        %v10389 = vpack.c.b16 %v10229, %v10225
        %v10390 = vpack.c.b16 %v10234, %v10230
        %v10391 = vpack.c.b16 %v10235, %v10231
        %v10392 = vpack.c.b16 %v10236, %v10232
        %v10393 = vpack.c.b16 %v10237, %v10233
        %v10394 = vpack.c.b16 %v10242, %v10238
        %v10395 = vpack.c.b16 %v10243, %v10239
        %v10396 = vpack.c.b16 %v10244, %v10240
        %v10397 = vpack.c.b16 %v10245, %v10241
        %v10398 = vpack.c.b16 %v10250, %v10246
        %v10399 = vpack.c.b16 %v10251, %v10247
        %v10400 = vpack.c.b16 %v10252, %v10248
        %v10401 = vpack.c.b16 %v10253, %v10249
        %v10402 = vpack.c.b16 %v10258, %v10254
        %v10403 = vpack.c.b16 %v10259, %v10255
        %v10404 = vpack.c.b16 %v10260, %v10256
        %v10405 = vpack.c.b16 %v10261, %v10257
        %v10406 = vpack.c.b16 %v10266, %v10262
        %v10407 = vpack.c.b16 %v10267, %v10263
        %v10408 = vpack.c.b16 %v10268, %v10264
        %v10409 = vpack.c.b16 %v10269, %v10265
        %v10410 = vpack.c.b16 %v10274, %v10270
        %v10411 = vpack.c.b16 %v10275, %v10271
        %v10412 = vpack.c.b16 %v10276, %v10272
        %v10413 = vpack.c.b16 %v10277, %v10273
        %v10414 = vpack.c.b16 %v10282, %v10278
        %v10415 = vpack.c.b16 %v10283, %v10279
        %v10416 = vpack.c.b16 %v10284, %v10280
        %v10417 = vpack.c.b16 %v10285, %v10281
        %v10418 = vpack.c.b16 %v10290, %v10286
        %v10419 = vpack.c.b16 %v10291, %v10287
        %v10420 = vpack.c.b16 %v10292, %v10288
        %v10421 = vpack.c.b16 %v10293, %v10289
        %10550 = vmatprep.subr.bf16.mxu0 %v10323
        %10551 = vmatpush1.bf16.msra.mxu0 %v10322
        %10552 = vmatprep.subr.bf16.mxu0 %v10319
        %10553 = vmatpush1.bf16.msra.mxu0 %v10318
        %10554 = vmatprep.subr.bf16.mxu0 %v10315
        %10555 = vmatpush1.bf16.msra.mxu0 %v10314
        %10556 = vmatprep.subr.bf16.mxu0 %v10311
        %10557 = vmatpush1.bf16.msra.mxu0 %v10310
        %10558 = vmatprep.subr.bf16.mxu0 %v10307
        %10559 = vmatpush1.bf16.msra.mxu0 %v10306
        %10560 = vmatprep.subr.bf16.mxu0 %v10303
        %10561 = vmatpush1.bf16.msra.mxu0 %v10302
        %10562 = vmatprep.subr.bf16.mxu0 %v10299
        %10563 = vmatpush1.bf16.msra.mxu0 %v10298
        %10564 = vmatprep.subr.bf16.mxu0 %v10295
        %10565 = vmatpush1.bf16.msra.mxu0 %v10294
        %10566 = vmatprep.subr.bf16.mxu0 %v10355
        %10567 = vmatpush2.bf16.msra.mxu0 %v10354
        %10568 = vmatprep.subr.bf16.mxu0 %v10351
        %10569 = vmatpush2.bf16.msra.mxu0 %v10350
        %10570 = vmatprep.subr.bf16.mxu0 %v10347
        %10571 = vmatpush2.bf16.msra.mxu0 %v10346
        %10572 = vmatprep.subr.bf16.mxu0 %v10343
        %10573 = vmatpush2.bf16.msra.mxu0 %v10342
        %10574 = vmatprep.subr.bf16.mxu0 %v10339
        %10575 = vmatpush2.bf16.msra.mxu0 %v10338
        %10576 = vmatprep.subr.bf16.mxu0 %v10335
        %10577 = vmatpush2.bf16.msra.mxu0 %v10334
        %10578 = vmatprep.subr.bf16.mxu0 %v10331
        %10579 = vmatpush2.bf16.msra.mxu0 %v10330
        %10580 = vmatprep.subr.bf16.mxu0 %v10327
        %10581 = vmatpush2.bf16.msra.mxu0 %v10326
        %10582 = vmatprep.mubr.bf16.mxu0 %v9778
        %10583 = vmatmul.mubr.bf16.gmra.mxu0 %v9777
        %v10584 = vpop.f32.mrf.mxu0
        %v10585 = vadd.f32 0.0, %v10584
        %v10586 = vpop.f32.mrf.mxu0
        %v10587 = vadd.f32 0.0, %v10586
        %v10588 = vpop.f32.mrf.mxu0
        %v10589 = vpop.f32.mrf.mxu0
        %10590 = vdwg.mxu0
        %10591 = vmatprep.subr.bf16.mxu0 %v10387
        %10592 = vmatpush1.bf16.msra.mxu0 %v10386
        %10593 = vmatprep.subr.bf16.mxu0 %v10383
        %10594 = vmatpush1.bf16.msra.mxu0 %v10382
        %10595 = vmatprep.subr.bf16.mxu0 %v10379
        %10596 = vmatpush1.bf16.msra.mxu0 %v10378
        %10597 = vmatprep.subr.bf16.mxu0 %v10375
        %10598 = vmatpush1.bf16.msra.mxu0 %v10374
        %10599 = vmatprep.subr.bf16.mxu0 %v10371
        %10600 = vmatpush1.bf16.msra.mxu0 %v10370
        %10601 = vmatprep.subr.bf16.mxu0 %v10367
        %10602 = vmatpush1.bf16.msra.mxu0 %v10366
        %10603 = vmatprep.subr.bf16.mxu0 %v10363
        %10604 = vmatpush1.bf16.msra.mxu0 %v10362
        %10605 = vmatprep.subr.bf16.mxu0 %v10359
        %10606 = vmatpush1.bf16.msra.mxu0 %v10358
        %10607 = vmatprep.subr.bf16.mxu0 %v10419
        %10608 = vmatpush2.bf16.msra.mxu0 %v10418
        %10609 = vmatprep.subr.bf16.mxu0 %v10415
        %10610 = vmatpush2.bf16.msra.mxu0 %v10414
        %10611 = vmatprep.subr.bf16.mxu0 %v10411
        %10612 = vmatpush2.bf16.msra.mxu0 %v10410
        %10613 = vmatprep.subr.bf16.mxu0 %v10407
        %10614 = vmatpush2.bf16.msra.mxu0 %v10406
        %10615 = vmatprep.subr.bf16.mxu0 %v10403
        %10616 = vmatpush2.bf16.msra.mxu0 %v10402
        %10617 = vmatprep.subr.bf16.mxu0 %v10399
        %10618 = vmatpush2.bf16.msra.mxu0 %v10398
        %10619 = vmatprep.subr.bf16.mxu0 %v10395
        %10620 = vmatpush2.bf16.msra.mxu0 %v10394
        %10621 = vmatprep.subr.bf16.mxu0 %v10391
        %10622 = vmatpush2.bf16.msra.mxu0 %v10390
        %10623 = vmatprep.mubr.bf16.mxu0 %v9780
        %10624 = vmatmul.mubr.bf16.gmra.mxu0 %v9779
        %v10625 = vpop.f32.mrf.mxu0
        %v10626 = vadd.f32 %v10585, %v10625
        %v10627 = vpop.f32.mrf.mxu0
        %v10628 = vadd.f32 %v10587, %v10627
        %v10629 = vpop.f32.mrf.mxu0
        %v10630 = vpop.f32.mrf.mxu0
        %10631 = vdwg.mxu0
        %10632 = vmatprep.subr.bf16.mxu0 %v10325
        %10633 = vmatpush1.bf16.msra.mxu0 %v10324
        %10634 = vmatprep.subr.bf16.mxu0 %v10321
        %10635 = vmatpush1.bf16.msra.mxu0 %v10320
        %10636 = vmatprep.subr.bf16.mxu0 %v10317
        %10637 = vmatpush1.bf16.msra.mxu0 %v10316
        %10638 = vmatprep.subr.bf16.mxu0 %v10313
        %10639 = vmatpush1.bf16.msra.mxu0 %v10312
        %10640 = vmatprep.subr.bf16.mxu0 %v10309
        %10641 = vmatpush1.bf16.msra.mxu0 %v10308
        %10642 = vmatprep.subr.bf16.mxu0 %v10305
        %10643 = vmatpush1.bf16.msra.mxu0 %v10304
        %10644 = vmatprep.subr.bf16.mxu0 %v10301
        %10645 = vmatpush1.bf16.msra.mxu0 %v10300
        %10646 = vmatprep.subr.bf16.mxu0 %v10297
        %10647 = vmatpush1.bf16.msra.mxu0 %v10296
        %10648 = vmatprep.subr.bf16.mxu0 %v10357
        %10649 = vmatpush2.bf16.msra.mxu0 %v10356
        %10650 = vmatprep.subr.bf16.mxu0 %v10353
        %10651 = vmatpush2.bf16.msra.mxu0 %v10352
        %10652 = vmatprep.subr.bf16.mxu0 %v10349
        %10653 = vmatpush2.bf16.msra.mxu0 %v10348
        %10654 = vmatprep.subr.bf16.mxu0 %v10345
        %10655 = vmatpush2.bf16.msra.mxu0 %v10344
        %10656 = vmatprep.subr.bf16.mxu0 %v10341
        %10657 = vmatpush2.bf16.msra.mxu0 %v10340
        %10658 = vmatprep.subr.bf16.mxu0 %v10337
        %10659 = vmatpush2.bf16.msra.mxu0 %v10336
        %10660 = vmatprep.subr.bf16.mxu0 %v10333
        %10661 = vmatpush2.bf16.msra.mxu0 %v10332
        %10662 = vmatprep.subr.bf16.mxu0 %v10329
        %10663 = vmatpush2.bf16.msra.mxu0 %v10328
        %10664 = vmatprep.mubr.bf16.mxu0 %v9778
        %10665 = vmatmul.mubr.bf16.gmra.mxu0 %v9777
        %v10666 = vpop.f32.mrf.mxu0
        %v10667 = vadd.f32 0.0, %v10666
        %v10668 = vpop.f32.mrf.mxu0
        %v10669 = vadd.f32 0.0, %v10668
        %v10670 = vpop.f32.mrf.mxu0
        %v10671 = vpop.f32.mrf.mxu0
        %10672 = vdwg.mxu0
        %10673 = vmatprep.subr.bf16.mxu0 %v10389
        %10674 = vmatpush1.bf16.msra.mxu0 %v10388
        %10675 = vmatprep.subr.bf16.mxu0 %v10385
        %10676 = vmatpush1.bf16.msra.mxu0 %v10384
        %10677 = vmatprep.subr.bf16.mxu0 %v10381
        %10678 = vmatpush1.bf16.msra.mxu0 %v10380
        %10679 = vmatprep.subr.bf16.mxu0 %v10377
        %10680 = vmatpush1.bf16.msra.mxu0 %v10376
        %10681 = vmatprep.subr.bf16.mxu0 %v10373
        %10682 = vmatpush1.bf16.msra.mxu0 %v10372
        %10683 = vmatprep.subr.bf16.mxu0 %v10369
        %10684 = vmatpush1.bf16.msra.mxu0 %v10368
        %10685 = vmatprep.subr.bf16.mxu0 %v10365
        %10686 = vmatpush1.bf16.msra.mxu0 %v10364
        %10687 = vmatprep.subr.bf16.mxu0 %v10361
        %10688 = vmatpush1.bf16.msra.mxu0 %v10360
        %10689 = vmatprep.subr.bf16.mxu0 %v10421
        %10690 = vmatpush2.bf16.msra.mxu0 %v10420
        %10691 = vmatprep.subr.bf16.mxu0 %v10417
        %10692 = vmatpush2.bf16.msra.mxu0 %v10416
        %10693 = vmatprep.subr.bf16.mxu0 %v10413
        %10694 = vmatpush2.bf16.msra.mxu0 %v10412
        %10695 = vmatprep.subr.bf16.mxu0 %v10409
        %10696 = vmatpush2.bf16.msra.mxu0 %v10408
        %10697 = vmatprep.subr.bf16.mxu0 %v10405
        %10698 = vmatpush2.bf16.msra.mxu0 %v10404
        %10699 = vmatprep.subr.bf16.mxu0 %v10401
        %10700 = vmatpush2.bf16.msra.mxu0 %v10400
        %10701 = vmatprep.subr.bf16.mxu0 %v10397
        %10702 = vmatpush2.bf16.msra.mxu0 %v10396
        %10703 = vmatprep.subr.bf16.mxu0 %v10393
        %10704 = vmatpush2.bf16.msra.mxu0 %v10392
        %10705 = vmatprep.mubr.bf16.mxu0 %v9780
        %10706 = vmatmul.mubr.bf16.gmra.mxu0 %v9779
        %v10707 = vpop.f32.mrf.mxu0
        %v10708 = vadd.f32 %v10667, %v10707
        %v10709 = vpop.f32.mrf.mxu0
        %v10710 = vadd.f32 %v10669, %v10709
        %v10711 = vpop.f32.mrf.mxu0
        %v10712 = vpop.f32.mrf.mxu0
        %10713 = vdwg.mxu0
        %v10714 = vadd.f32 %v9542, %v10626
        %v10715 = vadd.f32 %v9544, %v10628
        %v10716 = vadd.f32 %v9624, %v10708
        %v10717 = vadd.f32 %v9626, %v10710
        %v10718 = vld [vmem:[#allocation20] sm:$0xf]
        %v10720 = vlaneseq
        %v10721 = vshrl.u32 %v10720, 7
        %v10722 = vsub.s32 0, %v10721
        %v10723 = vrot.slane %v10718, %v10722
        %v10724 = vlaneseq
        %v10725 = vshrl.u32 %v10724, 7
        %v10726 = vsub.s32 1, %v10725
        %v10727 = vrot.slane %v10718, %v10726
        %v10728 = vlaneseq
        %v10729 = vshrl.u32 %v10728, 7
        %v10730 = vsub.s32 2, %v10729
        %v10731 = vrot.slane %v10718, %v10730
        %v10732 = vlaneseq
        %v10733 = vshrl.u32 %v10732, 7
        %v10734 = vsub.s32 3, %v10733
        %v10735 = vrot.slane %v10718, %v10734
        %v10740 = vadd.f32 %v10714, %v10723
        %v10741 = vadd.f32 %v10715, %v10727
        %v10742 = vadd.f32 %v10716, %v10731
        %v10743 = vadd.f32 %v10717, %v10735
        %v10744 = vmax.f32 %v10740, 0.0
        %v10745 = vmax.f32 %v10741, 0.0
        %v10746 = vmax.f32 %v10742, 0.0
        %v10747 = vmax.f32 %v10743, 0.0
        %v10748 = vpack.c.bf16 %v10744, %v10744
        %v10749 = vpack.c.bf16 %v10745, %v10745
        %v10750 = vpack.c.bf16 %v10746, %v10746
        %v10751 = vpack.c.bf16 %v10747, %v10747
        %v10752 = vld [vmem:[#allocation22] sm:$0xff]
        %v10753 = vld [vmem:[#allocation22 + $0x8] sm:$0xff]
        %v10754 = vld [vmem:[#allocation22 + $0x10] sm:$0xff]
        %v10755 = vld [vmem:[#allocation22 + $0x18] sm:$0xff]
        %v10756 = vld [vmem:[#allocation22 + $0x20] sm:$0xff]
        %v10757 = vld [vmem:[#allocation22 + $0x28] sm:$0xff]
        %v10758 = vld [vmem:[#allocation22 + $0x30] sm:$0xff]
        %v10759 = vld [vmem:[#allocation22 + $0x38] sm:$0xff]
        %v10760 = vld [vmem:[#allocation22 + $0x40] sm:$0xff]
        %v10761 = vld [vmem:[#allocation22 + $0x48] sm:$0xff]
        %v10762 = vld [vmem:[#allocation22 + $0x50] sm:$0xff]
        %v10763 = vld [vmem:[#allocation22 + $0x58] sm:$0xff]
        %v10764 = vld [vmem:[#allocation22 + $0x60] sm:$0xff]
        %v10765 = vld [vmem:[#allocation22 + $0x68] sm:$0xff]
        %v10766 = vld [vmem:[#allocation22 + $0x70] sm:$0xff]
        %v10767 = vld [vmem:[#allocation22 + $0x78] sm:$0xff]
        %v10768 = vld [vmem:[#allocation22 + $0x80] sm:$0xff]
        %v10769 = vld [vmem:[#allocation22 + $0x88] sm:$0xff]
        %v10770 = vld [vmem:[#allocation22 + $0x90] sm:$0xff]
        %v10771 = vld [vmem:[#allocation22 + $0x98] sm:$0xff]
        %v10772 = vld [vmem:[#allocation22 + $0xa0] sm:$0xff]
        %v10773 = vld [vmem:[#allocation22 + $0xa8] sm:$0xff]
        %v10774 = vld [vmem:[#allocation22 + $0xb0] sm:$0xff]
        %v10775 = vld [vmem:[#allocation22 + $0xb8] sm:$0xff]
        %v10776 = vld [vmem:[#allocation22 + $0xc0] sm:$0xff]
        %v10777 = vld [vmem:[#allocation22 + $0xc8] sm:$0xff]
        %v10778 = vld [vmem:[#allocation22 + $0xd0] sm:$0xff]
        %v10779 = vld [vmem:[#allocation22 + $0xd8] sm:$0xff]
        %v10780 = vld [vmem:[#allocation22 + $0xe0] sm:$0xff]
        %v10781 = vld [vmem:[#allocation22 + $0xe8] sm:$0xff]
        %v10782 = vld [vmem:[#allocation22 + $0xf0] sm:$0xff]
        %v10783 = vld [vmem:[#allocation22 + $0xf8] sm:$0xff]
        %v10784 = vld [vmem:[#allocation22 + $0x100] sm:$0xff]
        %v10785 = vld [vmem:[#allocation22 + $0x108] sm:$0xff]
        %v10786 = vld [vmem:[#allocation22 + $0x110] sm:$0xff]
        %v10787 = vld [vmem:[#allocation22 + $0x118] sm:$0xff]
        %v10788 = vld [vmem:[#allocation22 + $0x120] sm:$0xff]
        %v10789 = vld [vmem:[#allocation22 + $0x128] sm:$0xff]
        %v10790 = vld [vmem:[#allocation22 + $0x130] sm:$0xff]
        %v10791 = vld [vmem:[#allocation22 + $0x138] sm:$0xff]
        %v10792 = vld [vmem:[#allocation22 + $0x140] sm:$0xff]
        %v10793 = vld [vmem:[#allocation22 + $0x148] sm:$0xff]
        %v10794 = vld [vmem:[#allocation22 + $0x150] sm:$0xff]
        %v10795 = vld [vmem:[#allocation22 + $0x158] sm:$0xff]
        %v10796 = vld [vmem:[#allocation22 + $0x160] sm:$0xff]
        %v10797 = vld [vmem:[#allocation22 + $0x168] sm:$0xff]
        %v10798 = vld [vmem:[#allocation22 + $0x170] sm:$0xff]
        %v10799 = vld [vmem:[#allocation22 + $0x178] sm:$0xff]
        %v10800 = vld [vmem:[#allocation22 + $0x180] sm:$0xff]
        %v10801 = vld [vmem:[#allocation22 + $0x188] sm:$0xff]
        %v10802 = vld [vmem:[#allocation22 + $0x190] sm:$0xff]
        %v10803 = vld [vmem:[#allocation22 + $0x198] sm:$0xff]
        %v10804 = vld [vmem:[#allocation22 + $0x1a0] sm:$0xff]
        %v10805 = vld [vmem:[#allocation22 + $0x1a8] sm:$0xff]
        %v10806 = vld [vmem:[#allocation22 + $0x1b0] sm:$0xff]
        %v10807 = vld [vmem:[#allocation22 + $0x1b8] sm:$0xff]
        %v10808 = vld [vmem:[#allocation22 + $0x1c0] sm:$0xff]
        %v10809 = vld [vmem:[#allocation22 + $0x1c8] sm:$0xff]
        %v10810 = vld [vmem:[#allocation22 + $0x1d0] sm:$0xff]
        %v10811 = vld [vmem:[#allocation22 + $0x1d8] sm:$0xff]
        %v10812 = vld [vmem:[#allocation22 + $0x1e0] sm:$0xff]
        %v10813 = vld [vmem:[#allocation22 + $0x1e8] sm:$0xff]
        %v10814 = vld [vmem:[#allocation22 + $0x1f0] sm:$0xff]
        %v10815 = vld [vmem:[#allocation22 + $0x1f8] sm:$0xff]
        %v10816 = vld [vmem:[#allocation22 + $0x200] sm:$0xff]
        %v10817 = vld [vmem:[#allocation22 + $0x208] sm:$0xff]
        %v10818 = vld [vmem:[#allocation22 + $0x210] sm:$0xff]
        %v10819 = vld [vmem:[#allocation22 + $0x218] sm:$0xff]
        %v10820 = vld [vmem:[#allocation22 + $0x220] sm:$0xff]
        %v10821 = vld [vmem:[#allocation22 + $0x228] sm:$0xff]
        %v10822 = vld [vmem:[#allocation22 + $0x230] sm:$0xff]
        %v10823 = vld [vmem:[#allocation22 + $0x238] sm:$0xff]
        %v10824 = vld [vmem:[#allocation22 + $0x240] sm:$0xff]
        %v10825 = vld [vmem:[#allocation22 + $0x248] sm:$0xff]
        %v10826 = vld [vmem:[#allocation22 + $0x250] sm:$0xff]
        %v10827 = vld [vmem:[#allocation22 + $0x258] sm:$0xff]
        %v10828 = vld [vmem:[#allocation22 + $0x260] sm:$0xff]
        %v10829 = vld [vmem:[#allocation22 + $0x268] sm:$0xff]
        %v10830 = vld [vmem:[#allocation22 + $0x270] sm:$0xff]
        %v10831 = vld [vmem:[#allocation22 + $0x278] sm:$0xff]
        %v10832 = vld [vmem:[#allocation22 + $0x280] sm:$0xff]
        %v10833 = vld [vmem:[#allocation22 + $0x288] sm:$0xff]
        %v10834 = vld [vmem:[#allocation22 + $0x290] sm:$0xff]
        %v10835 = vld [vmem:[#allocation22 + $0x298] sm:$0xff]
        %v10836 = vld [vmem:[#allocation22 + $0x2a0] sm:$0xff]
        %v10837 = vld [vmem:[#allocation22 + $0x2a8] sm:$0xff]
        %v10838 = vld [vmem:[#allocation22 + $0x2b0] sm:$0xff]
        %v10839 = vld [vmem:[#allocation22 + $0x2b8] sm:$0xff]
        %v10840 = vld [vmem:[#allocation22 + $0x2c0] sm:$0xff]
        %v10841 = vld [vmem:[#allocation22 + $0x2c8] sm:$0xff]
        %v10842 = vld [vmem:[#allocation22 + $0x2d0] sm:$0xff]
        %v10843 = vld [vmem:[#allocation22 + $0x2d8] sm:$0xff]
        %v10844 = vld [vmem:[#allocation22 + $0x2e0] sm:$0xff]
        %v10845 = vld [vmem:[#allocation22 + $0x2e8] sm:$0xff]
        %v10846 = vld [vmem:[#allocation22 + $0x2f0] sm:$0xff]
        %v10847 = vld [vmem:[#allocation22 + $0x2f8] sm:$0xff]
        %v10848 = vld [vmem:[#allocation22 + $0x300] sm:$0xff]
        %v10849 = vld [vmem:[#allocation22 + $0x308] sm:$0xff]
        %v10850 = vld [vmem:[#allocation22 + $0x310] sm:$0xff]
        %v10851 = vld [vmem:[#allocation22 + $0x318] sm:$0xff]
        %v10852 = vld [vmem:[#allocation22 + $0x320] sm:$0xff]
        %v10853 = vld [vmem:[#allocation22 + $0x328] sm:$0xff]
        %v10854 = vld [vmem:[#allocation22 + $0x330] sm:$0xff]
        %v10855 = vld [vmem:[#allocation22 + $0x338] sm:$0xff]
        %v10856 = vld [vmem:[#allocation22 + $0x340] sm:$0xff]
        %v10857 = vld [vmem:[#allocation22 + $0x348] sm:$0xff]
        %v10858 = vld [vmem:[#allocation22 + $0x350] sm:$0xff]
        %v10859 = vld [vmem:[#allocation22 + $0x358] sm:$0xff]
        %v10860 = vld [vmem:[#allocation22 + $0x360] sm:$0xff]
        %v10861 = vld [vmem:[#allocation22 + $0x368] sm:$0xff]
        %v10862 = vld [vmem:[#allocation22 + $0x370] sm:$0xff]
        %v10863 = vld [vmem:[#allocation22 + $0x378] sm:$0xff]
        %v10864 = vld [vmem:[#allocation22 + $0x380] sm:$0xff]
        %v10865 = vld [vmem:[#allocation22 + $0x388] sm:$0xff]
        %v10866 = vld [vmem:[#allocation22 + $0x390] sm:$0xff]
        %v10867 = vld [vmem:[#allocation22 + $0x398] sm:$0xff]
        %v10868 = vld [vmem:[#allocation22 + $0x3a0] sm:$0xff]
        %v10869 = vld [vmem:[#allocation22 + $0x3a8] sm:$0xff]
        %v10870 = vld [vmem:[#allocation22 + $0x3b0] sm:$0xff]
        %v10871 = vld [vmem:[#allocation22 + $0x3b8] sm:$0xff]
        %v10872 = vld [vmem:[#allocation22 + $0x3c0] sm:$0xff]
        %v10873 = vld [vmem:[#allocation22 + $0x3c8] sm:$0xff]
        %v10874 = vld [vmem:[#allocation22 + $0x3d0] sm:$0xff]
        %v10875 = vld [vmem:[#allocation22 + $0x3d8] sm:$0xff]
        %v10876 = vld [vmem:[#allocation22 + $0x3e0] sm:$0xff]
        %v10877 = vld [vmem:[#allocation22 + $0x3e8] sm:$0xff]
        %v10878 = vld [vmem:[#allocation22 + $0x3f0] sm:$0xff]
        %v10879 = vld [vmem:[#allocation22 + $0x3f8] sm:$0xff]
        %v10880 = vld [vmem:[#allocation23] sm:$0xf]
        %v10882 = vlaneseq
        %v10883 = vshrl.u32 %v10882, 7
        %v10884 = vsub.s32 0, %v10883
        %v10885 = vrot.slane %v10880, %v10884
        %v10886 = vlaneseq
        %v10887 = vshrl.u32 %v10886, 7
        %v10888 = vsub.s32 1, %v10887
        %v10889 = vrot.slane %v10880, %v10888
        %v10890 = vlaneseq
        %v10891 = vshrl.u32 %v10890, 7
        %v10892 = vsub.s32 2, %v10891
        %v10893 = vrot.slane %v10880, %v10892
        %v10894 = vlaneseq
        %v10895 = vshrl.u32 %v10894, 7
        %v10896 = vsub.s32 3, %v10895
        %v10897 = vrot.slane %v10880, %v10896
        %v11030 = vunpack.c.l.b16 %v10752
        %v11031 = vunpack.c.h.b16 %v10752
        %v11032 = vunpack.c.l.b16 %v10753
        %v11033 = vunpack.c.h.b16 %v10753
        %v11034 = vunpack.c.l.b16 %v10754
        %v11035 = vunpack.c.h.b16 %v10754
        %v11036 = vunpack.c.l.b16 %v10755
        %v11037 = vunpack.c.h.b16 %v10755
        %v11038 = vunpack.c.l.b16 %v10756
        %v11039 = vunpack.c.h.b16 %v10756
        %v11040 = vunpack.c.l.b16 %v10757
        %v11041 = vunpack.c.h.b16 %v10757
        %v11042 = vunpack.c.l.b16 %v10758
        %v11043 = vunpack.c.h.b16 %v10758
        %v11044 = vunpack.c.l.b16 %v10759
        %v11045 = vunpack.c.h.b16 %v10759
        %v11046 = vunpack.c.l.b16 %v10760
        %v11047 = vunpack.c.h.b16 %v10760
        %v11048 = vunpack.c.l.b16 %v10761
        %v11049 = vunpack.c.h.b16 %v10761
        %v11050 = vunpack.c.l.b16 %v10762
        %v11051 = vunpack.c.h.b16 %v10762
        %v11052 = vunpack.c.l.b16 %v10763
        %v11053 = vunpack.c.h.b16 %v10763
        %v11054 = vunpack.c.l.b16 %v10764
        %v11055 = vunpack.c.h.b16 %v10764
        %v11056 = vunpack.c.l.b16 %v10765
        %v11057 = vunpack.c.h.b16 %v10765
        %v11058 = vunpack.c.l.b16 %v10766
        %v11059 = vunpack.c.h.b16 %v10766
        %v11060 = vunpack.c.l.b16 %v10767
        %v11061 = vunpack.c.h.b16 %v10767
        %v11062 = vunpack.c.l.b16 %v10768
        %v11063 = vunpack.c.h.b16 %v10768
        %v11064 = vunpack.c.l.b16 %v10769
        %v11065 = vunpack.c.h.b16 %v10769
        %v11066 = vunpack.c.l.b16 %v10770
        %v11067 = vunpack.c.h.b16 %v10770
        %v11068 = vunpack.c.l.b16 %v10771
        %v11069 = vunpack.c.h.b16 %v10771
        %v11070 = vunpack.c.l.b16 %v10772
        %v11071 = vunpack.c.h.b16 %v10772
        %v11072 = vunpack.c.l.b16 %v10773
        %v11073 = vunpack.c.h.b16 %v10773
        %v11074 = vunpack.c.l.b16 %v10774
        %v11075 = vunpack.c.h.b16 %v10774
        %v11076 = vunpack.c.l.b16 %v10775
        %v11077 = vunpack.c.h.b16 %v10775
        %v11078 = vunpack.c.l.b16 %v10776
        %v11079 = vunpack.c.h.b16 %v10776
        %v11080 = vunpack.c.l.b16 %v10777
        %v11081 = vunpack.c.h.b16 %v10777
        %v11082 = vunpack.c.l.b16 %v10778
        %v11083 = vunpack.c.h.b16 %v10778
        %v11084 = vunpack.c.l.b16 %v10779
        %v11085 = vunpack.c.h.b16 %v10779
        %v11086 = vunpack.c.l.b16 %v10780
        %v11087 = vunpack.c.h.b16 %v10780
        %v11088 = vunpack.c.l.b16 %v10781
        %v11089 = vunpack.c.h.b16 %v10781
        %v11090 = vunpack.c.l.b16 %v10782
        %v11091 = vunpack.c.h.b16 %v10782
        %v11092 = vunpack.c.l.b16 %v10783
        %v11093 = vunpack.c.h.b16 %v10783
        %v11094 = vunpack.c.l.b16 %v10784
        %v11095 = vunpack.c.h.b16 %v10784
        %v11096 = vunpack.c.l.b16 %v10785
        %v11097 = vunpack.c.h.b16 %v10785
        %v11098 = vunpack.c.l.b16 %v10786
        %v11099 = vunpack.c.h.b16 %v10786
        %v11100 = vunpack.c.l.b16 %v10787
        %v11101 = vunpack.c.h.b16 %v10787
        %v11102 = vunpack.c.l.b16 %v10788
        %v11103 = vunpack.c.h.b16 %v10788
        %v11104 = vunpack.c.l.b16 %v10789
        %v11105 = vunpack.c.h.b16 %v10789
        %v11106 = vunpack.c.l.b16 %v10790
        %v11107 = vunpack.c.h.b16 %v10790
        %v11108 = vunpack.c.l.b16 %v10791
        %v11109 = vunpack.c.h.b16 %v10791
        %v11110 = vunpack.c.l.b16 %v10792
        %v11111 = vunpack.c.h.b16 %v10792
        %v11112 = vunpack.c.l.b16 %v10793
        %v11113 = vunpack.c.h.b16 %v10793
        %v11114 = vunpack.c.l.b16 %v10794
        %v11115 = vunpack.c.h.b16 %v10794
        %v11116 = vunpack.c.l.b16 %v10795
        %v11117 = vunpack.c.h.b16 %v10795
        %v11118 = vunpack.c.l.b16 %v10796
        %v11119 = vunpack.c.h.b16 %v10796
        %v11120 = vunpack.c.l.b16 %v10797
        %v11121 = vunpack.c.h.b16 %v10797
        %v11122 = vunpack.c.l.b16 %v10798
        %v11123 = vunpack.c.h.b16 %v10798
        %v11124 = vunpack.c.l.b16 %v10799
        %v11125 = vunpack.c.h.b16 %v10799
        %v11126 = vunpack.c.l.b16 %v10800
        %v11127 = vunpack.c.h.b16 %v10800
        %v11128 = vunpack.c.l.b16 %v10801
        %v11129 = vunpack.c.h.b16 %v10801
        %v11130 = vunpack.c.l.b16 %v10802
        %v11131 = vunpack.c.h.b16 %v10802
        %v11132 = vunpack.c.l.b16 %v10803
        %v11133 = vunpack.c.h.b16 %v10803
        %v11134 = vunpack.c.l.b16 %v10804
        %v11135 = vunpack.c.h.b16 %v10804
        %v11136 = vunpack.c.l.b16 %v10805
        %v11137 = vunpack.c.h.b16 %v10805
        %v11138 = vunpack.c.l.b16 %v10806
        %v11139 = vunpack.c.h.b16 %v10806
        %v11140 = vunpack.c.l.b16 %v10807
        %v11141 = vunpack.c.h.b16 %v10807
        %v11142 = vunpack.c.l.b16 %v10808
        %v11143 = vunpack.c.h.b16 %v10808
        %v11144 = vunpack.c.l.b16 %v10809
        %v11145 = vunpack.c.h.b16 %v10809
        %v11146 = vunpack.c.l.b16 %v10810
        %v11147 = vunpack.c.h.b16 %v10810
        %v11148 = vunpack.c.l.b16 %v10811
        %v11149 = vunpack.c.h.b16 %v10811
        %v11150 = vunpack.c.l.b16 %v10812
        %v11151 = vunpack.c.h.b16 %v10812
        %v11152 = vunpack.c.l.b16 %v10813
        %v11153 = vunpack.c.h.b16 %v10813
        %v11154 = vunpack.c.l.b16 %v10814
        %v11155 = vunpack.c.h.b16 %v10814
        %v11156 = vunpack.c.l.b16 %v10815
        %v11157 = vunpack.c.h.b16 %v10815
        %v11158 = vunpack.c.l.b16 %v10816
        %v11159 = vunpack.c.h.b16 %v10816
        %v11160 = vunpack.c.l.b16 %v10817
        %v11161 = vunpack.c.h.b16 %v10817
        %v11162 = vunpack.c.l.b16 %v10818
        %v11163 = vunpack.c.h.b16 %v10818
        %v11164 = vunpack.c.l.b16 %v10819
        %v11165 = vunpack.c.h.b16 %v10819
        %v11166 = vunpack.c.l.b16 %v10820
        %v11167 = vunpack.c.h.b16 %v10820
        %v11168 = vunpack.c.l.b16 %v10821
        %v11169 = vunpack.c.h.b16 %v10821
        %v11170 = vunpack.c.l.b16 %v10822
        %v11171 = vunpack.c.h.b16 %v10822
        %v11172 = vunpack.c.l.b16 %v10823
        %v11173 = vunpack.c.h.b16 %v10823
        %v11174 = vunpack.c.l.b16 %v10824
        %v11175 = vunpack.c.h.b16 %v10824
        %v11176 = vunpack.c.l.b16 %v10825
        %v11177 = vunpack.c.h.b16 %v10825
        %v11178 = vunpack.c.l.b16 %v10826
        %v11179 = vunpack.c.h.b16 %v10826
        %v11180 = vunpack.c.l.b16 %v10827
        %v11181 = vunpack.c.h.b16 %v10827
        %v11182 = vunpack.c.l.b16 %v10828
        %v11183 = vunpack.c.h.b16 %v10828
        %v11184 = vunpack.c.l.b16 %v10829
        %v11185 = vunpack.c.h.b16 %v10829
        %v11186 = vunpack.c.l.b16 %v10830
        %v11187 = vunpack.c.h.b16 %v10830
        %v11188 = vunpack.c.l.b16 %v10831
        %v11189 = vunpack.c.h.b16 %v10831
        %v11190 = vunpack.c.l.b16 %v10832
        %v11191 = vunpack.c.h.b16 %v10832
        %v11192 = vunpack.c.l.b16 %v10833
        %v11193 = vunpack.c.h.b16 %v10833
        %v11194 = vunpack.c.l.b16 %v10834
        %v11195 = vunpack.c.h.b16 %v10834
        %v11196 = vunpack.c.l.b16 %v10835
        %v11197 = vunpack.c.h.b16 %v10835
        %v11198 = vunpack.c.l.b16 %v10836
        %v11199 = vunpack.c.h.b16 %v10836
        %v11200 = vunpack.c.l.b16 %v10837
        %v11201 = vunpack.c.h.b16 %v10837
        %v11202 = vunpack.c.l.b16 %v10838
        %v11203 = vunpack.c.h.b16 %v10838
        %v11204 = vunpack.c.l.b16 %v10839
        %v11205 = vunpack.c.h.b16 %v10839
        %v11206 = vunpack.c.l.b16 %v10840
        %v11207 = vunpack.c.h.b16 %v10840
        %v11208 = vunpack.c.l.b16 %v10841
        %v11209 = vunpack.c.h.b16 %v10841
        %v11210 = vunpack.c.l.b16 %v10842
        %v11211 = vunpack.c.h.b16 %v10842
        %v11212 = vunpack.c.l.b16 %v10843
        %v11213 = vunpack.c.h.b16 %v10843
        %v11214 = vunpack.c.l.b16 %v10844
        %v11215 = vunpack.c.h.b16 %v10844
        %v11216 = vunpack.c.l.b16 %v10845
        %v11217 = vunpack.c.h.b16 %v10845
        %v11218 = vunpack.c.l.b16 %v10846
        %v11219 = vunpack.c.h.b16 %v10846
        %v11220 = vunpack.c.l.b16 %v10847
        %v11221 = vunpack.c.h.b16 %v10847
        %v11222 = vunpack.c.l.b16 %v10848
        %v11223 = vunpack.c.h.b16 %v10848
        %v11224 = vunpack.c.l.b16 %v10849
        %v11225 = vunpack.c.h.b16 %v10849
        %v11226 = vunpack.c.l.b16 %v10850
        %v11227 = vunpack.c.h.b16 %v10850
        %v11228 = vunpack.c.l.b16 %v10851
        %v11229 = vunpack.c.h.b16 %v10851
        %v11230 = vunpack.c.l.b16 %v10852
        %v11231 = vunpack.c.h.b16 %v10852
        %v11232 = vunpack.c.l.b16 %v10853
        %v11233 = vunpack.c.h.b16 %v10853
        %v11234 = vunpack.c.l.b16 %v10854
        %v11235 = vunpack.c.h.b16 %v10854
        %v11236 = vunpack.c.l.b16 %v10855
        %v11237 = vunpack.c.h.b16 %v10855
        %v11238 = vunpack.c.l.b16 %v10856
        %v11239 = vunpack.c.h.b16 %v10856
        %v11240 = vunpack.c.l.b16 %v10857
        %v11241 = vunpack.c.h.b16 %v10857
        %v11242 = vunpack.c.l.b16 %v10858
        %v11243 = vunpack.c.h.b16 %v10858
        %v11244 = vunpack.c.l.b16 %v10859
        %v11245 = vunpack.c.h.b16 %v10859
        %v11246 = vunpack.c.l.b16 %v10860
        %v11247 = vunpack.c.h.b16 %v10860
        %v11248 = vunpack.c.l.b16 %v10861
        %v11249 = vunpack.c.h.b16 %v10861
        %v11250 = vunpack.c.l.b16 %v10862
        %v11251 = vunpack.c.h.b16 %v10862
        %v11252 = vunpack.c.l.b16 %v10863
        %v11253 = vunpack.c.h.b16 %v10863
        %v11254 = vunpack.c.l.b16 %v10864
        %v11255 = vunpack.c.h.b16 %v10864
        %v11256 = vunpack.c.l.b16 %v10865
        %v11257 = vunpack.c.h.b16 %v10865
        %v11258 = vunpack.c.l.b16 %v10866
        %v11259 = vunpack.c.h.b16 %v10866
        %v11260 = vunpack.c.l.b16 %v10867
        %v11261 = vunpack.c.h.b16 %v10867
        %v11262 = vunpack.c.l.b16 %v10868
        %v11263 = vunpack.c.h.b16 %v10868
        %v11264 = vunpack.c.l.b16 %v10869
        %v11265 = vunpack.c.h.b16 %v10869
        %v11266 = vunpack.c.l.b16 %v10870
        %v11267 = vunpack.c.h.b16 %v10870
        %v11268 = vunpack.c.l.b16 %v10871
        %v11269 = vunpack.c.h.b16 %v10871
        %v11270 = vunpack.c.l.b16 %v10872
        %v11271 = vunpack.c.h.b16 %v10872
        %v11272 = vunpack.c.l.b16 %v10873
        %v11273 = vunpack.c.h.b16 %v10873
        %v11274 = vunpack.c.l.b16 %v10874
        %v11275 = vunpack.c.h.b16 %v10874
        %v11276 = vunpack.c.l.b16 %v10875
        %v11277 = vunpack.c.h.b16 %v10875
        %v11278 = vunpack.c.l.b16 %v10876
        %v11279 = vunpack.c.h.b16 %v10876
        %v11280 = vunpack.c.l.b16 %v10877
        %v11281 = vunpack.c.h.b16 %v10877
        %v11282 = vunpack.c.l.b16 %v10878
        %v11283 = vunpack.c.h.b16 %v10878
        %v11284 = vunpack.c.l.b16 %v10879
        %v11285 = vunpack.c.h.b16 %v10879
        %v11286 = vpack.c.b16 %v11034, %v11030
        %v11287 = vpack.c.b16 %v11035, %v11031
        %v11288 = vpack.c.b16 %v11036, %v11032
        %v11289 = vpack.c.b16 %v11037, %v11033
        %v11290 = vpack.c.b16 %v11042, %v11038
        %v11291 = vpack.c.b16 %v11043, %v11039
        %v11292 = vpack.c.b16 %v11044, %v11040
        %v11293 = vpack.c.b16 %v11045, %v11041
        %v11294 = vpack.c.b16 %v11050, %v11046
        %v11295 = vpack.c.b16 %v11051, %v11047
        %v11296 = vpack.c.b16 %v11052, %v11048
        %v11297 = vpack.c.b16 %v11053, %v11049
        %v11298 = vpack.c.b16 %v11058, %v11054
        %v11299 = vpack.c.b16 %v11059, %v11055
        %v11300 = vpack.c.b16 %v11060, %v11056
        %v11301 = vpack.c.b16 %v11061, %v11057
        %v11302 = vpack.c.b16 %v11066, %v11062
        %v11303 = vpack.c.b16 %v11067, %v11063
        %v11304 = vpack.c.b16 %v11068, %v11064
        %v11305 = vpack.c.b16 %v11069, %v11065
        %v11306 = vpack.c.b16 %v11074, %v11070
        %v11307 = vpack.c.b16 %v11075, %v11071
        %v11308 = vpack.c.b16 %v11076, %v11072
        %v11309 = vpack.c.b16 %v11077, %v11073
        %v11310 = vpack.c.b16 %v11082, %v11078
        %v11311 = vpack.c.b16 %v11083, %v11079
        %v11312 = vpack.c.b16 %v11084, %v11080
        %v11313 = vpack.c.b16 %v11085, %v11081
        %v11314 = vpack.c.b16 %v11090, %v11086
        %v11315 = vpack.c.b16 %v11091, %v11087
        %v11316 = vpack.c.b16 %v11092, %v11088
        %v11317 = vpack.c.b16 %v11093, %v11089
        %v11318 = vpack.c.b16 %v11098, %v11094
        %v11319 = vpack.c.b16 %v11099, %v11095
        %v11320 = vpack.c.b16 %v11100, %v11096
        %v11321 = vpack.c.b16 %v11101, %v11097
        %v11322 = vpack.c.b16 %v11106, %v11102
        %v11323 = vpack.c.b16 %v11107, %v11103
        %v11324 = vpack.c.b16 %v11108, %v11104
        %v11325 = vpack.c.b16 %v11109, %v11105
        %v11326 = vpack.c.b16 %v11114, %v11110
        %v11327 = vpack.c.b16 %v11115, %v11111
        %v11328 = vpack.c.b16 %v11116, %v11112
        %v11329 = vpack.c.b16 %v11117, %v11113
        %v11330 = vpack.c.b16 %v11122, %v11118
        %v11331 = vpack.c.b16 %v11123, %v11119
        %v11332 = vpack.c.b16 %v11124, %v11120
        %v11333 = vpack.c.b16 %v11125, %v11121
        %v11334 = vpack.c.b16 %v11130, %v11126
        %v11335 = vpack.c.b16 %v11131, %v11127
        %v11336 = vpack.c.b16 %v11132, %v11128
        %v11337 = vpack.c.b16 %v11133, %v11129
        %v11338 = vpack.c.b16 %v11138, %v11134
        %v11339 = vpack.c.b16 %v11139, %v11135
        %v11340 = vpack.c.b16 %v11140, %v11136
        %v11341 = vpack.c.b16 %v11141, %v11137
        %v11342 = vpack.c.b16 %v11146, %v11142
        %v11343 = vpack.c.b16 %v11147, %v11143
        %v11344 = vpack.c.b16 %v11148, %v11144
        %v11345 = vpack.c.b16 %v11149, %v11145
        %v11346 = vpack.c.b16 %v11154, %v11150
        %v11347 = vpack.c.b16 %v11155, %v11151
        %v11348 = vpack.c.b16 %v11156, %v11152
        %v11349 = vpack.c.b16 %v11157, %v11153
        %v11350 = vpack.c.b16 %v11162, %v11158
        %v11351 = vpack.c.b16 %v11163, %v11159
        %v11352 = vpack.c.b16 %v11164, %v11160
        %v11353 = vpack.c.b16 %v11165, %v11161
        %v11354 = vpack.c.b16 %v11170, %v11166
        %v11355 = vpack.c.b16 %v11171, %v11167
        %v11356 = vpack.c.b16 %v11172, %v11168
        %v11357 = vpack.c.b16 %v11173, %v11169
        %v11358 = vpack.c.b16 %v11178, %v11174
        %v11359 = vpack.c.b16 %v11179, %v11175
        %v11360 = vpack.c.b16 %v11180, %v11176
        %v11361 = vpack.c.b16 %v11181, %v11177
        %v11362 = vpack.c.b16 %v11186, %v11182
        %v11363 = vpack.c.b16 %v11187, %v11183
        %v11364 = vpack.c.b16 %v11188, %v11184
        %v11365 = vpack.c.b16 %v11189, %v11185
        %v11366 = vpack.c.b16 %v11194, %v11190
        %v11367 = vpack.c.b16 %v11195, %v11191
        %v11368 = vpack.c.b16 %v11196, %v11192
        %v11369 = vpack.c.b16 %v11197, %v11193
        %v11370 = vpack.c.b16 %v11202, %v11198
        %v11371 = vpack.c.b16 %v11203, %v11199
        %v11372 = vpack.c.b16 %v11204, %v11200
        %v11373 = vpack.c.b16 %v11205, %v11201
        %v11374 = vpack.c.b16 %v11210, %v11206
        %v11375 = vpack.c.b16 %v11211, %v11207
        %v11376 = vpack.c.b16 %v11212, %v11208
        %v11377 = vpack.c.b16 %v11213, %v11209
        %v11378 = vpack.c.b16 %v11218, %v11214
        %v11379 = vpack.c.b16 %v11219, %v11215
        %v11380 = vpack.c.b16 %v11220, %v11216
        %v11381 = vpack.c.b16 %v11221, %v11217
        %v11382 = vpack.c.b16 %v11226, %v11222
        %v11383 = vpack.c.b16 %v11227, %v11223
        %v11384 = vpack.c.b16 %v11228, %v11224
        %v11385 = vpack.c.b16 %v11229, %v11225
        %v11386 = vpack.c.b16 %v11234, %v11230
        %v11387 = vpack.c.b16 %v11235, %v11231
        %v11388 = vpack.c.b16 %v11236, %v11232
        %v11389 = vpack.c.b16 %v11237, %v11233
        %v11390 = vpack.c.b16 %v11242, %v11238
        %v11391 = vpack.c.b16 %v11243, %v11239
        %v11392 = vpack.c.b16 %v11244, %v11240
        %v11393 = vpack.c.b16 %v11245, %v11241
        %v11394 = vpack.c.b16 %v11250, %v11246
        %v11395 = vpack.c.b16 %v11251, %v11247
        %v11396 = vpack.c.b16 %v11252, %v11248
        %v11397 = vpack.c.b16 %v11253, %v11249
        %v11398 = vpack.c.b16 %v11258, %v11254
        %v11399 = vpack.c.b16 %v11259, %v11255
        %v11400 = vpack.c.b16 %v11260, %v11256
        %v11401 = vpack.c.b16 %v11261, %v11257
        %v11402 = vpack.c.b16 %v11266, %v11262
        %v11403 = vpack.c.b16 %v11267, %v11263
        %v11404 = vpack.c.b16 %v11268, %v11264
        %v11405 = vpack.c.b16 %v11269, %v11265
        %v11406 = vpack.c.b16 %v11274, %v11270
        %v11407 = vpack.c.b16 %v11275, %v11271
        %v11408 = vpack.c.b16 %v11276, %v11272
        %v11409 = vpack.c.b16 %v11277, %v11273
        %v11410 = vpack.c.b16 %v11282, %v11278
        %v11411 = vpack.c.b16 %v11283, %v11279
        %v11412 = vpack.c.b16 %v11284, %v11280
        %v11413 = vpack.c.b16 %v11285, %v11281
        %11542 = vmatprep.subr.bf16.mxu0 %v11315
        %11543 = vmatpush1.bf16.msra.mxu0 %v11314
        %11544 = vmatprep.subr.bf16.mxu0 %v11311
        %11545 = vmatpush1.bf16.msra.mxu0 %v11310
        %11546 = vmatprep.subr.bf16.mxu0 %v11307
        %11547 = vmatpush1.bf16.msra.mxu0 %v11306
        %11548 = vmatprep.subr.bf16.mxu0 %v11303
        %11549 = vmatpush1.bf16.msra.mxu0 %v11302
        %11550 = vmatprep.subr.bf16.mxu0 %v11299
        %11551 = vmatpush1.bf16.msra.mxu0 %v11298
        %11552 = vmatprep.subr.bf16.mxu0 %v11295
        %11553 = vmatpush1.bf16.msra.mxu0 %v11294
        %11554 = vmatprep.subr.bf16.mxu0 %v11291
        %11555 = vmatpush1.bf16.msra.mxu0 %v11290
        %11556 = vmatprep.subr.bf16.mxu0 %v11287
        %11557 = vmatpush1.bf16.msra.mxu0 %v11286
        %11558 = vmatprep.subr.bf16.mxu0 %v11347
        %11559 = vmatpush2.bf16.msra.mxu0 %v11346
        %11560 = vmatprep.subr.bf16.mxu0 %v11343
        %11561 = vmatpush2.bf16.msra.mxu0 %v11342
        %11562 = vmatprep.subr.bf16.mxu0 %v11339
        %11563 = vmatpush2.bf16.msra.mxu0 %v11338
        %11564 = vmatprep.subr.bf16.mxu0 %v11335
        %11565 = vmatpush2.bf16.msra.mxu0 %v11334
        %11566 = vmatprep.subr.bf16.mxu0 %v11331
        %11567 = vmatpush2.bf16.msra.mxu0 %v11330
        %11568 = vmatprep.subr.bf16.mxu0 %v11327
        %11569 = vmatpush2.bf16.msra.mxu0 %v11326
        %11570 = vmatprep.subr.bf16.mxu0 %v11323
        %11571 = vmatpush2.bf16.msra.mxu0 %v11322
        %11572 = vmatprep.subr.bf16.mxu0 %v11319
        %11573 = vmatpush2.bf16.msra.mxu0 %v11318
        %11574 = vmatprep.mubr.bf16.mxu0 %v10749
        %11575 = vmatmul.mubr.bf16.gmra.mxu0 %v10748
        %v11576 = vpop.f32.mrf.mxu0
        %v11577 = vadd.f32 %v10885, %v11576
        %v11578 = vpop.f32.mrf.mxu0
        %v11579 = vadd.f32 %v10889, %v11578
        %v11580 = vpop.f32.mrf.mxu0
        %v11581 = vpop.f32.mrf.mxu0
        %11582 = vdwg.mxu0
        %11583 = vmatprep.subr.bf16.mxu0 %v11379
        %11584 = vmatpush1.bf16.msra.mxu0 %v11378
        %11585 = vmatprep.subr.bf16.mxu0 %v11375
        %11586 = vmatpush1.bf16.msra.mxu0 %v11374
        %11587 = vmatprep.subr.bf16.mxu0 %v11371
        %11588 = vmatpush1.bf16.msra.mxu0 %v11370
        %11589 = vmatprep.subr.bf16.mxu0 %v11367
        %11590 = vmatpush1.bf16.msra.mxu0 %v11366
        %11591 = vmatprep.subr.bf16.mxu0 %v11363
        %11592 = vmatpush1.bf16.msra.mxu0 %v11362
        %11593 = vmatprep.subr.bf16.mxu0 %v11359
        %11594 = vmatpush1.bf16.msra.mxu0 %v11358
        %11595 = vmatprep.subr.bf16.mxu0 %v11355
        %11596 = vmatpush1.bf16.msra.mxu0 %v11354
        %11597 = vmatprep.subr.bf16.mxu0 %v11351
        %11598 = vmatpush1.bf16.msra.mxu0 %v11350
        %11599 = vmatprep.subr.bf16.mxu0 %v11411
        %11600 = vmatpush2.bf16.msra.mxu0 %v11410
        %11601 = vmatprep.subr.bf16.mxu0 %v11407
        %11602 = vmatpush2.bf16.msra.mxu0 %v11406
        %11603 = vmatprep.subr.bf16.mxu0 %v11403
        %11604 = vmatpush2.bf16.msra.mxu0 %v11402
        %11605 = vmatprep.subr.bf16.mxu0 %v11399
        %11606 = vmatpush2.bf16.msra.mxu0 %v11398
        %11607 = vmatprep.subr.bf16.mxu0 %v11395
        %11608 = vmatpush2.bf16.msra.mxu0 %v11394
        %11609 = vmatprep.subr.bf16.mxu0 %v11391
        %11610 = vmatpush2.bf16.msra.mxu0 %v11390
        %11611 = vmatprep.subr.bf16.mxu0 %v11387
        %11612 = vmatpush2.bf16.msra.mxu0 %v11386
        %11613 = vmatprep.subr.bf16.mxu0 %v11383
        %11614 = vmatpush2.bf16.msra.mxu0 %v11382
        %11615 = vmatprep.mubr.bf16.mxu0 %v10751
        %11616 = vmatmul.mubr.bf16.gmra.mxu0 %v10750
        %v11617 = vpop.f32.mrf.mxu0
        %v11618 = vadd.f32 %v11577, %v11617
        %v11619 = vpop.f32.mrf.mxu0
        %v11620 = vadd.f32 %v11579, %v11619
        %v11621 = vpop.f32.mrf.mxu0
        %v11622 = vpop.f32.mrf.mxu0
        %11623 = vdwg.mxu0
        %11624 = vmatprep.subr.bf16.mxu0 %v11317
        %11625 = vmatpush1.bf16.msra.mxu0 %v11316
        %11626 = vmatprep.subr.bf16.mxu0 %v11313
        %11627 = vmatpush1.bf16.msra.mxu0 %v11312
        %11628 = vmatprep.subr.bf16.mxu0 %v11309
        %11629 = vmatpush1.bf16.msra.mxu0 %v11308
        %11630 = vmatprep.subr.bf16.mxu0 %v11305
        %11631 = vmatpush1.bf16.msra.mxu0 %v11304
        %11632 = vmatprep.subr.bf16.mxu0 %v11301
        %11633 = vmatpush1.bf16.msra.mxu0 %v11300
        %11634 = vmatprep.subr.bf16.mxu0 %v11297
        %11635 = vmatpush1.bf16.msra.mxu0 %v11296
        %11636 = vmatprep.subr.bf16.mxu0 %v11293
        %11637 = vmatpush1.bf16.msra.mxu0 %v11292
        %11638 = vmatprep.subr.bf16.mxu0 %v11289
        %11639 = vmatpush1.bf16.msra.mxu0 %v11288
        %11640 = vmatprep.subr.bf16.mxu0 %v11349
        %11641 = vmatpush2.bf16.msra.mxu0 %v11348
        %11642 = vmatprep.subr.bf16.mxu0 %v11345
        %11643 = vmatpush2.bf16.msra.mxu0 %v11344
        %11644 = vmatprep.subr.bf16.mxu0 %v11341
        %11645 = vmatpush2.bf16.msra.mxu0 %v11340
        %11646 = vmatprep.subr.bf16.mxu0 %v11337
        %11647 = vmatpush2.bf16.msra.mxu0 %v11336
        %11648 = vmatprep.subr.bf16.mxu0 %v11333
        %11649 = vmatpush2.bf16.msra.mxu0 %v11332
        %11650 = vmatprep.subr.bf16.mxu0 %v11329
        %11651 = vmatpush2.bf16.msra.mxu0 %v11328
        %11652 = vmatprep.subr.bf16.mxu0 %v11325
        %11653 = vmatpush2.bf16.msra.mxu0 %v11324
        %11654 = vmatprep.subr.bf16.mxu0 %v11321
        %11655 = vmatpush2.bf16.msra.mxu0 %v11320
        %11656 = vmatprep.mubr.bf16.mxu0 %v10749
        %11657 = vmatmul.mubr.bf16.gmra.mxu0 %v10748
        %v11658 = vpop.f32.mrf.mxu0
        %v11659 = vadd.f32 %v10893, %v11658
        %v11660 = vpop.f32.mrf.mxu0
        %v11661 = vadd.f32 %v10897, %v11660
        %v11662 = vpop.f32.mrf.mxu0
        %v11663 = vpop.f32.mrf.mxu0
        %11664 = vdwg.mxu0
        %11665 = vmatprep.subr.bf16.mxu0 %v11381
        %11666 = vmatpush1.bf16.msra.mxu0 %v11380
        %11667 = vmatprep.subr.bf16.mxu0 %v11377
        %11668 = vmatpush1.bf16.msra.mxu0 %v11376
        %11669 = vmatprep.subr.bf16.mxu0 %v11373
        %11670 = vmatpush1.bf16.msra.mxu0 %v11372
        %11671 = vmatprep.subr.bf16.mxu0 %v11369
        %11672 = vmatpush1.bf16.msra.mxu0 %v11368
        %11673 = vmatprep.subr.bf16.mxu0 %v11365
        %11674 = vmatpush1.bf16.msra.mxu0 %v11364
        %11675 = vmatprep.subr.bf16.mxu0 %v11361
        %11676 = vmatpush1.bf16.msra.mxu0 %v11360
        %11677 = vmatprep.subr.bf16.mxu0 %v11357
        %11678 = vmatpush1.bf16.msra.mxu0 %v11356
        %11679 = vmatprep.subr.bf16.mxu0 %v11353
        %11680 = vmatpush1.bf16.msra.mxu0 %v11352
        %11681 = vmatprep.subr.bf16.mxu0 %v11413
        %11682 = vmatpush2.bf16.msra.mxu0 %v11412
        %11683 = vmatprep.subr.bf16.mxu0 %v11409
        %11684 = vmatpush2.bf16.msra.mxu0 %v11408
        %11685 = vmatprep.subr.bf16.mxu0 %v11405
        %11686 = vmatpush2.bf16.msra.mxu0 %v11404
        %11687 = vmatprep.subr.bf16.mxu0 %v11401
        %11688 = vmatpush2.bf16.msra.mxu0 %v11400
        %11689 = vmatprep.subr.bf16.mxu0 %v11397
        %11690 = vmatpush2.bf16.msra.mxu0 %v11396
        %11691 = vmatprep.subr.bf16.mxu0 %v11393
        %11692 = vmatpush2.bf16.msra.mxu0 %v11392
        %11693 = vmatprep.subr.bf16.mxu0 %v11389
        %11694 = vmatpush2.bf16.msra.mxu0 %v11388
        %11695 = vmatprep.subr.bf16.mxu0 %v11385
        %11696 = vmatpush2.bf16.msra.mxu0 %v11384
        %11697 = vmatprep.mubr.bf16.mxu0 %v10751
        %11698 = vmatmul.mubr.bf16.gmra.mxu0 %v10750
        %v11699 = vpop.f32.mrf.mxu0
        %v11700 = vadd.f32 %v11659, %v11699
        %v11701 = vpop.f32.mrf.mxu0
        %v11702 = vadd.f32 %v11661, %v11701
        %v11703 = vpop.f32.mrf.mxu0
        %v11704 = vpop.f32.mrf.mxu0
        %11705 = vdwg.mxu0
        %v11706 = vmax.f32 %v11618, 0.0
        %v11707 = vmax.f32 %v11620, 0.0
        %v11708 = vmax.f32 %v11700, 0.0
        %v11709 = vmax.f32 %v11702, 0.0
        %v11710 = vpack.c.bf16 %v11706, %v11706
        %v11711 = vpack.c.bf16 %v11707, %v11707
        %v11712 = vpack.c.bf16 %v11708, %v11708
        %v11713 = vpack.c.bf16 %v11709, %v11709
        %v11714 = vld [vmem:[%s15] sm:$0xf]
        %v11715 = vld [vmem:[%s15 + $0x4] sm:$0xf]
        %v11716 = vld [vmem:[%s15 + $0x8] sm:$0xf]
        %v11717 = vld [vmem:[%s15 + $0xc] sm:$0xf]
        %v11718 = vld [vmem:[%s15 + $0x10] sm:$0xf]
        %v11719 = vld [vmem:[%s15 + $0x14] sm:$0xf]
        %v11720 = vld [vmem:[%s15 + $0x18] sm:$0xf]
        %v11721 = vld [vmem:[%s15 + $0x1c] sm:$0xf]
        %v11722 = vld [vmem:[%s15 + $0x20] sm:$0xf]
        %v11723 = vld [vmem:[%s15 + $0x24] sm:$0xf]
        %v11724 = vld [vmem:[%s15 + $0x28] sm:$0xf]
        %v11725 = vld [vmem:[%s15 + $0x2c] sm:$0xf]
        %v11726 = vld [vmem:[%s15 + $0x30] sm:$0xf]
        %v11727 = vld [vmem:[%s15 + $0x34] sm:$0xf]
        %v11728 = vld [vmem:[%s15 + $0x38] sm:$0xf]
        %v11729 = vld [vmem:[%s15 + $0x3c] sm:$0xf]
        %v11730 = vld [vmem:[%s15 + $0x40] sm:$0xf]
        %v11731 = vld [vmem:[%s15 + $0x44] sm:$0xf]
        %v11732 = vld [vmem:[%s15 + $0x48] sm:$0xf]
        %v11733 = vld [vmem:[%s15 + $0x4c] sm:$0xf]
        %v11734 = vld [vmem:[%s15 + $0x50] sm:$0xf]
        %v11735 = vld [vmem:[%s15 + $0x54] sm:$0xf]
        %v11736 = vld [vmem:[%s15 + $0x58] sm:$0xf]
        %v11737 = vld [vmem:[%s15 + $0x5c] sm:$0xf]
        %v11738 = vld [vmem:[%s15 + $0x60] sm:$0xf]
        %v11739 = vld [vmem:[%s15 + $0x64] sm:$0xf]
        %v11740 = vld [vmem:[%s15 + $0x68] sm:$0xf]
        %v11741 = vld [vmem:[%s15 + $0x6c] sm:$0xf]
        %v11742 = vld [vmem:[%s15 + $0x70] sm:$0xf]
        %v11743 = vld [vmem:[%s15 + $0x74] sm:$0xf]
        %v11744 = vld [vmem:[%s15 + $0x78] sm:$0xf]
        %v11745 = vld [vmem:[%s15 + $0x7c] sm:$0xf]
        %v11746 = vld [vmem:[%s15 + $0x80] sm:$0xf]
        %v11747 = vld [vmem:[%s15 + $0x84] sm:$0xf]
        %v11748 = vld [vmem:[%s15 + $0x88] sm:$0xf]
        %v11749 = vld [vmem:[%s15 + $0x8c] sm:$0xf]
        %v11750 = vld [vmem:[%s15 + $0x90] sm:$0xf]
        %v11751 = vld [vmem:[%s15 + $0x94] sm:$0xf]
        %v11752 = vld [vmem:[%s15 + $0x98] sm:$0xf]
        %v11753 = vld [vmem:[%s15 + $0x9c] sm:$0xf]
        %v11754 = vld [vmem:[%s15 + $0xa0] sm:$0xf]
        %v11755 = vld [vmem:[%s15 + $0xa4] sm:$0xf]
        %v11756 = vld [vmem:[%s15 + $0xa8] sm:$0xf]
        %v11757 = vld [vmem:[%s15 + $0xac] sm:$0xf]
        %v11758 = vld [vmem:[%s15 + $0xb0] sm:$0xf]
        %v11759 = vld [vmem:[%s15 + $0xb4] sm:$0xf]
        %v11760 = vld [vmem:[%s15 + $0xb8] sm:$0xf]
        %v11761 = vld [vmem:[%s15 + $0xbc] sm:$0xf]
        %v11762 = vld [vmem:[%s15 + $0xc0] sm:$0xf]
        %v11763 = vld [vmem:[%s15 + $0xc4] sm:$0xf]
        %v11764 = vld [vmem:[%s15 + $0xc8] sm:$0xf]
        %v11765 = vld [vmem:[%s15 + $0xcc] sm:$0xf]
        %v11766 = vld [vmem:[%s15 + $0xd0] sm:$0xf]
        %v11767 = vld [vmem:[%s15 + $0xd4] sm:$0xf]
        %v11768 = vld [vmem:[%s15 + $0xd8] sm:$0xf]
        %v11769 = vld [vmem:[%s15 + $0xdc] sm:$0xf]
        %v11770 = vld [vmem:[%s15 + $0xe0] sm:$0xf]
        %v11771 = vld [vmem:[%s15 + $0xe4] sm:$0xf]
        %v11772 = vld [vmem:[%s15 + $0xe8] sm:$0xf]
        %v11773 = vld [vmem:[%s15 + $0xec] sm:$0xf]
        %v11774 = vld [vmem:[%s15 + $0xf0] sm:$0xf]
        %v11775 = vld [vmem:[%s15 + $0xf4] sm:$0xf]
        %v11776 = vld [vmem:[%s15 + $0xf8] sm:$0xf]
        %v11777 = vld [vmem:[%s15 + $0xfc] sm:$0xf]
        %v11778 = vld [vmem:[#allocation25] sm:$0x1]
        %v11780 = vlaneseq
        %v11781 = vshrl.u32 %v11780, 7
        %v11782 = vsub.s32 0, %v11781
        %v11783 = vrot.slane %v11778, %v11782
        %v11849 = vunpack.c.l.b16 %v11714
        %v11850 = vunpack.c.l.b16 %v11715
        %v11851 = vunpack.c.l.b16 %v11716
        %v11852 = vunpack.c.l.b16 %v11717
        %v11853 = vunpack.c.l.b16 %v11718
        %v11854 = vunpack.c.l.b16 %v11719
        %v11855 = vunpack.c.l.b16 %v11720
        %v11856 = vunpack.c.l.b16 %v11721
        %v11857 = vunpack.c.l.b16 %v11722
        %v11858 = vunpack.c.l.b16 %v11723
        %v11859 = vunpack.c.l.b16 %v11724
        %v11860 = vunpack.c.l.b16 %v11725
        %v11861 = vunpack.c.l.b16 %v11726
        %v11862 = vunpack.c.l.b16 %v11727
        %v11863 = vunpack.c.l.b16 %v11728
        %v11864 = vunpack.c.l.b16 %v11729
        %v11865 = vunpack.c.l.b16 %v11730
        %v11866 = vunpack.c.l.b16 %v11731
        %v11867 = vunpack.c.l.b16 %v11732
        %v11868 = vunpack.c.l.b16 %v11733
        %v11869 = vunpack.c.l.b16 %v11734
        %v11870 = vunpack.c.l.b16 %v11735
        %v11871 = vunpack.c.l.b16 %v11736
        %v11872 = vunpack.c.l.b16 %v11737
        %v11873 = vunpack.c.l.b16 %v11738
        %v11874 = vunpack.c.l.b16 %v11739
        %v11875 = vunpack.c.l.b16 %v11740
        %v11876 = vunpack.c.l.b16 %v11741
        %v11877 = vunpack.c.l.b16 %v11742
        %v11878 = vunpack.c.l.b16 %v11743
        %v11879 = vunpack.c.l.b16 %v11744
        %v11880 = vunpack.c.l.b16 %v11745
        %v11881 = vunpack.c.l.b16 %v11746
        %v11882 = vunpack.c.l.b16 %v11747
        %v11883 = vunpack.c.l.b16 %v11748
        %v11884 = vunpack.c.l.b16 %v11749
        %v11885 = vunpack.c.l.b16 %v11750
        %v11886 = vunpack.c.l.b16 %v11751
        %v11887 = vunpack.c.l.b16 %v11752
        %v11888 = vunpack.c.l.b16 %v11753
        %v11889 = vunpack.c.l.b16 %v11754
        %v11890 = vunpack.c.l.b16 %v11755
        %v11891 = vunpack.c.l.b16 %v11756
        %v11892 = vunpack.c.l.b16 %v11757
        %v11893 = vunpack.c.l.b16 %v11758
        %v11894 = vunpack.c.l.b16 %v11759
        %v11895 = vunpack.c.l.b16 %v11760
        %v11896 = vunpack.c.l.b16 %v11761
        %v11897 = vunpack.c.l.b16 %v11762
        %v11898 = vunpack.c.l.b16 %v11763
        %v11899 = vunpack.c.l.b16 %v11764
        %v11900 = vunpack.c.l.b16 %v11765
        %v11901 = vunpack.c.l.b16 %v11766
        %v11902 = vunpack.c.l.b16 %v11767
        %v11903 = vunpack.c.l.b16 %v11768
        %v11904 = vunpack.c.l.b16 %v11769
        %v11905 = vunpack.c.l.b16 %v11770
        %v11906 = vunpack.c.l.b16 %v11771
        %v11907 = vunpack.c.l.b16 %v11772
        %v11908 = vunpack.c.l.b16 %v11773
        %v11909 = vunpack.c.l.b16 %v11774
        %v11910 = vunpack.c.l.b16 %v11775
        %v11911 = vunpack.c.l.b16 %v11776
        %v11912 = vunpack.c.l.b16 %v11777
        %v11913 = vpack.c.b16 %v11850, %v11849
        %v11914 = vpack.c.b16 %v11852, %v11851
        %v11915 = vpack.c.b16 %v11854, %v11853
        %v11916 = vpack.c.b16 %v11856, %v11855
        %v11917 = vpack.c.b16 %v11858, %v11857
        %v11918 = vpack.c.b16 %v11860, %v11859
        %v11919 = vpack.c.b16 %v11862, %v11861
        %v11920 = vpack.c.b16 %v11864, %v11863
        %v11921 = vpack.c.b16 %v11866, %v11865
        %v11922 = vpack.c.b16 %v11868, %v11867
        %v11923 = vpack.c.b16 %v11870, %v11869
        %v11924 = vpack.c.b16 %v11872, %v11871
        %v11925 = vpack.c.b16 %v11874, %v11873
        %v11926 = vpack.c.b16 %v11876, %v11875
        %v11927 = vpack.c.b16 %v11878, %v11877
        %v11928 = vpack.c.b16 %v11880, %v11879
        %v11929 = vpack.c.b16 %v11882, %v11881
        %v11930 = vpack.c.b16 %v11884, %v11883
        %v11931 = vpack.c.b16 %v11886, %v11885
        %v11932 = vpack.c.b16 %v11888, %v11887
        %v11933 = vpack.c.b16 %v11890, %v11889
        %v11934 = vpack.c.b16 %v11892, %v11891
        %v11935 = vpack.c.b16 %v11894, %v11893
        %v11936 = vpack.c.b16 %v11896, %v11895
        %v11937 = vpack.c.b16 %v11898, %v11897
        %v11938 = vpack.c.b16 %v11900, %v11899
        %v11939 = vpack.c.b16 %v11902, %v11901
        %v11940 = vpack.c.b16 %v11904, %v11903
        %v11941 = vpack.c.b16 %v11906, %v11905
        %v11942 = vpack.c.b16 %v11908, %v11907
        %v11943 = vpack.c.b16 %v11910, %v11909
        %v11944 = vpack.c.b16 %v11912, %v11911
        %11977 = vmatprep.subr.bf16.mxu0 0
        %11978 = vmatpush1.bf16.msra.mxu0 %v11920
        %11979 = vmatprep.subr.bf16.mxu0 0
        %11980 = vmatpush1.bf16.msra.mxu0 %v11919
        %11981 = vmatprep.subr.bf16.mxu0 0
        %11982 = vmatpush1.bf16.msra.mxu0 %v11918
        %11983 = vmatprep.subr.bf16.mxu0 0
        %11984 = vmatpush1.bf16.msra.mxu0 %v11917
        %11985 = vmatprep.subr.bf16.mxu0 0
        %11986 = vmatpush1.bf16.msra.mxu0 %v11916
        %11987 = vmatprep.subr.bf16.mxu0 0
        %11988 = vmatpush1.bf16.msra.mxu0 %v11915
        %11989 = vmatprep.subr.bf16.mxu0 0
        %11990 = vmatpush1.bf16.msra.mxu0 %v11914
        %11991 = vmatprep.subr.bf16.mxu0 0
        %11992 = vmatpush1.bf16.msra.mxu0 %v11913
        %11993 = vmatprep.subr.bf16.mxu0 0
        %11994 = vmatpush2.bf16.msra.mxu0 %v11928
        %11995 = vmatprep.subr.bf16.mxu0 0
        %11996 = vmatpush2.bf16.msra.mxu0 %v11927
        %11997 = vmatprep.subr.bf16.mxu0 0
        %11998 = vmatpush2.bf16.msra.mxu0 %v11926
        %11999 = vmatprep.subr.bf16.mxu0 0
        %12000 = vmatpush2.bf16.msra.mxu0 %v11925
        %12001 = vmatprep.subr.bf16.mxu0 0
        %12002 = vmatpush2.bf16.msra.mxu0 %v11924
        %12003 = vmatprep.subr.bf16.mxu0 0
        %12004 = vmatpush2.bf16.msra.mxu0 %v11923
        %12005 = vmatprep.subr.bf16.mxu0 0
        %12006 = vmatpush2.bf16.msra.mxu0 %v11922
        %12007 = vmatprep.subr.bf16.mxu0 0
        %12008 = vmatpush2.bf16.msra.mxu0 %v11921
        %12009 = vmatprep.mubr.bf16.mxu0 %v11711
        %12010 = vmatmul.mubr.bf16.gmra.mxu0 %v11710
        %v12011 = vpop.f32.mrf.mxu0
        %v12012 = vadd.f32 %v11783, %v12011
        %v12013 = vpop.f32.mrf.mxu0
        %v12014 = vpop.f32.mrf.mxu0
        %v12015 = vpop.f32.mrf.mxu0
        %12016 = vdwg.mxu0
        %12017 = vmatprep.subr.bf16.mxu0 0
        %12018 = vmatpush1.bf16.msra.mxu0 %v11936
        %12019 = vmatprep.subr.bf16.mxu0 0
        %12020 = vmatpush1.bf16.msra.mxu0 %v11935
        %12021 = vmatprep.subr.bf16.mxu0 0
        %12022 = vmatpush1.bf16.msra.mxu0 %v11934
        %12023 = vmatprep.subr.bf16.mxu0 0
        %12024 = vmatpush1.bf16.msra.mxu0 %v11933
        %12025 = vmatprep.subr.bf16.mxu0 0
        %12026 = vmatpush1.bf16.msra.mxu0 %v11932
        %12027 = vmatprep.subr.bf16.mxu0 0
        %12028 = vmatpush1.bf16.msra.mxu0 %v11931
        %12029 = vmatprep.subr.bf16.mxu0 0
        %12030 = vmatpush1.bf16.msra.mxu0 %v11930
        %12031 = vmatprep.subr.bf16.mxu0 0
        %12032 = vmatpush1.bf16.msra.mxu0 %v11929
        %12033 = vmatprep.subr.bf16.mxu0 0
        %12034 = vmatpush2.bf16.msra.mxu0 %v11944
        %12035 = vmatprep.subr.bf16.mxu0 0
        %12036 = vmatpush2.bf16.msra.mxu0 %v11943
        %12037 = vmatprep.subr.bf16.mxu0 0
        %12038 = vmatpush2.bf16.msra.mxu0 %v11942
        %12039 = vmatprep.subr.bf16.mxu0 0
        %12040 = vmatpush2.bf16.msra.mxu0 %v11941
        %12041 = vmatprep.subr.bf16.mxu0 0
        %12042 = vmatpush2.bf16.msra.mxu0 %v11940
        %12043 = vmatprep.subr.bf16.mxu0 0
        %12044 = vmatpush2.bf16.msra.mxu0 %v11939
        %12045 = vmatprep.subr.bf16.mxu0 0
        %12046 = vmatpush2.bf16.msra.mxu0 %v11938
        %12047 = vmatprep.subr.bf16.mxu0 0
        %12048 = vmatpush2.bf16.msra.mxu0 %v11937
        %12049 = vmatprep.mubr.bf16.mxu0 %v11713
        %12050 = vmatmul.mubr.bf16.gmra.mxu0 %v11712
        %v12051 = vpop.f32.mrf.mxu0
        %v12052 = vadd.f32 %v12012, %v12051
        %v12053 = vpop.f32.mrf.mxu0
        %v12054 = vpop.f32.mrf.mxu0
        %v12055 = vpop.f32.mrf.mxu0
        %12056 = vdwg.mxu0
        %v12057 = vld [vmem:[%s17] sm:$0xf]
        %v12058 = vld [vmem:[%s17 + $0x4] sm:$0xf]
        %v12059 = vld [vmem:[%s17 + $0x8] sm:$0xf]
        %v12060 = vld [vmem:[%s17 + $0xc] sm:$0xf]
        %v12061 = vpack.c.bf16 %v12052, %v12052
        %v12066 = vunpack.c.l.b16 %v12057
        %v12067 = vunpack.c.l.b16 %v12058
        %v12068 = vunpack.c.l.b16 %v12059
        %v12069 = vunpack.c.l.b16 %v12060
        %v12070 = vpack.c.b16 %v12067, %v12066
        %v12071 = vpack.c.b16 %v12069, %v12068
        %v12073 = vsel %vm7451, %v12070, 0
        %v12076 = vsel %vm7451, %v12071, 0
        %vm12078 = vcmask 1041408
        %v12080 = vsel %vm12078, %v12061, 0
        %12082 = vmatprep.subr.bf16.mxu0 0
        %12083 = vmatpush1.bf16.msra.mxu0 0
        %12084 = vmatprep.subr.bf16.mxu0 0
        %12085 = vmatpush1.bf16.msra.mxu0 0
        %12086 = vmatprep.subr.bf16.mxu0 0
        %12087 = vmatpush1.bf16.msra.mxu0 0
        %12088 = vmatprep.subr.bf16.mxu0 0
        %12089 = vmatpush1.bf16.msra.mxu0 0
        %12090 = vmatprep.subr.bf16.mxu0 0
        %12091 = vmatpush1.bf16.msra.mxu0 0
        %12092 = vmatprep.subr.bf16.mxu0 0
        %12093 = vmatpush1.bf16.msra.mxu0 0
        %12094 = vmatprep.subr.bf16.mxu0 0
        %12095 = vmatpush1.bf16.msra.mxu0 0
        %12096 = vmatprep.subr.bf16.mxu0 0
        %12097 = vmatpush1.bf16.msra.mxu0 %v12080
        %12098 = vmatprep.subr.bf16.mxu0 0
        %12099 = vmatpush2.bf16.msra.mxu0 0
        %12100 = vmatprep.subr.bf16.mxu0 0
        %12101 = vmatpush2.bf16.msra.mxu0 0
        %12102 = vmatprep.subr.bf16.mxu0 0
        %12103 = vmatpush2.bf16.msra.mxu0 0
        %12104 = vmatprep.subr.bf16.mxu0 0
        %12105 = vmatpush2.bf16.msra.mxu0 0
        %12106 = vmatprep.subr.bf16.mxu0 0
        %12107 = vmatpush2.bf16.msra.mxu0 0
        %12108 = vmatprep.subr.bf16.mxu0 0
        %12109 = vmatpush2.bf16.msra.mxu0 0
        %12110 = vmatprep.subr.bf16.mxu0 0
        %12111 = vmatpush2.bf16.msra.mxu0 0
        %12112 = vmatprep.subr.bf16.mxu0 0
        %12113 = vmatpush2.bf16.msra.mxu0 0
        %12114 = vmatprep.mubr.bf16.mxu0 0
        %12115 = vmatmul.mubr.bf16.gmra.mxu0 %v12073
        %v12116 = vpop.f32.mrf.mxu0
        %v12117 = vadd.f32 0.0, %v12116
        %v12118 = vpop.f32.mrf.mxu0
        %v12119 = vpop.f32.mrf.mxu0
        %v12120 = vadd.f32 0.0, %v12119
        %v12121 = vpop.f32.mrf.mxu0
        %12122 = vmatprep.mubr.bf16.mxu0 0
        %12123 = vmatmul.mubr.bf16.gmra.mxu0 %v12076
        %v12124 = vpop.f32.mrf.mxu0
        %v12125 = vadd.f32 0.0, %v12124
        %v12126 = vpop.f32.mrf.mxu0
        %v12127 = vpop.f32.mrf.mxu0
        %v12128 = vadd.f32 0.0, %v12127
        %v12129 = vpop.f32.mrf.mxu0
        %12130 = vdwg.mxu0
        %v12131 = vpack.c.bf16 %v12120, %v12117
        %v12132 = vpack.c.bf16 %v12128, %v12125
        %v12133 = vld [vmem:[#allocation26] sm:$0xf]
        %v12135 = vsel %vm4740, %v12131, 0
        %v12138 = vsel %vm4740, %v12132, 0
        %v12141 = vsel %vm7455, %v12133, 0
        %12143 = vmatprep.subr.bf16.mxu0 0
        %12144 = vmatpush1.bf16.msra.mxu0 0
        %12145 = vmatprep.subr.bf16.mxu0 0
        %12146 = vmatpush1.bf16.msra.mxu0 0
        %12147 = vmatprep.subr.bf16.mxu0 0
        %12148 = vmatpush1.bf16.msra.mxu0 0
        %12149 = vmatprep.subr.bf16.mxu0 0
        %12150 = vmatpush1.bf16.msra.mxu0 0
        %12151 = vmatprep.subr.bf16.mxu0 0
        %12152 = vmatpush1.bf16.msra.mxu0 0
        %12153 = vmatprep.subr.bf16.mxu0 0
        %12154 = vmatpush1.bf16.msra.mxu0 0
        %12155 = vmatprep.subr.bf16.mxu0 0
        %12156 = vmatpush1.bf16.msra.mxu0 0
        %12157 = vmatprep.subr.bf16.mxu0 0
        %12158 = vmatpush1.bf16.msra.mxu0 %v12141
        %12159 = vmatprep.subr.bf16.mxu0 0
        %12160 = vmatpush2.bf16.msra.mxu0 0
        %12161 = vmatprep.subr.bf16.mxu0 0
        %12162 = vmatpush2.bf16.msra.mxu0 0
        %12163 = vmatprep.subr.bf16.mxu0 0
        %12164 = vmatpush2.bf16.msra.mxu0 0
        %12165 = vmatprep.subr.bf16.mxu0 0
        %12166 = vmatpush2.bf16.msra.mxu0 0
        %12167 = vmatprep.subr.bf16.mxu0 0
        %12168 = vmatpush2.bf16.msra.mxu0 0
        %12169 = vmatprep.subr.bf16.mxu0 0
        %12170 = vmatpush2.bf16.msra.mxu0 0
        %12171 = vmatprep.subr.bf16.mxu0 0
        %12172 = vmatpush2.bf16.msra.mxu0 0
        %12173 = vmatprep.subr.bf16.mxu0 0
        %12174 = vmatpush2.bf16.msra.mxu0 0
        %12175 = vmatprep.mubr.bf16.mxu0 0
        %12176 = vmatmul.mubr.bf16.gmra.mxu0 %v12135
        %v12177 = vpop.f32.mrf.mxu0
        %v12178 = vadd.f32 0.0, %v12177
        %v12179 = vpop.f32.mrf.mxu0
        %v12180 = vpop.f32.mrf.mxu0
        %v12181 = vadd.f32 0.0, %v12180
        %v12182 = vpop.f32.mrf.mxu0
        %12183 = vmatprep.mubr.bf16.mxu0 0
        %12184 = vmatmul.mubr.bf16.gmra.mxu0 %v12138
        %v12185 = vpop.f32.mrf.mxu0
        %v12186 = vadd.f32 0.0, %v12185
        %v12187 = vpop.f32.mrf.mxu0
        %v12188 = vpop.f32.mrf.mxu0
        %v12189 = vadd.f32 0.0, %v12188
        %v12190 = vpop.f32.mrf.mxu0
        %12191 = vdwg.mxu0
        %12192 = vst.msk [vmem:[%s816] sm:$0xff] %vm833, %v12178
        %12193 = vst.msk [vmem:[%s816 + $0x8] sm:$0xff] %vm833, %v12181
        %12194 = vst.msk [vmem:[%s816 + $0x10] sm:$0xff] %vm833, %v12186
        %12195 = vst.msk [vmem:[%s816 + $0x18] sm:$0xff] %vm833, %v12189
        %s12196 = scalar_lea.vmem [#allocation26], 4
        %v12197 = vld [vmem:[%s12196] sm:$0xf]
        %v12199 = vsel %vm7455, %v12197, 0
        %12201 = vmatprep.subr.bf16.mxu0 0
        %12202 = vmatpush1.bf16.msra.mxu0 0
        %12203 = vmatprep.subr.bf16.mxu0 0
        %12204 = vmatpush1.bf16.msra.mxu0 0
        %12205 = vmatprep.subr.bf16.mxu0 0
        %12206 = vmatpush1.bf16.msra.mxu0 0
        %12207 = vmatprep.subr.bf16.mxu0 0
        %12208 = vmatpush1.bf16.msra.mxu0 0
        %12209 = vmatprep.subr.bf16.mxu0 0
        %12210 = vmatpush1.bf16.msra.mxu0 0
        %12211 = vmatprep.subr.bf16.mxu0 0
        %12212 = vmatpush1.bf16.msra.mxu0 0
        %12213 = vmatprep.subr.bf16.mxu0 0
        %12214 = vmatpush1.bf16.msra.mxu0 0
        %12215 = vmatprep.subr.bf16.mxu0 0
        %12216 = vmatpush1.bf16.msra.mxu0 %v12199
        %12217 = vmatprep.subr.bf16.mxu0 0
        %12218 = vmatpush2.bf16.msra.mxu0 0
        %12219 = vmatprep.subr.bf16.mxu0 0
        %12220 = vmatpush2.bf16.msra.mxu0 0
        %12221 = vmatprep.subr.bf16.mxu0 0
        %12222 = vmatpush2.bf16.msra.mxu0 0
        %12223 = vmatprep.subr.bf16.mxu0 0
        %12224 = vmatpush2.bf16.msra.mxu0 0
        %12225 = vmatprep.subr.bf16.mxu0 0
        %12226 = vmatpush2.bf16.msra.mxu0 0
        %12227 = vmatprep.subr.bf16.mxu0 0
        %12228 = vmatpush2.bf16.msra.mxu0 0
        %12229 = vmatprep.subr.bf16.mxu0 0
        %12230 = vmatpush2.bf16.msra.mxu0 0
        %12231 = vmatprep.subr.bf16.mxu0 0
        %12232 = vmatpush2.bf16.msra.mxu0 0
        %12233 = vmatprep.mubr.bf16.mxu0 0
        %12234 = vmatmul.mubr.bf16.gmra.mxu0 %v12135
        %v12235 = vpop.f32.mrf.mxu0
        %v12236 = vadd.f32 0.0, %v12235
        %v12237 = vpop.f32.mrf.mxu0
        %v12238 = vpop.f32.mrf.mxu0
        %v12239 = vadd.f32 0.0, %v12238
        %v12240 = vpop.f32.mrf.mxu0
        %12241 = vmatprep.mubr.bf16.mxu0 0
        %12242 = vmatmul.mubr.bf16.gmra.mxu0 %v12138
        %v12243 = vpop.f32.mrf.mxu0
        %v12244 = vadd.f32 0.0, %v12243
        %v12245 = vpop.f32.mrf.mxu0
        %v12246 = vpop.f32.mrf.mxu0
        %v12247 = vadd.f32 0.0, %v12246
        %v12248 = vpop.f32.mrf.mxu0
        %12249 = vdwg.mxu0
        %s12250 = scalar_lea.vmem %s816, 32 [#allocation28]
        %12251 = vst.msk [vmem:[%s12250] sm:$0xff] %vm833, %v12236
        %12252 = vst.msk [vmem:[%s12250 + $0x8] sm:$0xff] %vm833, %v12239
        %12253 = vst.msk [vmem:[%s12250 + $0x10] sm:$0xff] %vm833, %v12244
        %12254 = vst.msk [vmem:[%s12250 + $0x18] sm:$0xff] %vm833, %v12247
        %s12255 = sand.u32 %s454, 1
        %s12256 = scalar_lea.sflag [#allocation4], %s12255
        %s12257 = sand.u32 %s454, 1
        %s12258 = smul.addr %s12257, 64
        %s12259 = scalar_lea.vmem [#allocation28], %s12258
        // Predicated region
        $region161: #{fast_scnn_forward.1} parent=95 // pred_check
          %p12260 = pneg %p464
        $region162: #{fast_scnn_forward.1} parent=95 // pred_check_branch
          %12262 = sbr.rel (%p12260) target = $region164
        $region163: #{fast_scnn_forward.1} parent=95 // pred_region
          %s12264 = ssub.s32 1024, 1024
          %12265 = vsyncadd %s12256, %s12264
          %s12266 = smul.addr %s42, 8
          %s12267 = smul.addr %s12266, 128
          %s12268 = scalar_lea.hbm %s19, %s12267
          %s12269 = sshll.u32 %s12259, 4
          %s12270 = int_to_ptr.vmem [resolvable:$true] %s12269
          %12275 = dma.vmem_to_hbm [thread:$0]  %s12270, 1024, %s12268, %s12256, 128, 128, 8
        $region164: #{fast_scnn_forward.1} parent=95 // pred_fallthru
          _
      $region96: #{fast_scnn_forward.1} parent=5 // pred_fallthru
        _
      %p12276 = scmp.le.s32.totalorder 2, %s37
      // Predicated region
      $region165: #{fast_scnn_forward.1} parent=5 // pred_check
        %p12277 = pneg %p12276
      $region166: #{fast_scnn_forward.1} parent=5 // pred_check_branch
        %12279 = sbr.rel (%p12277) target = $region168
      $region167: #{fast_scnn_forward.1} parent=5 // pred_region
        %s12280 = ssub.s32 %s37, 2
        // Predicated region
        $region169: #{fast_scnn_forward.1} parent=167 // pred_check
          %p12281 = pneg %p470
        $region170: #{fast_scnn_forward.1} parent=167 // pred_check_branch
          %12283 = sbr.rel (%p12281) target = $region172
        $region171: #{fast_scnn_forward.1} parent=167 // pred_region
          %s12284 = sand.u32 %s455, 1
          %s12285 = scalar_lea.sflag [#allocation4], %s12284
          %s12286 = sand.u32 %s455, 1
          %s12287 = smul.addr %s12286, 64
          %s12288 = scalar_lea.vmem [#allocation28], %s12287
          %12289 = dma.done %s12285, 1024
        $region172: #{fast_scnn_forward.1} parent=167 // pred_fallthru
          _
      $region168: #{fast_scnn_forward.1} parent=5 // pred_fallthru
        _
    $region6: #{fast_scnn_forward.1} parent=1 // loop_footer
      %s41 = sadd.s32 1, %s37
    $region7: #{fast_scnn_forward.1} parent=1 // loop_footer_branch
      %36 = sbr.rel target = $region3
    $region8: #{fast_scnn_forward.1} parent=1 // loop_exit
      _
    %12290 = vsyncpa [#allocation3], 1
    %s12291 = scalar_lea.sflag [#allocation3], 1
    %12292 = vsyncpa %s12291, 1
    %12293 = vsyncpa [#allocation6], 1
    %12294 = vsyncpa [#allocation9], 1
    %12295 = vsyncpa [#allocation12], 1
    %12296 = vsyncpa [#allocation15], 1
    %12297 = vsyncpa [#allocation18], 1
    %12298 = vsyncpa [#allocation21], 1
    %12299 = vsyncpa [#allocation24], 1
    %12300 = vsyncpa [#allocation27], 1
    %12301 = vsyncpa [#allocation4], 1
    %s12302 = scalar_lea.sflag [#allocation4], 1
    %12303 = vsyncpa %s12302, 1

</llo_original>
